<compile_context>
chip_gen: v5e
topology: v5e:2x2
jax: 0.10.0
libtpu: 0.0.40
codegen_flags: <defaults>
</compile_context>

<pallas_src>
import math
import jax
import jax.numpy as jnp
from jax.experimental import pallas as pl
from jax.experimental.pallas import tpu as pltpu

# ---- model hyper-params (small, consistent with the module's __init__) ----
DIM = 32
HEADS = 4
DIM_HEAD = 8
INNER = HEADS * DIM_HEAD          # 32
MLP_DIM = 64
DEPTH = 2
LN_EPS = 1e-5
NEG = -1e9

_ATTN_NP = 7                      # ln_g, ln_b, wq, wk, wv, wo, bo
_FF_NP = 6                        # ln_g, ln_b, w1, b1, w2, b2
_LAYER_NP = 2 * _ATTN_NP + _FF_NP


# --------------------------- in-kernel helpers -----------------------------
def _erf(x):
    # Abramowitz & Stegun 7.1.26 rational approximation (max abs err ~1.5e-7,
    # i.e. f32-accurate). Built from exp/mul/add only (guaranteed Mosaic lowering).
    a1, a2, a3, a4, a5 = (0.254829592, -0.284496736, 1.421413741,
                          -1.453152027, 1.061405429)
    p = 0.3275911
    ax = jnp.abs(x)
    t = 1.0 / (1.0 + p * ax)
    poly = ((((a5 * t + a4) * t + a3) * t + a2) * t + a1) * t
    y = 1.0 - poly * jnp.exp(-ax * ax)
    return jnp.where(x < 0.0, -y, y)


def _gelu(x):
    # exact (erf-based) GELU, matching torch.nn.GELU() default (tanh-approx
    # GELU was considered but is functionally further from the reference).
    return 0.5 * x * (1.0 + _erf(x * 0.7071067811865476))


def _layernorm(x, g, b):
    mu = jnp.mean(x, axis=-1, keepdims=True)
    var = jnp.mean((x - mu) ** 2, axis=-1, keepdims=True)
    return (x - mu) * jax.lax.rsqrt(var + LN_EPS) * g + b


def _attention(x, src, bias, ln_g, ln_b, wq_h, wk_h, wv_h, wo_h, bo, *, is_self):
    """ResidualAttn(PreNormAttn(Attention)) on batch-flattened activations.

    x    : (B*Nq, D) query-side residual stream
    src  : (B*Nk, D) key/value source (== x for self-attention)
    bias : (B, Nq, Nk) additive mask bias (0 attend / -1e9 masked), hoisted
    wq_h/wk_h/wv_h : (H, D, dh) head-major projections; wo_h: (H, dh, D)
    """
    H, _, dh = wq_h.shape
    B, n_q, n_k = bias.shape
    scale = 1.0 / math.sqrt(dh)

    # PreNormAttn applies the SAME LayerNorm to query, key and value inputs.
    xn = _layernorm(x, ln_g, ln_b)
    srcn = xn if is_self else _layernorm(src, ln_g, ln_b)

    # Heads-batched projections on the batch-flattened token axis
    # (no per-head Python loop, no sub-128 lane slices).
    xn_b = jnp.broadcast_to(xn[None], (H,) + xn.shape)
    srcn_b = xn_b if is_self else jnp.broadcast_to(srcn[None], (H,) + srcn.shape)
    q = jnp.einsum('hnd,hde->hne', xn_b, wq_h, preferred_element_type=jnp.float32)
    k = jnp.einsum('hnd,hde->hne', srcn_b, wk_h, preferred_element_type=jnp.float32)
    v = jnp.einsum('hnd,hde->hne', srcn_b, wv_h, preferred_element_type=jnp.float32)

    outs = []
    for b in range(B):                        # B is tiny & static -> unrolled
        qb = q[:, b * n_q:(b + 1) * n_q, :]   # aligned sublane slices
        kb = k[:, b * n_k:(b + 1) * n_k, :]
        vb = v[:, b * n_k:(b + 1) * n_k, :]
        dots = jnp.einsum('hqe,hke->hqk', qb, kb,
                          preferred_element_type=jnp.float32) * scale
        dots = dots + bias[b][None]           # hoisted mask bias, shared by heads
        dots = dots - jnp.max(dots, axis=-1, keepdims=True)
        p = jnp.exp(dots)
        denom = jnp.sum(p, axis=-1, keepdims=True)
        attn = p * pl.reciprocal(denom, approx=False)  # exact: parity w/ torch
        ctx = jnp.einsum('hqk,hke->hqe', attn, vb,
                         preferred_element_type=jnp.float32)      # (H, Nq, dh)
        proj = jnp.einsum('hqe,hed->hqd', ctx, wo_h,
                          preferred_element_type=jnp.float32)     # (H, Nq, D)
        outs.append(jnp.sum(proj, axis=0))    # concat-heads @ Wo == sum of heads
    out = jnp.concatenate(outs, axis=0) if B > 1 else outs[0]     # (B*Nq, D)
    return out + bo + x                       # output-proj bias + residual


def _feedforward(x, ln_g, ln_b, w1, b1, w2, b2):
    xn = _layernorm(x, ln_g, ln_b)
    h = jnp.dot(xn, w1, preferred_element_type=jnp.float32) + b1
    h = _gelu(h)
    y = jnp.dot(h, w2, preferred_element_type=jnp.float32) + b2
    return y + x


# ------------------------------- kernel ------------------------------------
def _decoder_kernel(*refs):
    """Entire decoder stack in ONE kernel invocation (no grid).

    refs = [x2d, mem2d, target_mask, src_mask, *layer_params, out2d]
    """
    x_ref, mem_ref, tmask_ref, smask_ref = refs[:4]
    out_ref = refs[-1]
    prefs = refs[4:-1]
    depth = len(prefs) // _LAYER_NP

    x = x_ref[...]            # (B*N, D)
    mem = mem_ref[...]        # (B*M, D)

    # mask -> additive bias, computed ONCE (not per layer / per head)
    tgt_bias = jnp.where(tmask_ref[...] == 0.0, NEG, 0.0)   # (B, N, N)
    src_bias = jnp.where(smask_ref[...] == 0.0, NEG, 0.0)   # (B, N, M)

    i = 0
    for _ in range(depth):
        sp = [r[...] for r in prefs[i:i + _ATTN_NP]]; i += _ATTN_NP
        cp = [r[...] for r in prefs[i:i + _ATTN_NP]]; i += _ATTN_NP
        fp = [r[...] for r in prefs[i:i + _FF_NP]];   i += _FF_NP
        x = _attention(x, x, tgt_bias, *sp, is_self=True)
        x = _attention(x, mem, src_bias, *cp, is_self=False)
        x = _feedforward(x, *fp)

    out_ref[...] = x


# ------------------------------ wrapper ------------------------------------
def _flatten_params(layers):
    flat = []
    for layer in layers:
        for blk in ("self_attn", "src_attn"):
            p = layer[blk]
            flat += [p["ln_g"], p["ln_b"], p["wq"], p["wk"], p["wv"],
                     p["wo"], p["bo"]]
        p = layer["ff"]
        flat += [p["ln_g"], p["ln_b"], p["w1"], p["b1"], p["w2"], p["b2"]]
    return flat


def decoder_forward(x, memory, src_mask, target_mask, layers):
    B, N, D = x.shape
    M = memory.shape[1]
    inputs = [x.reshape(B * N, D), memory.reshape(B * M, D),
              target_mask, src_mask] + _flatten_params(layers)

    vmem = pl.BlockSpec(memory_space=pltpu.MemorySpace.VMEM)
    out2d = pl.pallas_call(
        _decoder_kernel,
        out_shape=jax.ShapeDtypeStruct((B * N, D), x.dtype),
        in_specs=[vmem] * len(inputs),
        out_specs=vmem,
        compiler_params=pltpu.CompilerParams(vmem_limit_bytes=16 * 1024 * 1024),
    )(*inputs)
    return out2d.reshape(B, N, D)


# --------------------------- parameter init --------------------------------
def _uniform(key, shape, fan_in):
    bound = 1.0 / math.sqrt(fan_in)
    return jax.random.uniform(key, shape, jnp.float32, -bound, bound)


def _attn_params(key):
    k1, k2, k3, k4, k5 = jax.random.split(key, 5)

    def heads_in(w):   # (D, H*dh) -> (H, D, dh) head-major layout (host-side)
        return jnp.transpose(w.reshape(DIM, HEADS, DIM_HEAD), (1, 0, 2))

    return dict(
        ln_g=jnp.ones((1, DIM), jnp.float32),
        ln_b=jnp.zeros((1, DIM), jnp.float32),
        wq=heads_in(_uniform(k1, (DIM, INNER), DIM)),
        wk=heads_in(_uniform(k2, (DIM, INNER), DIM)),
        wv=heads_in(_uniform(k3, (DIM, INNER), DIM)),
        wo=_uniform(k4, (INNER, DIM), INNER).reshape(HEADS, DIM_HEAD, DIM),
        bo=_uniform(k5, (1, DIM), INNER))


def _ff_params(key):
    k1, k2, k3, k4 = jax.random.split(key, 4)
    return dict(
        ln_g=jnp.ones((1, DIM), jnp.float32),
        ln_b=jnp.zeros((1, DIM), jnp.float32),
        w1=_uniform(k1, (DIM, MLP_DIM), DIM),
        b1=_uniform(k2, (1, MLP_DIM), DIM),
        w2=_uniform(k3, (MLP_DIM, DIM), MLP_DIM),
        b2=_uniform(k4, (1, DIM), MLP_DIM))


def init_params(key):
    layers = []
    for _ in range(DEPTH):
        key, ka, kb, kc = jax.random.split(key, 4)
        layers.append(dict(self_attn=_attn_params(ka),
                           src_attn=_attn_params(kb),
                           ff=_ff_params(kc)))
    return layers


# --------------------------------- main -------------------------------------
if __name__ == "__main__":
    B, N, M = 2, 8, 8
    key = jax.random.PRNGKey(0)
    kx, km, kp = jax.random.split(key, 3)

    x = jax.random.normal(kx, (B, N, DIM), jnp.float32)
    memory = jax.random.normal(km, (B, M, DIM), jnp.float32)

    # causal target mask (self-attn), full source mask (cross-attn)
    target_mask = jnp.broadcast_to(jnp.tril(jnp.ones((N, N), jnp.float32)),
                                   (B, N, N))
    src_mask = jnp.ones((B, N, M), jnp.float32)

    params = init_params(kp)

    fwd = jax.jit(decoder_forward)
    out = jax.block_until_ready(fwd(x, memory, src_mask, target_mask, params))

    assert out.shape == (B, N, DIM)
    assert bool(jnp.all(jnp.isfinite(out)))
    print("KERNEL_OK")
</pallas_src>

<mosaic_0001>
module attributes {stable_mosaic.version = 11 : i64} {
  func.func @_decoder_kernel(%arg0: memref<16x32xf32, #tpu.memory_space<vmem>>, %arg1: memref<16x32xf32, #tpu.memory_space<vmem>>, %arg2: memref<2x8x8xf32, #tpu.memory_space<vmem>>, %arg3: memref<2x8x8xf32, #tpu.memory_space<vmem>>, %arg4: memref<1x32xf32, #tpu.memory_space<vmem>>, %arg5: memref<1x32xf32, #tpu.memory_space<vmem>>, %arg6: memref<4x32x8xf32, #tpu.memory_space<vmem>>, %arg7: memref<4x32x8xf32, #tpu.memory_space<vmem>>, %arg8: memref<4x32x8xf32, #tpu.memory_space<vmem>>, %arg9: memref<4x8x32xf32, #tpu.memory_space<vmem>>, %arg10: memref<1x32xf32, #tpu.memory_space<vmem>>, %arg11: memref<1x32xf32, #tpu.memory_space<vmem>>, %arg12: memref<1x32xf32, #tpu.memory_space<vmem>>, %arg13: memref<4x32x8xf32, #tpu.memory_space<vmem>>, %arg14: memref<4x32x8xf32, #tpu.memory_space<vmem>>, %arg15: memref<4x32x8xf32, #tpu.memory_space<vmem>>, %arg16: memref<4x8x32xf32, #tpu.memory_space<vmem>>, %arg17: memref<1x32xf32, #tpu.memory_space<vmem>>, %arg18: memref<1x32xf32, #tpu.memory_space<vmem>>, %arg19: memref<1x32xf32, #tpu.memory_space<vmem>>, %arg20: memref<32x64xf32, #tpu.memory_space<vmem>>, %arg21: memref<1x64xf32, #tpu.memory_space<vmem>>, %arg22: memref<64x32xf32, #tpu.memory_space<vmem>>, %arg23: memref<1x32xf32, #tpu.memory_space<vmem>>, %arg24: memref<1x32xf32, #tpu.memory_space<vmem>>, %arg25: memref<1x32xf32, #tpu.memory_space<vmem>>, %arg26: memref<4x32x8xf32, #tpu.memory_space<vmem>>, %arg27: memref<4x32x8xf32, #tpu.memory_space<vmem>>, %arg28: memref<4x32x8xf32, #tpu.memory_space<vmem>>, %arg29: memref<4x8x32xf32, #tpu.memory_space<vmem>>, %arg30: memref<1x32xf32, #tpu.memory_space<vmem>>, %arg31: memref<1x32xf32, #tpu.memory_space<vmem>>, %arg32: memref<1x32xf32, #tpu.memory_space<vmem>>, %arg33: memref<4x32x8xf32, #tpu.memory_space<vmem>>, %arg34: memref<4x32x8xf32, #tpu.memory_space<vmem>>, %arg35: memref<4x32x8xf32, #tpu.memory_space<vmem>>, %arg36: memref<4x8x32xf32, #tpu.memory_space<vmem>>, %arg37: memref<1x32xf32, #tpu.memory_space<vmem>>, %arg38: memref<1x32xf32, #tpu.memory_space<vmem>>, %arg39: memref<1x32xf32, #tpu.memory_space<vmem>>, %arg40: memref<32x64xf32, #tpu.memory_space<vmem>>, %arg41: memref<1x64xf32, #tpu.memory_space<vmem>>, %arg42: memref<64x32xf32, #tpu.memory_space<vmem>>, %arg43: memref<1x32xf32, #tpu.memory_space<vmem>>, %arg44: memref<16x32xf32, #tpu.memory_space<vmem>>) attributes {dimension_semantics = [], scalar_prefetch = 0 : i64, scratch_operands = 0 : i64, tpu.core_type = #tpu.core_type<tc>} {
    %c0 = arith.constant 0 : index
    %c0_0 = arith.constant 0 : index
    %0 = vector.load %arg0[%c0, %c0_0] : memref<16x32xf32, #tpu.memory_space<vmem>>, vector<16x32xf32>
    %c0_1 = arith.constant 0 : index
    %c0_2 = arith.constant 0 : index
    %1 = vector.load %arg1[%c0_1, %c0_2] : memref<16x32xf32, #tpu.memory_space<vmem>>, vector<16x32xf32>
    %c0_3 = arith.constant 0 : index
    %c0_4 = arith.constant 0 : index
    %c0_5 = arith.constant 0 : index
    %2 = vector.load %arg2[%c0_3, %c0_4, %c0_5] : memref<2x8x8xf32, #tpu.memory_space<vmem>>, vector<2x8x8xf32>
    %cst = arith.constant 0.000000e+00 : f32
    %3 = vector.broadcast %cst : f32 to vector<2x8x8xf32>
    %4 = arith.cmpf oeq, %2, %3 : vector<2x8x8xf32>
    %cst_6 = arith.constant -1.000000e+09 : f32
    %cst_7 = arith.constant 0.000000e+00 : f32
    %5 = vector.broadcast %cst_6 : f32 to vector<2x8x8xf32>
    %6 = vector.broadcast %cst_7 : f32 to vector<2x8x8xf32>
    %7 = arith.select %4, %5, %6 : vector<2x8x8xi1>, vector<2x8x8xf32>
    %c0_8 = arith.constant 0 : index
    %c0_9 = arith.constant 0 : index
    %c0_10 = arith.constant 0 : index
    %8 = vector.load %arg3[%c0_8, %c0_9, %c0_10] : memref<2x8x8xf32, #tpu.memory_space<vmem>>, vector<2x8x8xf32>
    %cst_11 = arith.constant 0.000000e+00 : f32
    %9 = vector.broadcast %cst_11 : f32 to vector<2x8x8xf32>
    %10 = arith.cmpf oeq, %8, %9 : vector<2x8x8xf32>
    %cst_12 = arith.constant -1.000000e+09 : f32
    %cst_13 = arith.constant 0.000000e+00 : f32
    %11 = vector.broadcast %cst_12 : f32 to vector<2x8x8xf32>
    %12 = vector.broadcast %cst_13 : f32 to vector<2x8x8xf32>
    %13 = arith.select %10, %11, %12 : vector<2x8x8xi1>, vector<2x8x8xf32>
    %c0_14 = arith.constant 0 : index
    %c0_15 = arith.constant 0 : index
    %14 = vector.load %arg4[%c0_14, %c0_15] : memref<1x32xf32, #tpu.memory_space<vmem>>, vector<1x32xf32>
    %c0_16 = arith.constant 0 : index
    %c0_17 = arith.constant 0 : index
    %15 = vector.load %arg5[%c0_16, %c0_17] : memref<1x32xf32, #tpu.memory_space<vmem>>, vector<1x32xf32>
    %c0_18 = arith.constant 0 : index
    %c0_19 = arith.constant 0 : index
    %c0_20 = arith.constant 0 : index
    %16 = vector.load %arg6[%c0_18, %c0_19, %c0_20] : memref<4x32x8xf32, #tpu.memory_space<vmem>>, vector<4x32x8xf32>
    %c0_21 = arith.constant 0 : index
    %c0_22 = arith.constant 0 : index
    %c0_23 = arith.constant 0 : index
    %17 = vector.load %arg7[%c0_21, %c0_22, %c0_23] : memref<4x32x8xf32, #tpu.memory_space<vmem>>, vector<4x32x8xf32>
    %c0_24 = arith.constant 0 : index
    %c0_25 = arith.constant 0 : index
    %c0_26 = arith.constant 0 : index
    %18 = vector.load %arg8[%c0_24, %c0_25, %c0_26] : memref<4x32x8xf32, #tpu.memory_space<vmem>>, vector<4x32x8xf32>
    %c0_27 = arith.constant 0 : index
    %c0_28 = arith.constant 0 : index
    %c0_29 = arith.constant 0 : index
    %19 = vector.load %arg9[%c0_27, %c0_28, %c0_29] : memref<4x8x32xf32, #tpu.memory_space<vmem>>, vector<4x8x32xf32>
    %c0_30 = arith.constant 0 : index
    %c0_31 = arith.constant 0 : index
    %20 = vector.load %arg10[%c0_30, %c0_31] : memref<1x32xf32, #tpu.memory_space<vmem>>, vector<1x32xf32>
    %c0_32 = arith.constant 0 : index
    %c0_33 = arith.constant 0 : index
    %21 = vector.load %arg11[%c0_32, %c0_33] : memref<1x32xf32, #tpu.memory_space<vmem>>, vector<1x32xf32>
    %c0_34 = arith.constant 0 : index
    %c0_35 = arith.constant 0 : index
    %22 = vector.load %arg12[%c0_34, %c0_35] : memref<1x32xf32, #tpu.memory_space<vmem>>, vector<1x32xf32>
    %c0_36 = arith.constant 0 : index
    %c0_37 = arith.constant 0 : index
    %c0_38 = arith.constant 0 : index
    %23 = vector.load %arg13[%c0_36, %c0_37, %c0_38] : memref<4x32x8xf32, #tpu.memory_space<vmem>>, vector<4x32x8xf32>
    %c0_39 = arith.constant 0 : index
    %c0_40 = arith.constant 0 : index
    %c0_41 = arith.constant 0 : index
    %24 = vector.load %arg14[%c0_39, %c0_40, %c0_41] : memref<4x32x8xf32, #tpu.memory_space<vmem>>, vector<4x32x8xf32>
    %c0_42 = arith.constant 0 : index
    %c0_43 = arith.constant 0 : index
    %c0_44 = arith.constant 0 : index
    %25 = vector.load %arg15[%c0_42, %c0_43, %c0_44] : memref<4x32x8xf32, #tpu.memory_space<vmem>>, vector<4x32x8xf32>
    %c0_45 = arith.constant 0 : index
    %c0_46 = arith.constant 0 : index
    %c0_47 = arith.constant 0 : index
    %26 = vector.load %arg16[%c0_45, %c0_46, %c0_47] : memref<4x8x32xf32, #tpu.memory_space<vmem>>, vector<4x8x32xf32>
    %c0_48 = arith.constant 0 : index
    %c0_49 = arith.constant 0 : index
    %27 = vector.load %arg17[%c0_48, %c0_49] : memref<1x32xf32, #tpu.memory_space<vmem>>, vector<1x32xf32>
    %c0_50 = arith.constant 0 : index
    %c0_51 = arith.constant 0 : index
    %28 = vector.load %arg18[%c0_50, %c0_51] : memref<1x32xf32, #tpu.memory_space<vmem>>, vector<1x32xf32>
    %c0_52 = arith.constant 0 : index
    %c0_53 = arith.constant 0 : index
    %29 = vector.load %arg19[%c0_52, %c0_53] : memref<1x32xf32, #tpu.memory_space<vmem>>, vector<1x32xf32>
    %c0_54 = arith.constant 0 : index
    %c0_55 = arith.constant 0 : index
    %30 = vector.load %arg20[%c0_54, %c0_55] : memref<32x64xf32, #tpu.memory_space<vmem>>, vector<32x64xf32>
    %c0_56 = arith.constant 0 : index
    %c0_57 = arith.constant 0 : index
    %31 = vector.load %arg21[%c0_56, %c0_57] : memref<1x64xf32, #tpu.memory_space<vmem>>, vector<1x64xf32>
    %c0_58 = arith.constant 0 : index
    %c0_59 = arith.constant 0 : index
    %32 = vector.load %arg22[%c0_58, %c0_59] : memref<64x32xf32, #tpu.memory_space<vmem>>, vector<64x32xf32>
    %c0_60 = arith.constant 0 : index
    %c0_61 = arith.constant 0 : index
    %33 = vector.load %arg23[%c0_60, %c0_61] : memref<1x32xf32, #tpu.memory_space<vmem>>, vector<1x32xf32>
    %cst_62 = arith.constant dense<0.000000e+00> : vector<16xf32>
    %34 = vector.multi_reduction <add>, %0, %cst_62 [1] : vector<16x32xf32> to vector<16xf32>
    %35 = vector.shape_cast %34 : vector<16xf32> to vector<16x1xf32>
    %cst_63 = arith.constant 3.200000e+01 : f32
    %36 = vector.broadcast %cst_63 : f32 to vector<16x1xf32>
    %37 = arith.divf %35, %36 : vector<16x1xf32>
    %38 = vector.broadcast %37 : vector<16x1xf32> to vector<16x32xf32>
    %39 = arith.subf %0, %38 : vector<16x32xf32>
    %40 = arith.mulf %39, %39 : vector<16x32xf32>
    %cst_64 = arith.constant dense<0.000000e+00> : vector<16xf32>
    %41 = vector.multi_reduction <add>, %40, %cst_64 [1] : vector<16x32xf32> to vector<16xf32>
    %42 = vector.shape_cast %41 : vector<16xf32> to vector<16x1xf32>
    %cst_65 = arith.constant 3.200000e+01 : f32
    %43 = vector.broadcast %cst_65 : f32 to vector<16x1xf32>
    %44 = arith.divf %42, %43 : vector<16x1xf32>
    %45 = vector.broadcast %37 : vector<16x1xf32> to vector<16x32xf32>
    %46 = arith.subf %0, %45 : vector<16x32xf32>
    %cst_66 = arith.constant 9.99999974E-6 : f32
    %47 = vector.broadcast %cst_66 : f32 to vector<16x1xf32>
    %48 = arith.addf %44, %47 : vector<16x1xf32>
    %49 = math.rsqrt %48 : vector<16x1xf32>
    %50 = vector.broadcast %49 : vector<16x1xf32> to vector<16x32xf32>
    %51 = arith.mulf %46, %50 : vector<16x32xf32>
    %52 = vector.broadcast %14 : vector<1x32xf32> to vector<16x32xf32>
    %53 = arith.mulf %51, %52 : vector<16x32xf32>
    %54 = vector.broadcast %15 : vector<1x32xf32> to vector<16x32xf32>
    %55 = arith.addf %53, %54 : vector<16x32xf32>
    %56 = vector.shape_cast %55 : vector<16x32xf32> to vector<1x16x32xf32>
    %57 = vector.shape_cast %56 : vector<1x16x32xf32> to vector<1x16x32xf32>
    %58 = vector.broadcast %57 : vector<1x16x32xf32> to vector<4x16x32xf32>
    "tpu.trace_start"() <{level = 10 : i32, message = "hnd,hde->hne"}> : () -> ()
    %cst_67 = arith.constant dense<0.000000e+00> : vector<4x16x8xf32>
    %59 = tpu.matmul %58, %16, %cst_67 {dimension_numbers = #tpu.dot_dimension_numbers<[2], [1], [1], [2], [0, 0, 0, 1, 1, 2], [0], [0]>} : vector<4x16x32xf32>, vector<4x32x8xf32>, vector<4x16x8xf32> -> vector<4x16x8xf32>
    %cst_68 = arith.constant dense<0.000000e+00> : vector<4x16x8xf32>
    %60 = tpu.matmul %58, %17, %cst_68 {dimension_numbers = #tpu.dot_dimension_numbers<[2], [1], [1], [2], [0, 0, 0, 1, 1, 2], [0], [0]>} : vector<4x16x32xf32>, vector<4x32x8xf32>, vector<4x16x8xf32> -> vector<4x16x8xf32>
    %cst_69 = arith.constant dense<0.000000e+00> : vector<4x16x8xf32>
    %61 = tpu.matmul %58, %18, %cst_69 {dimension_numbers = #tpu.dot_dimension_numbers<[2], [1], [1], [2], [0, 0, 0, 1, 1, 2], [0], [0]>} : vector<4x16x32xf32>, vector<4x32x8xf32>, vector<4x16x8xf32> -> vector<4x16x8xf32>
    "tpu.trace_stop"() : () -> ()
    %62 = vector.extract_strided_slice %59 {offsets = [0, 0, 0], sizes = [4, 8, 8], strides = [1, 1, 1]} : vector<4x16x8xf32> to vector<4x8x8xf32>
    %63 = vector.extract_strided_slice %60 {offsets = [0, 0, 0], sizes = [4, 8, 8], strides = [1, 1, 1]} : vector<4x16x8xf32> to vector<4x8x8xf32>
    %64 = vector.extract_strided_slice %61 {offsets = [0, 0, 0], sizes = [4, 8, 8], strides = [1, 1, 1]} : vector<4x16x8xf32> to vector<4x8x8xf32>
    "tpu.trace_start"() <{level = 10 : i32, message = "hqe,hke->hqk"}> : () -> ()
    %cst_70 = arith.constant dense<0.000000e+00> : vector<4x8x8xf32>
    %65 = tpu.matmul %62, %63, %cst_70 {dimension_numbers = #tpu.dot_dimension_numbers<[2], [2], [1], [1], [0, 0, 0, 1, 1, 1], [0], [0]>} : vector<4x8x8xf32>, vector<4x8x8xf32>, vector<4x8x8xf32> -> vector<4x8x8xf32>
    "tpu.trace_stop"() : () -> ()
    %cst_71 = arith.constant 0.353553385 : f32
    %66 = vector.broadcast %cst_71 : f32 to vector<4x8x8xf32>
    %67 = arith.mulf %65, %66 : vector<4x8x8xf32>
    %68 = vector.extract_strided_slice %7 {offsets = [0, 0, 0], sizes = [1, 8, 8], strides = [1, 1, 1]} : vector<2x8x8xf32> to vector<1x8x8xf32>
    %69 = vector.shape_cast %68 : vector<1x8x8xf32> to vector<8x8xf32>
    %70 = vector.shape_cast %69 : vector<8x8xf32> to vector<1x8x8xf32>
    %71 = vector.broadcast %70 : vector<1x8x8xf32> to vector<4x8x8xf32>
    %72 = arith.addf %67, %71 : vector<4x8x8xf32>
    %cst_72 = arith.constant dense<0xFF800000> : vector<4x8xf32>
    %73 = vector.multi_reduction <maximumf>, %72, %cst_72 [2] : vector<4x8x8xf32> to vector<4x8xf32>
    %74 = vector.shape_cast %73 : vector<4x8xf32> to vector<4x8x1xf32>
    %75 = vector.broadcast %74 : vector<4x8x1xf32> to vector<4x8x8xf32>
    %76 = arith.subf %72, %75 : vector<4x8x8xf32>
    %77 = math.exp %76 : vector<4x8x8xf32>
    %cst_73 = arith.constant dense<0.000000e+00> : vector<4x8xf32>
    %78 = vector.multi_reduction <add>, %77, %cst_73 [2] : vector<4x8x8xf32> to vector<4x8xf32>
    %79 = vector.shape_cast %78 : vector<4x8xf32> to vector<4x8x1xf32>
    %80 = tpu.reciprocal %79 : vector<4x8x1xf32> -> vector<4x8x1xf32>
    %81 = vector.broadcast %80 : vector<4x8x1xf32> to vector<4x8x8xf32>
    %82 = arith.mulf %77, %81 : vector<4x8x8xf32>
    "tpu.trace_start"() <{level = 10 : i32, message = "hqk,hke->hqe"}> : () -> ()
    %cst_74 = arith.constant dense<0.000000e+00> : vector<4x8x8xf32>
    %83 = tpu.matmul %82, %64, %cst_74 {dimension_numbers = #tpu.dot_dimension_numbers<[2], [1], [1], [2], [0, 0, 0, 1, 1, 2], [0], [0]>} : vector<4x8x8xf32>, vector<4x8x8xf32>, vector<4x8x8xf32> -> vector<4x8x8xf32>
    "tpu.trace_stop"() : () -> ()
    "tpu.trace_start"() <{level = 10 : i32, message = "hqe,hed->hqd"}> : () -> ()
    %cst_75 = arith.constant dense<0.000000e+00> : vector<4x8x32xf32>
    %84 = tpu.matmul %83, %19, %cst_75 {dimension_numbers = #tpu.dot_dimension_numbers<[2], [1], [1], [2], [0, 0, 0, 1, 1, 2], [0], [0]>} : vector<4x8x8xf32>, vector<4x8x32xf32>, vector<4x8x32xf32> -> vector<4x8x32xf32>
    "tpu.trace_stop"() : () -> ()
    %cst_76 = arith.constant dense<0.000000e+00> : vector<8x32xf32>
    %85 = vector.multi_reduction <add>, %84, %cst_76 [0] : vector<4x8x32xf32> to vector<8x32xf32>
    %86 = vector.extract_strided_slice %59 {offsets = [0, 8, 0], sizes = [4, 8, 8], strides = [1, 1, 1]} : vector<4x16x8xf32> to vector<4x8x8xf32>
    %87 = vector.extract_strided_slice %60 {offsets = [0, 8, 0], sizes = [4, 8, 8], strides = [1, 1, 1]} : vector<4x16x8xf32> to vector<4x8x8xf32>
    %88 = vector.extract_strided_slice %61 {offsets = [0, 8, 0], sizes = [4, 8, 8], strides = [1, 1, 1]} : vector<4x16x8xf32> to vector<4x8x8xf32>
    "tpu.trace_start"() <{level = 10 : i32, message = "hqe,hke->hqk"}> : () -> ()
    %cst_77 = arith.constant dense<0.000000e+00> : vector<4x8x8xf32>
    %89 = tpu.matmul %86, %87, %cst_77 {dimension_numbers = #tpu.dot_dimension_numbers<[2], [2], [1], [1], [0, 0, 0, 1, 1, 1], [0], [0]>} : vector<4x8x8xf32>, vector<4x8x8xf32>, vector<4x8x8xf32> -> vector<4x8x8xf32>
    "tpu.trace_stop"() : () -> ()
    %cst_78 = arith.constant 0.353553385 : f32
    %90 = vector.broadcast %cst_78 : f32 to vector<4x8x8xf32>
    %91 = arith.mulf %89, %90 : vector<4x8x8xf32>
    %92 = vector.extract_strided_slice %7 {offsets = [1, 0, 0], sizes = [1, 8, 8], strides = [1, 1, 1]} : vector<2x8x8xf32> to vector<1x8x8xf32>
    %93 = vector.shape_cast %92 : vector<1x8x8xf32> to vector<8x8xf32>
    %94 = vector.shape_cast %93 : vector<8x8xf32> to vector<1x8x8xf32>
    %95 = vector.broadcast %94 : vector<1x8x8xf32> to vector<4x8x8xf32>
    %96 = arith.addf %91, %95 : vector<4x8x8xf32>
    %cst_79 = arith.constant dense<0xFF800000> : vector<4x8xf32>
    %97 = vector.multi_reduction <maximumf>, %96, %cst_79 [2] : vector<4x8x8xf32> to vector<4x8xf32>
    %98 = vector.shape_cast %97 : vector<4x8xf32> to vector<4x8x1xf32>
    %99 = vector.broadcast %98 : vector<4x8x1xf32> to vector<4x8x8xf32>
    %100 = arith.subf %96, %99 : vector<4x8x8xf32>
    %101 = math.exp %100 : vector<4x8x8xf32>
    %cst_80 = arith.constant dense<0.000000e+00> : vector<4x8xf32>
    %102 = vector.multi_reduction <add>, %101, %cst_80 [2] : vector<4x8x8xf32> to vector<4x8xf32>
    %103 = vector.shape_cast %102 : vector<4x8xf32> to vector<4x8x1xf32>
    %104 = tpu.reciprocal %103 : vector<4x8x1xf32> -> vector<4x8x1xf32>
    %105 = vector.broadcast %104 : vector<4x8x1xf32> to vector<4x8x8xf32>
    %106 = arith.mulf %101, %105 : vector<4x8x8xf32>
    "tpu.trace_start"() <{level = 10 : i32, message = "hqk,hke->hqe"}> : () -> ()
    %cst_81 = arith.constant dense<0.000000e+00> : vector<4x8x8xf32>
    %107 = tpu.matmul %106, %88, %cst_81 {dimension_numbers = #tpu.dot_dimension_numbers<[2], [1], [1], [2], [0, 0, 0, 1, 1, 2], [0], [0]>} : vector<4x8x8xf32>, vector<4x8x8xf32>, vector<4x8x8xf32> -> vector<4x8x8xf32>
    "tpu.trace_stop"() : () -> ()
    "tpu.trace_start"() <{level = 10 : i32, message = "hqe,hed->hqd"}> : () -> ()
    %cst_82 = arith.constant dense<0.000000e+00> : vector<4x8x32xf32>
    %108 = tpu.matmul %107, %19, %cst_82 {dimension_numbers = #tpu.dot_dimension_numbers<[2], [1], [1], [2], [0, 0, 0, 1, 1, 2], [0], [0]>} : vector<4x8x8xf32>, vector<4x8x32xf32>, vector<4x8x32xf32> -> vector<4x8x32xf32>
    "tpu.trace_stop"() : () -> ()
    %cst_83 = arith.constant dense<0.000000e+00> : vector<8x32xf32>
    %109 = vector.multi_reduction <add>, %108, %cst_83 [0] : vector<4x8x32xf32> to vector<8x32xf32>
    %110 = tpu.concatenate %85, %109 in 0 : vector<8x32xf32>, vector<8x32xf32> -> vector<16x32xf32>
    %111 = vector.broadcast %20 : vector<1x32xf32> to vector<16x32xf32>
    %112 = arith.addf %110, %111 : vector<16x32xf32>
    %113 = arith.addf %112, %0 : vector<16x32xf32>
    %cst_84 = arith.constant dense<0.000000e+00> : vector<16xf32>
    %114 = vector.multi_reduction <add>, %113, %cst_84 [1] : vector<16x32xf32> to vector<16xf32>
    %115 = vector.shape_cast %114 : vector<16xf32> to vector<16x1xf32>
    %cst_85 = arith.constant 3.200000e+01 : f32
    %116 = vector.broadcast %cst_85 : f32 to vector<16x1xf32>
    %117 = arith.divf %115, %116 : vector<16x1xf32>
    %118 = vector.broadcast %117 : vector<16x1xf32> to vector<16x32xf32>
    %119 = arith.subf %113, %118 : vector<16x32xf32>
    %120 = arith.mulf %119, %119 : vector<16x32xf32>
    %cst_86 = arith.constant dense<0.000000e+00> : vector<16xf32>
    %121 = vector.multi_reduction <add>, %120, %cst_86 [1] : vector<16x32xf32> to vector<16xf32>
    %122 = vector.shape_cast %121 : vector<16xf32> to vector<16x1xf32>
    %cst_87 = arith.constant 3.200000e+01 : f32
    %123 = vector.broadcast %cst_87 : f32 to vector<16x1xf32>
    %124 = arith.divf %122, %123 : vector<16x1xf32>
    %125 = vector.broadcast %117 : vector<16x1xf32> to vector<16x32xf32>
    %126 = arith.subf %113, %125 : vector<16x32xf32>
    %cst_88 = arith.constant 9.99999974E-6 : f32
    %127 = vector.broadcast %cst_88 : f32 to vector<16x1xf32>
    %128 = arith.addf %124, %127 : vector<16x1xf32>
    %129 = math.rsqrt %128 : vector<16x1xf32>
    %130 = vector.broadcast %129 : vector<16x1xf32> to vector<16x32xf32>
    %131 = arith.mulf %126, %130 : vector<16x32xf32>
    %132 = vector.broadcast %21 : vector<1x32xf32> to vector<16x32xf32>
    %133 = arith.mulf %131, %132 : vector<16x32xf32>
    %134 = vector.broadcast %22 : vector<1x32xf32> to vector<16x32xf32>
    %135 = arith.addf %133, %134 : vector<16x32xf32>
    %cst_89 = arith.constant dense<0.000000e+00> : vector<16xf32>
    %136 = vector.multi_reduction <add>, %1, %cst_89 [1] : vector<16x32xf32> to vector<16xf32>
    %137 = vector.shape_cast %136 : vector<16xf32> to vector<16x1xf32>
    %cst_90 = arith.constant 3.200000e+01 : f32
    %138 = vector.broadcast %cst_90 : f32 to vector<16x1xf32>
    %139 = arith.divf %137, %138 : vector<16x1xf32>
    %140 = vector.broadcast %139 : vector<16x1xf32> to vector<16x32xf32>
    %141 = arith.subf %1, %140 : vector<16x32xf32>
    %142 = arith.mulf %141, %141 : vector<16x32xf32>
    %cst_91 = arith.constant dense<0.000000e+00> : vector<16xf32>
    %143 = vector.multi_reduction <add>, %142, %cst_91 [1] : vector<16x32xf32> to vector<16xf32>
    %144 = vector.shape_cast %143 : vector<16xf32> to vector<16x1xf32>
    %cst_92 = arith.constant 3.200000e+01 : f32
    %145 = vector.broadcast %cst_92 : f32 to vector<16x1xf32>
    %146 = arith.divf %144, %145 : vector<16x1xf32>
    %147 = vector.broadcast %139 : vector<16x1xf32> to vector<16x32xf32>
    %148 = arith.subf %1, %147 : vector<16x32xf32>
    %cst_93 = arith.constant 9.99999974E-6 : f32
    %149 = vector.broadcast %cst_93 : f32 to vector<16x1xf32>
    %150 = arith.addf %146, %149 : vector<16x1xf32>
    %151 = math.rsqrt %150 : vector<16x1xf32>
    %152 = vector.broadcast %151 : vector<16x1xf32> to vector<16x32xf32>
    %153 = arith.mulf %148, %152 : vector<16x32xf32>
    %154 = vector.broadcast %21 : vector<1x32xf32> to vector<16x32xf32>
    %155 = arith.mulf %153, %154 : vector<16x32xf32>
    %156 = vector.broadcast %22 : vector<1x32xf32> to vector<16x32xf32>
    %157 = arith.addf %155, %156 : vector<16x32xf32>
    %158 = vector.shape_cast %135 : vector<16x32xf32> to vector<1x16x32xf32>
    %159 = vector.shape_cast %158 : vector<1x16x32xf32> to vector<1x16x32xf32>
    %160 = vector.broadcast %159 : vector<1x16x32xf32> to vector<4x16x32xf32>
    %161 = vector.shape_cast %157 : vector<16x32xf32> to vector<1x16x32xf32>
    %162 = vector.shape_cast %161 : vector<1x16x32xf32> to vector<1x16x32xf32>
    %163 = vector.broadcast %162 : vector<1x16x32xf32> to vector<4x16x32xf32>
    "tpu.trace_start"() <{level = 10 : i32, message = "hnd,hde->hne"}> : () -> ()
    %cst_94 = arith.constant dense<0.000000e+00> : vector<4x16x8xf32>
    %164 = tpu.matmul %160, %23, %cst_94 {dimension_numbers = #tpu.dot_dimension_numbers<[2], [1], [1], [2], [0, 0, 0, 1, 1, 2], [0], [0]>} : vector<4x16x32xf32>, vector<4x32x8xf32>, vector<4x16x8xf32> -> vector<4x16x8xf32>
    %cst_95 = arith.constant dense<0.000000e+00> : vector<4x16x8xf32>
    %165 = tpu.matmul %163, %24, %cst_95 {dimension_numbers = #tpu.dot_dimension_numbers<[2], [1], [1], [2], [0, 0, 0, 1, 1, 2], [0], [0]>} : vector<4x16x32xf32>, vector<4x32x8xf32>, vector<4x16x8xf32> -> vector<4x16x8xf32>
    %cst_96 = arith.constant dense<0.000000e+00> : vector<4x16x8xf32>
    %166 = tpu.matmul %163, %25, %cst_96 {dimension_numbers = #tpu.dot_dimension_numbers<[2], [1], [1], [2], [0, 0, 0, 1, 1, 2], [0], [0]>} : vector<4x16x32xf32>, vector<4x32x8xf32>, vector<4x16x8xf32> -> vector<4x16x8xf32>
    "tpu.trace_stop"() : () -> ()
    %167 = vector.extract_strided_slice %164 {offsets = [0, 0, 0], sizes = [4, 8, 8], strides = [1, 1, 1]} : vector<4x16x8xf32> to vector<4x8x8xf32>
    %168 = vector.extract_strided_slice %165 {offsets = [0, 0, 0], sizes = [4, 8, 8], strides = [1, 1, 1]} : vector<4x16x8xf32> to vector<4x8x8xf32>
    %169 = vector.extract_strided_slice %166 {offsets = [0, 0, 0], sizes = [4, 8, 8], strides = [1, 1, 1]} : vector<4x16x8xf32> to vector<4x8x8xf32>
    "tpu.trace_start"() <{level = 10 : i32, message = "hqe,hke->hqk"}> : () -> ()
    %cst_97 = arith.constant dense<0.000000e+00> : vector<4x8x8xf32>
    %170 = tpu.matmul %167, %168, %cst_97 {dimension_numbers = #tpu.dot_dimension_numbers<[2], [2], [1], [1], [0, 0, 0, 1, 1, 1], [0], [0]>} : vector<4x8x8xf32>, vector<4x8x8xf32>, vector<4x8x8xf32> -> vector<4x8x8xf32>
    "tpu.trace_stop"() : () -> ()
    %cst_98 = arith.constant 0.353553385 : f32
    %171 = vector.broadcast %cst_98 : f32 to vector<4x8x8xf32>
    %172 = arith.mulf %170, %171 : vector<4x8x8xf32>
    %173 = vector.extract_strided_slice %13 {offsets = [0, 0, 0], sizes = [1, 8, 8], strides = [1, 1, 1]} : vector<2x8x8xf32> to vector<1x8x8xf32>
    %174 = vector.shape_cast %173 : vector<1x8x8xf32> to vector<8x8xf32>
    %175 = vector.shape_cast %174 : vector<8x8xf32> to vector<1x8x8xf32>
    %176 = vector.broadcast %175 : vector<1x8x8xf32> to vector<4x8x8xf32>
    %177 = arith.addf %172, %176 : vector<4x8x8xf32>
    %cst_99 = arith.constant dense<0xFF800000> : vector<4x8xf32>
    %178 = vector.multi_reduction <maximumf>, %177, %cst_99 [2] : vector<4x8x8xf32> to vector<4x8xf32>
    %179 = vector.shape_cast %178 : vector<4x8xf32> to vector<4x8x1xf32>
    %180 = vector.broadcast %179 : vector<4x8x1xf32> to vector<4x8x8xf32>
    %181 = arith.subf %177, %180 : vector<4x8x8xf32>
    %182 = math.exp %181 : vector<4x8x8xf32>
    %cst_100 = arith.constant dense<0.000000e+00> : vector<4x8xf32>
    %183 = vector.multi_reduction <add>, %182, %cst_100 [2] : vector<4x8x8xf32> to vector<4x8xf32>
    %184 = vector.shape_cast %183 : vector<4x8xf32> to vector<4x8x1xf32>
    %185 = tpu.reciprocal %184 : vector<4x8x1xf32> -> vector<4x8x1xf32>
    %186 = vector.broadcast %185 : vector<4x8x1xf32> to vector<4x8x8xf32>
    %187 = arith.mulf %182, %186 : vector<4x8x8xf32>
    "tpu.trace_start"() <{level = 10 : i32, message = "hqk,hke->hqe"}> : () -> ()
    %cst_101 = arith.constant dense<0.000000e+00> : vector<4x8x8xf32>
    %188 = tpu.matmul %187, %169, %cst_101 {dimension_numbers = #tpu.dot_dimension_numbers<[2], [1], [1], [2], [0, 0, 0, 1, 1, 2], [0], [0]>} : vector<4x8x8xf32>, vector<4x8x8xf32>, vector<4x8x8xf32> -> vector<4x8x8xf32>
    "tpu.trace_stop"() : () -> ()
    "tpu.trace_start"() <{level = 10 : i32, message = "hqe,hed->hqd"}> : () -> ()
    %cst_102 = arith.constant dense<0.000000e+00> : vector<4x8x32xf32>
    %189 = tpu.matmul %188, %26, %cst_102 {dimension_numbers = #tpu.dot_dimension_numbers<[2], [1], [1], [2], [0, 0, 0, 1, 1, 2], [0], [0]>} : vector<4x8x8xf32>, vector<4x8x32xf32>, vector<4x8x32xf32> -> vector<4x8x32xf32>
    "tpu.trace_stop"() : () -> ()
    %cst_103 = arith.constant dense<0.000000e+00> : vector<8x32xf32>
    %190 = vector.multi_reduction <add>, %189, %cst_103 [0] : vector<4x8x32xf32> to vector<8x32xf32>
    %191 = vector.extract_strided_slice %164 {offsets = [0, 8, 0], sizes = [4, 8, 8], strides = [1, 1, 1]} : vector<4x16x8xf32> to vector<4x8x8xf32>
    %192 = vector.extract_strided_slice %165 {offsets = [0, 8, 0], sizes = [4, 8, 8], strides = [1, 1, 1]} : vector<4x16x8xf32> to vector<4x8x8xf32>
    %193 = vector.extract_strided_slice %166 {offsets = [0, 8, 0], sizes = [4, 8, 8], strides = [1, 1, 1]} : vector<4x16x8xf32> to vector<4x8x8xf32>
    "tpu.trace_start"() <{level = 10 : i32, message = "hqe,hke->hqk"}> : () -> ()
    %cst_104 = arith.constant dense<0.000000e+00> : vector<4x8x8xf32>
    %194 = tpu.matmul %191, %192, %cst_104 {dimension_numbers = #tpu.dot_dimension_numbers<[2], [2], [1], [1], [0, 0, 0, 1, 1, 1], [0], [0]>} : vector<4x8x8xf32>, vector<4x8x8xf32>, vector<4x8x8xf32> -> vector<4x8x8xf32>
    "tpu.trace_stop"() : () -> ()
    %cst_105 = arith.constant 0.353553385 : f32
    %195 = vector.broadcast %cst_105 : f32 to vector<4x8x8xf32>
    %196 = arith.mulf %194, %195 : vector<4x8x8xf32>
    %197 = vector.extract_strided_slice %13 {offsets = [1, 0, 0], sizes = [1, 8, 8], strides = [1, 1, 1]} : vector<2x8x8xf32> to vector<1x8x8xf32>
    %198 = vector.shape_cast %197 : vector<1x8x8xf32> to vector<8x8xf32>
    %199 = vector.shape_cast %198 : vector<8x8xf32> to vector<1x8x8xf32>
    %200 = vector.broadcast %199 : vector<1x8x8xf32> to vector<4x8x8xf32>
    %201 = arith.addf %196, %200 : vector<4x8x8xf32>
    %cst_106 = arith.constant dense<0xFF800000> : vector<4x8xf32>
    %202 = vector.multi_reduction <maximumf>, %201, %cst_106 [2] : vector<4x8x8xf32> to vector<4x8xf32>
    %203 = vector.shape_cast %202 : vector<4x8xf32> to vector<4x8x1xf32>
    %204 = vector.broadcast %203 : vector<4x8x1xf32> to vector<4x8x8xf32>
    %205 = arith.subf %201, %204 : vector<4x8x8xf32>
    %206 = math.exp %205 : vector<4x8x8xf32>
    %cst_107 = arith.constant dense<0.000000e+00> : vector<4x8xf32>
    %207 = vector.multi_reduction <add>, %206, %cst_107 [2] : vector<4x8x8xf32> to vector<4x8xf32>
    %208 = vector.shape_cast %207 : vector<4x8xf32> to vector<4x8x1xf32>
    %209 = tpu.reciprocal %208 : vector<4x8x1xf32> -> vector<4x8x1xf32>
    %210 = vector.broadcast %209 : vector<4x8x1xf32> to vector<4x8x8xf32>
    %211 = arith.mulf %206, %210 : vector<4x8x8xf32>
    "tpu.trace_start"() <{level = 10 : i32, message = "hqk,hke->hqe"}> : () -> ()
    %cst_108 = arith.constant dense<0.000000e+00> : vector<4x8x8xf32>
    %212 = tpu.matmul %211, %193, %cst_108 {dimension_numbers = #tpu.dot_dimension_numbers<[2], [1], [1], [2], [0, 0, 0, 1, 1, 2], [0], [0]>} : vector<4x8x8xf32>, vector<4x8x8xf32>, vector<4x8x8xf32> -> vector<4x8x8xf32>
    "tpu.trace_stop"() : () -> ()
    "tpu.trace_start"() <{level = 10 : i32, message = "hqe,hed->hqd"}> : () -> ()
    %cst_109 = arith.constant dense<0.000000e+00> : vector<4x8x32xf32>
    %213 = tpu.matmul %212, %26, %cst_109 {dimension_numbers = #tpu.dot_dimension_numbers<[2], [1], [1], [2], [0, 0, 0, 1, 1, 2], [0], [0]>} : vector<4x8x8xf32>, vector<4x8x32xf32>, vector<4x8x32xf32> -> vector<4x8x32xf32>
    "tpu.trace_stop"() : () -> ()
    %cst_110 = arith.constant dense<0.000000e+00> : vector<8x32xf32>
    %214 = vector.multi_reduction <add>, %213, %cst_110 [0] : vector<4x8x32xf32> to vector<8x32xf32>
    %215 = tpu.concatenate %190, %214 in 0 : vector<8x32xf32>, vector<8x32xf32> -> vector<16x32xf32>
    %216 = vector.broadcast %27 : vector<1x32xf32> to vector<16x32xf32>
    %217 = arith.addf %215, %216 : vector<16x32xf32>
    %218 = arith.addf %217, %113 : vector<16x32xf32>
    %cst_111 = arith.constant dense<0.000000e+00> : vector<16xf32>
    %219 = vector.multi_reduction <add>, %218, %cst_111 [1] : vector<16x32xf32> to vector<16xf32>
    %220 = vector.shape_cast %219 : vector<16xf32> to vector<16x1xf32>
    %cst_112 = arith.constant 3.200000e+01 : f32
    %221 = vector.broadcast %cst_112 : f32 to vector<16x1xf32>
    %222 = arith.divf %220, %221 : vector<16x1xf32>
    %223 = vector.broadcast %222 : vector<16x1xf32> to vector<16x32xf32>
    %224 = arith.subf %218, %223 : vector<16x32xf32>
    %225 = arith.mulf %224, %224 : vector<16x32xf32>
    %cst_113 = arith.constant dense<0.000000e+00> : vector<16xf32>
    %226 = vector.multi_reduction <add>, %225, %cst_113 [1] : vector<16x32xf32> to vector<16xf32>
    %227 = vector.shape_cast %226 : vector<16xf32> to vector<16x1xf32>
    %cst_114 = arith.constant 3.200000e+01 : f32
    %228 = vector.broadcast %cst_114 : f32 to vector<16x1xf32>
    %229 = arith.divf %227, %228 : vector<16x1xf32>
    %230 = vector.broadcast %222 : vector<16x1xf32> to vector<16x32xf32>
    %231 = arith.subf %218, %230 : vector<16x32xf32>
    %cst_115 = arith.constant 9.99999974E-6 : f32
    %232 = vector.broadcast %cst_115 : f32 to vector<16x1xf32>
    %233 = arith.addf %229, %232 : vector<16x1xf32>
    %234 = math.rsqrt %233 : vector<16x1xf32>
    %235 = vector.broadcast %234 : vector<16x1xf32> to vector<16x32xf32>
    %236 = arith.mulf %231, %235 : vector<16x32xf32>
    %237 = vector.broadcast %28 : vector<1x32xf32> to vector<16x32xf32>
    %238 = arith.mulf %236, %237 : vector<16x32xf32>
    %239 = vector.broadcast %29 : vector<1x32xf32> to vector<16x32xf32>
    %240 = arith.addf %238, %239 : vector<16x32xf32>
    %cst_116 = arith.constant dense<0.000000e+00> : vector<16x64xf32>
    %241 = tpu.matmul %240, %30, %cst_116 {dimension_numbers = #tpu.dot_dimension_numbers<[1], [0], [0], [1], [0, 0, 1, 1], [], []>} : vector<16x32xf32>, vector<32x64xf32>, vector<16x64xf32> -> vector<16x64xf32>
    %242 = vector.broadcast %31 : vector<1x64xf32> to vector<16x64xf32>
    %243 = arith.addf %241, %242 : vector<16x64xf32>
    %cst_117 = arith.constant 5.000000e-01 : f32
    %244 = vector.broadcast %cst_117 : f32 to vector<16x64xf32>
    %245 = arith.mulf %244, %243 : vector<16x64xf32>
    %cst_118 = arith.constant 0.707106769 : f32
    %246 = vector.broadcast %cst_118 : f32 to vector<16x64xf32>
    %247 = arith.mulf %243, %246 : vector<16x64xf32>
    %248 = math.absf %247 : vector<16x64xf32>
    %cst_119 = arith.constant 0.327591091 : f32
    %249 = vector.broadcast %cst_119 : f32 to vector<16x64xf32>
    %250 = arith.mulf %249, %248 : vector<16x64xf32>
    %cst_120 = arith.constant 1.000000e+00 : f32
    %251 = vector.broadcast %cst_120 : f32 to vector<16x64xf32>
    %252 = arith.addf %251, %250 : vector<16x64xf32>
    %cst_121 = arith.constant 1.000000e+00 : f32
    %253 = vector.broadcast %cst_121 : f32 to vector<16x64xf32>
    %254 = arith.divf %253, %252 : vector<16x64xf32>
    %cst_122 = arith.constant 1.06140542 : f32
    %255 = vector.broadcast %cst_122 : f32 to vector<16x64xf32>
    %256 = arith.mulf %255, %254 : vector<16x64xf32>
    %cst_123 = arith.constant -1.45315206 : f32
    %257 = vector.broadcast %cst_123 : f32 to vector<16x64xf32>
    %258 = arith.addf %256, %257 : vector<16x64xf32>
    %259 = arith.mulf %258, %254 : vector<16x64xf32>
    %cst_124 = arith.constant 1.42141378 : f32
    %260 = vector.broadcast %cst_124 : f32 to vector<16x64xf32>
    %261 = arith.addf %259, %260 : vector<16x64xf32>
    %262 = arith.mulf %261, %254 : vector<16x64xf32>
    %cst_125 = arith.constant -0.284496725 : f32
    %263 = vector.broadcast %cst_125 : f32 to vector<16x64xf32>
    %264 = arith.addf %262, %263 : vector<16x64xf32>
    %265 = arith.mulf %264, %254 : vector<16x64xf32>
    %cst_126 = arith.constant 0.254829586 : f32
    %266 = vector.broadcast %cst_126 : f32 to vector<16x64xf32>
    %267 = arith.addf %265, %266 : vector<16x64xf32>
    %268 = arith.mulf %267, %254 : vector<16x64xf32>
    %cst_127 = arith.constant 0.000000e+00 : f32
    %269 = vector.broadcast %cst_127 : f32 to vector<16x64xf32>
    %270 = arith.subf %269, %248 : vector<16x64xf32>
    %271 = arith.mulf %270, %248 : vector<16x64xf32>
    %272 = math.exp %271 : vector<16x64xf32>
    %273 = arith.mulf %268, %272 : vector<16x64xf32>
    %cst_128 = arith.constant 1.000000e+00 : f32
    %274 = vector.broadcast %cst_128 : f32 to vector<16x64xf32>
    %275 = arith.subf %274, %273 : vector<16x64xf32>
    %cst_129 = arith.constant 0.000000e+00 : f32
    %276 = vector.broadcast %cst_129 : f32 to vector<16x64xf32>
    %277 = arith.cmpf olt, %247, %276 : vector<16x64xf32>
    %cst_130 = arith.constant 0.000000e+00 : f32
    %278 = vector.broadcast %cst_130 : f32 to vector<16x64xf32>
    %279 = arith.subf %278, %275 : vector<16x64xf32>
    %280 = arith.select %277, %279, %275 : vector<16x64xi1>, vector<16x64xf32>
    %cst_131 = arith.constant 1.000000e+00 : f32
    %281 = vector.broadcast %cst_131 : f32 to vector<16x64xf32>
    %282 = arith.addf %281, %280 : vector<16x64xf32>
    %283 = arith.mulf %245, %282 : vector<16x64xf32>
    %cst_132 = arith.constant dense<0.000000e+00> : vector<16x32xf32>
    %284 = tpu.matmul %283, %32, %cst_132 {dimension_numbers = #tpu.dot_dimension_numbers<[1], [0], [0], [1], [0, 0, 1, 1], [], []>} : vector<16x64xf32>, vector<64x32xf32>, vector<16x32xf32> -> vector<16x32xf32>
    %285 = vector.broadcast %33 : vector<1x32xf32> to vector<16x32xf32>
    %286 = arith.addf %284, %285 : vector<16x32xf32>
    %287 = arith.addf %286, %218 : vector<16x32xf32>
    %c0_133 = arith.constant 0 : index
    %c0_134 = arith.constant 0 : index
    %288 = vector.load %arg24[%c0_133, %c0_134] : memref<1x32xf32, #tpu.memory_space<vmem>>, vector<1x32xf32>
    %c0_135 = arith.constant 0 : index
    %c0_136 = arith.constant 0 : index
    %289 = vector.load %arg25[%c0_135, %c0_136] : memref<1x32xf32, #tpu.memory_space<vmem>>, vector<1x32xf32>
    %c0_137 = arith.constant 0 : index
    %c0_138 = arith.constant 0 : index
    %c0_139 = arith.constant 0 : index
    %290 = vector.load %arg26[%c0_137, %c0_138, %c0_139] : memref<4x32x8xf32, #tpu.memory_space<vmem>>, vector<4x32x8xf32>
    %c0_140 = arith.constant 0 : index
    %c0_141 = arith.constant 0 : index
    %c0_142 = arith.constant 0 : index
    %291 = vector.load %arg27[%c0_140, %c0_141, %c0_142] : memref<4x32x8xf32, #tpu.memory_space<vmem>>, vector<4x32x8xf32>
    %c0_143 = arith.constant 0 : index
    %c0_144 = arith.constant 0 : index
    %c0_145 = arith.constant 0 : index
    %292 = vector.load %arg28[%c0_143, %c0_144, %c0_145] : memref<4x32x8xf32, #tpu.memory_space<vmem>>, vector<4x32x8xf32>
    %c0_146 = arith.constant 0 : index
    %c0_147 = arith.constant 0 : index
    %c0_148 = arith.constant 0 : index
    %293 = vector.load %arg29[%c0_146, %c0_147, %c0_148] : memref<4x8x32xf32, #tpu.memory_space<vmem>>, vector<4x8x32xf32>
    %c0_149 = arith.constant 0 : index
    %c0_150 = arith.constant 0 : index
    %294 = vector.load %arg30[%c0_149, %c0_150] : memref<1x32xf32, #tpu.memory_space<vmem>>, vector<1x32xf32>
    %c0_151 = arith.constant 0 : index
    %c0_152 = arith.constant 0 : index
    %295 = vector.load %arg31[%c0_151, %c0_152] : memref<1x32xf32, #tpu.memory_space<vmem>>, vector<1x32xf32>
    %c0_153 = arith.constant 0 : index
    %c0_154 = arith.constant 0 : index
    %296 = vector.load %arg32[%c0_153, %c0_154] : memref<1x32xf32, #tpu.memory_space<vmem>>, vector<1x32xf32>
    %c0_155 = arith.constant 0 : index
    %c0_156 = arith.constant 0 : index
    %c0_157 = arith.constant 0 : index
    %297 = vector.load %arg33[%c0_155, %c0_156, %c0_157] : memref<4x32x8xf32, #tpu.memory_space<vmem>>, vector<4x32x8xf32>
    %c0_158 = arith.constant 0 : index
    %c0_159 = arith.constant 0 : index
    %c0_160 = arith.constant 0 : index
    %298 = vector.load %arg34[%c0_158, %c0_159, %c0_160] : memref<4x32x8xf32, #tpu.memory_space<vmem>>, vector<4x32x8xf32>
    %c0_161 = arith.constant 0 : index
    %c0_162 = arith.constant 0 : index
    %c0_163 = arith.constant 0 : index
    %299 = vector.load %arg35[%c0_161, %c0_162, %c0_163] : memref<4x32x8xf32, #tpu.memory_space<vmem>>, vector<4x32x8xf32>
    %c0_164 = arith.constant 0 : index
    %c0_165 = arith.constant 0 : index
    %c0_166 = arith.constant 0 : index
    %300 = vector.load %arg36[%c0_164, %c0_165, %c0_166] : memref<4x8x32xf32, #tpu.memory_space<vmem>>, vector<4x8x32xf32>
    %c0_167 = arith.constant 0 : index
    %c0_168 = arith.constant 0 : index
    %301 = vector.load %arg37[%c0_167, %c0_168] : memref<1x32xf32, #tpu.memory_space<vmem>>, vector<1x32xf32>
    %c0_169 = arith.constant 0 : index
    %c0_170 = arith.constant 0 : index
    %302 = vector.load %arg38[%c0_169, %c0_170] : memref<1x32xf32, #tpu.memory_space<vmem>>, vector<1x32xf32>
    %c0_171 = arith.constant 0 : index
    %c0_172 = arith.constant 0 : index
    %303 = vector.load %arg39[%c0_171, %c0_172] : memref<1x32xf32, #tpu.memory_space<vmem>>, vector<1x32xf32>
    %c0_173 = arith.constant 0 : index
    %c0_174 = arith.constant 0 : index
    %304 = vector.load %arg40[%c0_173, %c0_174] : memref<32x64xf32, #tpu.memory_space<vmem>>, vector<32x64xf32>
    %c0_175 = arith.constant 0 : index
    %c0_176 = arith.constant 0 : index
    %305 = vector.load %arg41[%c0_175, %c0_176] : memref<1x64xf32, #tpu.memory_space<vmem>>, vector<1x64xf32>
    %c0_177 = arith.constant 0 : index
    %c0_178 = arith.constant 0 : index
    %306 = vector.load %arg42[%c0_177, %c0_178] : memref<64x32xf32, #tpu.memory_space<vmem>>, vector<64x32xf32>
    %c0_179 = arith.constant 0 : index
    %c0_180 = arith.constant 0 : index
    %307 = vector.load %arg43[%c0_179, %c0_180] : memref<1x32xf32, #tpu.memory_space<vmem>>, vector<1x32xf32>
    %cst_181 = arith.constant dense<0.000000e+00> : vector<16xf32>
    %308 = vector.multi_reduction <add>, %287, %cst_181 [1] : vector<16x32xf32> to vector<16xf32>
    %309 = vector.shape_cast %308 : vector<16xf32> to vector<16x1xf32>
    %cst_182 = arith.constant 3.200000e+01 : f32
    %310 = vector.broadcast %cst_182 : f32 to vector<16x1xf32>
    %311 = arith.divf %309, %310 : vector<16x1xf32>
    %312 = vector.broadcast %311 : vector<16x1xf32> to vector<16x32xf32>
    %313 = arith.subf %287, %312 : vector<16x32xf32>
    %314 = arith.mulf %313, %313 : vector<16x32xf32>
    %cst_183 = arith.constant dense<0.000000e+00> : vector<16xf32>
    %315 = vector.multi_reduction <add>, %314, %cst_183 [1] : vector<16x32xf32> to vector<16xf32>
    %316 = vector.shape_cast %315 : vector<16xf32> to vector<16x1xf32>
    %cst_184 = arith.constant 3.200000e+01 : f32
    %317 = vector.broadcast %cst_184 : f32 to vector<16x1xf32>
    %318 = arith.divf %316, %317 : vector<16x1xf32>
    %319 = vector.broadcast %311 : vector<16x1xf32> to vector<16x32xf32>
    %320 = arith.subf %287, %319 : vector<16x32xf32>
    %cst_185 = arith.constant 9.99999974E-6 : f32
    %321 = vector.broadcast %cst_185 : f32 to vector<16x1xf32>
    %322 = arith.addf %318, %321 : vector<16x1xf32>
    %323 = math.rsqrt %322 : vector<16x1xf32>
    %324 = vector.broadcast %323 : vector<16x1xf32> to vector<16x32xf32>
    %325 = arith.mulf %320, %324 : vector<16x32xf32>
    %326 = vector.broadcast %288 : vector<1x32xf32> to vector<16x32xf32>
    %327 = arith.mulf %325, %326 : vector<16x32xf32>
    %328 = vector.broadcast %289 : vector<1x32xf32> to vector<16x32xf32>
    %329 = arith.addf %327, %328 : vector<16x32xf32>
    %330 = vector.shape_cast %329 : vector<16x32xf32> to vector<1x16x32xf32>
    %331 = vector.shape_cast %330 : vector<1x16x32xf32> to vector<1x16x32xf32>
    %332 = vector.broadcast %331 : vector<1x16x32xf32> to vector<4x16x32xf32>
    "tpu.trace_start"() <{level = 10 : i32, message = "hnd,hde->hne"}> : () -> ()
    %cst_186 = arith.constant dense<0.000000e+00> : vector<4x16x8xf32>
    %333 = tpu.matmul %332, %290, %cst_186 {dimension_numbers = #tpu.dot_dimension_numbers<[2], [1], [1], [2], [0, 0, 0, 1, 1, 2], [0], [0]>} : vector<4x16x32xf32>, vector<4x32x8xf32>, vector<4x16x8xf32> -> vector<4x16x8xf32>
    %cst_187 = arith.constant dense<0.000000e+00> : vector<4x16x8xf32>
    %334 = tpu.matmul %332, %291, %cst_187 {dimension_numbers = #tpu.dot_dimension_numbers<[2], [1], [1], [2], [0, 0, 0, 1, 1, 2], [0], [0]>} : vector<4x16x32xf32>, vector<4x32x8xf32>, vector<4x16x8xf32> -> vector<4x16x8xf32>
    %cst_188 = arith.constant dense<0.000000e+00> : vector<4x16x8xf32>
    %335 = tpu.matmul %332, %292, %cst_188 {dimension_numbers = #tpu.dot_dimension_numbers<[2], [1], [1], [2], [0, 0, 0, 1, 1, 2], [0], [0]>} : vector<4x16x32xf32>, vector<4x32x8xf32>, vector<4x16x8xf32> -> vector<4x16x8xf32>
    "tpu.trace_stop"() : () -> ()
    %336 = vector.extract_strided_slice %333 {offsets = [0, 0, 0], sizes = [4, 8, 8], strides = [1, 1, 1]} : vector<4x16x8xf32> to vector<4x8x8xf32>
    %337 = vector.extract_strided_slice %334 {offsets = [0, 0, 0], sizes = [4, 8, 8], strides = [1, 1, 1]} : vector<4x16x8xf32> to vector<4x8x8xf32>
    %338 = vector.extract_strided_slice %335 {offsets = [0, 0, 0], sizes = [4, 8, 8], strides = [1, 1, 1]} : vector<4x16x8xf32> to vector<4x8x8xf32>
    "tpu.trace_start"() <{level = 10 : i32, message = "hqe,hke->hqk"}> : () -> ()
    %cst_189 = arith.constant dense<0.000000e+00> : vector<4x8x8xf32>
    %339 = tpu.matmul %336, %337, %cst_189 {dimension_numbers = #tpu.dot_dimension_numbers<[2], [2], [1], [1], [0, 0, 0, 1, 1, 1], [0], [0]>} : vector<4x8x8xf32>, vector<4x8x8xf32>, vector<4x8x8xf32> -> vector<4x8x8xf32>
    "tpu.trace_stop"() : () -> ()
    %cst_190 = arith.constant 0.353553385 : f32
    %340 = vector.broadcast %cst_190 : f32 to vector<4x8x8xf32>
    %341 = arith.mulf %339, %340 : vector<4x8x8xf32>
    %342 = vector.extract_strided_slice %7 {offsets = [0, 0, 0], sizes = [1, 8, 8], strides = [1, 1, 1]} : vector<2x8x8xf32> to vector<1x8x8xf32>
    %343 = vector.shape_cast %342 : vector<1x8x8xf32> to vector<8x8xf32>
    %344 = vector.shape_cast %343 : vector<8x8xf32> to vector<1x8x8xf32>
    %345 = vector.broadcast %344 : vector<1x8x8xf32> to vector<4x8x8xf32>
    %346 = arith.addf %341, %345 : vector<4x8x8xf32>
    %cst_191 = arith.constant dense<0xFF800000> : vector<4x8xf32>
    %347 = vector.multi_reduction <maximumf>, %346, %cst_191 [2] : vector<4x8x8xf32> to vector<4x8xf32>
    %348 = vector.shape_cast %347 : vector<4x8xf32> to vector<4x8x1xf32>
    %349 = vector.broadcast %348 : vector<4x8x1xf32> to vector<4x8x8xf32>
    %350 = arith.subf %346, %349 : vector<4x8x8xf32>
    %351 = math.exp %350 : vector<4x8x8xf32>
    %cst_192 = arith.constant dense<0.000000e+00> : vector<4x8xf32>
    %352 = vector.multi_reduction <add>, %351, %cst_192 [2] : vector<4x8x8xf32> to vector<4x8xf32>
    %353 = vector.shape_cast %352 : vector<4x8xf32> to vector<4x8x1xf32>
    %354 = tpu.reciprocal %353 : vector<4x8x1xf32> -> vector<4x8x1xf32>
    %355 = vector.broadcast %354 : vector<4x8x1xf32> to vector<4x8x8xf32>
    %356 = arith.mulf %351, %355 : vector<4x8x8xf32>
    "tpu.trace_start"() <{level = 10 : i32, message = "hqk,hke->hqe"}> : () -> ()
    %cst_193 = arith.constant dense<0.000000e+00> : vector<4x8x8xf32>
    %357 = tpu.matmul %356, %338, %cst_193 {dimension_numbers = #tpu.dot_dimension_numbers<[2], [1], [1], [2], [0, 0, 0, 1, 1, 2], [0], [0]>} : vector<4x8x8xf32>, vector<4x8x8xf32>, vector<4x8x8xf32> -> vector<4x8x8xf32>
    "tpu.trace_stop"() : () -> ()
    "tpu.trace_start"() <{level = 10 : i32, message = "hqe,hed->hqd"}> : () -> ()
    %cst_194 = arith.constant dense<0.000000e+00> : vector<4x8x32xf32>
    %358 = tpu.matmul %357, %293, %cst_194 {dimension_numbers = #tpu.dot_dimension_numbers<[2], [1], [1], [2], [0, 0, 0, 1, 1, 2], [0], [0]>} : vector<4x8x8xf32>, vector<4x8x32xf32>, vector<4x8x32xf32> -> vector<4x8x32xf32>
    "tpu.trace_stop"() : () -> ()
    %cst_195 = arith.constant dense<0.000000e+00> : vector<8x32xf32>
    %359 = vector.multi_reduction <add>, %358, %cst_195 [0] : vector<4x8x32xf32> to vector<8x32xf32>
    %360 = vector.extract_strided_slice %333 {offsets = [0, 8, 0], sizes = [4, 8, 8], strides = [1, 1, 1]} : vector<4x16x8xf32> to vector<4x8x8xf32>
    %361 = vector.extract_strided_slice %334 {offsets = [0, 8, 0], sizes = [4, 8, 8], strides = [1, 1, 1]} : vector<4x16x8xf32> to vector<4x8x8xf32>
    %362 = vector.extract_strided_slice %335 {offsets = [0, 8, 0], sizes = [4, 8, 8], strides = [1, 1, 1]} : vector<4x16x8xf32> to vector<4x8x8xf32>
    "tpu.trace_start"() <{level = 10 : i32, message = "hqe,hke->hqk"}> : () -> ()
    %cst_196 = arith.constant dense<0.000000e+00> : vector<4x8x8xf32>
    %363 = tpu.matmul %360, %361, %cst_196 {dimension_numbers = #tpu.dot_dimension_numbers<[2], [2], [1], [1], [0, 0, 0, 1, 1, 1], [0], [0]>} : vector<4x8x8xf32>, vector<4x8x8xf32>, vector<4x8x8xf32> -> vector<4x8x8xf32>
    "tpu.trace_stop"() : () -> ()
    %cst_197 = arith.constant 0.353553385 : f32
    %364 = vector.broadcast %cst_197 : f32 to vector<4x8x8xf32>
    %365 = arith.mulf %363, %364 : vector<4x8x8xf32>
    %366 = vector.extract_strided_slice %7 {offsets = [1, 0, 0], sizes = [1, 8, 8], strides = [1, 1, 1]} : vector<2x8x8xf32> to vector<1x8x8xf32>
    %367 = vector.shape_cast %366 : vector<1x8x8xf32> to vector<8x8xf32>
    %368 = vector.shape_cast %367 : vector<8x8xf32> to vector<1x8x8xf32>
    %369 = vector.broadcast %368 : vector<1x8x8xf32> to vector<4x8x8xf32>
    %370 = arith.addf %365, %369 : vector<4x8x8xf32>
    %cst_198 = arith.constant dense<0xFF800000> : vector<4x8xf32>
    %371 = vector.multi_reduction <maximumf>, %370, %cst_198 [2] : vector<4x8x8xf32> to vector<4x8xf32>
    %372 = vector.shape_cast %371 : vector<4x8xf32> to vector<4x8x1xf32>
    %373 = vector.broadcast %372 : vector<4x8x1xf32> to vector<4x8x8xf32>
    %374 = arith.subf %370, %373 : vector<4x8x8xf32>
    %375 = math.exp %374 : vector<4x8x8xf32>
    %cst_199 = arith.constant dense<0.000000e+00> : vector<4x8xf32>
    %376 = vector.multi_reduction <add>, %375, %cst_199 [2] : vector<4x8x8xf32> to vector<4x8xf32>
    %377 = vector.shape_cast %376 : vector<4x8xf32> to vector<4x8x1xf32>
    %378 = tpu.reciprocal %377 : vector<4x8x1xf32> -> vector<4x8x1xf32>
    %379 = vector.broadcast %378 : vector<4x8x1xf32> to vector<4x8x8xf32>
    %380 = arith.mulf %375, %379 : vector<4x8x8xf32>
    "tpu.trace_start"() <{level = 10 : i32, message = "hqk,hke->hqe"}> : () -> ()
    %cst_200 = arith.constant dense<0.000000e+00> : vector<4x8x8xf32>
    %381 = tpu.matmul %380, %362, %cst_200 {dimension_numbers = #tpu.dot_dimension_numbers<[2], [1], [1], [2], [0, 0, 0, 1, 1, 2], [0], [0]>} : vector<4x8x8xf32>, vector<4x8x8xf32>, vector<4x8x8xf32> -> vector<4x8x8xf32>
    "tpu.trace_stop"() : () -> ()
    "tpu.trace_start"() <{level = 10 : i32, message = "hqe,hed->hqd"}> : () -> ()
    %cst_201 = arith.constant dense<0.000000e+00> : vector<4x8x32xf32>
    %382 = tpu.matmul %381, %293, %cst_201 {dimension_numbers = #tpu.dot_dimension_numbers<[2], [1], [1], [2], [0, 0, 0, 1, 1, 2], [0], [0]>} : vector<4x8x8xf32>, vector<4x8x32xf32>, vector<4x8x32xf32> -> vector<4x8x32xf32>
    "tpu.trace_stop"() : () -> ()
    %cst_202 = arith.constant dense<0.000000e+00> : vector<8x32xf32>
    %383 = vector.multi_reduction <add>, %382, %cst_202 [0] : vector<4x8x32xf32> to vector<8x32xf32>
    %384 = tpu.concatenate %359, %383 in 0 : vector<8x32xf32>, vector<8x32xf32> -> vector<16x32xf32>
    %385 = vector.broadcast %294 : vector<1x32xf32> to vector<16x32xf32>
    %386 = arith.addf %384, %385 : vector<16x32xf32>
    %387 = arith.addf %386, %287 : vector<16x32xf32>
    %cst_203 = arith.constant dense<0.000000e+00> : vector<16xf32>
    %388 = vector.multi_reduction <add>, %387, %cst_203 [1] : vector<16x32xf32> to vector<16xf32>
    %389 = vector.shape_cast %388 : vector<16xf32> to vector<16x1xf32>
    %cst_204 = arith.constant 3.200000e+01 : f32
    %390 = vector.broadcast %cst_204 : f32 to vector<16x1xf32>
    %391 = arith.divf %389, %390 : vector<16x1xf32>
    %392 = vector.broadcast %391 : vector<16x1xf32> to vector<16x32xf32>
    %393 = arith.subf %387, %392 : vector<16x32xf32>
    %394 = arith.mulf %393, %393 : vector<16x32xf32>
    %cst_205 = arith.constant dense<0.000000e+00> : vector<16xf32>
    %395 = vector.multi_reduction <add>, %394, %cst_205 [1] : vector<16x32xf32> to vector<16xf32>
    %396 = vector.shape_cast %395 : vector<16xf32> to vector<16x1xf32>
    %cst_206 = arith.constant 3.200000e+01 : f32
    %397 = vector.broadcast %cst_206 : f32 to vector<16x1xf32>
    %398 = arith.divf %396, %397 : vector<16x1xf32>
    %399 = vector.broadcast %391 : vector<16x1xf32> to vector<16x32xf32>
    %400 = arith.subf %387, %399 : vector<16x32xf32>
    %cst_207 = arith.constant 9.99999974E-6 : f32
    %401 = vector.broadcast %cst_207 : f32 to vector<16x1xf32>
    %402 = arith.addf %398, %401 : vector<16x1xf32>
    %403 = math.rsqrt %402 : vector<16x1xf32>
    %404 = vector.broadcast %403 : vector<16x1xf32> to vector<16x32xf32>
    %405 = arith.mulf %400, %404 : vector<16x32xf32>
    %406 = vector.broadcast %295 : vector<1x32xf32> to vector<16x32xf32>
    %407 = arith.mulf %405, %406 : vector<16x32xf32>
    %408 = vector.broadcast %296 : vector<1x32xf32> to vector<16x32xf32>
    %409 = arith.addf %407, %408 : vector<16x32xf32>
    %cst_208 = arith.constant dense<0.000000e+00> : vector<16xf32>
    %410 = vector.multi_reduction <add>, %1, %cst_208 [1] : vector<16x32xf32> to vector<16xf32>
    %411 = vector.shape_cast %410 : vector<16xf32> to vector<16x1xf32>
    %cst_209 = arith.constant 3.200000e+01 : f32
    %412 = vector.broadcast %cst_209 : f32 to vector<16x1xf32>
    %413 = arith.divf %411, %412 : vector<16x1xf32>
    %414 = vector.broadcast %413 : vector<16x1xf32> to vector<16x32xf32>
    %415 = arith.subf %1, %414 : vector<16x32xf32>
    %416 = arith.mulf %415, %415 : vector<16x32xf32>
    %cst_210 = arith.constant dense<0.000000e+00> : vector<16xf32>
    %417 = vector.multi_reduction <add>, %416, %cst_210 [1] : vector<16x32xf32> to vector<16xf32>
    %418 = vector.shape_cast %417 : vector<16xf32> to vector<16x1xf32>
    %cst_211 = arith.constant 3.200000e+01 : f32
    %419 = vector.broadcast %cst_211 : f32 to vector<16x1xf32>
    %420 = arith.divf %418, %419 : vector<16x1xf32>
    %421 = vector.broadcast %413 : vector<16x1xf32> to vector<16x32xf32>
    %422 = arith.subf %1, %421 : vector<16x32xf32>
    %cst_212 = arith.constant 9.99999974E-6 : f32
    %423 = vector.broadcast %cst_212 : f32 to vector<16x1xf32>
    %424 = arith.addf %420, %423 : vector<16x1xf32>
    %425 = math.rsqrt %424 : vector<16x1xf32>
    %426 = vector.broadcast %425 : vector<16x1xf32> to vector<16x32xf32>
    %427 = arith.mulf %422, %426 : vector<16x32xf32>
    %428 = vector.broadcast %295 : vector<1x32xf32> to vector<16x32xf32>
    %429 = arith.mulf %427, %428 : vector<16x32xf32>
    %430 = vector.broadcast %296 : vector<1x32xf32> to vector<16x32xf32>
    %431 = arith.addf %429, %430 : vector<16x32xf32>
    %432 = vector.shape_cast %409 : vector<16x32xf32> to vector<1x16x32xf32>
    %433 = vector.shape_cast %432 : vector<1x16x32xf32> to vector<1x16x32xf32>
    %434 = vector.broadcast %433 : vector<1x16x32xf32> to vector<4x16x32xf32>
    %435 = vector.shape_cast %431 : vector<16x32xf32> to vector<1x16x32xf32>
    %436 = vector.shape_cast %435 : vector<1x16x32xf32> to vector<1x16x32xf32>
    %437 = vector.broadcast %436 : vector<1x16x32xf32> to vector<4x16x32xf32>
    "tpu.trace_start"() <{level = 10 : i32, message = "hnd,hde->hne"}> : () -> ()
    %cst_213 = arith.constant dense<0.000000e+00> : vector<4x16x8xf32>
    %438 = tpu.matmul %434, %297, %cst_213 {dimension_numbers = #tpu.dot_dimension_numbers<[2], [1], [1], [2], [0, 0, 0, 1, 1, 2], [0], [0]>} : vector<4x16x32xf32>, vector<4x32x8xf32>, vector<4x16x8xf32> -> vector<4x16x8xf32>
    %cst_214 = arith.constant dense<0.000000e+00> : vector<4x16x8xf32>
    %439 = tpu.matmul %437, %298, %cst_214 {dimension_numbers = #tpu.dot_dimension_numbers<[2], [1], [1], [2], [0, 0, 0, 1, 1, 2], [0], [0]>} : vector<4x16x32xf32>, vector<4x32x8xf32>, vector<4x16x8xf32> -> vector<4x16x8xf32>
    %cst_215 = arith.constant dense<0.000000e+00> : vector<4x16x8xf32>
    %440 = tpu.matmul %437, %299, %cst_215 {dimension_numbers = #tpu.dot_dimension_numbers<[2], [1], [1], [2], [0, 0, 0, 1, 1, 2], [0], [0]>} : vector<4x16x32xf32>, vector<4x32x8xf32>, vector<4x16x8xf32> -> vector<4x16x8xf32>
    "tpu.trace_stop"() : () -> ()
    %441 = vector.extract_strided_slice %438 {offsets = [0, 0, 0], sizes = [4, 8, 8], strides = [1, 1, 1]} : vector<4x16x8xf32> to vector<4x8x8xf32>
    %442 = vector.extract_strided_slice %439 {offsets = [0, 0, 0], sizes = [4, 8, 8], strides = [1, 1, 1]} : vector<4x16x8xf32> to vector<4x8x8xf32>
    %443 = vector.extract_strided_slice %440 {offsets = [0, 0, 0], sizes = [4, 8, 8], strides = [1, 1, 1]} : vector<4x16x8xf32> to vector<4x8x8xf32>
    "tpu.trace_start"() <{level = 10 : i32, message = "hqe,hke->hqk"}> : () -> ()
    %cst_216 = arith.constant dense<0.000000e+00> : vector<4x8x8xf32>
    %444 = tpu.matmul %441, %442, %cst_216 {dimension_numbers = #tpu.dot_dimension_numbers<[2], [2], [1], [1], [0, 0, 0, 1, 1, 1], [0], [0]>} : vector<4x8x8xf32>, vector<4x8x8xf32>, vector<4x8x8xf32> -> vector<4x8x8xf32>
    "tpu.trace_stop"() : () -> ()
    %cst_217 = arith.constant 0.353553385 : f32
    %445 = vector.broadcast %cst_217 : f32 to vector<4x8x8xf32>
    %446 = arith.mulf %444, %445 : vector<4x8x8xf32>
    %447 = vector.extract_strided_slice %13 {offsets = [0, 0, 0], sizes = [1, 8, 8], strides = [1, 1, 1]} : vector<2x8x8xf32> to vector<1x8x8xf32>
    %448 = vector.shape_cast %447 : vector<1x8x8xf32> to vector<8x8xf32>
    %449 = vector.shape_cast %448 : vector<8x8xf32> to vector<1x8x8xf32>
    %450 = vector.broadcast %449 : vector<1x8x8xf32> to vector<4x8x8xf32>
    %451 = arith.addf %446, %450 : vector<4x8x8xf32>
    %cst_218 = arith.constant dense<0xFF800000> : vector<4x8xf32>
    %452 = vector.multi_reduction <maximumf>, %451, %cst_218 [2] : vector<4x8x8xf32> to vector<4x8xf32>
    %453 = vector.shape_cast %452 : vector<4x8xf32> to vector<4x8x1xf32>
    %454 = vector.broadcast %453 : vector<4x8x1xf32> to vector<4x8x8xf32>
    %455 = arith.subf %451, %454 : vector<4x8x8xf32>
    %456 = math.exp %455 : vector<4x8x8xf32>
    %cst_219 = arith.constant dense<0.000000e+00> : vector<4x8xf32>
    %457 = vector.multi_reduction <add>, %456, %cst_219 [2] : vector<4x8x8xf32> to vector<4x8xf32>
    %458 = vector.shape_cast %457 : vector<4x8xf32> to vector<4x8x1xf32>
    %459 = tpu.reciprocal %458 : vector<4x8x1xf32> -> vector<4x8x1xf32>
    %460 = vector.broadcast %459 : vector<4x8x1xf32> to vector<4x8x8xf32>
    %461 = arith.mulf %456, %460 : vector<4x8x8xf32>
    "tpu.trace_start"() <{level = 10 : i32, message = "hqk,hke->hqe"}> : () -> ()
    %cst_220 = arith.constant dense<0.000000e+00> : vector<4x8x8xf32>
    %462 = tpu.matmul %461, %443, %cst_220 {dimension_numbers = #tpu.dot_dimension_numbers<[2], [1], [1], [2], [0, 0, 0, 1, 1, 2], [0], [0]>} : vector<4x8x8xf32>, vector<4x8x8xf32>, vector<4x8x8xf32> -> vector<4x8x8xf32>
    "tpu.trace_stop"() : () -> ()
    "tpu.trace_start"() <{level = 10 : i32, message = "hqe,hed->hqd"}> : () -> ()
    %cst_221 = arith.constant dense<0.000000e+00> : vector<4x8x32xf32>
    %463 = tpu.matmul %462, %300, %cst_221 {dimension_numbers = #tpu.dot_dimension_numbers<[2], [1], [1], [2], [0, 0, 0, 1, 1, 2], [0], [0]>} : vector<4x8x8xf32>, vector<4x8x32xf32>, vector<4x8x32xf32> -> vector<4x8x32xf32>
    "tpu.trace_stop"() : () -> ()
    %cst_222 = arith.constant dense<0.000000e+00> : vector<8x32xf32>
    %464 = vector.multi_reduction <add>, %463, %cst_222 [0] : vector<4x8x32xf32> to vector<8x32xf32>
    %465 = vector.extract_strided_slice %438 {offsets = [0, 8, 0], sizes = [4, 8, 8], strides = [1, 1, 1]} : vector<4x16x8xf32> to vector<4x8x8xf32>
    %466 = vector.extract_strided_slice %439 {offsets = [0, 8, 0], sizes = [4, 8, 8], strides = [1, 1, 1]} : vector<4x16x8xf32> to vector<4x8x8xf32>
    %467 = vector.extract_strided_slice %440 {offsets = [0, 8, 0], sizes = [4, 8, 8], strides = [1, 1, 1]} : vector<4x16x8xf32> to vector<4x8x8xf32>
    "tpu.trace_start"() <{level = 10 : i32, message = "hqe,hke->hqk"}> : () -> ()
    %cst_223 = arith.constant dense<0.000000e+00> : vector<4x8x8xf32>
    %468 = tpu.matmul %465, %466, %cst_223 {dimension_numbers = #tpu.dot_dimension_numbers<[2], [2], [1], [1], [0, 0, 0, 1, 1, 1], [0], [0]>} : vector<4x8x8xf32>, vector<4x8x8xf32>, vector<4x8x8xf32> -> vector<4x8x8xf32>
    "tpu.trace_stop"() : () -> ()
    %cst_224 = arith.constant 0.353553385 : f32
    %469 = vector.broadcast %cst_224 : f32 to vector<4x8x8xf32>
    %470 = arith.mulf %468, %469 : vector<4x8x8xf32>
    %471 = vector.extract_strided_slice %13 {offsets = [1, 0, 0], sizes = [1, 8, 8], strides = [1, 1, 1]} : vector<2x8x8xf32> to vector<1x8x8xf32>
    %472 = vector.shape_cast %471 : vector<1x8x8xf32> to vector<8x8xf32>
    %473 = vector.shape_cast %472 : vector<8x8xf32> to vector<1x8x8xf32>
    %474 = vector.broadcast %473 : vector<1x8x8xf32> to vector<4x8x8xf32>
    %475 = arith.addf %470, %474 : vector<4x8x8xf32>
    %cst_225 = arith.constant dense<0xFF800000> : vector<4x8xf32>
    %476 = vector.multi_reduction <maximumf>, %475, %cst_225 [2] : vector<4x8x8xf32> to vector<4x8xf32>
    %477 = vector.shape_cast %476 : vector<4x8xf32> to vector<4x8x1xf32>
    %478 = vector.broadcast %477 : vector<4x8x1xf32> to vector<4x8x8xf32>
    %479 = arith.subf %475, %478 : vector<4x8x8xf32>
    %480 = math.exp %479 : vector<4x8x8xf32>
    %cst_226 = arith.constant dense<0.000000e+00> : vector<4x8xf32>
    %481 = vector.multi_reduction <add>, %480, %cst_226 [2] : vector<4x8x8xf32> to vector<4x8xf32>
    %482 = vector.shape_cast %481 : vector<4x8xf32> to vector<4x8x1xf32>
    %483 = tpu.reciprocal %482 : vector<4x8x1xf32> -> vector<4x8x1xf32>
    %484 = vector.broadcast %483 : vector<4x8x1xf32> to vector<4x8x8xf32>
    %485 = arith.mulf %480, %484 : vector<4x8x8xf32>
    "tpu.trace_start"() <{level = 10 : i32, message = "hqk,hke->hqe"}> : () -> ()
    %cst_227 = arith.constant dense<0.000000e+00> : vector<4x8x8xf32>
    %486 = tpu.matmul %485, %467, %cst_227 {dimension_numbers = #tpu.dot_dimension_numbers<[2], [1], [1], [2], [0, 0, 0, 1, 1, 2], [0], [0]>} : vector<4x8x8xf32>, vector<4x8x8xf32>, vector<4x8x8xf32> -> vector<4x8x8xf32>
    "tpu.trace_stop"() : () -> ()
    "tpu.trace_start"() <{level = 10 : i32, message = "hqe,hed->hqd"}> : () -> ()
    %cst_228 = arith.constant dense<0.000000e+00> : vector<4x8x32xf32>
    %487 = tpu.matmul %486, %300, %cst_228 {dimension_numbers = #tpu.dot_dimension_numbers<[2], [1], [1], [2], [0, 0, 0, 1, 1, 2], [0], [0]>} : vector<4x8x8xf32>, vector<4x8x32xf32>, vector<4x8x32xf32> -> vector<4x8x32xf32>
    "tpu.trace_stop"() : () -> ()
    %cst_229 = arith.constant dense<0.000000e+00> : vector<8x32xf32>
    %488 = vector.multi_reduction <add>, %487, %cst_229 [0] : vector<4x8x32xf32> to vector<8x32xf32>
    %489 = tpu.concatenate %464, %488 in 0 : vector<8x32xf32>, vector<8x32xf32> -> vector<16x32xf32>
    %490 = vector.broadcast %301 : vector<1x32xf32> to vector<16x32xf32>
    %491 = arith.addf %489, %490 : vector<16x32xf32>
    %492 = arith.addf %491, %387 : vector<16x32xf32>
    %cst_230 = arith.constant dense<0.000000e+00> : vector<16xf32>
    %493 = vector.multi_reduction <add>, %492, %cst_230 [1] : vector<16x32xf32> to vector<16xf32>
    %494 = vector.shape_cast %493 : vector<16xf32> to vector<16x1xf32>
    %cst_231 = arith.constant 3.200000e+01 : f32
    %495 = vector.broadcast %cst_231 : f32 to vector<16x1xf32>
    %496 = arith.divf %494, %495 : vector<16x1xf32>
    %497 = vector.broadcast %496 : vector<16x1xf32> to vector<16x32xf32>
    %498 = arith.subf %492, %497 : vector<16x32xf32>
    %499 = arith.mulf %498, %498 : vector<16x32xf32>
    %cst_232 = arith.constant dense<0.000000e+00> : vector<16xf32>
    %500 = vector.multi_reduction <add>, %499, %cst_232 [1] : vector<16x32xf32> to vector<16xf32>
    %501 = vector.shape_cast %500 : vector<16xf32> to vector<16x1xf32>
    %cst_233 = arith.constant 3.200000e+01 : f32
    %502 = vector.broadcast %cst_233 : f32 to vector<16x1xf32>
    %503 = arith.divf %501, %502 : vector<16x1xf32>
    %504 = vector.broadcast %496 : vector<16x1xf32> to vector<16x32xf32>
    %505 = arith.subf %492, %504 : vector<16x32xf32>
    %cst_234 = arith.constant 9.99999974E-6 : f32
    %506 = vector.broadcast %cst_234 : f32 to vector<16x1xf32>
    %507 = arith.addf %503, %506 : vector<16x1xf32>
    %508 = math.rsqrt %507 : vector<16x1xf32>
    %509 = vector.broadcast %508 : vector<16x1xf32> to vector<16x32xf32>
    %510 = arith.mulf %505, %509 : vector<16x32xf32>
    %511 = vector.broadcast %302 : vector<1x32xf32> to vector<16x32xf32>
    %512 = arith.mulf %510, %511 : vector<16x32xf32>
    %513 = vector.broadcast %303 : vector<1x32xf32> to vector<16x32xf32>
    %514 = arith.addf %512, %513 : vector<16x32xf32>
    %cst_235 = arith.constant dense<0.000000e+00> : vector<16x64xf32>
    %515 = tpu.matmul %514, %304, %cst_235 {dimension_numbers = #tpu.dot_dimension_numbers<[1], [0], [0], [1], [0, 0, 1, 1], [], []>} : vector<16x32xf32>, vector<32x64xf32>, vector<16x64xf32> -> vector<16x64xf32>
    %516 = vector.broadcast %305 : vector<1x64xf32> to vector<16x64xf32>
    %517 = arith.addf %515, %516 : vector<16x64xf32>
    %cst_236 = arith.constant 5.000000e-01 : f32
    %518 = vector.broadcast %cst_236 : f32 to vector<16x64xf32>
    %519 = arith.mulf %518, %517 : vector<16x64xf32>
    %cst_237 = arith.constant 0.707106769 : f32
    %520 = vector.broadcast %cst_237 : f32 to vector<16x64xf32>
    %521 = arith.mulf %517, %520 : vector<16x64xf32>
    %522 = math.absf %521 : vector<16x64xf32>
    %cst_238 = arith.constant 0.327591091 : f32
    %523 = vector.broadcast %cst_238 : f32 to vector<16x64xf32>
    %524 = arith.mulf %523, %522 : vector<16x64xf32>
    %cst_239 = arith.constant 1.000000e+00 : f32
    %525 = vector.broadcast %cst_239 : f32 to vector<16x64xf32>
    %526 = arith.addf %525, %524 : vector<16x64xf32>
    %cst_240 = arith.constant 1.000000e+00 : f32
    %527 = vector.broadcast %cst_240 : f32 to vector<16x64xf32>
    %528 = arith.divf %527, %526 : vector<16x64xf32>
    %cst_241 = arith.constant 1.06140542 : f32
    %529 = vector.broadcast %cst_241 : f32 to vector<16x64xf32>
    %530 = arith.mulf %529, %528 : vector<16x64xf32>
    %cst_242 = arith.constant -1.45315206 : f32
    %531 = vector.broadcast %cst_242 : f32 to vector<16x64xf32>
    %532 = arith.addf %530, %531 : vector<16x64xf32>
    %533 = arith.mulf %532, %528 : vector<16x64xf32>
    %cst_243 = arith.constant 1.42141378 : f32
    %534 = vector.broadcast %cst_243 : f32 to vector<16x64xf32>
    %535 = arith.addf %533, %534 : vector<16x64xf32>
    %536 = arith.mulf %535, %528 : vector<16x64xf32>
    %cst_244 = arith.constant -0.284496725 : f32
    %537 = vector.broadcast %cst_244 : f32 to vector<16x64xf32>
    %538 = arith.addf %536, %537 : vector<16x64xf32>
    %539 = arith.mulf %538, %528 : vector<16x64xf32>
    %cst_245 = arith.constant 0.254829586 : f32
    %540 = vector.broadcast %cst_245 : f32 to vector<16x64xf32>
    %541 = arith.addf %539, %540 : vector<16x64xf32>
    %542 = arith.mulf %541, %528 : vector<16x64xf32>
    %cst_246 = arith.constant 0.000000e+00 : f32
    %543 = vector.broadcast %cst_246 : f32 to vector<16x64xf32>
    %544 = arith.subf %543, %522 : vector<16x64xf32>
    %545 = arith.mulf %544, %522 : vector<16x64xf32>
    %546 = math.exp %545 : vector<16x64xf32>
    %547 = arith.mulf %542, %546 : vector<16x64xf32>
    %cst_247 = arith.constant 1.000000e+00 : f32
    %548 = vector.broadcast %cst_247 : f32 to vector<16x64xf32>
    %549 = arith.subf %548, %547 : vector<16x64xf32>
    %cst_248 = arith.constant 0.000000e+00 : f32
    %550 = vector.broadcast %cst_248 : f32 to vector<16x64xf32>
    %551 = arith.cmpf olt, %521, %550 : vector<16x64xf32>
    %cst_249 = arith.constant 0.000000e+00 : f32
    %552 = vector.broadcast %cst_249 : f32 to vector<16x64xf32>
    %553 = arith.subf %552, %549 : vector<16x64xf32>
    %554 = arith.select %551, %553, %549 : vector<16x64xi1>, vector<16x64xf32>
    %cst_250 = arith.constant 1.000000e+00 : f32
    %555 = vector.broadcast %cst_250 : f32 to vector<16x64xf32>
    %556 = arith.addf %555, %554 : vector<16x64xf32>
    %557 = arith.mulf %519, %556 : vector<16x64xf32>
    %cst_251 = arith.constant dense<0.000000e+00> : vector<16x32xf32>
    %558 = tpu.matmul %557, %306, %cst_251 {dimension_numbers = #tpu.dot_dimension_numbers<[1], [0], [0], [1], [0, 0, 1, 1], [], []>} : vector<16x64xf32>, vector<64x32xf32>, vector<16x32xf32> -> vector<16x32xf32>
    %559 = vector.broadcast %307 : vector<1x32xf32> to vector<16x32xf32>
    %560 = arith.addf %558, %559 : vector<16x32xf32>
    %561 = arith.addf %560, %492 : vector<16x32xf32>
    %c0_252 = arith.constant 0 : index
    %c0_253 = arith.constant 0 : index
    %562 = vector.load %arg44[%c0_252, %c0_253] : memref<16x32xf32, #tpu.memory_space<vmem>>, vector<16x32xf32>
    tpu.vector_store %arg44[%c0_252, %c0_253], %561 {strides = array<i32>} : memref<16x32xf32, #tpu.memory_space<vmem>>, vector<16x32xf32>,
    return
  }
}

</mosaic_0001>

<llo_original>
// kernel: decoder_forward.1
$region0: #{decoder_forward.1}
  #allocation0 [shape = 'u32[]', space=smem, size = 0x4, offset = 0x4, fixed_abs, tag = 'smem constant byte address 0x4 - core index']
  #allocation1 [shape = 'u32[72,128]{1,0:T(1,128)}', space=vmem, size = 0x9000, scoped, tag = 'internal scratch']
  %s0 = inlined_call_operand.smem [shape: u32[45], index: -1, kind: input, shape index: {}]
  %s1 = sld [smem:[%s0]]
  %s2 = scalar_lea.smem %s0, 1
  %s3 = sld [smem:[%s2]]
  %s4 = scalar_lea.smem %s0, 2
  %s5 = sld [smem:[%s4]]
  %s6 = scalar_lea.smem %s0, 3
  %s7 = sld [smem:[%s6]]
  %s8 = scalar_lea.smem %s0, 4
  %s9 = sld [smem:[%s8]]
  %s10 = scalar_lea.smem %s0, 5
  %s11 = sld [smem:[%s10]]
  %s12 = scalar_lea.smem %s0, 6
  %s13 = sld [smem:[%s12]]
  %s14 = scalar_lea.smem %s0, 7
  %s15 = sld [smem:[%s14]]
  %s16 = scalar_lea.smem %s0, 8
  %s17 = sld [smem:[%s16]]
  %s18 = scalar_lea.smem %s0, 9
  %s19 = sld [smem:[%s18]]
  %s20 = scalar_lea.smem %s0, 10
  %s21 = sld [smem:[%s20]]
  %s22 = scalar_lea.smem %s0, 11
  %s23 = sld [smem:[%s22]]
  %s24 = scalar_lea.smem %s0, 12
  %s25 = sld [smem:[%s24]]
  %s26 = scalar_lea.smem %s0, 13
  %s27 = sld [smem:[%s26]]
  %s28 = scalar_lea.smem %s0, 14
  %s29 = sld [smem:[%s28]]
  %s30 = scalar_lea.smem %s0, 15
  %s31 = sld [smem:[%s30]]
  %s32 = scalar_lea.smem %s0, 16
  %s33 = sld [smem:[%s32]]
  %s34 = scalar_lea.smem %s0, 17
  %s35 = sld [smem:[%s34]]
  %s36 = scalar_lea.smem %s0, 18
  %s37 = sld [smem:[%s36]]
  %s38 = scalar_lea.smem %s0, 19
  %s39 = sld [smem:[%s38]]
  %s40 = scalar_lea.smem %s0, 20
  %s41 = sld [smem:[%s40]]
  %s42 = scalar_lea.smem %s0, 21
  %s43 = sld [smem:[%s42]]
  %s44 = scalar_lea.smem %s0, 22
  %s45 = sld [smem:[%s44]]
  %s46 = scalar_lea.smem %s0, 23
  %s47 = sld [smem:[%s46]]
  %s48 = scalar_lea.smem %s0, 24
  %s49 = sld [smem:[%s48]]
  %s50 = scalar_lea.smem %s0, 25
  %s51 = sld [smem:[%s50]]
  %s52 = scalar_lea.smem %s0, 26
  %s53 = sld [smem:[%s52]]
  %s54 = scalar_lea.smem %s0, 27
  %s55 = sld [smem:[%s54]]
  %s56 = scalar_lea.smem %s0, 28
  %s57 = sld [smem:[%s56]]
  %s58 = scalar_lea.smem %s0, 29
  %s59 = sld [smem:[%s58]]
  %s60 = scalar_lea.smem %s0, 30
  %s61 = sld [smem:[%s60]]
  %s62 = scalar_lea.smem %s0, 31
  %s63 = sld [smem:[%s62]]
  %s64 = scalar_lea.smem %s0, 32
  %s65 = sld [smem:[%s64]]
  %s66 = scalar_lea.smem %s0, 33
  %s67 = sld [smem:[%s66]]
  %s68 = scalar_lea.smem %s0, 34
  %s69 = sld [smem:[%s68]]
  %s70 = scalar_lea.smem %s0, 35
  %s71 = sld [smem:[%s70]]
  %s72 = scalar_lea.smem %s0, 36
  %s73 = sld [smem:[%s72]]
  %s74 = scalar_lea.smem %s0, 37
  %s75 = sld [smem:[%s74]]
  %s76 = scalar_lea.smem %s0, 38
  %s77 = sld [smem:[%s76]]
  %s78 = scalar_lea.smem %s0, 39
  %s79 = sld [smem:[%s78]]
  %s80 = scalar_lea.smem %s0, 40
  %s81 = sld [smem:[%s80]]
  %s82 = scalar_lea.smem %s0, 41
  %s83 = sld [smem:[%s82]]
  %s84 = scalar_lea.smem %s0, 42
  %s85 = sld [smem:[%s84]]
  %s86 = scalar_lea.smem %s0, 43
  %s87 = sld [smem:[%s86]]
  %s88 = scalar_lea.smem %s0, 44
  %s89 = sld [smem:[%s88]]
  %s90 = sld [smem:[#allocation0]]
  $region186: #{decoder_forward.1} parent=0
    _
  %s92 = ssub.s32 1, %s90
  %s93 = scalar_select 0, %s92, %s90
  $region1: #{decoder_forward.1} parent=0
    #allocation2 [shape = 'u8[8192]{0}', space=vmem, size = 0x2000, scoped, tag = 'output window, operand 0, single buffered']
    #allocation3 [shape = 's32[1]{0}', space=sflag, size = 0x4, scoped, tag = 'scoped memory for decoder_forward.1']
    %94 = vsyncpa [#allocation3], 0
    // Predicated region
    $region2: #{decoder_forward.1} parent=1 // pred_check
      _
    $region3: #{decoder_forward.1} parent=1 // pred_check_branch
      %96 = sbr.rel (0) target = $region5
    $region4: #{decoder_forward.1} parent=1 // pred_region
      _
    $region5: #{decoder_forward.1} parent=1 // pred_fallthru
      _
    // Predicated region
    $region6: #{decoder_forward.1} parent=1 // pred_check
      _
    $region7: #{decoder_forward.1} parent=1 // pred_check_branch
      %98 = sbr.rel (0) target = $region9
    $region8: #{decoder_forward.1} parent=1 // pred_region
      _
    $region9: #{decoder_forward.1} parent=1 // pred_fallthru
      _
    // Predicated region
    $region10: #{decoder_forward.1} parent=1 // pred_check
      _
    $region11: #{decoder_forward.1} parent=1 // pred_check_branch
      %100 = sbr.rel (0) target = $region13
    $region12: #{decoder_forward.1} parent=1 // pred_region
      _
    $region13: #{decoder_forward.1} parent=1 // pred_fallthru
      _
    // Predicated region
    $region14: #{decoder_forward.1} parent=1 // pred_check
      _
    $region15: #{decoder_forward.1} parent=1 // pred_check_branch
      %102 = sbr.rel (0) target = $region17
    $region16: #{decoder_forward.1} parent=1 // pred_region
      _
    $region17: #{decoder_forward.1} parent=1 // pred_fallthru
      _
    // Predicated region
    $region18: #{decoder_forward.1} parent=1 // pred_check
      _
    $region19: #{decoder_forward.1} parent=1 // pred_check_branch
      %104 = sbr.rel (0) target = $region21
    $region20: #{decoder_forward.1} parent=1 // pred_region
      _
    $region21: #{decoder_forward.1} parent=1 // pred_fallthru
      _
    // Predicated region
    $region22: #{decoder_forward.1} parent=1 // pred_check
      _
    $region23: #{decoder_forward.1} parent=1 // pred_check_branch
      %106 = sbr.rel (0) target = $region25
    $region24: #{decoder_forward.1} parent=1 // pred_region
      _
    $region25: #{decoder_forward.1} parent=1 // pred_fallthru
      _
    // Predicated region
    $region26: #{decoder_forward.1} parent=1 // pred_check
      _
    $region27: #{decoder_forward.1} parent=1 // pred_check_branch
      %108 = sbr.rel (0) target = $region29
    $region28: #{decoder_forward.1} parent=1 // pred_region
      _
    $region29: #{decoder_forward.1} parent=1 // pred_fallthru
      _
    // Predicated region
    $region30: #{decoder_forward.1} parent=1 // pred_check
      _
    $region31: #{decoder_forward.1} parent=1 // pred_check_branch
      %110 = sbr.rel (0) target = $region33
    $region32: #{decoder_forward.1} parent=1 // pred_region
      _
    $region33: #{decoder_forward.1} parent=1 // pred_fallthru
      _
    // Predicated region
    $region34: #{decoder_forward.1} parent=1 // pred_check
      _
    $region35: #{decoder_forward.1} parent=1 // pred_check_branch
      %112 = sbr.rel (0) target = $region37
    $region36: #{decoder_forward.1} parent=1 // pred_region
      _
    $region37: #{decoder_forward.1} parent=1 // pred_fallthru
      _
    // Predicated region
    $region38: #{decoder_forward.1} parent=1 // pred_check
      _
    $region39: #{decoder_forward.1} parent=1 // pred_check_branch
      %114 = sbr.rel (0) target = $region41
    $region40: #{decoder_forward.1} parent=1 // pred_region
      _
    $region41: #{decoder_forward.1} parent=1 // pred_fallthru
      _
    // Predicated region
    $region42: #{decoder_forward.1} parent=1 // pred_check
      _
    $region43: #{decoder_forward.1} parent=1 // pred_check_branch
      %116 = sbr.rel (0) target = $region45
    $region44: #{decoder_forward.1} parent=1 // pred_region
      _
    $region45: #{decoder_forward.1} parent=1 // pred_fallthru
      _
    // Predicated region
    $region46: #{decoder_forward.1} parent=1 // pred_check
      _
    $region47: #{decoder_forward.1} parent=1 // pred_check_branch
      %118 = sbr.rel (0) target = $region49
    $region48: #{decoder_forward.1} parent=1 // pred_region
      _
    $region49: #{decoder_forward.1} parent=1 // pred_fallthru
      _
    // Predicated region
    $region50: #{decoder_forward.1} parent=1 // pred_check
      _
    $region51: #{decoder_forward.1} parent=1 // pred_check_branch
      %120 = sbr.rel (0) target = $region53
    $region52: #{decoder_forward.1} parent=1 // pred_region
      _
    $region53: #{decoder_forward.1} parent=1 // pred_fallthru
      _
    // Predicated region
    $region54: #{decoder_forward.1} parent=1 // pred_check
      _
    $region55: #{decoder_forward.1} parent=1 // pred_check_branch
      %122 = sbr.rel (0) target = $region57
    $region56: #{decoder_forward.1} parent=1 // pred_region
      _
    $region57: #{decoder_forward.1} parent=1 // pred_fallthru
      _
    // Predicated region
    $region58: #{decoder_forward.1} parent=1 // pred_check
      _
    $region59: #{decoder_forward.1} parent=1 // pred_check_branch
      %124 = sbr.rel (0) target = $region61
    $region60: #{decoder_forward.1} parent=1 // pred_region
      _
    $region61: #{decoder_forward.1} parent=1 // pred_fallthru
      _
    // Predicated region
    $region62: #{decoder_forward.1} parent=1 // pred_check
      _
    $region63: #{decoder_forward.1} parent=1 // pred_check_branch
      %126 = sbr.rel (0) target = $region65
    $region64: #{decoder_forward.1} parent=1 // pred_region
      _
    $region65: #{decoder_forward.1} parent=1 // pred_fallthru
      _
    // Predicated region
    $region66: #{decoder_forward.1} parent=1 // pred_check
      _
    $region67: #{decoder_forward.1} parent=1 // pred_check_branch
      %128 = sbr.rel (0) target = $region69
    $region68: #{decoder_forward.1} parent=1 // pred_region
      _
    $region69: #{decoder_forward.1} parent=1 // pred_fallthru
      _
    // Predicated region
    $region70: #{decoder_forward.1} parent=1 // pred_check
      _
    $region71: #{decoder_forward.1} parent=1 // pred_check_branch
      %130 = sbr.rel (0) target = $region73
    $region72: #{decoder_forward.1} parent=1 // pred_region
      _
    $region73: #{decoder_forward.1} parent=1 // pred_fallthru
      _
    // Predicated region
    $region74: #{decoder_forward.1} parent=1 // pred_check
      _
    $region75: #{decoder_forward.1} parent=1 // pred_check_branch
      %132 = sbr.rel (0) target = $region77
    $region76: #{decoder_forward.1} parent=1 // pred_region
      _
    $region77: #{decoder_forward.1} parent=1 // pred_fallthru
      _
    // Predicated region
    $region78: #{decoder_forward.1} parent=1 // pred_check
      _
    $region79: #{decoder_forward.1} parent=1 // pred_check_branch
      %134 = sbr.rel (0) target = $region81
    $region80: #{decoder_forward.1} parent=1 // pred_region
      _
    $region81: #{decoder_forward.1} parent=1 // pred_fallthru
      _
    // Predicated region
    $region82: #{decoder_forward.1} parent=1 // pred_check
      _
    $region83: #{decoder_forward.1} parent=1 // pred_check_branch
      %136 = sbr.rel (0) target = $region85
    $region84: #{decoder_forward.1} parent=1 // pred_region
      _
    $region85: #{decoder_forward.1} parent=1 // pred_fallthru
      _
    // Predicated region
    $region86: #{decoder_forward.1} parent=1 // pred_check
      _
    $region87: #{decoder_forward.1} parent=1 // pred_check_branch
      %138 = sbr.rel (0) target = $region89
    $region88: #{decoder_forward.1} parent=1 // pred_region
      _
    $region89: #{decoder_forward.1} parent=1 // pred_fallthru
      _
    // Predicated region
    $region90: #{decoder_forward.1} parent=1 // pred_check
      _
    $region91: #{decoder_forward.1} parent=1 // pred_check_branch
      %140 = sbr.rel (0) target = $region93
    $region92: #{decoder_forward.1} parent=1 // pred_region
      _
    $region93: #{decoder_forward.1} parent=1 // pred_fallthru
      _
    // Predicated region
    $region94: #{decoder_forward.1} parent=1 // pred_check
      _
    $region95: #{decoder_forward.1} parent=1 // pred_check_branch
      %142 = sbr.rel (0) target = $region97
    $region96: #{decoder_forward.1} parent=1 // pred_region
      _
    $region97: #{decoder_forward.1} parent=1 // pred_fallthru
      _
    // Predicated region
    $region98: #{decoder_forward.1} parent=1 // pred_check
      _
    $region99: #{decoder_forward.1} parent=1 // pred_check_branch
      %144 = sbr.rel (0) target = $region101
    $region100: #{decoder_forward.1} parent=1 // pred_region
      _
    $region101: #{decoder_forward.1} parent=1 // pred_fallthru
      _
    // Predicated region
    $region102: #{decoder_forward.1} parent=1 // pred_check
      _
    $region103: #{decoder_forward.1} parent=1 // pred_check_branch
      %146 = sbr.rel (0) target = $region105
    $region104: #{decoder_forward.1} parent=1 // pred_region
      _
    $region105: #{decoder_forward.1} parent=1 // pred_fallthru
      _
    // Predicated region
    $region106: #{decoder_forward.1} parent=1 // pred_check
      _
    $region107: #{decoder_forward.1} parent=1 // pred_check_branch
      %148 = sbr.rel (0) target = $region109
    $region108: #{decoder_forward.1} parent=1 // pred_region
      _
    $region109: #{decoder_forward.1} parent=1 // pred_fallthru
      _
    // Predicated region
    $region110: #{decoder_forward.1} parent=1 // pred_check
      _
    $region111: #{decoder_forward.1} parent=1 // pred_check_branch
      %150 = sbr.rel (0) target = $region113
    $region112: #{decoder_forward.1} parent=1 // pred_region
      _
    $region113: #{decoder_forward.1} parent=1 // pred_fallthru
      _
    // Predicated region
    $region114: #{decoder_forward.1} parent=1 // pred_check
      _
    $region115: #{decoder_forward.1} parent=1 // pred_check_branch
      %152 = sbr.rel (0) target = $region117
    $region116: #{decoder_forward.1} parent=1 // pred_region
      _
    $region117: #{decoder_forward.1} parent=1 // pred_fallthru
      _
    // Predicated region
    $region118: #{decoder_forward.1} parent=1 // pred_check
      _
    $region119: #{decoder_forward.1} parent=1 // pred_check_branch
      %154 = sbr.rel (0) target = $region121
    $region120: #{decoder_forward.1} parent=1 // pred_region
      _
    $region121: #{decoder_forward.1} parent=1 // pred_fallthru
      _
    // Predicated region
    $region122: #{decoder_forward.1} parent=1 // pred_check
      _
    $region123: #{decoder_forward.1} parent=1 // pred_check_branch
      %156 = sbr.rel (0) target = $region125
    $region124: #{decoder_forward.1} parent=1 // pred_region
      _
    $region125: #{decoder_forward.1} parent=1 // pred_fallthru
      _
    // Predicated region
    $region126: #{decoder_forward.1} parent=1 // pred_check
      _
    $region127: #{decoder_forward.1} parent=1 // pred_check_branch
      %158 = sbr.rel (0) target = $region129
    $region128: #{decoder_forward.1} parent=1 // pred_region
      _
    $region129: #{decoder_forward.1} parent=1 // pred_fallthru
      _
    // Predicated region
    $region130: #{decoder_forward.1} parent=1 // pred_check
      _
    $region131: #{decoder_forward.1} parent=1 // pred_check_branch
      %160 = sbr.rel (0) target = $region133
    $region132: #{decoder_forward.1} parent=1 // pred_region
      _
    $region133: #{decoder_forward.1} parent=1 // pred_fallthru
      _
    // Predicated region
    $region134: #{decoder_forward.1} parent=1 // pred_check
      _
    $region135: #{decoder_forward.1} parent=1 // pred_check_branch
      %162 = sbr.rel (0) target = $region137
    $region136: #{decoder_forward.1} parent=1 // pred_region
      _
    $region137: #{decoder_forward.1} parent=1 // pred_fallthru
      _
    // Predicated region
    $region138: #{decoder_forward.1} parent=1 // pred_check
      _
    $region139: #{decoder_forward.1} parent=1 // pred_check_branch
      %164 = sbr.rel (0) target = $region141
    $region140: #{decoder_forward.1} parent=1 // pred_region
      _
    $region141: #{decoder_forward.1} parent=1 // pred_fallthru
      _
    // Predicated region
    $region142: #{decoder_forward.1} parent=1 // pred_check
      _
    $region143: #{decoder_forward.1} parent=1 // pred_check_branch
      %166 = sbr.rel (0) target = $region145
    $region144: #{decoder_forward.1} parent=1 // pred_region
      _
    $region145: #{decoder_forward.1} parent=1 // pred_fallthru
      _
    // Predicated region
    $region146: #{decoder_forward.1} parent=1 // pred_check
      _
    $region147: #{decoder_forward.1} parent=1 // pred_check_branch
      %168 = sbr.rel (0) target = $region149
    $region148: #{decoder_forward.1} parent=1 // pred_region
      _
    $region149: #{decoder_forward.1} parent=1 // pred_fallthru
      _
    // Predicated region
    $region150: #{decoder_forward.1} parent=1 // pred_check
      _
    $region151: #{decoder_forward.1} parent=1 // pred_check_branch
      %170 = sbr.rel (0) target = $region153
    $region152: #{decoder_forward.1} parent=1 // pred_region
      _
    $region153: #{decoder_forward.1} parent=1 // pred_fallthru
      _
    // Predicated region
    $region154: #{decoder_forward.1} parent=1 // pred_check
      _
    $region155: #{decoder_forward.1} parent=1 // pred_check_branch
      %172 = sbr.rel (0) target = $region157
    $region156: #{decoder_forward.1} parent=1 // pred_region
      _
    $region157: #{decoder_forward.1} parent=1 // pred_fallthru
      _
    // Predicated region
    $region158: #{decoder_forward.1} parent=1 // pred_check
      _
    $region159: #{decoder_forward.1} parent=1 // pred_check_branch
      %174 = sbr.rel (0) target = $region161
    $region160: #{decoder_forward.1} parent=1 // pred_region
      _
    $region161: #{decoder_forward.1} parent=1 // pred_fallthru
      _
    // Predicated region
    $region162: #{decoder_forward.1} parent=1 // pred_check
      _
    $region163: #{decoder_forward.1} parent=1 // pred_check_branch
      %176 = sbr.rel (0) target = $region165
    $region164: #{decoder_forward.1} parent=1 // pred_region
      _
    $region165: #{decoder_forward.1} parent=1 // pred_fallthru
      _
    // Predicated region
    $region166: #{decoder_forward.1} parent=1 // pred_check
      _
    $region167: #{decoder_forward.1} parent=1 // pred_check_branch
      %178 = sbr.rel (0) target = $region169
    $region168: #{decoder_forward.1} parent=1 // pred_region
      _
    $region169: #{decoder_forward.1} parent=1 // pred_fallthru
      _
    // Predicated region
    $region170: #{decoder_forward.1} parent=1 // pred_check
      _
    $region171: #{decoder_forward.1} parent=1 // pred_check_branch
      %180 = sbr.rel (0) target = $region173
    $region172: #{decoder_forward.1} parent=1 // pred_region
      _
    $region173: #{decoder_forward.1} parent=1 // pred_fallthru
      _
    // Predicated region
    $region174: #{decoder_forward.1} parent=1 // pred_check
      _
    $region175: #{decoder_forward.1} parent=1 // pred_check_branch
      %182 = sbr.rel (0) target = $region177
    $region176: #{decoder_forward.1} parent=1 // pred_region
      _
    $region177: #{decoder_forward.1} parent=1 // pred_fallthru
      _
    %v183 = vld [vmem:[%s1] sm:$0xff]
    %v184 = vld [vmem:[%s1 + $0x8] sm:$0xff]
    %v185 = vld [vmem:[%s3] sm:$0xff]
    %v186 = vld [vmem:[%s3 + $0x8] sm:$0xff]
    %v187 = vld [vmem:[%s5] sm:$0xff]
    %v188 = vld [vmem:[%s5 + $0x8] sm:$0xff]
    %vm189 = vcmp.eq.f32.partialorder %v187, 0.0
    %vm190 = vcmp.eq.f32.partialorder %v188, 0.0
    %v191 = vsel %vm189, -1e+09, 0.0
    %v192 = vsel %vm190, -1e+09, 0.0
    %v193 = vld [vmem:[%s7] sm:$0xff]
    %v194 = vld [vmem:[%s7 + $0x8] sm:$0xff]
    %vm195 = vcmp.eq.f32.partialorder %v193, 0.0
    %vm196 = vcmp.eq.f32.partialorder %v194, 0.0
    %v197 = vsel %vm195, -1e+09, 0.0
    %v198 = vsel %vm196, -1e+09, 0.0
    %v199 = vld [vmem:[%s9] sm:$0x1]
    %v200 = vld [vmem:[%s11] sm:$0x1]
    %v201 = vld [vmem:[%s13] sm:$0xff]
    %v202 = vld [vmem:[%s13 + $0x8] sm:$0xff]
    %v203 = vld [vmem:[%s13 + $0x10] sm:$0xff]
    %v204 = vld [vmem:[%s13 + $0x18] sm:$0xff]
    %v205 = vld [vmem:[%s13 + $0x20] sm:$0xff]
    %v206 = vld [vmem:[%s13 + $0x28] sm:$0xff]
    %v207 = vld [vmem:[%s13 + $0x30] sm:$0xff]
    %v208 = vld [vmem:[%s13 + $0x38] sm:$0xff]
    %v209 = vld [vmem:[%s13 + $0x40] sm:$0xff]
    %v210 = vld [vmem:[%s13 + $0x48] sm:$0xff]
    %v211 = vld [vmem:[%s13 + $0x50] sm:$0xff]
    %v212 = vld [vmem:[%s13 + $0x58] sm:$0xff]
    %v213 = vld [vmem:[%s13 + $0x60] sm:$0xff]
    %v214 = vld [vmem:[%s13 + $0x68] sm:$0xff]
    %v215 = vld [vmem:[%s13 + $0x70] sm:$0xff]
    %v216 = vld [vmem:[%s13 + $0x78] sm:$0xff]
    %v217 = vld [vmem:[%s15] sm:$0xff]
    %v218 = vld [vmem:[%s15 + $0x8] sm:$0xff]
    %v219 = vld [vmem:[%s15 + $0x10] sm:$0xff]
    %v220 = vld [vmem:[%s15 + $0x18] sm:$0xff]
    %v221 = vld [vmem:[%s15 + $0x20] sm:$0xff]
    %v222 = vld [vmem:[%s15 + $0x28] sm:$0xff]
    %v223 = vld [vmem:[%s15 + $0x30] sm:$0xff]
    %v224 = vld [vmem:[%s15 + $0x38] sm:$0xff]
    %v225 = vld [vmem:[%s15 + $0x40] sm:$0xff]
    %v226 = vld [vmem:[%s15 + $0x48] sm:$0xff]
    %v227 = vld [vmem:[%s15 + $0x50] sm:$0xff]
    %v228 = vld [vmem:[%s15 + $0x58] sm:$0xff]
    %v229 = vld [vmem:[%s15 + $0x60] sm:$0xff]
    %v230 = vld [vmem:[%s15 + $0x68] sm:$0xff]
    %v231 = vld [vmem:[%s15 + $0x70] sm:$0xff]
    %v232 = vld [vmem:[%s15 + $0x78] sm:$0xff]
    %v233 = vld [vmem:[%s17] sm:$0xff]
    %v234 = vld [vmem:[%s17 + $0x8] sm:$0xff]
    %v235 = vld [vmem:[%s17 + $0x10] sm:$0xff]
    %v236 = vld [vmem:[%s17 + $0x18] sm:$0xff]
    %v237 = vld [vmem:[%s17 + $0x20] sm:$0xff]
    %v238 = vld [vmem:[%s17 + $0x28] sm:$0xff]
    %v239 = vld [vmem:[%s17 + $0x30] sm:$0xff]
    %v240 = vld [vmem:[%s17 + $0x38] sm:$0xff]
    %v241 = vld [vmem:[%s17 + $0x40] sm:$0xff]
    %v242 = vld [vmem:[%s17 + $0x48] sm:$0xff]
    %v243 = vld [vmem:[%s17 + $0x50] sm:$0xff]
    %v244 = vld [vmem:[%s17 + $0x58] sm:$0xff]
    %v245 = vld [vmem:[%s17 + $0x60] sm:$0xff]
    %v246 = vld [vmem:[%s17 + $0x68] sm:$0xff]
    %v247 = vld [vmem:[%s17 + $0x70] sm:$0xff]
    %v248 = vld [vmem:[%s17 + $0x78] sm:$0xff]
    %v249 = vld [vmem:[%s19] sm:$0xff]
    %v250 = vld [vmem:[%s19 + $0x8] sm:$0xff]
    %v251 = vld [vmem:[%s19 + $0x10] sm:$0xff]
    %v252 = vld [vmem:[%s19 + $0x18] sm:$0xff]
    %v253 = vld [vmem:[%s21] sm:$0x1]
    %v254 = vld [vmem:[%s23] sm:$0x1]
    %v255 = vld [vmem:[%s25] sm:$0x1]
    %v256 = vld [vmem:[%s27] sm:$0xff]
    %v257 = vld [vmem:[%s27 + $0x8] sm:$0xff]
    %v258 = vld [vmem:[%s27 + $0x10] sm:$0xff]
    %v259 = vld [vmem:[%s27 + $0x18] sm:$0xff]
    %v260 = vld [vmem:[%s27 + $0x20] sm:$0xff]
    %v261 = vld [vmem:[%s27 + $0x28] sm:$0xff]
    %v262 = vld [vmem:[%s27 + $0x30] sm:$0xff]
    %v263 = vld [vmem:[%s27 + $0x38] sm:$0xff]
    %v264 = vld [vmem:[%s27 + $0x40] sm:$0xff]
    %v265 = vld [vmem:[%s27 + $0x48] sm:$0xff]
    %v266 = vld [vmem:[%s27 + $0x50] sm:$0xff]
    %v267 = vld [vmem:[%s27 + $0x58] sm:$0xff]
    %v268 = vld [vmem:[%s27 + $0x60] sm:$0xff]
    %v269 = vld [vmem:[%s27 + $0x68] sm:$0xff]
    %v270 = vld [vmem:[%s27 + $0x70] sm:$0xff]
    %v271 = vld [vmem:[%s27 + $0x78] sm:$0xff]
    %v272 = vld [vmem:[%s29] sm:$0xff]
    %v273 = vld [vmem:[%s29 + $0x8] sm:$0xff]
    %v274 = vld [vmem:[%s29 + $0x10] sm:$0xff]
    %v275 = vld [vmem:[%s29 + $0x18] sm:$0xff]
    %v276 = vld [vmem:[%s29 + $0x20] sm:$0xff]
    %v277 = vld [vmem:[%s29 + $0x28] sm:$0xff]
    %v278 = vld [vmem:[%s29 + $0x30] sm:$0xff]
    %v279 = vld [vmem:[%s29 + $0x38] sm:$0xff]
    %v280 = vld [vmem:[%s29 + $0x40] sm:$0xff]
    %v281 = vld [vmem:[%s29 + $0x48] sm:$0xff]
    %v282 = vld [vmem:[%s29 + $0x50] sm:$0xff]
    %v283 = vld [vmem:[%s29 + $0x58] sm:$0xff]
    %v284 = vld [vmem:[%s29 + $0x60] sm:$0xff]
    %v285 = vld [vmem:[%s29 + $0x68] sm:$0xff]
    %v286 = vld [vmem:[%s29 + $0x70] sm:$0xff]
    %v287 = vld [vmem:[%s29 + $0x78] sm:$0xff]
    %v288 = vld [vmem:[%s31] sm:$0xff]
    %v289 = vld [vmem:[%s31 + $0x8] sm:$0xff]
    %v290 = vld [vmem:[%s31 + $0x10] sm:$0xff]
    %v291 = vld [vmem:[%s31 + $0x18] sm:$0xff]
    %v292 = vld [vmem:[%s31 + $0x20] sm:$0xff]
    %v293 = vld [vmem:[%s31 + $0x28] sm:$0xff]
    %v294 = vld [vmem:[%s31 + $0x30] sm:$0xff]
    %v295 = vld [vmem:[%s31 + $0x38] sm:$0xff]
    %v296 = vld [vmem:[%s31 + $0x40] sm:$0xff]
    %v297 = vld [vmem:[%s31 + $0x48] sm:$0xff]
    %v298 = vld [vmem:[%s31 + $0x50] sm:$0xff]
    %v299 = vld [vmem:[%s31 + $0x58] sm:$0xff]
    %v300 = vld [vmem:[%s31 + $0x60] sm:$0xff]
    %v301 = vld [vmem:[%s31 + $0x68] sm:$0xff]
    %v302 = vld [vmem:[%s31 + $0x70] sm:$0xff]
    %v303 = vld [vmem:[%s31 + $0x78] sm:$0xff]
    %v304 = vld [vmem:[%s33] sm:$0xff]
    %v305 = vld [vmem:[%s33 + $0x8] sm:$0xff]
    %v306 = vld [vmem:[%s33 + $0x10] sm:$0xff]
    %v307 = vld [vmem:[%s33 + $0x18] sm:$0xff]
    %v308 = vld [vmem:[%s35] sm:$0x1]
    %v309 = vld [vmem:[%s37] sm:$0x1]
    %v310 = vld [vmem:[%s39] sm:$0x1]
    %v311 = vld [vmem:[%s41] sm:$0xff]
    %v312 = vld [vmem:[%s41 + $0x8] sm:$0xff]
    %v313 = vld [vmem:[%s41 + $0x10] sm:$0xff]
    %v314 = vld [vmem:[%s41 + $0x18] sm:$0xff]
    %v315 = vld [vmem:[%s43] sm:$0x1]
    %v316 = vld [vmem:[%s45] sm:$0xff]
    %v317 = vld [vmem:[%s45 + $0x8] sm:$0xff]
    %v318 = vld [vmem:[%s45 + $0x10] sm:$0xff]
    %v319 = vld [vmem:[%s45 + $0x18] sm:$0xff]
    %v320 = vld [vmem:[%s45 + $0x20] sm:$0xff]
    %v321 = vld [vmem:[%s45 + $0x28] sm:$0xff]
    %v322 = vld [vmem:[%s45 + $0x30] sm:$0xff]
    %v323 = vld [vmem:[%s45 + $0x38] sm:$0xff]
    %v324 = vld [vmem:[%s47] sm:$0x1]
    %vm325 = vcmask 261120
    %v326 = vsel %vm325, %v183, 0.0
    %327 = vadd.xlane.f32.xlu0 %v326
    %v328 = vpop.xlane.xlu0 %327
    %v329 = vsel %vm325, %v184, 0.0
    %330 = vadd.xlane.f32.xlu0 %v329
    %v331 = vpop.xlane.xlu0 %330
    %v332 = vrcp.pop 32.0
    %v333 = vmul.f32 32.0, %v332
    %v334 = vsub.f32 1.0, %v333
    %v335 = vmul.f32 %v332, %v334
    %v336 = vadd.f32 %v332, %v335
    %vm337 = vweird.f32 %v332
    %v338 = vsel %vm337, %v332, %v336
    %v339 = vmul.f32 %v328, %v338
    %v340 = vmul.f32 %v331, %v338
    %v341 = vsub.f32 %v183, %v339
    %v342 = vsub.f32 %v184, %v340
    %v343 = vmul.f32 %v341, %v341
    %v344 = vmul.f32 %v342, %v342
    %v345 = vsel %vm325, %v343, 0.0
    %346 = vadd.xlane.f32.xlu0 %v345
    %v347 = vpop.xlane.xlu0 %346
    %v348 = vsel %vm325, %v344, 0.0
    %349 = vadd.xlane.f32.xlu0 %v348
    %v350 = vpop.xlane.xlu0 %349
    %v351 = vmul.f32 %v347, %v338
    %v352 = vmul.f32 %v350, %v338
    %v353 = vadd.f32 %v351, 1e-05
    %v354 = vadd.f32 %v352, 1e-05
    %v355 = vrsqrt.pop %v353
    %v356 = vmul.f32 %v355, %v353
    %v357 = vmul.f32 %v356, %v355
    %v358 = vmul.f32 0.5, %v357
    %v359 = vsub.f32 1.5, %v358
    %v360 = vmul.f32 %v355, %v359
    %vm361 = vweird.f32 %v353
    %vm362 = vweird.f32 %v355
    %vm363 = vmor %vm361, %vm362
    %v364 = vsel %vm363, %v355, %v360
    %v365 = vrsqrt.pop %v354
    %v366 = vmul.f32 %v365, %v354
    %v367 = vmul.f32 %v366, %v365
    %v368 = vmul.f32 0.5, %v367
    %v369 = vsub.f32 1.5, %v368
    %v370 = vmul.f32 %v365, %v369
    %vm371 = vweird.f32 %v354
    %vm372 = vweird.f32 %v365
    %vm373 = vmor %vm371, %vm372
    %v374 = vsel %vm373, %v365, %v370
    %v375 = vmul.f32 %v341, %v364
    %v376 = vmul.f32 %v342, %v374
    %v378 = vperm.slane %v199, 0
    %v380 = vmul.f32 %v375, %v378
    %v381 = vmul.f32 %v376, %v378
    %v383 = vperm.slane %v200, 0
    %v385 = vadd.f32 %v380, %v383
    %v386 = vadd.f32 %v381, %v383
    %v388 = vsel %vm325, %v385, 0
    %v391 = vsel %vm325, %v386, 0
    %393 = vmatpush.msra.mxu0 0.0
    %394 = vmatpush.msra.mxu0 0.0
    %395 = vmatpush.msra.mxu0 0.0
    %396 = vmatpush.msra.mxu0 0.0
    %397 = vmatpush.msra.mxu0 0.0
    %398 = vmatpush.msra.mxu0 0.0
    %399 = vmatpush.msra.mxu0 0.0
    %400 = vmatpush.msra.mxu0 0.0
    %401 = vmatpush.msra.mxu0 0.0
    %402 = vmatpush.msra.mxu0 0.0
    %403 = vmatpush.msra.mxu0 0.0
    %404 = vmatpush.msra.mxu0 0.0
    %405 = vmatpush.msra.mxu0 %v204
    %406 = vmatpush.msra.mxu0 %v203
    %407 = vmatpush.msra.mxu0 %v202
    %408 = vmatpush.msra.mxu0 %v201
    %409 = vmatmul.f32.gmra.mxu0 %v388
    %v410 = vpop.f32.mrf.mxu0
    %v411 = vadd.f32 0.0, %v410
    %412 = vmatmul.f32.gmra.mxu0 %v391
    %v413 = vpop.f32.mrf.mxu0
    %v414 = vadd.f32 0.0, %v413
    %415 = vdwg.mxu0
    %416 = vmatpush.msra.mxu0 0.0
    %417 = vmatpush.msra.mxu0 0.0
    %418 = vmatpush.msra.mxu0 0.0
    %419 = vmatpush.msra.mxu0 0.0
    %420 = vmatpush.msra.mxu0 0.0
    %421 = vmatpush.msra.mxu0 0.0
    %422 = vmatpush.msra.mxu0 0.0
    %423 = vmatpush.msra.mxu0 0.0
    %424 = vmatpush.msra.mxu0 0.0
    %425 = vmatpush.msra.mxu0 0.0
    %426 = vmatpush.msra.mxu0 0.0
    %427 = vmatpush.msra.mxu0 0.0
    %428 = vmatpush.msra.mxu0 %v208
    %429 = vmatpush.msra.mxu0 %v207
    %430 = vmatpush.msra.mxu0 %v206
    %431 = vmatpush.msra.mxu0 %v205
    %432 = vmatmul.f32.gmra.mxu0 %v388
    %v433 = vpop.f32.mrf.mxu0
    %v434 = vadd.f32 0.0, %v433
    %435 = vmatmul.f32.gmra.mxu0 %v391
    %v436 = vpop.f32.mrf.mxu0
    %v437 = vadd.f32 0.0, %v436
    %438 = vdwg.mxu0
    %439 = vmatpush.msra.mxu0 0.0
    %440 = vmatpush.msra.mxu0 0.0
    %441 = vmatpush.msra.mxu0 0.0
    %442 = vmatpush.msra.mxu0 0.0
    %443 = vmatpush.msra.mxu0 0.0
    %444 = vmatpush.msra.mxu0 0.0
    %445 = vmatpush.msra.mxu0 0.0
    %446 = vmatpush.msra.mxu0 0.0
    %447 = vmatpush.msra.mxu0 0.0
    %448 = vmatpush.msra.mxu0 0.0
    %449 = vmatpush.msra.mxu0 0.0
    %450 = vmatpush.msra.mxu0 0.0
    %451 = vmatpush.msra.mxu0 %v212
    %452 = vmatpush.msra.mxu0 %v211
    %453 = vmatpush.msra.mxu0 %v210
    %454 = vmatpush.msra.mxu0 %v209
    %455 = vmatmul.f32.gmra.mxu0 %v388
    %v456 = vpop.f32.mrf.mxu0
    %v457 = vadd.f32 0.0, %v456
    %458 = vmatmul.f32.gmra.mxu0 %v391
    %v459 = vpop.f32.mrf.mxu0
    %v460 = vadd.f32 0.0, %v459
    %461 = vdwg.mxu0
    %462 = vmatpush.msra.mxu0 0.0
    %463 = vmatpush.msra.mxu0 0.0
    %464 = vmatpush.msra.mxu0 0.0
    %465 = vmatpush.msra.mxu0 0.0
    %466 = vmatpush.msra.mxu0 0.0
    %467 = vmatpush.msra.mxu0 0.0
    %468 = vmatpush.msra.mxu0 0.0
    %469 = vmatpush.msra.mxu0 0.0
    %470 = vmatpush.msra.mxu0 0.0
    %471 = vmatpush.msra.mxu0 0.0
    %472 = vmatpush.msra.mxu0 0.0
    %473 = vmatpush.msra.mxu0 0.0
    %474 = vmatpush.msra.mxu0 %v216
    %475 = vmatpush.msra.mxu0 %v215
    %476 = vmatpush.msra.mxu0 %v214
    %477 = vmatpush.msra.mxu0 %v213
    %478 = vmatmul.f32.gmra.mxu0 %v388
    %v479 = vpop.f32.mrf.mxu0
    %v480 = vadd.f32 0.0, %v479
    %481 = vmatmul.f32.gmra.mxu0 %v391
    %v482 = vpop.f32.mrf.mxu0
    %v483 = vadd.f32 0.0, %v482
    %484 = vdwg.mxu0
    %485 = vmatpush.msra.mxu0 0.0
    %486 = vmatpush.msra.mxu0 0.0
    %487 = vmatpush.msra.mxu0 0.0
    %488 = vmatpush.msra.mxu0 0.0
    %489 = vmatpush.msra.mxu0 0.0
    %490 = vmatpush.msra.mxu0 0.0
    %491 = vmatpush.msra.mxu0 0.0
    %492 = vmatpush.msra.mxu0 0.0
    %493 = vmatpush.msra.mxu0 0.0
    %494 = vmatpush.msra.mxu0 0.0
    %495 = vmatpush.msra.mxu0 0.0
    %496 = vmatpush.msra.mxu0 0.0
    %497 = vmatpush.msra.mxu0 %v220
    %498 = vmatpush.msra.mxu0 %v219
    %499 = vmatpush.msra.mxu0 %v218
    %500 = vmatpush.msra.mxu0 %v217
    %501 = vmatmul.f32.gmra.mxu0 %v388
    %v502 = vpop.f32.mrf.mxu0
    %v503 = vadd.f32 0.0, %v502
    %504 = vmatmul.f32.gmra.mxu0 %v391
    %v505 = vpop.f32.mrf.mxu0
    %v506 = vadd.f32 0.0, %v505
    %507 = vdwg.mxu0
    %508 = vmatpush.msra.mxu0 0.0
    %509 = vmatpush.msra.mxu0 0.0
    %510 = vmatpush.msra.mxu0 0.0
    %511 = vmatpush.msra.mxu0 0.0
    %512 = vmatpush.msra.mxu0 0.0
    %513 = vmatpush.msra.mxu0 0.0
    %514 = vmatpush.msra.mxu0 0.0
    %515 = vmatpush.msra.mxu0 0.0
    %516 = vmatpush.msra.mxu0 0.0
    %517 = vmatpush.msra.mxu0 0.0
    %518 = vmatpush.msra.mxu0 0.0
    %519 = vmatpush.msra.mxu0 0.0
    %520 = vmatpush.msra.mxu0 %v224
    %521 = vmatpush.msra.mxu0 %v223
    %522 = vmatpush.msra.mxu0 %v222
    %523 = vmatpush.msra.mxu0 %v221
    %524 = vmatmul.f32.gmra.mxu0 %v388
    %v525 = vpop.f32.mrf.mxu0
    %v526 = vadd.f32 0.0, %v525
    %527 = vmatmul.f32.gmra.mxu0 %v391
    %v528 = vpop.f32.mrf.mxu0
    %v529 = vadd.f32 0.0, %v528
    %530 = vdwg.mxu0
    %531 = vmatpush.msra.mxu0 0.0
    %532 = vmatpush.msra.mxu0 0.0
    %533 = vmatpush.msra.mxu0 0.0
    %534 = vmatpush.msra.mxu0 0.0
    %535 = vmatpush.msra.mxu0 0.0
    %536 = vmatpush.msra.mxu0 0.0
    %537 = vmatpush.msra.mxu0 0.0
    %538 = vmatpush.msra.mxu0 0.0
    %539 = vmatpush.msra.mxu0 0.0
    %540 = vmatpush.msra.mxu0 0.0
    %541 = vmatpush.msra.mxu0 0.0
    %542 = vmatpush.msra.mxu0 0.0
    %543 = vmatpush.msra.mxu0 %v228
    %544 = vmatpush.msra.mxu0 %v227
    %545 = vmatpush.msra.mxu0 %v226
    %546 = vmatpush.msra.mxu0 %v225
    %547 = vmatmul.f32.gmra.mxu0 %v388
    %v548 = vpop.f32.mrf.mxu0
    %v549 = vadd.f32 0.0, %v548
    %550 = vmatmul.f32.gmra.mxu0 %v391
    %v551 = vpop.f32.mrf.mxu0
    %v552 = vadd.f32 0.0, %v551
    %553 = vdwg.mxu0
    %554 = vmatpush.msra.mxu0 0.0
    %555 = vmatpush.msra.mxu0 0.0
    %556 = vmatpush.msra.mxu0 0.0
    %557 = vmatpush.msra.mxu0 0.0
    %558 = vmatpush.msra.mxu0 0.0
    %559 = vmatpush.msra.mxu0 0.0
    %560 = vmatpush.msra.mxu0 0.0
    %561 = vmatpush.msra.mxu0 0.0
    %562 = vmatpush.msra.mxu0 0.0
    %563 = vmatpush.msra.mxu0 0.0
    %564 = vmatpush.msra.mxu0 0.0
    %565 = vmatpush.msra.mxu0 0.0
    %566 = vmatpush.msra.mxu0 %v232
    %567 = vmatpush.msra.mxu0 %v231
    %568 = vmatpush.msra.mxu0 %v230
    %569 = vmatpush.msra.mxu0 %v229
    %570 = vmatmul.f32.gmra.mxu0 %v388
    %v571 = vpop.f32.mrf.mxu0
    %v572 = vadd.f32 0.0, %v571
    %573 = vmatmul.f32.gmra.mxu0 %v391
    %v574 = vpop.f32.mrf.mxu0
    %v575 = vadd.f32 0.0, %v574
    %576 = vdwg.mxu0
    %577 = vmatpush.msra.mxu0 0.0
    %578 = vmatpush.msra.mxu0 0.0
    %579 = vmatpush.msra.mxu0 0.0
    %580 = vmatpush.msra.mxu0 0.0
    %581 = vmatpush.msra.mxu0 0.0
    %582 = vmatpush.msra.mxu0 0.0
    %583 = vmatpush.msra.mxu0 0.0
    %584 = vmatpush.msra.mxu0 0.0
    %585 = vmatpush.msra.mxu0 0.0
    %586 = vmatpush.msra.mxu0 0.0
    %587 = vmatpush.msra.mxu0 0.0
    %588 = vmatpush.msra.mxu0 0.0
    %589 = vmatpush.msra.mxu0 %v236
    %590 = vmatpush.msra.mxu0 %v235
    %591 = vmatpush.msra.mxu0 %v234
    %592 = vmatpush.msra.mxu0 %v233
    %593 = vmatmul.f32.gmra.mxu0 %v388
    %v594 = vpop.f32.mrf.mxu0
    %v595 = vadd.f32 0.0, %v594
    %596 = vmatmul.f32.gmra.mxu0 %v391
    %v597 = vpop.f32.mrf.mxu0
    %v598 = vadd.f32 0.0, %v597
    %599 = vdwg.mxu0
    %600 = vmatpush.msra.mxu0 0.0
    %601 = vmatpush.msra.mxu0 0.0
    %602 = vmatpush.msra.mxu0 0.0
    %603 = vmatpush.msra.mxu0 0.0
    %604 = vmatpush.msra.mxu0 0.0
    %605 = vmatpush.msra.mxu0 0.0
    %606 = vmatpush.msra.mxu0 0.0
    %607 = vmatpush.msra.mxu0 0.0
    %608 = vmatpush.msra.mxu0 0.0
    %609 = vmatpush.msra.mxu0 0.0
    %610 = vmatpush.msra.mxu0 0.0
    %611 = vmatpush.msra.mxu0 0.0
    %612 = vmatpush.msra.mxu0 %v240
    %613 = vmatpush.msra.mxu0 %v239
    %614 = vmatpush.msra.mxu0 %v238
    %615 = vmatpush.msra.mxu0 %v237
    %616 = vmatmul.f32.gmra.mxu0 %v388
    %v617 = vpop.f32.mrf.mxu0
    %v618 = vadd.f32 0.0, %v617
    %619 = vmatmul.f32.gmra.mxu0 %v391
    %v620 = vpop.f32.mrf.mxu0
    %v621 = vadd.f32 0.0, %v620
    %622 = vdwg.mxu0
    %623 = vmatpush.msra.mxu0 0.0
    %624 = vmatpush.msra.mxu0 0.0
    %625 = vmatpush.msra.mxu0 0.0
    %626 = vmatpush.msra.mxu0 0.0
    %627 = vmatpush.msra.mxu0 0.0
    %628 = vmatpush.msra.mxu0 0.0
    %629 = vmatpush.msra.mxu0 0.0
    %630 = vmatpush.msra.mxu0 0.0
    %631 = vmatpush.msra.mxu0 0.0
    %632 = vmatpush.msra.mxu0 0.0
    %633 = vmatpush.msra.mxu0 0.0
    %634 = vmatpush.msra.mxu0 0.0
    %635 = vmatpush.msra.mxu0 %v244
    %636 = vmatpush.msra.mxu0 %v243
    %637 = vmatpush.msra.mxu0 %v242
    %638 = vmatpush.msra.mxu0 %v241
    %639 = vmatmul.f32.gmra.mxu0 %v388
    %v640 = vpop.f32.mrf.mxu0
    %v641 = vadd.f32 0.0, %v640
    %642 = vmatmul.f32.gmra.mxu0 %v391
    %v643 = vpop.f32.mrf.mxu0
    %v644 = vadd.f32 0.0, %v643
    %645 = vdwg.mxu0
    %646 = vmatpush.msra.mxu0 0.0
    %647 = vmatpush.msra.mxu0 0.0
    %648 = vmatpush.msra.mxu0 0.0
    %649 = vmatpush.msra.mxu0 0.0
    %650 = vmatpush.msra.mxu0 0.0
    %651 = vmatpush.msra.mxu0 0.0
    %652 = vmatpush.msra.mxu0 0.0
    %653 = vmatpush.msra.mxu0 0.0
    %654 = vmatpush.msra.mxu0 0.0
    %655 = vmatpush.msra.mxu0 0.0
    %656 = vmatpush.msra.mxu0 0.0
    %657 = vmatpush.msra.mxu0 0.0
    %658 = vmatpush.msra.mxu0 %v248
    %659 = vmatpush.msra.mxu0 %v247
    %660 = vmatpush.msra.mxu0 %v246
    %661 = vmatpush.msra.mxu0 %v245
    %662 = vmatmul.f32.gmra.mxu0 %v388
    %v663 = vpop.f32.mrf.mxu0
    %v664 = vadd.f32 0.0, %v663
    %665 = vmatmul.f32.gmra.mxu0 %v391
    %v666 = vpop.f32.mrf.mxu0
    %v667 = vadd.f32 0.0, %v666
    %668 = vdwg.mxu0
    %vm669 = vcmask 64512
    %v671 = vsel %vm669, %v411, 0
    %v674 = vsel %vm669, %v503, 0
    %676 = vmatpush.xpose.msra.mxu0 0.0
    %677 = vmatpush.xpose.msra.mxu0 0.0
    %678 = vmatpush.xpose.msra.mxu0 0.0
    %679 = vmatpush.xpose.msra.mxu0 0.0
    %680 = vmatpush.xpose.msra.mxu0 0.0
    %681 = vmatpush.xpose.msra.mxu0 0.0
    %682 = vmatpush.xpose.msra.mxu0 0.0
    %683 = vmatpush.xpose.msra.mxu0 0.0
    %684 = vmatpush.xpose.msra.mxu0 0.0
    %685 = vmatpush.xpose.msra.mxu0 0.0
    %686 = vmatpush.xpose.msra.mxu0 0.0
    %687 = vmatpush.xpose.msra.mxu0 0.0
    %688 = vmatpush.xpose.msra.mxu0 0.0
    %689 = vmatpush.xpose.msra.mxu0 0.0
    %690 = vmatpush.xpose.msra.mxu0 0.0
    %691 = vmatpush.xpose.msra.mxu0 %v674
    %692 = vmatmul.f32.gmra.mxu0 %v671
    %v693 = vpop.f32.mrf.mxu0
    %v694 = vadd.f32 0.0, %v693
    %695 = vdwg.mxu0
    %v697 = vsel %vm669, %v434, 0
    %v700 = vsel %vm669, %v526, 0
    %702 = vmatpush.xpose.msra.mxu0 0.0
    %703 = vmatpush.xpose.msra.mxu0 0.0
    %704 = vmatpush.xpose.msra.mxu0 0.0
    %705 = vmatpush.xpose.msra.mxu0 0.0
    %706 = vmatpush.xpose.msra.mxu0 0.0
    %707 = vmatpush.xpose.msra.mxu0 0.0
    %708 = vmatpush.xpose.msra.mxu0 0.0
    %709 = vmatpush.xpose.msra.mxu0 0.0
    %710 = vmatpush.xpose.msra.mxu0 0.0
    %711 = vmatpush.xpose.msra.mxu0 0.0
    %712 = vmatpush.xpose.msra.mxu0 0.0
    %713 = vmatpush.xpose.msra.mxu0 0.0
    %714 = vmatpush.xpose.msra.mxu0 0.0
    %715 = vmatpush.xpose.msra.mxu0 0.0
    %716 = vmatpush.xpose.msra.mxu0 0.0
    %717 = vmatpush.xpose.msra.mxu0 %v700
    %718 = vmatmul.f32.gmra.mxu0 %v697
    %v719 = vpop.f32.mrf.mxu0
    %v720 = vadd.f32 0.0, %v719
    %721 = vdwg.mxu0
    %v723 = vsel %vm669, %v457, 0
    %v726 = vsel %vm669, %v549, 0
    %728 = vmatpush.xpose.msra.mxu0 0.0
    %729 = vmatpush.xpose.msra.mxu0 0.0
    %730 = vmatpush.xpose.msra.mxu0 0.0
    %731 = vmatpush.xpose.msra.mxu0 0.0
    %732 = vmatpush.xpose.msra.mxu0 0.0
    %733 = vmatpush.xpose.msra.mxu0 0.0
    %734 = vmatpush.xpose.msra.mxu0 0.0
    %735 = vmatpush.xpose.msra.mxu0 0.0
    %736 = vmatpush.xpose.msra.mxu0 0.0
    %737 = vmatpush.xpose.msra.mxu0 0.0
    %738 = vmatpush.xpose.msra.mxu0 0.0
    %739 = vmatpush.xpose.msra.mxu0 0.0
    %740 = vmatpush.xpose.msra.mxu0 0.0
    %741 = vmatpush.xpose.msra.mxu0 0.0
    %742 = vmatpush.xpose.msra.mxu0 0.0
    %743 = vmatpush.xpose.msra.mxu0 %v726
    %744 = vmatmul.f32.gmra.mxu0 %v723
    %v745 = vpop.f32.mrf.mxu0
    %v746 = vadd.f32 0.0, %v745
    %747 = vdwg.mxu0
    %v749 = vsel %vm669, %v480, 0
    %v752 = vsel %vm669, %v572, 0
    %754 = vmatpush.xpose.msra.mxu0 0.0
    %755 = vmatpush.xpose.msra.mxu0 0.0
    %756 = vmatpush.xpose.msra.mxu0 0.0
    %757 = vmatpush.xpose.msra.mxu0 0.0
    %758 = vmatpush.xpose.msra.mxu0 0.0
    %759 = vmatpush.xpose.msra.mxu0 0.0
    %760 = vmatpush.xpose.msra.mxu0 0.0
    %761 = vmatpush.xpose.msra.mxu0 0.0
    %762 = vmatpush.xpose.msra.mxu0 0.0
    %763 = vmatpush.xpose.msra.mxu0 0.0
    %764 = vmatpush.xpose.msra.mxu0 0.0
    %765 = vmatpush.xpose.msra.mxu0 0.0
    %766 = vmatpush.xpose.msra.mxu0 0.0
    %767 = vmatpush.xpose.msra.mxu0 0.0
    %768 = vmatpush.xpose.msra.mxu0 0.0
    %769 = vmatpush.xpose.msra.mxu0 %v752
    %770 = vmatmul.f32.gmra.mxu0 %v749
    %v771 = vpop.f32.mrf.mxu0
    %v772 = vadd.f32 0.0, %v771
    %773 = vdwg.mxu0
    %v774 = vmul.f32 %v694, 0.35355338
    %v775 = vmul.f32 %v720, 0.35355338
    %v776 = vmul.f32 %v746, 0.35355338
    %v777 = vmul.f32 %v772, 0.35355338
    %v778 = vadd.f32 %v774, %v191
    %v779 = vadd.f32 %v775, %v191
    %v780 = vadd.f32 %v776, %v191
    %v781 = vadd.f32 %v777, %v191
    %v782 = vsel %vm669, %v778, -inf
    %783 = vmax.xlane.f32.xlu0 %v782
    %v784 = vpop.xlane.xlu0 %783
    %v785 = vsel %vm669, %v779, -inf
    %786 = vmax.xlane.f32.xlu0 %v785
    %v787 = vpop.xlane.xlu0 %786
    %v788 = vsel %vm669, %v780, -inf
    %789 = vmax.xlane.f32.xlu0 %v788
    %v790 = vpop.xlane.xlu0 %789
    %v791 = vsel %vm669, %v781, -inf
    %792 = vmax.xlane.f32.xlu0 %v791
    %v793 = vpop.xlane.xlu0 %792
    %v794 = vsub.f32 %v778, %v784
    %v795 = vsub.f32 %v779, %v787
    %v796 = vsub.f32 %v780, %v790
    %v797 = vsub.f32 %v781, %v793
    %v798 = vmul.f32 %v794, 1.442695
    %v799 = vpow.pop %v798
    %v800 = vmul.f32 %v795, 1.442695
    %v801 = vpow.pop %v800
    %v802 = vmul.f32 %v796, 1.442695
    %v803 = vpow.pop %v802
    %v804 = vmul.f32 %v797, 1.442695
    %v805 = vpow.pop %v804
    %v806 = vsel %vm669, %v799, 0.0
    %807 = vadd.xlane.f32.xlu0 %v806
    %v808 = vpop.xlane.xlu0 %807
    %v809 = vsel %vm669, %v801, 0.0
    %810 = vadd.xlane.f32.xlu0 %v809
    %v811 = vpop.xlane.xlu0 %810
    %v812 = vsel %vm669, %v803, 0.0
    %813 = vadd.xlane.f32.xlu0 %v812
    %v814 = vpop.xlane.xlu0 %813
    %v815 = vsel %vm669, %v805, 0.0
    %816 = vadd.xlane.f32.xlu0 %v815
    %v817 = vpop.xlane.xlu0 %816
    %v818 = vrcp.pop %v808
    %v819 = vmul.f32 %v808, %v818
    %v820 = vsub.f32 1.0, %v819
    %v821 = vmul.f32 %v818, %v820
    %v822 = vadd.f32 %v818, %v821
    %vm823 = vweird.f32 %v808
    %vm824 = vweird.f32 %v818
    %vm825 = vmor %vm823, %vm824
    %v826 = vsel %vm825, %v818, %v822
    %v827 = vand.u32 2147483647, %v808
    %vm828 = vcmp.eq.f32.partialorder %v827, 8.507059e+37
    %v829 = vand.u32 %v808, 2147483648
    %v830 = vor.u32 1.1754944e-38, %v829
    %v831 = vsel %vm828, %v830, %v826
    %v832 = vrcp.pop %v811
    %v833 = vmul.f32 %v811, %v832
    %v834 = vsub.f32 1.0, %v833
    %v835 = vmul.f32 %v832, %v834
    %v836 = vadd.f32 %v832, %v835
    %vm837 = vweird.f32 %v811
    %vm838 = vweird.f32 %v832
    %vm839 = vmor %vm837, %vm838
    %v840 = vsel %vm839, %v832, %v836
    %v841 = vand.u32 2147483647, %v811
    %vm842 = vcmp.eq.f32.partialorder %v841, 8.507059e+37
    %v843 = vand.u32 %v811, 2147483648
    %v844 = vor.u32 1.1754944e-38, %v843
    %v845 = vsel %vm842, %v844, %v840
    %v846 = vrcp.pop %v814
    %v847 = vmul.f32 %v814, %v846
    %v848 = vsub.f32 1.0, %v847
    %v849 = vmul.f32 %v846, %v848
    %v850 = vadd.f32 %v846, %v849
    %vm851 = vweird.f32 %v814
    %vm852 = vweird.f32 %v846
    %vm853 = vmor %vm851, %vm852
    %v854 = vsel %vm853, %v846, %v850
    %v855 = vand.u32 2147483647, %v814
    %vm856 = vcmp.eq.f32.partialorder %v855, 8.507059e+37
    %v857 = vand.u32 %v814, 2147483648
    %v858 = vor.u32 1.1754944e-38, %v857
    %v859 = vsel %vm856, %v858, %v854
    %v860 = vrcp.pop %v817
    %v861 = vmul.f32 %v817, %v860
    %v862 = vsub.f32 1.0, %v861
    %v863 = vmul.f32 %v860, %v862
    %v864 = vadd.f32 %v860, %v863
    %vm865 = vweird.f32 %v817
    %vm866 = vweird.f32 %v860
    %vm867 = vmor %vm865, %vm866
    %v868 = vsel %vm867, %v860, %v864
    %v869 = vand.u32 2147483647, %v817
    %vm870 = vcmp.eq.f32.partialorder %v869, 8.507059e+37
    %v871 = vand.u32 %v817, 2147483648
    %v872 = vor.u32 1.1754944e-38, %v871
    %v873 = vsel %vm870, %v872, %v868
    %v874 = vmul.f32 %v799, %v831
    %v875 = vmul.f32 %v801, %v845
    %v876 = vmul.f32 %v803, %v859
    %v877 = vmul.f32 %v805, %v873
    %v879 = vsel %vm669, %v874, 0
    %881 = vmatpush.msra.mxu0 0.0
    %882 = vmatpush.msra.mxu0 0.0
    %883 = vmatpush.msra.mxu0 0.0
    %884 = vmatpush.msra.mxu0 0.0
    %885 = vmatpush.msra.mxu0 0.0
    %886 = vmatpush.msra.mxu0 0.0
    %887 = vmatpush.msra.mxu0 0.0
    %888 = vmatpush.msra.mxu0 0.0
    %889 = vmatpush.msra.mxu0 0.0
    %890 = vmatpush.msra.mxu0 0.0
    %891 = vmatpush.msra.mxu0 0.0
    %892 = vmatpush.msra.mxu0 0.0
    %893 = vmatpush.msra.mxu0 0.0
    %894 = vmatpush.msra.mxu0 0.0
    %895 = vmatpush.msra.mxu0 0.0
    %896 = vmatpush.msra.mxu0 %v595
    %897 = vmatmul.f32.gmra.mxu0 %v879
    %v898 = vpop.f32.mrf.mxu0
    %v899 = vadd.f32 0.0, %v898
    %900 = vdwg.mxu0
    %v902 = vsel %vm669, %v875, 0
    %904 = vmatpush.msra.mxu0 0.0
    %905 = vmatpush.msra.mxu0 0.0
    %906 = vmatpush.msra.mxu0 0.0
    %907 = vmatpush.msra.mxu0 0.0
    %908 = vmatpush.msra.mxu0 0.0
    %909 = vmatpush.msra.mxu0 0.0
    %910 = vmatpush.msra.mxu0 0.0
    %911 = vmatpush.msra.mxu0 0.0
    %912 = vmatpush.msra.mxu0 0.0
    %913 = vmatpush.msra.mxu0 0.0
    %914 = vmatpush.msra.mxu0 0.0
    %915 = vmatpush.msra.mxu0 0.0
    %916 = vmatpush.msra.mxu0 0.0
    %917 = vmatpush.msra.mxu0 0.0
    %918 = vmatpush.msra.mxu0 0.0
    %919 = vmatpush.msra.mxu0 %v618
    %920 = vmatmul.f32.gmra.mxu0 %v902
    %v921 = vpop.f32.mrf.mxu0
    %v922 = vadd.f32 0.0, %v921
    %923 = vdwg.mxu0
    %v925 = vsel %vm669, %v876, 0
    %927 = vmatpush.msra.mxu0 0.0
    %928 = vmatpush.msra.mxu0 0.0
    %929 = vmatpush.msra.mxu0 0.0
    %930 = vmatpush.msra.mxu0 0.0
    %931 = vmatpush.msra.mxu0 0.0
    %932 = vmatpush.msra.mxu0 0.0
    %933 = vmatpush.msra.mxu0 0.0
    %934 = vmatpush.msra.mxu0 0.0
    %935 = vmatpush.msra.mxu0 0.0
    %936 = vmatpush.msra.mxu0 0.0
    %937 = vmatpush.msra.mxu0 0.0
    %938 = vmatpush.msra.mxu0 0.0
    %939 = vmatpush.msra.mxu0 0.0
    %940 = vmatpush.msra.mxu0 0.0
    %941 = vmatpush.msra.mxu0 0.0
    %942 = vmatpush.msra.mxu0 %v641
    %943 = vmatmul.f32.gmra.mxu0 %v925
    %v944 = vpop.f32.mrf.mxu0
    %v945 = vadd.f32 0.0, %v944
    %946 = vdwg.mxu0
    %v948 = vsel %vm669, %v877, 0
    %950 = vmatpush.msra.mxu0 0.0
    %951 = vmatpush.msra.mxu0 0.0
    %952 = vmatpush.msra.mxu0 0.0
    %953 = vmatpush.msra.mxu0 0.0
    %954 = vmatpush.msra.mxu0 0.0
    %955 = vmatpush.msra.mxu0 0.0
    %956 = vmatpush.msra.mxu0 0.0
    %957 = vmatpush.msra.mxu0 0.0
    %958 = vmatpush.msra.mxu0 0.0
    %959 = vmatpush.msra.mxu0 0.0
    %960 = vmatpush.msra.mxu0 0.0
    %961 = vmatpush.msra.mxu0 0.0
    %962 = vmatpush.msra.mxu0 0.0
    %963 = vmatpush.msra.mxu0 0.0
    %964 = vmatpush.msra.mxu0 0.0
    %965 = vmatpush.msra.mxu0 %v664
    %966 = vmatmul.f32.gmra.mxu0 %v948
    %v967 = vpop.f32.mrf.mxu0
    %v968 = vadd.f32 0.0, %v967
    %969 = vdwg.mxu0
    %v971 = vsel %vm669, %v899, 0
    %973 = vmatpush.msra.mxu0 0.0
    %974 = vmatpush.msra.mxu0 0.0
    %975 = vmatpush.msra.mxu0 0.0
    %976 = vmatpush.msra.mxu0 0.0
    %977 = vmatpush.msra.mxu0 0.0
    %978 = vmatpush.msra.mxu0 0.0
    %979 = vmatpush.msra.mxu0 0.0
    %980 = vmatpush.msra.mxu0 0.0
    %981 = vmatpush.msra.mxu0 0.0
    %982 = vmatpush.msra.mxu0 0.0
    %983 = vmatpush.msra.mxu0 0.0
    %984 = vmatpush.msra.mxu0 0.0
    %985 = vmatpush.msra.mxu0 0.0
    %986 = vmatpush.msra.mxu0 0.0
    %987 = vmatpush.msra.mxu0 0.0
    %988 = vmatpush.msra.mxu0 %v249
    %989 = vmatmul.f32.gmra.mxu0 %v971
    %v990 = vpop.f32.mrf.mxu0
    %v991 = vadd.f32 0.0, %v990
    %992 = vdwg.mxu0
    %v994 = vsel %vm669, %v922, 0
    %996 = vmatpush.msra.mxu0 0.0
    %997 = vmatpush.msra.mxu0 0.0
    %998 = vmatpush.msra.mxu0 0.0
    %999 = vmatpush.msra.mxu0 0.0
    %1000 = vmatpush.msra.mxu0 0.0
    %1001 = vmatpush.msra.mxu0 0.0
    %1002 = vmatpush.msra.mxu0 0.0
    %1003 = vmatpush.msra.mxu0 0.0
    %1004 = vmatpush.msra.mxu0 0.0
    %1005 = vmatpush.msra.mxu0 0.0
    %1006 = vmatpush.msra.mxu0 0.0
    %1007 = vmatpush.msra.mxu0 0.0
    %1008 = vmatpush.msra.mxu0 0.0
    %1009 = vmatpush.msra.mxu0 0.0
    %1010 = vmatpush.msra.mxu0 0.0
    %1011 = vmatpush.msra.mxu0 %v250
    %1012 = vmatmul.f32.gmra.mxu0 %v994
    %v1013 = vpop.f32.mrf.mxu0
    %v1014 = vadd.f32 0.0, %v1013
    %1015 = vdwg.mxu0
    %v1017 = vsel %vm669, %v945, 0
    %1019 = vmatpush.msra.mxu0 0.0
    %1020 = vmatpush.msra.mxu0 0.0
    %1021 = vmatpush.msra.mxu0 0.0
    %1022 = vmatpush.msra.mxu0 0.0
    %1023 = vmatpush.msra.mxu0 0.0
    %1024 = vmatpush.msra.mxu0 0.0
    %1025 = vmatpush.msra.mxu0 0.0
    %1026 = vmatpush.msra.mxu0 0.0
    %1027 = vmatpush.msra.mxu0 0.0
    %1028 = vmatpush.msra.mxu0 0.0
    %1029 = vmatpush.msra.mxu0 0.0
    %1030 = vmatpush.msra.mxu0 0.0
    %1031 = vmatpush.msra.mxu0 0.0
    %1032 = vmatpush.msra.mxu0 0.0
    %1033 = vmatpush.msra.mxu0 0.0
    %1034 = vmatpush.msra.mxu0 %v251
    %1035 = vmatmul.f32.gmra.mxu0 %v1017
    %v1036 = vpop.f32.mrf.mxu0
    %v1037 = vadd.f32 0.0, %v1036
    %1038 = vdwg.mxu0
    %v1040 = vsel %vm669, %v968, 0
    %1042 = vmatpush.msra.mxu0 0.0
    %1043 = vmatpush.msra.mxu0 0.0
    %1044 = vmatpush.msra.mxu0 0.0
    %1045 = vmatpush.msra.mxu0 0.0
    %1046 = vmatpush.msra.mxu0 0.0
    %1047 = vmatpush.msra.mxu0 0.0
    %1048 = vmatpush.msra.mxu0 0.0
    %1049 = vmatpush.msra.mxu0 0.0
    %1050 = vmatpush.msra.mxu0 0.0
    %1051 = vmatpush.msra.mxu0 0.0
    %1052 = vmatpush.msra.mxu0 0.0
    %1053 = vmatpush.msra.mxu0 0.0
    %1054 = vmatpush.msra.mxu0 0.0
    %1055 = vmatpush.msra.mxu0 0.0
    %1056 = vmatpush.msra.mxu0 0.0
    %1057 = vmatpush.msra.mxu0 %v252
    %1058 = vmatmul.f32.gmra.mxu0 %v1040
    %v1059 = vpop.f32.mrf.mxu0
    %v1060 = vadd.f32 0.0, %v1059
    %1061 = vdwg.mxu0
    %v1062 = vsel %vm325, %v991, 0.0
    %v1063 = vsel %vm325, %v1014, 0.0
    %v1064 = vadd.f32 %v1062, %v1063
    %v1065 = vsel %vm325, %v1037, 0.0
    %v1066 = vadd.f32 %v1064, %v1065
    %v1067 = vsel %vm325, %v1060, 0.0
    %v1068 = vadd.f32 %v1066, %v1067
    %v1070 = vsel %vm669, %v414, 0
    %v1073 = vsel %vm669, %v506, 0
    %1075 = vmatpush.xpose.msra.mxu0 0.0
    %1076 = vmatpush.xpose.msra.mxu0 0.0
    %1077 = vmatpush.xpose.msra.mxu0 0.0
    %1078 = vmatpush.xpose.msra.mxu0 0.0
    %1079 = vmatpush.xpose.msra.mxu0 0.0
    %1080 = vmatpush.xpose.msra.mxu0 0.0
    %1081 = vmatpush.xpose.msra.mxu0 0.0
    %1082 = vmatpush.xpose.msra.mxu0 0.0
    %1083 = vmatpush.xpose.msra.mxu0 0.0
    %1084 = vmatpush.xpose.msra.mxu0 0.0
    %1085 = vmatpush.xpose.msra.mxu0 0.0
    %1086 = vmatpush.xpose.msra.mxu0 0.0
    %1087 = vmatpush.xpose.msra.mxu0 0.0
    %1088 = vmatpush.xpose.msra.mxu0 0.0
    %1089 = vmatpush.xpose.msra.mxu0 0.0
    %1090 = vmatpush.xpose.msra.mxu0 %v1073
    %1091 = vmatmul.f32.gmra.mxu0 %v1070
    %v1092 = vpop.f32.mrf.mxu0
    %v1093 = vadd.f32 0.0, %v1092
    %1094 = vdwg.mxu0
    %v1096 = vsel %vm669, %v437, 0
    %v1099 = vsel %vm669, %v529, 0
    %1101 = vmatpush.xpose.msra.mxu0 0.0
    %1102 = vmatpush.xpose.msra.mxu0 0.0
    %1103 = vmatpush.xpose.msra.mxu0 0.0
    %1104 = vmatpush.xpose.msra.mxu0 0.0
    %1105 = vmatpush.xpose.msra.mxu0 0.0
    %1106 = vmatpush.xpose.msra.mxu0 0.0
    %1107 = vmatpush.xpose.msra.mxu0 0.0
    %1108 = vmatpush.xpose.msra.mxu0 0.0
    %1109 = vmatpush.xpose.msra.mxu0 0.0
    %1110 = vmatpush.xpose.msra.mxu0 0.0
    %1111 = vmatpush.xpose.msra.mxu0 0.0
    %1112 = vmatpush.xpose.msra.mxu0 0.0
    %1113 = vmatpush.xpose.msra.mxu0 0.0
    %1114 = vmatpush.xpose.msra.mxu0 0.0
    %1115 = vmatpush.xpose.msra.mxu0 0.0
    %1116 = vmatpush.xpose.msra.mxu0 %v1099
    %1117 = vmatmul.f32.gmra.mxu0 %v1096
    %v1118 = vpop.f32.mrf.mxu0
    %v1119 = vadd.f32 0.0, %v1118
    %1120 = vdwg.mxu0
    %v1122 = vsel %vm669, %v460, 0
    %v1125 = vsel %vm669, %v552, 0
    %1127 = vmatpush.xpose.msra.mxu0 0.0
    %1128 = vmatpush.xpose.msra.mxu0 0.0
    %1129 = vmatpush.xpose.msra.mxu0 0.0
    %1130 = vmatpush.xpose.msra.mxu0 0.0
    %1131 = vmatpush.xpose.msra.mxu0 0.0
    %1132 = vmatpush.xpose.msra.mxu0 0.0
    %1133 = vmatpush.xpose.msra.mxu0 0.0
    %1134 = vmatpush.xpose.msra.mxu0 0.0
    %1135 = vmatpush.xpose.msra.mxu0 0.0
    %1136 = vmatpush.xpose.msra.mxu0 0.0
    %1137 = vmatpush.xpose.msra.mxu0 0.0
    %1138 = vmatpush.xpose.msra.mxu0 0.0
    %1139 = vmatpush.xpose.msra.mxu0 0.0
    %1140 = vmatpush.xpose.msra.mxu0 0.0
    %1141 = vmatpush.xpose.msra.mxu0 0.0
    %1142 = vmatpush.xpose.msra.mxu0 %v1125
    %1143 = vmatmul.f32.gmra.mxu0 %v1122
    %v1144 = vpop.f32.mrf.mxu0
    %v1145 = vadd.f32 0.0, %v1144
    %1146 = vdwg.mxu0
    %v1148 = vsel %vm669, %v483, 0
    %v1151 = vsel %vm669, %v575, 0
    %1153 = vmatpush.xpose.msra.mxu0 0.0
    %1154 = vmatpush.xpose.msra.mxu0 0.0
    %1155 = vmatpush.xpose.msra.mxu0 0.0
    %1156 = vmatpush.xpose.msra.mxu0 0.0
    %1157 = vmatpush.xpose.msra.mxu0 0.0
    %1158 = vmatpush.xpose.msra.mxu0 0.0
    %1159 = vmatpush.xpose.msra.mxu0 0.0
    %1160 = vmatpush.xpose.msra.mxu0 0.0
    %1161 = vmatpush.xpose.msra.mxu0 0.0
    %1162 = vmatpush.xpose.msra.mxu0 0.0
    %1163 = vmatpush.xpose.msra.mxu0 0.0
    %1164 = vmatpush.xpose.msra.mxu0 0.0
    %1165 = vmatpush.xpose.msra.mxu0 0.0
    %1166 = vmatpush.xpose.msra.mxu0 0.0
    %1167 = vmatpush.xpose.msra.mxu0 0.0
    %1168 = vmatpush.xpose.msra.mxu0 %v1151
    %1169 = vmatmul.f32.gmra.mxu0 %v1148
    %v1170 = vpop.f32.mrf.mxu0
    %v1171 = vadd.f32 0.0, %v1170
    %1172 = vdwg.mxu0
    %v1173 = vmul.f32 %v1093, 0.35355338
    %v1174 = vmul.f32 %v1119, 0.35355338
    %v1175 = vmul.f32 %v1145, 0.35355338
    %v1176 = vmul.f32 %v1171, 0.35355338
    %v1177 = vadd.f32 %v1173, %v192
    %v1178 = vadd.f32 %v1174, %v192
    %v1179 = vadd.f32 %v1175, %v192
    %v1180 = vadd.f32 %v1176, %v192
    %v1181 = vsel %vm669, %v1177, -inf
    %1182 = vmax.xlane.f32.xlu0 %v1181
    %v1183 = vpop.xlane.xlu0 %1182
    %v1184 = vsel %vm669, %v1178, -inf
    %1185 = vmax.xlane.f32.xlu0 %v1184
    %v1186 = vpop.xlane.xlu0 %1185
    %v1187 = vsel %vm669, %v1179, -inf
    %1188 = vmax.xlane.f32.xlu0 %v1187
    %v1189 = vpop.xlane.xlu0 %1188
    %v1190 = vsel %vm669, %v1180, -inf
    %1191 = vmax.xlane.f32.xlu0 %v1190
    %v1192 = vpop.xlane.xlu0 %1191
    %v1193 = vsub.f32 %v1177, %v1183
    %v1194 = vsub.f32 %v1178, %v1186
    %v1195 = vsub.f32 %v1179, %v1189
    %v1196 = vsub.f32 %v1180, %v1192
    %v1197 = vmul.f32 %v1193, 1.442695
    %v1198 = vpow.pop %v1197
    %v1199 = vmul.f32 %v1194, 1.442695
    %v1200 = vpow.pop %v1199
    %v1201 = vmul.f32 %v1195, 1.442695
    %v1202 = vpow.pop %v1201
    %v1203 = vmul.f32 %v1196, 1.442695
    %v1204 = vpow.pop %v1203
    %v1205 = vsel %vm669, %v1198, 0.0
    %1206 = vadd.xlane.f32.xlu0 %v1205
    %v1207 = vpop.xlane.xlu0 %1206
    %v1208 = vsel %vm669, %v1200, 0.0
    %1209 = vadd.xlane.f32.xlu0 %v1208
    %v1210 = vpop.xlane.xlu0 %1209
    %v1211 = vsel %vm669, %v1202, 0.0
    %1212 = vadd.xlane.f32.xlu0 %v1211
    %v1213 = vpop.xlane.xlu0 %1212
    %v1214 = vsel %vm669, %v1204, 0.0
    %1215 = vadd.xlane.f32.xlu0 %v1214
    %v1216 = vpop.xlane.xlu0 %1215
    %v1217 = vrcp.pop %v1207
    %v1218 = vmul.f32 %v1207, %v1217
    %v1219 = vsub.f32 1.0, %v1218
    %v1220 = vmul.f32 %v1217, %v1219
    %v1221 = vadd.f32 %v1217, %v1220
    %vm1222 = vweird.f32 %v1207
    %vm1223 = vweird.f32 %v1217
    %vm1224 = vmor %vm1222, %vm1223
    %v1225 = vsel %vm1224, %v1217, %v1221
    %v1226 = vand.u32 2147483647, %v1207
    %vm1227 = vcmp.eq.f32.partialorder %v1226, 8.507059e+37
    %v1228 = vand.u32 %v1207, 2147483648
    %v1229 = vor.u32 1.1754944e-38, %v1228
    %v1230 = vsel %vm1227, %v1229, %v1225
    %v1231 = vrcp.pop %v1210
    %v1232 = vmul.f32 %v1210, %v1231
    %v1233 = vsub.f32 1.0, %v1232
    %v1234 = vmul.f32 %v1231, %v1233
    %v1235 = vadd.f32 %v1231, %v1234
    %vm1236 = vweird.f32 %v1210
    %vm1237 = vweird.f32 %v1231
    %vm1238 = vmor %vm1236, %vm1237
    %v1239 = vsel %vm1238, %v1231, %v1235
    %v1240 = vand.u32 2147483647, %v1210
    %vm1241 = vcmp.eq.f32.partialorder %v1240, 8.507059e+37
    %v1242 = vand.u32 %v1210, 2147483648
    %v1243 = vor.u32 1.1754944e-38, %v1242
    %v1244 = vsel %vm1241, %v1243, %v1239
    %v1245 = vrcp.pop %v1213
    %v1246 = vmul.f32 %v1213, %v1245
    %v1247 = vsub.f32 1.0, %v1246
    %v1248 = vmul.f32 %v1245, %v1247
    %v1249 = vadd.f32 %v1245, %v1248
    %vm1250 = vweird.f32 %v1213
    %vm1251 = vweird.f32 %v1245
    %vm1252 = vmor %vm1250, %vm1251
    %v1253 = vsel %vm1252, %v1245, %v1249
    %v1254 = vand.u32 2147483647, %v1213
    %vm1255 = vcmp.eq.f32.partialorder %v1254, 8.507059e+37
    %v1256 = vand.u32 %v1213, 2147483648
    %v1257 = vor.u32 1.1754944e-38, %v1256
    %v1258 = vsel %vm1255, %v1257, %v1253
    %v1259 = vrcp.pop %v1216
    %v1260 = vmul.f32 %v1216, %v1259
    %v1261 = vsub.f32 1.0, %v1260
    %v1262 = vmul.f32 %v1259, %v1261
    %v1263 = vadd.f32 %v1259, %v1262
    %vm1264 = vweird.f32 %v1216
    %vm1265 = vweird.f32 %v1259
    %vm1266 = vmor %vm1264, %vm1265
    %v1267 = vsel %vm1266, %v1259, %v1263
    %v1268 = vand.u32 2147483647, %v1216
    %vm1269 = vcmp.eq.f32.partialorder %v1268, 8.507059e+37
    %v1270 = vand.u32 %v1216, 2147483648
    %v1271 = vor.u32 1.1754944e-38, %v1270
    %v1272 = vsel %vm1269, %v1271, %v1267
    %v1273 = vmul.f32 %v1198, %v1230
    %v1274 = vmul.f32 %v1200, %v1244
    %v1275 = vmul.f32 %v1202, %v1258
    %v1276 = vmul.f32 %v1204, %v1272
    %v1278 = vsel %vm669, %v1273, 0
    %1280 = vmatpush.msra.mxu0 0.0
    %1281 = vmatpush.msra.mxu0 0.0
    %1282 = vmatpush.msra.mxu0 0.0
    %1283 = vmatpush.msra.mxu0 0.0
    %1284 = vmatpush.msra.mxu0 0.0
    %1285 = vmatpush.msra.mxu0 0.0
    %1286 = vmatpush.msra.mxu0 0.0
    %1287 = vmatpush.msra.mxu0 0.0
    %1288 = vmatpush.msra.mxu0 0.0
    %1289 = vmatpush.msra.mxu0 0.0
    %1290 = vmatpush.msra.mxu0 0.0
    %1291 = vmatpush.msra.mxu0 0.0
    %1292 = vmatpush.msra.mxu0 0.0
    %1293 = vmatpush.msra.mxu0 0.0
    %1294 = vmatpush.msra.mxu0 0.0
    %1295 = vmatpush.msra.mxu0 %v598
    %1296 = vmatmul.f32.gmra.mxu0 %v1278
    %v1297 = vpop.f32.mrf.mxu0
    %v1298 = vadd.f32 0.0, %v1297
    %1299 = vdwg.mxu0
    %v1301 = vsel %vm669, %v1274, 0
    %1303 = vmatpush.msra.mxu0 0.0
    %1304 = vmatpush.msra.mxu0 0.0
    %1305 = vmatpush.msra.mxu0 0.0
    %1306 = vmatpush.msra.mxu0 0.0
    %1307 = vmatpush.msra.mxu0 0.0
    %1308 = vmatpush.msra.mxu0 0.0
    %1309 = vmatpush.msra.mxu0 0.0
    %1310 = vmatpush.msra.mxu0 0.0
    %1311 = vmatpush.msra.mxu0 0.0
    %1312 = vmatpush.msra.mxu0 0.0
    %1313 = vmatpush.msra.mxu0 0.0
    %1314 = vmatpush.msra.mxu0 0.0
    %1315 = vmatpush.msra.mxu0 0.0
    %1316 = vmatpush.msra.mxu0 0.0
    %1317 = vmatpush.msra.mxu0 0.0
    %1318 = vmatpush.msra.mxu0 %v621
    %1319 = vmatmul.f32.gmra.mxu0 %v1301
    %v1320 = vpop.f32.mrf.mxu0
    %v1321 = vadd.f32 0.0, %v1320
    %1322 = vdwg.mxu0
    %v1324 = vsel %vm669, %v1275, 0
    %1326 = vmatpush.msra.mxu0 0.0
    %1327 = vmatpush.msra.mxu0 0.0
    %1328 = vmatpush.msra.mxu0 0.0
    %1329 = vmatpush.msra.mxu0 0.0
    %1330 = vmatpush.msra.mxu0 0.0
    %1331 = vmatpush.msra.mxu0 0.0
    %1332 = vmatpush.msra.mxu0 0.0
    %1333 = vmatpush.msra.mxu0 0.0
    %1334 = vmatpush.msra.mxu0 0.0
    %1335 = vmatpush.msra.mxu0 0.0
    %1336 = vmatpush.msra.mxu0 0.0
    %1337 = vmatpush.msra.mxu0 0.0
    %1338 = vmatpush.msra.mxu0 0.0
    %1339 = vmatpush.msra.mxu0 0.0
    %1340 = vmatpush.msra.mxu0 0.0
    %1341 = vmatpush.msra.mxu0 %v644
    %1342 = vmatmul.f32.gmra.mxu0 %v1324
    %v1343 = vpop.f32.mrf.mxu0
    %v1344 = vadd.f32 0.0, %v1343
    %1345 = vdwg.mxu0
    %v1347 = vsel %vm669, %v1276, 0
    %1349 = vmatpush.msra.mxu0 0.0
    %1350 = vmatpush.msra.mxu0 0.0
    %1351 = vmatpush.msra.mxu0 0.0
    %1352 = vmatpush.msra.mxu0 0.0
    %1353 = vmatpush.msra.mxu0 0.0
    %1354 = vmatpush.msra.mxu0 0.0
    %1355 = vmatpush.msra.mxu0 0.0
    %1356 = vmatpush.msra.mxu0 0.0
    %1357 = vmatpush.msra.mxu0 0.0
    %1358 = vmatpush.msra.mxu0 0.0
    %1359 = vmatpush.msra.mxu0 0.0
    %1360 = vmatpush.msra.mxu0 0.0
    %1361 = vmatpush.msra.mxu0 0.0
    %1362 = vmatpush.msra.mxu0 0.0
    %1363 = vmatpush.msra.mxu0 0.0
    %1364 = vmatpush.msra.mxu0 %v667
    %1365 = vmatmul.f32.gmra.mxu0 %v1347
    %v1366 = vpop.f32.mrf.mxu0
    %v1367 = vadd.f32 0.0, %v1366
    %1368 = vdwg.mxu0
    %v1370 = vsel %vm669, %v1298, 0
    %1372 = vmatpush.msra.mxu0 0.0
    %1373 = vmatpush.msra.mxu0 0.0
    %1374 = vmatpush.msra.mxu0 0.0
    %1375 = vmatpush.msra.mxu0 0.0
    %1376 = vmatpush.msra.mxu0 0.0
    %1377 = vmatpush.msra.mxu0 0.0
    %1378 = vmatpush.msra.mxu0 0.0
    %1379 = vmatpush.msra.mxu0 0.0
    %1380 = vmatpush.msra.mxu0 0.0
    %1381 = vmatpush.msra.mxu0 0.0
    %1382 = vmatpush.msra.mxu0 0.0
    %1383 = vmatpush.msra.mxu0 0.0
    %1384 = vmatpush.msra.mxu0 0.0
    %1385 = vmatpush.msra.mxu0 0.0
    %1386 = vmatpush.msra.mxu0 0.0
    %1387 = vmatpush.msra.mxu0 %v249
    %1388 = vmatmul.f32.gmra.mxu0 %v1370
    %v1389 = vpop.f32.mrf.mxu0
    %v1390 = vadd.f32 0.0, %v1389
    %1391 = vdwg.mxu0
    %v1393 = vsel %vm669, %v1321, 0
    %1395 = vmatpush.msra.mxu0 0.0
    %1396 = vmatpush.msra.mxu0 0.0
    %1397 = vmatpush.msra.mxu0 0.0
    %1398 = vmatpush.msra.mxu0 0.0
    %1399 = vmatpush.msra.mxu0 0.0
    %1400 = vmatpush.msra.mxu0 0.0
    %1401 = vmatpush.msra.mxu0 0.0
    %1402 = vmatpush.msra.mxu0 0.0
    %1403 = vmatpush.msra.mxu0 0.0
    %1404 = vmatpush.msra.mxu0 0.0
    %1405 = vmatpush.msra.mxu0 0.0
    %1406 = vmatpush.msra.mxu0 0.0
    %1407 = vmatpush.msra.mxu0 0.0
    %1408 = vmatpush.msra.mxu0 0.0
    %1409 = vmatpush.msra.mxu0 0.0
    %1410 = vmatpush.msra.mxu0 %v250
    %1411 = vmatmul.f32.gmra.mxu0 %v1393
    %v1412 = vpop.f32.mrf.mxu0
    %v1413 = vadd.f32 0.0, %v1412
    %1414 = vdwg.mxu0
    %v1416 = vsel %vm669, %v1344, 0
    %1418 = vmatpush.msra.mxu0 0.0
    %1419 = vmatpush.msra.mxu0 0.0
    %1420 = vmatpush.msra.mxu0 0.0
    %1421 = vmatpush.msra.mxu0 0.0
    %1422 = vmatpush.msra.mxu0 0.0
    %1423 = vmatpush.msra.mxu0 0.0
    %1424 = vmatpush.msra.mxu0 0.0
    %1425 = vmatpush.msra.mxu0 0.0
    %1426 = vmatpush.msra.mxu0 0.0
    %1427 = vmatpush.msra.mxu0 0.0
    %1428 = vmatpush.msra.mxu0 0.0
    %1429 = vmatpush.msra.mxu0 0.0
    %1430 = vmatpush.msra.mxu0 0.0
    %1431 = vmatpush.msra.mxu0 0.0
    %1432 = vmatpush.msra.mxu0 0.0
    %1433 = vmatpush.msra.mxu0 %v251
    %1434 = vmatmul.f32.gmra.mxu0 %v1416
    %v1435 = vpop.f32.mrf.mxu0
    %v1436 = vadd.f32 0.0, %v1435
    %1437 = vdwg.mxu0
    %v1439 = vsel %vm669, %v1367, 0
    %1441 = vmatpush.msra.mxu0 0.0
    %1442 = vmatpush.msra.mxu0 0.0
    %1443 = vmatpush.msra.mxu0 0.0
    %1444 = vmatpush.msra.mxu0 0.0
    %1445 = vmatpush.msra.mxu0 0.0
    %1446 = vmatpush.msra.mxu0 0.0
    %1447 = vmatpush.msra.mxu0 0.0
    %1448 = vmatpush.msra.mxu0 0.0
    %1449 = vmatpush.msra.mxu0 0.0
    %1450 = vmatpush.msra.mxu0 0.0
    %1451 = vmatpush.msra.mxu0 0.0
    %1452 = vmatpush.msra.mxu0 0.0
    %1453 = vmatpush.msra.mxu0 0.0
    %1454 = vmatpush.msra.mxu0 0.0
    %1455 = vmatpush.msra.mxu0 0.0
    %1456 = vmatpush.msra.mxu0 %v252
    %1457 = vmatmul.f32.gmra.mxu0 %v1439
    %v1458 = vpop.f32.mrf.mxu0
    %v1459 = vadd.f32 0.0, %v1458
    %1460 = vdwg.mxu0
    %v1461 = vsel %vm325, %v1390, 0.0
    %v1462 = vsel %vm325, %v1413, 0.0
    %v1463 = vadd.f32 %v1461, %v1462
    %v1464 = vsel %vm325, %v1436, 0.0
    %v1465 = vadd.f32 %v1463, %v1464
    %v1466 = vsel %vm325, %v1459, 0.0
    %v1467 = vadd.f32 %v1465, %v1466
    %v1469 = vperm.slane %v253, 0
    %v1471 = vadd.f32 %v1068, %v1469
    %v1472 = vadd.f32 %v1467, %v1469
    %v1473 = vadd.f32 %v1471, %v183
    %v1474 = vadd.f32 %v1472, %v184
    %v1475 = vsel %vm325, %v1473, 0.0
    %1476 = vadd.xlane.f32.xlu0 %v1475
    %v1477 = vpop.xlane.xlu0 %1476
    %v1478 = vsel %vm325, %v1474, 0.0
    %1479 = vadd.xlane.f32.xlu0 %v1478
    %v1480 = vpop.xlane.xlu0 %1479
    %v1481 = vmul.f32 %v1477, %v338
    %v1482 = vmul.f32 %v1480, %v338
    %v1483 = vsub.f32 %v1473, %v1481
    %v1484 = vsub.f32 %v1474, %v1482
    %v1485 = vmul.f32 %v1483, %v1483
    %v1486 = vmul.f32 %v1484, %v1484
    %v1487 = vsel %vm325, %v1485, 0.0
    %1488 = vadd.xlane.f32.xlu0 %v1487
    %v1489 = vpop.xlane.xlu0 %1488
    %v1490 = vsel %vm325, %v1486, 0.0
    %1491 = vadd.xlane.f32.xlu0 %v1490
    %v1492 = vpop.xlane.xlu0 %1491
    %v1493 = vmul.f32 %v1489, %v338
    %v1494 = vmul.f32 %v1492, %v338
    %v1495 = vadd.f32 %v1493, 1e-05
    %v1496 = vadd.f32 %v1494, 1e-05
    %v1497 = vrsqrt.pop %v1495
    %v1498 = vmul.f32 %v1497, %v1495
    %v1499 = vmul.f32 %v1498, %v1497
    %v1500 = vmul.f32 0.5, %v1499
    %v1501 = vsub.f32 1.5, %v1500
    %v1502 = vmul.f32 %v1497, %v1501
    %vm1503 = vweird.f32 %v1495
    %vm1504 = vweird.f32 %v1497
    %vm1505 = vmor %vm1503, %vm1504
    %v1506 = vsel %vm1505, %v1497, %v1502
    %v1507 = vrsqrt.pop %v1496
    %v1508 = vmul.f32 %v1507, %v1496
    %v1509 = vmul.f32 %v1508, %v1507
    %v1510 = vmul.f32 0.5, %v1509
    %v1511 = vsub.f32 1.5, %v1510
    %v1512 = vmul.f32 %v1507, %v1511
    %vm1513 = vweird.f32 %v1496
    %vm1514 = vweird.f32 %v1507
    %vm1515 = vmor %vm1513, %vm1514
    %v1516 = vsel %vm1515, %v1507, %v1512
    %v1517 = vmul.f32 %v1483, %v1506
    %v1518 = vmul.f32 %v1484, %v1516
    %v1520 = vperm.slane %v254, 0
    %v1522 = vmul.f32 %v1517, %v1520
    %v1523 = vmul.f32 %v1518, %v1520
    %v1525 = vperm.slane %v255, 0
    %v1527 = vadd.f32 %v1522, %v1525
    %v1528 = vadd.f32 %v1523, %v1525
    %v1529 = vsel %vm325, %v185, 0.0
    %1530 = vadd.xlane.f32.xlu0 %v1529
    %v1531 = vpop.xlane.xlu0 %1530
    %v1532 = vsel %vm325, %v186, 0.0
    %1533 = vadd.xlane.f32.xlu0 %v1532
    %v1534 = vpop.xlane.xlu0 %1533
    %v1535 = vmul.f32 %v1531, %v338
    %v1536 = vmul.f32 %v1534, %v338
    %v1537 = vsub.f32 %v185, %v1535
    %v1538 = vsub.f32 %v186, %v1536
    %v1539 = vmul.f32 %v1537, %v1537
    %v1540 = vmul.f32 %v1538, %v1538
    %v1541 = vsel %vm325, %v1539, 0.0
    %1542 = vadd.xlane.f32.xlu0 %v1541
    %v1543 = vpop.xlane.xlu0 %1542
    %v1544 = vsel %vm325, %v1540, 0.0
    %1545 = vadd.xlane.f32.xlu0 %v1544
    %v1546 = vpop.xlane.xlu0 %1545
    %v1547 = vmul.f32 %v1543, %v338
    %v1548 = vmul.f32 %v1546, %v338
    %v1549 = vadd.f32 %v1547, 1e-05
    %v1550 = vadd.f32 %v1548, 1e-05
    %v1551 = vrsqrt.pop %v1549
    %v1552 = vmul.f32 %v1551, %v1549
    %v1553 = vmul.f32 %v1552, %v1551
    %v1554 = vmul.f32 0.5, %v1553
    %v1555 = vsub.f32 1.5, %v1554
    %v1556 = vmul.f32 %v1551, %v1555
    %vm1557 = vweird.f32 %v1549
    %vm1558 = vweird.f32 %v1551
    %vm1559 = vmor %vm1557, %vm1558
    %v1560 = vsel %vm1559, %v1551, %v1556
    %v1561 = vrsqrt.pop %v1550
    %v1562 = vmul.f32 %v1561, %v1550
    %v1563 = vmul.f32 %v1562, %v1561
    %v1564 = vmul.f32 0.5, %v1563
    %v1565 = vsub.f32 1.5, %v1564
    %v1566 = vmul.f32 %v1561, %v1565
    %vm1567 = vweird.f32 %v1550
    %vm1568 = vweird.f32 %v1561
    %vm1569 = vmor %vm1567, %vm1568
    %v1570 = vsel %vm1569, %v1561, %v1566
    %v1571 = vmul.f32 %v1537, %v1560
    %v1572 = vmul.f32 %v1538, %v1570
    %v1573 = vmul.f32 %v1571, %v1520
    %v1574 = vmul.f32 %v1572, %v1520
    %v1575 = vadd.f32 %v1573, %v1525
    %v1576 = vadd.f32 %v1574, %v1525
    %v1578 = vsel %vm325, %v1527, 0
    %v1581 = vsel %vm325, %v1528, 0
    %1583 = vmatpush.msra.mxu0 0.0
    %1584 = vmatpush.msra.mxu0 0.0
    %1585 = vmatpush.msra.mxu0 0.0
    %1586 = vmatpush.msra.mxu0 0.0
    %1587 = vmatpush.msra.mxu0 0.0
    %1588 = vmatpush.msra.mxu0 0.0
    %1589 = vmatpush.msra.mxu0 0.0
    %1590 = vmatpush.msra.mxu0 0.0
    %1591 = vmatpush.msra.mxu0 0.0
    %1592 = vmatpush.msra.mxu0 0.0
    %1593 = vmatpush.msra.mxu0 0.0
    %1594 = vmatpush.msra.mxu0 0.0
    %1595 = vmatpush.msra.mxu0 %v259
    %1596 = vmatpush.msra.mxu0 %v258
    %1597 = vmatpush.msra.mxu0 %v257
    %1598 = vmatpush.msra.mxu0 %v256
    %1599 = vmatmul.f32.gmra.mxu0 %v1578
    %v1600 = vpop.f32.mrf.mxu0
    %v1601 = vadd.f32 0.0, %v1600
    %1602 = vmatmul.f32.gmra.mxu0 %v1581
    %v1603 = vpop.f32.mrf.mxu0
    %v1604 = vadd.f32 0.0, %v1603
    %1605 = vdwg.mxu0
    %1606 = vmatpush.msra.mxu0 0.0
    %1607 = vmatpush.msra.mxu0 0.0
    %1608 = vmatpush.msra.mxu0 0.0
    %1609 = vmatpush.msra.mxu0 0.0
    %1610 = vmatpush.msra.mxu0 0.0
    %1611 = vmatpush.msra.mxu0 0.0
    %1612 = vmatpush.msra.mxu0 0.0
    %1613 = vmatpush.msra.mxu0 0.0
    %1614 = vmatpush.msra.mxu0 0.0
    %1615 = vmatpush.msra.mxu0 0.0
    %1616 = vmatpush.msra.mxu0 0.0
    %1617 = vmatpush.msra.mxu0 0.0
    %1618 = vmatpush.msra.mxu0 %v263
    %1619 = vmatpush.msra.mxu0 %v262
    %1620 = vmatpush.msra.mxu0 %v261
    %1621 = vmatpush.msra.mxu0 %v260
    %1622 = vmatmul.f32.gmra.mxu0 %v1578
    %v1623 = vpop.f32.mrf.mxu0
    %v1624 = vadd.f32 0.0, %v1623
    %1625 = vmatmul.f32.gmra.mxu0 %v1581
    %v1626 = vpop.f32.mrf.mxu0
    %v1627 = vadd.f32 0.0, %v1626
    %1628 = vdwg.mxu0
    %1629 = vmatpush.msra.mxu0 0.0
    %1630 = vmatpush.msra.mxu0 0.0
    %1631 = vmatpush.msra.mxu0 0.0
    %1632 = vmatpush.msra.mxu0 0.0
    %1633 = vmatpush.msra.mxu0 0.0
    %1634 = vmatpush.msra.mxu0 0.0
    %1635 = vmatpush.msra.mxu0 0.0
    %1636 = vmatpush.msra.mxu0 0.0
    %1637 = vmatpush.msra.mxu0 0.0
    %1638 = vmatpush.msra.mxu0 0.0
    %1639 = vmatpush.msra.mxu0 0.0
    %1640 = vmatpush.msra.mxu0 0.0
    %1641 = vmatpush.msra.mxu0 %v267
    %1642 = vmatpush.msra.mxu0 %v266
    %1643 = vmatpush.msra.mxu0 %v265
    %1644 = vmatpush.msra.mxu0 %v264
    %1645 = vmatmul.f32.gmra.mxu0 %v1578
    %v1646 = vpop.f32.mrf.mxu0
    %v1647 = vadd.f32 0.0, %v1646
    %1648 = vmatmul.f32.gmra.mxu0 %v1581
    %v1649 = vpop.f32.mrf.mxu0
    %v1650 = vadd.f32 0.0, %v1649
    %1651 = vdwg.mxu0
    %1652 = vmatpush.msra.mxu0 0.0
    %1653 = vmatpush.msra.mxu0 0.0
    %1654 = vmatpush.msra.mxu0 0.0
    %1655 = vmatpush.msra.mxu0 0.0
    %1656 = vmatpush.msra.mxu0 0.0
    %1657 = vmatpush.msra.mxu0 0.0
    %1658 = vmatpush.msra.mxu0 0.0
    %1659 = vmatpush.msra.mxu0 0.0
    %1660 = vmatpush.msra.mxu0 0.0
    %1661 = vmatpush.msra.mxu0 0.0
    %1662 = vmatpush.msra.mxu0 0.0
    %1663 = vmatpush.msra.mxu0 0.0
    %1664 = vmatpush.msra.mxu0 %v271
    %1665 = vmatpush.msra.mxu0 %v270
    %1666 = vmatpush.msra.mxu0 %v269
    %1667 = vmatpush.msra.mxu0 %v268
    %1668 = vmatmul.f32.gmra.mxu0 %v1578
    %v1669 = vpop.f32.mrf.mxu0
    %v1670 = vadd.f32 0.0, %v1669
    %1671 = vmatmul.f32.gmra.mxu0 %v1581
    %v1672 = vpop.f32.mrf.mxu0
    %v1673 = vadd.f32 0.0, %v1672
    %1674 = vdwg.mxu0
    %v1676 = vsel %vm325, %v1575, 0
    %v1679 = vsel %vm325, %v1576, 0
    %1681 = vmatpush.msra.mxu0 0.0
    %1682 = vmatpush.msra.mxu0 0.0
    %1683 = vmatpush.msra.mxu0 0.0
    %1684 = vmatpush.msra.mxu0 0.0
    %1685 = vmatpush.msra.mxu0 0.0
    %1686 = vmatpush.msra.mxu0 0.0
    %1687 = vmatpush.msra.mxu0 0.0
    %1688 = vmatpush.msra.mxu0 0.0
    %1689 = vmatpush.msra.mxu0 0.0
    %1690 = vmatpush.msra.mxu0 0.0
    %1691 = vmatpush.msra.mxu0 0.0
    %1692 = vmatpush.msra.mxu0 0.0
    %1693 = vmatpush.msra.mxu0 %v275
    %1694 = vmatpush.msra.mxu0 %v274
    %1695 = vmatpush.msra.mxu0 %v273
    %1696 = vmatpush.msra.mxu0 %v272
    %1697 = vmatmul.f32.gmra.mxu0 %v1676
    %v1698 = vpop.f32.mrf.mxu0
    %v1699 = vadd.f32 0.0, %v1698
    %1700 = vmatmul.f32.gmra.mxu0 %v1679
    %v1701 = vpop.f32.mrf.mxu0
    %v1702 = vadd.f32 0.0, %v1701
    %1703 = vdwg.mxu0
    %1704 = vmatpush.msra.mxu0 0.0
    %1705 = vmatpush.msra.mxu0 0.0
    %1706 = vmatpush.msra.mxu0 0.0
    %1707 = vmatpush.msra.mxu0 0.0
    %1708 = vmatpush.msra.mxu0 0.0
    %1709 = vmatpush.msra.mxu0 0.0
    %1710 = vmatpush.msra.mxu0 0.0
    %1711 = vmatpush.msra.mxu0 0.0
    %1712 = vmatpush.msra.mxu0 0.0
    %1713 = vmatpush.msra.mxu0 0.0
    %1714 = vmatpush.msra.mxu0 0.0
    %1715 = vmatpush.msra.mxu0 0.0
    %1716 = vmatpush.msra.mxu0 %v279
    %1717 = vmatpush.msra.mxu0 %v278
    %1718 = vmatpush.msra.mxu0 %v277
    %1719 = vmatpush.msra.mxu0 %v276
    %1720 = vmatmul.f32.gmra.mxu0 %v1676
    %v1721 = vpop.f32.mrf.mxu0
    %v1722 = vadd.f32 0.0, %v1721
    %1723 = vmatmul.f32.gmra.mxu0 %v1679
    %v1724 = vpop.f32.mrf.mxu0
    %v1725 = vadd.f32 0.0, %v1724
    %1726 = vdwg.mxu0
    %1727 = vmatpush.msra.mxu0 0.0
    %1728 = vmatpush.msra.mxu0 0.0
    %1729 = vmatpush.msra.mxu0 0.0
    %1730 = vmatpush.msra.mxu0 0.0
    %1731 = vmatpush.msra.mxu0 0.0
    %1732 = vmatpush.msra.mxu0 0.0
    %1733 = vmatpush.msra.mxu0 0.0
    %1734 = vmatpush.msra.mxu0 0.0
    %1735 = vmatpush.msra.mxu0 0.0
    %1736 = vmatpush.msra.mxu0 0.0
    %1737 = vmatpush.msra.mxu0 0.0
    %1738 = vmatpush.msra.mxu0 0.0
    %1739 = vmatpush.msra.mxu0 %v283
    %1740 = vmatpush.msra.mxu0 %v282
    %1741 = vmatpush.msra.mxu0 %v281
    %1742 = vmatpush.msra.mxu0 %v280
    %1743 = vmatmul.f32.gmra.mxu0 %v1676
    %v1744 = vpop.f32.mrf.mxu0
    %v1745 = vadd.f32 0.0, %v1744
    %1746 = vmatmul.f32.gmra.mxu0 %v1679
    %v1747 = vpop.f32.mrf.mxu0
    %v1748 = vadd.f32 0.0, %v1747
    %1749 = vdwg.mxu0
    %1750 = vmatpush.msra.mxu0 0.0
    %1751 = vmatpush.msra.mxu0 0.0
    %1752 = vmatpush.msra.mxu0 0.0
    %1753 = vmatpush.msra.mxu0 0.0
    %1754 = vmatpush.msra.mxu0 0.0
    %1755 = vmatpush.msra.mxu0 0.0
    %1756 = vmatpush.msra.mxu0 0.0
    %1757 = vmatpush.msra.mxu0 0.0
    %1758 = vmatpush.msra.mxu0 0.0
    %1759 = vmatpush.msra.mxu0 0.0
    %1760 = vmatpush.msra.mxu0 0.0
    %1761 = vmatpush.msra.mxu0 0.0
    %1762 = vmatpush.msra.mxu0 %v287
    %1763 = vmatpush.msra.mxu0 %v286
    %1764 = vmatpush.msra.mxu0 %v285
    %1765 = vmatpush.msra.mxu0 %v284
    %1766 = vmatmul.f32.gmra.mxu0 %v1676
    %v1767 = vpop.f32.mrf.mxu0
    %v1768 = vadd.f32 0.0, %v1767
    %1769 = vmatmul.f32.gmra.mxu0 %v1679
    %v1770 = vpop.f32.mrf.mxu0
    %v1771 = vadd.f32 0.0, %v1770
    %1772 = vdwg.mxu0
    %1773 = vmatpush.msra.mxu0 0.0
    %1774 = vmatpush.msra.mxu0 0.0
    %1775 = vmatpush.msra.mxu0 0.0
    %1776 = vmatpush.msra.mxu0 0.0
    %1777 = vmatpush.msra.mxu0 0.0
    %1778 = vmatpush.msra.mxu0 0.0
    %1779 = vmatpush.msra.mxu0 0.0
    %1780 = vmatpush.msra.mxu0 0.0
    %1781 = vmatpush.msra.mxu0 0.0
    %1782 = vmatpush.msra.mxu0 0.0
    %1783 = vmatpush.msra.mxu0 0.0
    %1784 = vmatpush.msra.mxu0 0.0
    %1785 = vmatpush.msra.mxu0 %v291
    %1786 = vmatpush.msra.mxu0 %v290
    %1787 = vmatpush.msra.mxu0 %v289
    %1788 = vmatpush.msra.mxu0 %v288
    %1789 = vmatmul.f32.gmra.mxu0 %v1676
    %v1790 = vpop.f32.mrf.mxu0
    %v1791 = vadd.f32 0.0, %v1790
    %1792 = vmatmul.f32.gmra.mxu0 %v1679
    %v1793 = vpop.f32.mrf.mxu0
    %v1794 = vadd.f32 0.0, %v1793
    %1795 = vdwg.mxu0
    %1796 = vmatpush.msra.mxu0 0.0
    %1797 = vmatpush.msra.mxu0 0.0
    %1798 = vmatpush.msra.mxu0 0.0
    %1799 = vmatpush.msra.mxu0 0.0
    %1800 = vmatpush.msra.mxu0 0.0
    %1801 = vmatpush.msra.mxu0 0.0
    %1802 = vmatpush.msra.mxu0 0.0
    %1803 = vmatpush.msra.mxu0 0.0
    %1804 = vmatpush.msra.mxu0 0.0
    %1805 = vmatpush.msra.mxu0 0.0
    %1806 = vmatpush.msra.mxu0 0.0
    %1807 = vmatpush.msra.mxu0 0.0
    %1808 = vmatpush.msra.mxu0 %v295
    %1809 = vmatpush.msra.mxu0 %v294
    %1810 = vmatpush.msra.mxu0 %v293
    %1811 = vmatpush.msra.mxu0 %v292
    %1812 = vmatmul.f32.gmra.mxu0 %v1676
    %v1813 = vpop.f32.mrf.mxu0
    %v1814 = vadd.f32 0.0, %v1813
    %1815 = vmatmul.f32.gmra.mxu0 %v1679
    %v1816 = vpop.f32.mrf.mxu0
    %v1817 = vadd.f32 0.0, %v1816
    %1818 = vdwg.mxu0
    %1819 = vmatpush.msra.mxu0 0.0
    %1820 = vmatpush.msra.mxu0 0.0
    %1821 = vmatpush.msra.mxu0 0.0
    %1822 = vmatpush.msra.mxu0 0.0
    %1823 = vmatpush.msra.mxu0 0.0
    %1824 = vmatpush.msra.mxu0 0.0
    %1825 = vmatpush.msra.mxu0 0.0
    %1826 = vmatpush.msra.mxu0 0.0
    %1827 = vmatpush.msra.mxu0 0.0
    %1828 = vmatpush.msra.mxu0 0.0
    %1829 = vmatpush.msra.mxu0 0.0
    %1830 = vmatpush.msra.mxu0 0.0
    %1831 = vmatpush.msra.mxu0 %v299
    %1832 = vmatpush.msra.mxu0 %v298
    %1833 = vmatpush.msra.mxu0 %v297
    %1834 = vmatpush.msra.mxu0 %v296
    %1835 = vmatmul.f32.gmra.mxu0 %v1676
    %v1836 = vpop.f32.mrf.mxu0
    %v1837 = vadd.f32 0.0, %v1836
    %1838 = vmatmul.f32.gmra.mxu0 %v1679
    %v1839 = vpop.f32.mrf.mxu0
    %v1840 = vadd.f32 0.0, %v1839
    %1841 = vdwg.mxu0
    %1842 = vmatpush.msra.mxu0 0.0
    %1843 = vmatpush.msra.mxu0 0.0
    %1844 = vmatpush.msra.mxu0 0.0
    %1845 = vmatpush.msra.mxu0 0.0
    %1846 = vmatpush.msra.mxu0 0.0
    %1847 = vmatpush.msra.mxu0 0.0
    %1848 = vmatpush.msra.mxu0 0.0
    %1849 = vmatpush.msra.mxu0 0.0
    %1850 = vmatpush.msra.mxu0 0.0
    %1851 = vmatpush.msra.mxu0 0.0
    %1852 = vmatpush.msra.mxu0 0.0
    %1853 = vmatpush.msra.mxu0 0.0
    %1854 = vmatpush.msra.mxu0 %v303
    %1855 = vmatpush.msra.mxu0 %v302
    %1856 = vmatpush.msra.mxu0 %v301
    %1857 = vmatpush.msra.mxu0 %v300
    %1858 = vmatmul.f32.gmra.mxu0 %v1676
    %v1859 = vpop.f32.mrf.mxu0
    %v1860 = vadd.f32 0.0, %v1859
    %1861 = vmatmul.f32.gmra.mxu0 %v1679
    %v1862 = vpop.f32.mrf.mxu0
    %v1863 = vadd.f32 0.0, %v1862
    %1864 = vdwg.mxu0
    %v1866 = vsel %vm669, %v1601, 0
    %v1869 = vsel %vm669, %v1699, 0
    %1871 = vmatpush.xpose.msra.mxu0 0.0
    %1872 = vmatpush.xpose.msra.mxu0 0.0
    %1873 = vmatpush.xpose.msra.mxu0 0.0
    %1874 = vmatpush.xpose.msra.mxu0 0.0
    %1875 = vmatpush.xpose.msra.mxu0 0.0
    %1876 = vmatpush.xpose.msra.mxu0 0.0
    %1877 = vmatpush.xpose.msra.mxu0 0.0
    %1878 = vmatpush.xpose.msra.mxu0 0.0
    %1879 = vmatpush.xpose.msra.mxu0 0.0
    %1880 = vmatpush.xpose.msra.mxu0 0.0
    %1881 = vmatpush.xpose.msra.mxu0 0.0
    %1882 = vmatpush.xpose.msra.mxu0 0.0
    %1883 = vmatpush.xpose.msra.mxu0 0.0
    %1884 = vmatpush.xpose.msra.mxu0 0.0
    %1885 = vmatpush.xpose.msra.mxu0 0.0
    %1886 = vmatpush.xpose.msra.mxu0 %v1869
    %1887 = vmatmul.f32.gmra.mxu0 %v1866
    %v1888 = vpop.f32.mrf.mxu0
    %v1889 = vadd.f32 0.0, %v1888
    %1890 = vdwg.mxu0
    %v1892 = vsel %vm669, %v1624, 0
    %v1895 = vsel %vm669, %v1722, 0
    %1897 = vmatpush.xpose.msra.mxu0 0.0
    %1898 = vmatpush.xpose.msra.mxu0 0.0
    %1899 = vmatpush.xpose.msra.mxu0 0.0
    %1900 = vmatpush.xpose.msra.mxu0 0.0
    %1901 = vmatpush.xpose.msra.mxu0 0.0
    %1902 = vmatpush.xpose.msra.mxu0 0.0
    %1903 = vmatpush.xpose.msra.mxu0 0.0
    %1904 = vmatpush.xpose.msra.mxu0 0.0
    %1905 = vmatpush.xpose.msra.mxu0 0.0
    %1906 = vmatpush.xpose.msra.mxu0 0.0
    %1907 = vmatpush.xpose.msra.mxu0 0.0
    %1908 = vmatpush.xpose.msra.mxu0 0.0
    %1909 = vmatpush.xpose.msra.mxu0 0.0
    %1910 = vmatpush.xpose.msra.mxu0 0.0
    %1911 = vmatpush.xpose.msra.mxu0 0.0
    %1912 = vmatpush.xpose.msra.mxu0 %v1895
    %1913 = vmatmul.f32.gmra.mxu0 %v1892
    %v1914 = vpop.f32.mrf.mxu0
    %v1915 = vadd.f32 0.0, %v1914
    %1916 = vdwg.mxu0
    %v1918 = vsel %vm669, %v1647, 0
    %v1921 = vsel %vm669, %v1745, 0
    %1923 = vmatpush.xpose.msra.mxu0 0.0
    %1924 = vmatpush.xpose.msra.mxu0 0.0
    %1925 = vmatpush.xpose.msra.mxu0 0.0
    %1926 = vmatpush.xpose.msra.mxu0 0.0
    %1927 = vmatpush.xpose.msra.mxu0 0.0
    %1928 = vmatpush.xpose.msra.mxu0 0.0
    %1929 = vmatpush.xpose.msra.mxu0 0.0
    %1930 = vmatpush.xpose.msra.mxu0 0.0
    %1931 = vmatpush.xpose.msra.mxu0 0.0
    %1932 = vmatpush.xpose.msra.mxu0 0.0
    %1933 = vmatpush.xpose.msra.mxu0 0.0
    %1934 = vmatpush.xpose.msra.mxu0 0.0
    %1935 = vmatpush.xpose.msra.mxu0 0.0
    %1936 = vmatpush.xpose.msra.mxu0 0.0
    %1937 = vmatpush.xpose.msra.mxu0 0.0
    %1938 = vmatpush.xpose.msra.mxu0 %v1921
    %1939 = vmatmul.f32.gmra.mxu0 %v1918
    %v1940 = vpop.f32.mrf.mxu0
    %v1941 = vadd.f32 0.0, %v1940
    %1942 = vdwg.mxu0
    %v1944 = vsel %vm669, %v1670, 0
    %v1947 = vsel %vm669, %v1768, 0
    %1949 = vmatpush.xpose.msra.mxu0 0.0
    %1950 = vmatpush.xpose.msra.mxu0 0.0
    %1951 = vmatpush.xpose.msra.mxu0 0.0
    %1952 = vmatpush.xpose.msra.mxu0 0.0
    %1953 = vmatpush.xpose.msra.mxu0 0.0
    %1954 = vmatpush.xpose.msra.mxu0 0.0
    %1955 = vmatpush.xpose.msra.mxu0 0.0
    %1956 = vmatpush.xpose.msra.mxu0 0.0
    %1957 = vmatpush.xpose.msra.mxu0 0.0
    %1958 = vmatpush.xpose.msra.mxu0 0.0
    %1959 = vmatpush.xpose.msra.mxu0 0.0
    %1960 = vmatpush.xpose.msra.mxu0 0.0
    %1961 = vmatpush.xpose.msra.mxu0 0.0
    %1962 = vmatpush.xpose.msra.mxu0 0.0
    %1963 = vmatpush.xpose.msra.mxu0 0.0
    %1964 = vmatpush.xpose.msra.mxu0 %v1947
    %1965 = vmatmul.f32.gmra.mxu0 %v1944
    %v1966 = vpop.f32.mrf.mxu0
    %v1967 = vadd.f32 0.0, %v1966
    %1968 = vdwg.mxu0
    %v1969 = vmul.f32 %v1889, 0.35355338
    %v1970 = vmul.f32 %v1915, 0.35355338
    %v1971 = vmul.f32 %v1941, 0.35355338
    %v1972 = vmul.f32 %v1967, 0.35355338
    %v1973 = vadd.f32 %v1969, %v197
    %v1974 = vadd.f32 %v1970, %v197
    %v1975 = vadd.f32 %v1971, %v197
    %v1976 = vadd.f32 %v1972, %v197
    %v1977 = vsel %vm669, %v1973, -inf
    %1978 = vmax.xlane.f32.xlu0 %v1977
    %v1979 = vpop.xlane.xlu0 %1978
    %v1980 = vsel %vm669, %v1974, -inf
    %1981 = vmax.xlane.f32.xlu0 %v1980
    %v1982 = vpop.xlane.xlu0 %1981
    %v1983 = vsel %vm669, %v1975, -inf
    %1984 = vmax.xlane.f32.xlu0 %v1983
    %v1985 = vpop.xlane.xlu0 %1984
    %v1986 = vsel %vm669, %v1976, -inf
    %1987 = vmax.xlane.f32.xlu0 %v1986
    %v1988 = vpop.xlane.xlu0 %1987
    %v1989 = vsub.f32 %v1973, %v1979
    %v1990 = vsub.f32 %v1974, %v1982
    %v1991 = vsub.f32 %v1975, %v1985
    %v1992 = vsub.f32 %v1976, %v1988
    %v1993 = vmul.f32 %v1989, 1.442695
    %v1994 = vpow.pop %v1993
    %v1995 = vmul.f32 %v1990, 1.442695
    %v1996 = vpow.pop %v1995
    %v1997 = vmul.f32 %v1991, 1.442695
    %v1998 = vpow.pop %v1997
    %v1999 = vmul.f32 %v1992, 1.442695
    %v2000 = vpow.pop %v1999
    %v2001 = vsel %vm669, %v1994, 0.0
    %2002 = vadd.xlane.f32.xlu0 %v2001
    %v2003 = vpop.xlane.xlu0 %2002
    %v2004 = vsel %vm669, %v1996, 0.0
    %2005 = vadd.xlane.f32.xlu0 %v2004
    %v2006 = vpop.xlane.xlu0 %2005
    %v2007 = vsel %vm669, %v1998, 0.0
    %2008 = vadd.xlane.f32.xlu0 %v2007
    %v2009 = vpop.xlane.xlu0 %2008
    %v2010 = vsel %vm669, %v2000, 0.0
    %2011 = vadd.xlane.f32.xlu0 %v2010
    %v2012 = vpop.xlane.xlu0 %2011
    %v2013 = vrcp.pop %v2003
    %v2014 = vmul.f32 %v2003, %v2013
    %v2015 = vsub.f32 1.0, %v2014
    %v2016 = vmul.f32 %v2013, %v2015
    %v2017 = vadd.f32 %v2013, %v2016
    %vm2018 = vweird.f32 %v2003
    %vm2019 = vweird.f32 %v2013
    %vm2020 = vmor %vm2018, %vm2019
    %v2021 = vsel %vm2020, %v2013, %v2017
    %v2022 = vand.u32 2147483647, %v2003
    %vm2023 = vcmp.eq.f32.partialorder %v2022, 8.507059e+37
    %v2024 = vand.u32 %v2003, 2147483648
    %v2025 = vor.u32 1.1754944e-38, %v2024
    %v2026 = vsel %vm2023, %v2025, %v2021
    %v2027 = vrcp.pop %v2006
    %v2028 = vmul.f32 %v2006, %v2027
    %v2029 = vsub.f32 1.0, %v2028
    %v2030 = vmul.f32 %v2027, %v2029
    %v2031 = vadd.f32 %v2027, %v2030
    %vm2032 = vweird.f32 %v2006
    %vm2033 = vweird.f32 %v2027
    %vm2034 = vmor %vm2032, %vm2033
    %v2035 = vsel %vm2034, %v2027, %v2031
    %v2036 = vand.u32 2147483647, %v2006
    %vm2037 = vcmp.eq.f32.partialorder %v2036, 8.507059e+37
    %v2038 = vand.u32 %v2006, 2147483648
    %v2039 = vor.u32 1.1754944e-38, %v2038
    %v2040 = vsel %vm2037, %v2039, %v2035
    %v2041 = vrcp.pop %v2009
    %v2042 = vmul.f32 %v2009, %v2041
    %v2043 = vsub.f32 1.0, %v2042
    %v2044 = vmul.f32 %v2041, %v2043
    %v2045 = vadd.f32 %v2041, %v2044
    %vm2046 = vweird.f32 %v2009
    %vm2047 = vweird.f32 %v2041
    %vm2048 = vmor %vm2046, %vm2047
    %v2049 = vsel %vm2048, %v2041, %v2045
    %v2050 = vand.u32 2147483647, %v2009
    %vm2051 = vcmp.eq.f32.partialorder %v2050, 8.507059e+37
    %v2052 = vand.u32 %v2009, 2147483648
    %v2053 = vor.u32 1.1754944e-38, %v2052
    %v2054 = vsel %vm2051, %v2053, %v2049
    %v2055 = vrcp.pop %v2012
    %v2056 = vmul.f32 %v2012, %v2055
    %v2057 = vsub.f32 1.0, %v2056
    %v2058 = vmul.f32 %v2055, %v2057
    %v2059 = vadd.f32 %v2055, %v2058
    %vm2060 = vweird.f32 %v2012
    %vm2061 = vweird.f32 %v2055
    %vm2062 = vmor %vm2060, %vm2061
    %v2063 = vsel %vm2062, %v2055, %v2059
    %v2064 = vand.u32 2147483647, %v2012
    %vm2065 = vcmp.eq.f32.partialorder %v2064, 8.507059e+37
    %v2066 = vand.u32 %v2012, 2147483648
    %v2067 = vor.u32 1.1754944e-38, %v2066
    %v2068 = vsel %vm2065, %v2067, %v2063
    %v2069 = vmul.f32 %v1994, %v2026
    %v2070 = vmul.f32 %v1996, %v2040
    %v2071 = vmul.f32 %v1998, %v2054
    %v2072 = vmul.f32 %v2000, %v2068
    %v2074 = vsel %vm669, %v2069, 0
    %2076 = vmatpush.msra.mxu0 0.0
    %2077 = vmatpush.msra.mxu0 0.0
    %2078 = vmatpush.msra.mxu0 0.0
    %2079 = vmatpush.msra.mxu0 0.0
    %2080 = vmatpush.msra.mxu0 0.0
    %2081 = vmatpush.msra.mxu0 0.0
    %2082 = vmatpush.msra.mxu0 0.0
    %2083 = vmatpush.msra.mxu0 0.0
    %2084 = vmatpush.msra.mxu0 0.0
    %2085 = vmatpush.msra.mxu0 0.0
    %2086 = vmatpush.msra.mxu0 0.0
    %2087 = vmatpush.msra.mxu0 0.0
    %2088 = vmatpush.msra.mxu0 0.0
    %2089 = vmatpush.msra.mxu0 0.0
    %2090 = vmatpush.msra.mxu0 0.0
    %2091 = vmatpush.msra.mxu0 %v1791
    %2092 = vmatmul.f32.gmra.mxu0 %v2074
    %v2093 = vpop.f32.mrf.mxu0
    %v2094 = vadd.f32 0.0, %v2093
    %2095 = vdwg.mxu0
    %v2097 = vsel %vm669, %v2070, 0
    %2099 = vmatpush.msra.mxu0 0.0
    %2100 = vmatpush.msra.mxu0 0.0
    %2101 = vmatpush.msra.mxu0 0.0
    %2102 = vmatpush.msra.mxu0 0.0
    %2103 = vmatpush.msra.mxu0 0.0
    %2104 = vmatpush.msra.mxu0 0.0
    %2105 = vmatpush.msra.mxu0 0.0
    %2106 = vmatpush.msra.mxu0 0.0
    %2107 = vmatpush.msra.mxu0 0.0
    %2108 = vmatpush.msra.mxu0 0.0
    %2109 = vmatpush.msra.mxu0 0.0
    %2110 = vmatpush.msra.mxu0 0.0
    %2111 = vmatpush.msra.mxu0 0.0
    %2112 = vmatpush.msra.mxu0 0.0
    %2113 = vmatpush.msra.mxu0 0.0
    %2114 = vmatpush.msra.mxu0 %v1814
    %2115 = vmatmul.f32.gmra.mxu0 %v2097
    %v2116 = vpop.f32.mrf.mxu0
    %v2117 = vadd.f32 0.0, %v2116
    %2118 = vdwg.mxu0
    %v2120 = vsel %vm669, %v2071, 0
    %2122 = vmatpush.msra.mxu0 0.0
    %2123 = vmatpush.msra.mxu0 0.0
    %2124 = vmatpush.msra.mxu0 0.0
    %2125 = vmatpush.msra.mxu0 0.0
    %2126 = vmatpush.msra.mxu0 0.0
    %2127 = vmatpush.msra.mxu0 0.0
    %2128 = vmatpush.msra.mxu0 0.0
    %2129 = vmatpush.msra.mxu0 0.0
    %2130 = vmatpush.msra.mxu0 0.0
    %2131 = vmatpush.msra.mxu0 0.0
    %2132 = vmatpush.msra.mxu0 0.0
    %2133 = vmatpush.msra.mxu0 0.0
    %2134 = vmatpush.msra.mxu0 0.0
    %2135 = vmatpush.msra.mxu0 0.0
    %2136 = vmatpush.msra.mxu0 0.0
    %2137 = vmatpush.msra.mxu0 %v1837
    %2138 = vmatmul.f32.gmra.mxu0 %v2120
    %v2139 = vpop.f32.mrf.mxu0
    %v2140 = vadd.f32 0.0, %v2139
    %2141 = vdwg.mxu0
    %v2143 = vsel %vm669, %v2072, 0
    %2145 = vmatpush.msra.mxu0 0.0
    %2146 = vmatpush.msra.mxu0 0.0
    %2147 = vmatpush.msra.mxu0 0.0
    %2148 = vmatpush.msra.mxu0 0.0
    %2149 = vmatpush.msra.mxu0 0.0
    %2150 = vmatpush.msra.mxu0 0.0
    %2151 = vmatpush.msra.mxu0 0.0
    %2152 = vmatpush.msra.mxu0 0.0
    %2153 = vmatpush.msra.mxu0 0.0
    %2154 = vmatpush.msra.mxu0 0.0
    %2155 = vmatpush.msra.mxu0 0.0
    %2156 = vmatpush.msra.mxu0 0.0
    %2157 = vmatpush.msra.mxu0 0.0
    %2158 = vmatpush.msra.mxu0 0.0
    %2159 = vmatpush.msra.mxu0 0.0
    %2160 = vmatpush.msra.mxu0 %v1860
    %2161 = vmatmul.f32.gmra.mxu0 %v2143
    %v2162 = vpop.f32.mrf.mxu0
    %v2163 = vadd.f32 0.0, %v2162
    %2164 = vdwg.mxu0
    %v2166 = vsel %vm669, %v2094, 0
    %2168 = vmatpush.msra.mxu0 0.0
    %2169 = vmatpush.msra.mxu0 0.0
    %2170 = vmatpush.msra.mxu0 0.0
    %2171 = vmatpush.msra.mxu0 0.0
    %2172 = vmatpush.msra.mxu0 0.0
    %2173 = vmatpush.msra.mxu0 0.0
    %2174 = vmatpush.msra.mxu0 0.0
    %2175 = vmatpush.msra.mxu0 0.0
    %2176 = vmatpush.msra.mxu0 0.0
    %2177 = vmatpush.msra.mxu0 0.0
    %2178 = vmatpush.msra.mxu0 0.0
    %2179 = vmatpush.msra.mxu0 0.0
    %2180 = vmatpush.msra.mxu0 0.0
    %2181 = vmatpush.msra.mxu0 0.0
    %2182 = vmatpush.msra.mxu0 0.0
    %2183 = vmatpush.msra.mxu0 %v304
    %2184 = vmatmul.f32.gmra.mxu0 %v2166
    %v2185 = vpop.f32.mrf.mxu0
    %v2186 = vadd.f32 0.0, %v2185
    %2187 = vdwg.mxu0
    %v2189 = vsel %vm669, %v2117, 0
    %2191 = vmatpush.msra.mxu0 0.0
    %2192 = vmatpush.msra.mxu0 0.0
    %2193 = vmatpush.msra.mxu0 0.0
    %2194 = vmatpush.msra.mxu0 0.0
    %2195 = vmatpush.msra.mxu0 0.0
    %2196 = vmatpush.msra.mxu0 0.0
    %2197 = vmatpush.msra.mxu0 0.0
    %2198 = vmatpush.msra.mxu0 0.0
    %2199 = vmatpush.msra.mxu0 0.0
    %2200 = vmatpush.msra.mxu0 0.0
    %2201 = vmatpush.msra.mxu0 0.0
    %2202 = vmatpush.msra.mxu0 0.0
    %2203 = vmatpush.msra.mxu0 0.0
    %2204 = vmatpush.msra.mxu0 0.0
    %2205 = vmatpush.msra.mxu0 0.0
    %2206 = vmatpush.msra.mxu0 %v305
    %2207 = vmatmul.f32.gmra.mxu0 %v2189
    %v2208 = vpop.f32.mrf.mxu0
    %v2209 = vadd.f32 0.0, %v2208
    %2210 = vdwg.mxu0
    %v2212 = vsel %vm669, %v2140, 0
    %2214 = vmatpush.msra.mxu0 0.0
    %2215 = vmatpush.msra.mxu0 0.0
    %2216 = vmatpush.msra.mxu0 0.0
    %2217 = vmatpush.msra.mxu0 0.0
    %2218 = vmatpush.msra.mxu0 0.0
    %2219 = vmatpush.msra.mxu0 0.0
    %2220 = vmatpush.msra.mxu0 0.0
    %2221 = vmatpush.msra.mxu0 0.0
    %2222 = vmatpush.msra.mxu0 0.0
    %2223 = vmatpush.msra.mxu0 0.0
    %2224 = vmatpush.msra.mxu0 0.0
    %2225 = vmatpush.msra.mxu0 0.0
    %2226 = vmatpush.msra.mxu0 0.0
    %2227 = vmatpush.msra.mxu0 0.0
    %2228 = vmatpush.msra.mxu0 0.0
    %2229 = vmatpush.msra.mxu0 %v306
    %2230 = vmatmul.f32.gmra.mxu0 %v2212
    %v2231 = vpop.f32.mrf.mxu0
    %v2232 = vadd.f32 0.0, %v2231
    %2233 = vdwg.mxu0
    %v2235 = vsel %vm669, %v2163, 0
    %2237 = vmatpush.msra.mxu0 0.0
    %2238 = vmatpush.msra.mxu0 0.0
    %2239 = vmatpush.msra.mxu0 0.0
    %2240 = vmatpush.msra.mxu0 0.0
    %2241 = vmatpush.msra.mxu0 0.0
    %2242 = vmatpush.msra.mxu0 0.0
    %2243 = vmatpush.msra.mxu0 0.0
    %2244 = vmatpush.msra.mxu0 0.0
    %2245 = vmatpush.msra.mxu0 0.0
    %2246 = vmatpush.msra.mxu0 0.0
    %2247 = vmatpush.msra.mxu0 0.0
    %2248 = vmatpush.msra.mxu0 0.0
    %2249 = vmatpush.msra.mxu0 0.0
    %2250 = vmatpush.msra.mxu0 0.0
    %2251 = vmatpush.msra.mxu0 0.0
    %2252 = vmatpush.msra.mxu0 %v307
    %2253 = vmatmul.f32.gmra.mxu0 %v2235
    %v2254 = vpop.f32.mrf.mxu0
    %v2255 = vadd.f32 0.0, %v2254
    %2256 = vdwg.mxu0
    %v2257 = vsel %vm325, %v2186, 0.0
    %v2258 = vsel %vm325, %v2209, 0.0
    %v2259 = vadd.f32 %v2257, %v2258
    %v2260 = vsel %vm325, %v2232, 0.0
    %v2261 = vadd.f32 %v2259, %v2260
    %v2262 = vsel %vm325, %v2255, 0.0
    %v2263 = vadd.f32 %v2261, %v2262
    %v2265 = vsel %vm669, %v1604, 0
    %v2268 = vsel %vm669, %v1702, 0
    %2270 = vmatpush.xpose.msra.mxu0 0.0
    %2271 = vmatpush.xpose.msra.mxu0 0.0
    %2272 = vmatpush.xpose.msra.mxu0 0.0
    %2273 = vmatpush.xpose.msra.mxu0 0.0
    %2274 = vmatpush.xpose.msra.mxu0 0.0
    %2275 = vmatpush.xpose.msra.mxu0 0.0
    %2276 = vmatpush.xpose.msra.mxu0 0.0
    %2277 = vmatpush.xpose.msra.mxu0 0.0
    %2278 = vmatpush.xpose.msra.mxu0 0.0
    %2279 = vmatpush.xpose.msra.mxu0 0.0
    %2280 = vmatpush.xpose.msra.mxu0 0.0
    %2281 = vmatpush.xpose.msra.mxu0 0.0
    %2282 = vmatpush.xpose.msra.mxu0 0.0
    %2283 = vmatpush.xpose.msra.mxu0 0.0
    %2284 = vmatpush.xpose.msra.mxu0 0.0
    %2285 = vmatpush.xpose.msra.mxu0 %v2268
    %2286 = vmatmul.f32.gmra.mxu0 %v2265
    %v2287 = vpop.f32.mrf.mxu0
    %v2288 = vadd.f32 0.0, %v2287
    %2289 = vdwg.mxu0
    %v2291 = vsel %vm669, %v1627, 0
    %v2294 = vsel %vm669, %v1725, 0
    %2296 = vmatpush.xpose.msra.mxu0 0.0
    %2297 = vmatpush.xpose.msra.mxu0 0.0
    %2298 = vmatpush.xpose.msra.mxu0 0.0
    %2299 = vmatpush.xpose.msra.mxu0 0.0
    %2300 = vmatpush.xpose.msra.mxu0 0.0
    %2301 = vmatpush.xpose.msra.mxu0 0.0
    %2302 = vmatpush.xpose.msra.mxu0 0.0
    %2303 = vmatpush.xpose.msra.mxu0 0.0
    %2304 = vmatpush.xpose.msra.mxu0 0.0
    %2305 = vmatpush.xpose.msra.mxu0 0.0
    %2306 = vmatpush.xpose.msra.mxu0 0.0
    %2307 = vmatpush.xpose.msra.mxu0 0.0
    %2308 = vmatpush.xpose.msra.mxu0 0.0
    %2309 = vmatpush.xpose.msra.mxu0 0.0
    %2310 = vmatpush.xpose.msra.mxu0 0.0
    %2311 = vmatpush.xpose.msra.mxu0 %v2294
    %2312 = vmatmul.f32.gmra.mxu0 %v2291
    %v2313 = vpop.f32.mrf.mxu0
    %v2314 = vadd.f32 0.0, %v2313
    %2315 = vdwg.mxu0
    %v2317 = vsel %vm669, %v1650, 0
    %v2320 = vsel %vm669, %v1748, 0
    %2322 = vmatpush.xpose.msra.mxu0 0.0
    %2323 = vmatpush.xpose.msra.mxu0 0.0
    %2324 = vmatpush.xpose.msra.mxu0 0.0
    %2325 = vmatpush.xpose.msra.mxu0 0.0
    %2326 = vmatpush.xpose.msra.mxu0 0.0
    %2327 = vmatpush.xpose.msra.mxu0 0.0
    %2328 = vmatpush.xpose.msra.mxu0 0.0
    %2329 = vmatpush.xpose.msra.mxu0 0.0
    %2330 = vmatpush.xpose.msra.mxu0 0.0
    %2331 = vmatpush.xpose.msra.mxu0 0.0
    %2332 = vmatpush.xpose.msra.mxu0 0.0
    %2333 = vmatpush.xpose.msra.mxu0 0.0
    %2334 = vmatpush.xpose.msra.mxu0 0.0
    %2335 = vmatpush.xpose.msra.mxu0 0.0
    %2336 = vmatpush.xpose.msra.mxu0 0.0
    %2337 = vmatpush.xpose.msra.mxu0 %v2320
    %2338 = vmatmul.f32.gmra.mxu0 %v2317
    %v2339 = vpop.f32.mrf.mxu0
    %v2340 = vadd.f32 0.0, %v2339
    %2341 = vdwg.mxu0
    %v2343 = vsel %vm669, %v1673, 0
    %v2346 = vsel %vm669, %v1771, 0
    %2348 = vmatpush.xpose.msra.mxu0 0.0
    %2349 = vmatpush.xpose.msra.mxu0 0.0
    %2350 = vmatpush.xpose.msra.mxu0 0.0
    %2351 = vmatpush.xpose.msra.mxu0 0.0
    %2352 = vmatpush.xpose.msra.mxu0 0.0
    %2353 = vmatpush.xpose.msra.mxu0 0.0
    %2354 = vmatpush.xpose.msra.mxu0 0.0
    %2355 = vmatpush.xpose.msra.mxu0 0.0
    %2356 = vmatpush.xpose.msra.mxu0 0.0
    %2357 = vmatpush.xpose.msra.mxu0 0.0
    %2358 = vmatpush.xpose.msra.mxu0 0.0
    %2359 = vmatpush.xpose.msra.mxu0 0.0
    %2360 = vmatpush.xpose.msra.mxu0 0.0
    %2361 = vmatpush.xpose.msra.mxu0 0.0
    %2362 = vmatpush.xpose.msra.mxu0 0.0
    %2363 = vmatpush.xpose.msra.mxu0 %v2346
    %2364 = vmatmul.f32.gmra.mxu0 %v2343
    %v2365 = vpop.f32.mrf.mxu0
    %v2366 = vadd.f32 0.0, %v2365
    %2367 = vdwg.mxu0
    %v2368 = vmul.f32 %v2288, 0.35355338
    %v2369 = vmul.f32 %v2314, 0.35355338
    %v2370 = vmul.f32 %v2340, 0.35355338
    %v2371 = vmul.f32 %v2366, 0.35355338
    %v2372 = vadd.f32 %v2368, %v198
    %v2373 = vadd.f32 %v2369, %v198
    %v2374 = vadd.f32 %v2370, %v198
    %v2375 = vadd.f32 %v2371, %v198
    %v2376 = vsel %vm669, %v2372, -inf
    %2377 = vmax.xlane.f32.xlu0 %v2376
    %v2378 = vpop.xlane.xlu0 %2377
    %v2379 = vsel %vm669, %v2373, -inf
    %2380 = vmax.xlane.f32.xlu0 %v2379
    %v2381 = vpop.xlane.xlu0 %2380
    %v2382 = vsel %vm669, %v2374, -inf
    %2383 = vmax.xlane.f32.xlu0 %v2382
    %v2384 = vpop.xlane.xlu0 %2383
    %v2385 = vsel %vm669, %v2375, -inf
    %2386 = vmax.xlane.f32.xlu0 %v2385
    %v2387 = vpop.xlane.xlu0 %2386
    %v2388 = vsub.f32 %v2372, %v2378
    %v2389 = vsub.f32 %v2373, %v2381
    %v2390 = vsub.f32 %v2374, %v2384
    %v2391 = vsub.f32 %v2375, %v2387
    %v2392 = vmul.f32 %v2388, 1.442695
    %v2393 = vpow.pop %v2392
    %v2394 = vmul.f32 %v2389, 1.442695
    %v2395 = vpow.pop %v2394
    %v2396 = vmul.f32 %v2390, 1.442695
    %v2397 = vpow.pop %v2396
    %v2398 = vmul.f32 %v2391, 1.442695
    %v2399 = vpow.pop %v2398
    %v2400 = vsel %vm669, %v2393, 0.0
    %2401 = vadd.xlane.f32.xlu0 %v2400
    %v2402 = vpop.xlane.xlu0 %2401
    %v2403 = vsel %vm669, %v2395, 0.0
    %2404 = vadd.xlane.f32.xlu0 %v2403
    %v2405 = vpop.xlane.xlu0 %2404
    %v2406 = vsel %vm669, %v2397, 0.0
    %2407 = vadd.xlane.f32.xlu0 %v2406
    %v2408 = vpop.xlane.xlu0 %2407
    %v2409 = vsel %vm669, %v2399, 0.0
    %2410 = vadd.xlane.f32.xlu0 %v2409
    %v2411 = vpop.xlane.xlu0 %2410
    %v2412 = vrcp.pop %v2402
    %v2413 = vmul.f32 %v2402, %v2412
    %v2414 = vsub.f32 1.0, %v2413
    %v2415 = vmul.f32 %v2412, %v2414
    %v2416 = vadd.f32 %v2412, %v2415
    %vm2417 = vweird.f32 %v2402
    %vm2418 = vweird.f32 %v2412
    %vm2419 = vmor %vm2417, %vm2418
    %v2420 = vsel %vm2419, %v2412, %v2416
    %v2421 = vand.u32 2147483647, %v2402
    %vm2422 = vcmp.eq.f32.partialorder %v2421, 8.507059e+37
    %v2423 = vand.u32 %v2402, 2147483648
    %v2424 = vor.u32 1.1754944e-38, %v2423
    %v2425 = vsel %vm2422, %v2424, %v2420
    %v2426 = vrcp.pop %v2405
    %v2427 = vmul.f32 %v2405, %v2426
    %v2428 = vsub.f32 1.0, %v2427
    %v2429 = vmul.f32 %v2426, %v2428
    %v2430 = vadd.f32 %v2426, %v2429
    %vm2431 = vweird.f32 %v2405
    %vm2432 = vweird.f32 %v2426
    %vm2433 = vmor %vm2431, %vm2432
    %v2434 = vsel %vm2433, %v2426, %v2430
    %v2435 = vand.u32 2147483647, %v2405
    %vm2436 = vcmp.eq.f32.partialorder %v2435, 8.507059e+37
    %v2437 = vand.u32 %v2405, 2147483648
    %v2438 = vor.u32 1.1754944e-38, %v2437
    %v2439 = vsel %vm2436, %v2438, %v2434
    %v2440 = vrcp.pop %v2408
    %v2441 = vmul.f32 %v2408, %v2440
    %v2442 = vsub.f32 1.0, %v2441
    %v2443 = vmul.f32 %v2440, %v2442
    %v2444 = vadd.f32 %v2440, %v2443
    %vm2445 = vweird.f32 %v2408
    %vm2446 = vweird.f32 %v2440
    %vm2447 = vmor %vm2445, %vm2446
    %v2448 = vsel %vm2447, %v2440, %v2444
    %v2449 = vand.u32 2147483647, %v2408
    %vm2450 = vcmp.eq.f32.partialorder %v2449, 8.507059e+37
    %v2451 = vand.u32 %v2408, 2147483648
    %v2452 = vor.u32 1.1754944e-38, %v2451
    %v2453 = vsel %vm2450, %v2452, %v2448
    %v2454 = vrcp.pop %v2411
    %v2455 = vmul.f32 %v2411, %v2454
    %v2456 = vsub.f32 1.0, %v2455
    %v2457 = vmul.f32 %v2454, %v2456
    %v2458 = vadd.f32 %v2454, %v2457
    %vm2459 = vweird.f32 %v2411
    %vm2460 = vweird.f32 %v2454
    %vm2461 = vmor %vm2459, %vm2460
    %v2462 = vsel %vm2461, %v2454, %v2458
    %v2463 = vand.u32 2147483647, %v2411
    %vm2464 = vcmp.eq.f32.partialorder %v2463, 8.507059e+37
    %v2465 = vand.u32 %v2411, 2147483648
    %v2466 = vor.u32 1.1754944e-38, %v2465
    %v2467 = vsel %vm2464, %v2466, %v2462
    %v2468 = vmul.f32 %v2393, %v2425
    %v2469 = vmul.f32 %v2395, %v2439
    %v2470 = vmul.f32 %v2397, %v2453
    %v2471 = vmul.f32 %v2399, %v2467
    %v2473 = vsel %vm669, %v2468, 0
    %2475 = vmatpush.msra.mxu0 0.0
    %2476 = vmatpush.msra.mxu0 0.0
    %2477 = vmatpush.msra.mxu0 0.0
    %2478 = vmatpush.msra.mxu0 0.0
    %2479 = vmatpush.msra.mxu0 0.0
    %2480 = vmatpush.msra.mxu0 0.0
    %2481 = vmatpush.msra.mxu0 0.0
    %2482 = vmatpush.msra.mxu0 0.0
    %2483 = vmatpush.msra.mxu0 0.0
    %2484 = vmatpush.msra.mxu0 0.0
    %2485 = vmatpush.msra.mxu0 0.0
    %2486 = vmatpush.msra.mxu0 0.0
    %2487 = vmatpush.msra.mxu0 0.0
    %2488 = vmatpush.msra.mxu0 0.0
    %2489 = vmatpush.msra.mxu0 0.0
    %2490 = vmatpush.msra.mxu0 %v1794
    %2491 = vmatmul.f32.gmra.mxu0 %v2473
    %v2492 = vpop.f32.mrf.mxu0
    %v2493 = vadd.f32 0.0, %v2492
    %2494 = vdwg.mxu0
    %v2496 = vsel %vm669, %v2469, 0
    %2498 = vmatpush.msra.mxu0 0.0
    %2499 = vmatpush.msra.mxu0 0.0
    %2500 = vmatpush.msra.mxu0 0.0
    %2501 = vmatpush.msra.mxu0 0.0
    %2502 = vmatpush.msra.mxu0 0.0
    %2503 = vmatpush.msra.mxu0 0.0
    %2504 = vmatpush.msra.mxu0 0.0
    %2505 = vmatpush.msra.mxu0 0.0
    %2506 = vmatpush.msra.mxu0 0.0
    %2507 = vmatpush.msra.mxu0 0.0
    %2508 = vmatpush.msra.mxu0 0.0
    %2509 = vmatpush.msra.mxu0 0.0
    %2510 = vmatpush.msra.mxu0 0.0
    %2511 = vmatpush.msra.mxu0 0.0
    %2512 = vmatpush.msra.mxu0 0.0
    %2513 = vmatpush.msra.mxu0 %v1817
    %2514 = vmatmul.f32.gmra.mxu0 %v2496
    %v2515 = vpop.f32.mrf.mxu0
    %v2516 = vadd.f32 0.0, %v2515
    %2517 = vdwg.mxu0
    %v2519 = vsel %vm669, %v2470, 0
    %2521 = vmatpush.msra.mxu0 0.0
    %2522 = vmatpush.msra.mxu0 0.0
    %2523 = vmatpush.msra.mxu0 0.0
    %2524 = vmatpush.msra.mxu0 0.0
    %2525 = vmatpush.msra.mxu0 0.0
    %2526 = vmatpush.msra.mxu0 0.0
    %2527 = vmatpush.msra.mxu0 0.0
    %2528 = vmatpush.msra.mxu0 0.0
    %2529 = vmatpush.msra.mxu0 0.0
    %2530 = vmatpush.msra.mxu0 0.0
    %2531 = vmatpush.msra.mxu0 0.0
    %2532 = vmatpush.msra.mxu0 0.0
    %2533 = vmatpush.msra.mxu0 0.0
    %2534 = vmatpush.msra.mxu0 0.0
    %2535 = vmatpush.msra.mxu0 0.0
    %2536 = vmatpush.msra.mxu0 %v1840
    %2537 = vmatmul.f32.gmra.mxu0 %v2519
    %v2538 = vpop.f32.mrf.mxu0
    %v2539 = vadd.f32 0.0, %v2538
    %2540 = vdwg.mxu0
    %v2542 = vsel %vm669, %v2471, 0
    %2544 = vmatpush.msra.mxu0 0.0
    %2545 = vmatpush.msra.mxu0 0.0
    %2546 = vmatpush.msra.mxu0 0.0
    %2547 = vmatpush.msra.mxu0 0.0
    %2548 = vmatpush.msra.mxu0 0.0
    %2549 = vmatpush.msra.mxu0 0.0
    %2550 = vmatpush.msra.mxu0 0.0
    %2551 = vmatpush.msra.mxu0 0.0
    %2552 = vmatpush.msra.mxu0 0.0
    %2553 = vmatpush.msra.mxu0 0.0
    %2554 = vmatpush.msra.mxu0 0.0
    %2555 = vmatpush.msra.mxu0 0.0
    %2556 = vmatpush.msra.mxu0 0.0
    %2557 = vmatpush.msra.mxu0 0.0
    %2558 = vmatpush.msra.mxu0 0.0
    %2559 = vmatpush.msra.mxu0 %v1863
    %2560 = vmatmul.f32.gmra.mxu0 %v2542
    %v2561 = vpop.f32.mrf.mxu0
    %v2562 = vadd.f32 0.0, %v2561
    %2563 = vdwg.mxu0
    %v2565 = vsel %vm669, %v2493, 0
    %2567 = vmatpush.msra.mxu0 0.0
    %2568 = vmatpush.msra.mxu0 0.0
    %2569 = vmatpush.msra.mxu0 0.0
    %2570 = vmatpush.msra.mxu0 0.0
    %2571 = vmatpush.msra.mxu0 0.0
    %2572 = vmatpush.msra.mxu0 0.0
    %2573 = vmatpush.msra.mxu0 0.0
    %2574 = vmatpush.msra.mxu0 0.0
    %2575 = vmatpush.msra.mxu0 0.0
    %2576 = vmatpush.msra.mxu0 0.0
    %2577 = vmatpush.msra.mxu0 0.0
    %2578 = vmatpush.msra.mxu0 0.0
    %2579 = vmatpush.msra.mxu0 0.0
    %2580 = vmatpush.msra.mxu0 0.0
    %2581 = vmatpush.msra.mxu0 0.0
    %2582 = vmatpush.msra.mxu0 %v304
    %2583 = vmatmul.f32.gmra.mxu0 %v2565
    %v2584 = vpop.f32.mrf.mxu0
    %v2585 = vadd.f32 0.0, %v2584
    %2586 = vdwg.mxu0
    %v2588 = vsel %vm669, %v2516, 0
    %2590 = vmatpush.msra.mxu0 0.0
    %2591 = vmatpush.msra.mxu0 0.0
    %2592 = vmatpush.msra.mxu0 0.0
    %2593 = vmatpush.msra.mxu0 0.0
    %2594 = vmatpush.msra.mxu0 0.0
    %2595 = vmatpush.msra.mxu0 0.0
    %2596 = vmatpush.msra.mxu0 0.0
    %2597 = vmatpush.msra.mxu0 0.0
    %2598 = vmatpush.msra.mxu0 0.0
    %2599 = vmatpush.msra.mxu0 0.0
    %2600 = vmatpush.msra.mxu0 0.0
    %2601 = vmatpush.msra.mxu0 0.0
    %2602 = vmatpush.msra.mxu0 0.0
    %2603 = vmatpush.msra.mxu0 0.0
    %2604 = vmatpush.msra.mxu0 0.0
    %2605 = vmatpush.msra.mxu0 %v305
    %2606 = vmatmul.f32.gmra.mxu0 %v2588
    %v2607 = vpop.f32.mrf.mxu0
    %v2608 = vadd.f32 0.0, %v2607
    %2609 = vdwg.mxu0
    %v2611 = vsel %vm669, %v2539, 0
    %2613 = vmatpush.msra.mxu0 0.0
    %2614 = vmatpush.msra.mxu0 0.0
    %2615 = vmatpush.msra.mxu0 0.0
    %2616 = vmatpush.msra.mxu0 0.0
    %2617 = vmatpush.msra.mxu0 0.0
    %2618 = vmatpush.msra.mxu0 0.0
    %2619 = vmatpush.msra.mxu0 0.0
    %2620 = vmatpush.msra.mxu0 0.0
    %2621 = vmatpush.msra.mxu0 0.0
    %2622 = vmatpush.msra.mxu0 0.0
    %2623 = vmatpush.msra.mxu0 0.0
    %2624 = vmatpush.msra.mxu0 0.0
    %2625 = vmatpush.msra.mxu0 0.0
    %2626 = vmatpush.msra.mxu0 0.0
    %2627 = vmatpush.msra.mxu0 0.0
    %2628 = vmatpush.msra.mxu0 %v306
    %2629 = vmatmul.f32.gmra.mxu0 %v2611
    %v2630 = vpop.f32.mrf.mxu0
    %v2631 = vadd.f32 0.0, %v2630
    %2632 = vdwg.mxu0
    %v2634 = vsel %vm669, %v2562, 0
    %2636 = vmatpush.msra.mxu0 0.0
    %2637 = vmatpush.msra.mxu0 0.0
    %2638 = vmatpush.msra.mxu0 0.0
    %2639 = vmatpush.msra.mxu0 0.0
    %2640 = vmatpush.msra.mxu0 0.0
    %2641 = vmatpush.msra.mxu0 0.0
    %2642 = vmatpush.msra.mxu0 0.0
    %2643 = vmatpush.msra.mxu0 0.0
    %2644 = vmatpush.msra.mxu0 0.0
    %2645 = vmatpush.msra.mxu0 0.0
    %2646 = vmatpush.msra.mxu0 0.0
    %2647 = vmatpush.msra.mxu0 0.0
    %2648 = vmatpush.msra.mxu0 0.0
    %2649 = vmatpush.msra.mxu0 0.0
    %2650 = vmatpush.msra.mxu0 0.0
    %2651 = vmatpush.msra.mxu0 %v307
    %2652 = vmatmul.f32.gmra.mxu0 %v2634
    %v2653 = vpop.f32.mrf.mxu0
    %v2654 = vadd.f32 0.0, %v2653
    %2655 = vdwg.mxu0
    %v2656 = vsel %vm325, %v2585, 0.0
    %v2657 = vsel %vm325, %v2608, 0.0
    %v2658 = vadd.f32 %v2656, %v2657
    %v2659 = vsel %vm325, %v2631, 0.0
    %v2660 = vadd.f32 %v2658, %v2659
    %v2661 = vsel %vm325, %v2654, 0.0
    %v2662 = vadd.f32 %v2660, %v2661
    %v2664 = vperm.slane %v308, 0
    %v2666 = vadd.f32 %v2263, %v2664
    %v2667 = vadd.f32 %v2662, %v2664
    %v2668 = vadd.f32 %v2666, %v1473
    %v2669 = vadd.f32 %v2667, %v1474
    %v2670 = vsel %vm325, %v2668, 0.0
    %2671 = vadd.xlane.f32.xlu0 %v2670
    %v2672 = vpop.xlane.xlu0 %2671
    %v2673 = vsel %vm325, %v2669, 0.0
    %2674 = vadd.xlane.f32.xlu0 %v2673
    %v2675 = vpop.xlane.xlu0 %2674
    %v2676 = vmul.f32 %v2672, %v338
    %v2677 = vmul.f32 %v2675, %v338
    %v2678 = vsub.f32 %v2668, %v2676
    %v2679 = vsub.f32 %v2669, %v2677
    %v2680 = vmul.f32 %v2678, %v2678
    %v2681 = vmul.f32 %v2679, %v2679
    %v2682 = vsel %vm325, %v2680, 0.0
    %2683 = vadd.xlane.f32.xlu0 %v2682
    %v2684 = vpop.xlane.xlu0 %2683
    %v2685 = vsel %vm325, %v2681, 0.0
    %2686 = vadd.xlane.f32.xlu0 %v2685
    %v2687 = vpop.xlane.xlu0 %2686
    %v2688 = vmul.f32 %v2684, %v338
    %v2689 = vmul.f32 %v2687, %v338
    %v2690 = vadd.f32 %v2688, 1e-05
    %v2691 = vadd.f32 %v2689, 1e-05
    %v2692 = vrsqrt.pop %v2690
    %v2693 = vmul.f32 %v2692, %v2690
    %v2694 = vmul.f32 %v2693, %v2692
    %v2695 = vmul.f32 0.5, %v2694
    %v2696 = vsub.f32 1.5, %v2695
    %v2697 = vmul.f32 %v2692, %v2696
    %vm2698 = vweird.f32 %v2690
    %vm2699 = vweird.f32 %v2692
    %vm2700 = vmor %vm2698, %vm2699
    %v2701 = vsel %vm2700, %v2692, %v2697
    %v2702 = vrsqrt.pop %v2691
    %v2703 = vmul.f32 %v2702, %v2691
    %v2704 = vmul.f32 %v2703, %v2702
    %v2705 = vmul.f32 0.5, %v2704
    %v2706 = vsub.f32 1.5, %v2705
    %v2707 = vmul.f32 %v2702, %v2706
    %vm2708 = vweird.f32 %v2691
    %vm2709 = vweird.f32 %v2702
    %vm2710 = vmor %vm2708, %vm2709
    %v2711 = vsel %vm2710, %v2702, %v2707
    %v2712 = vmul.f32 %v2678, %v2701
    %v2713 = vmul.f32 %v2679, %v2711
    %v2715 = vperm.slane %v309, 0
    %v2717 = vmul.f32 %v2712, %v2715
    %v2718 = vmul.f32 %v2713, %v2715
    %v2720 = vperm.slane %v310, 0
    %v2722 = vadd.f32 %v2717, %v2720
    %v2723 = vadd.f32 %v2718, %v2720
    %v2725 = vperm.slane %v315, 0
    %v2728 = vsel %vm325, %v2722, 0
    %v2731 = vsel %vm325, %v2723, 0
    %2733 = vmatpush.msra.mxu0 0.0
    %2734 = vmatpush.msra.mxu0 0.0
    %2735 = vmatpush.msra.mxu0 0.0
    %2736 = vmatpush.msra.mxu0 0.0
    %2737 = vmatpush.msra.mxu0 0.0
    %2738 = vmatpush.msra.mxu0 0.0
    %2739 = vmatpush.msra.mxu0 0.0
    %2740 = vmatpush.msra.mxu0 0.0
    %2741 = vmatpush.msra.mxu0 0.0
    %2742 = vmatpush.msra.mxu0 0.0
    %2743 = vmatpush.msra.mxu0 0.0
    %2744 = vmatpush.msra.mxu0 0.0
    %2745 = vmatpush.msra.mxu0 %v314
    %2746 = vmatpush.msra.mxu0 %v313
    %2747 = vmatpush.msra.mxu0 %v312
    %2748 = vmatpush.msra.mxu0 %v311
    %2749 = vmatmul.f32.gmra.mxu0 %v2728
    %v2750 = vpop.f32.mrf.mxu0
    %v2751 = vadd.f32 %v2725, %v2750
    %2752 = vmatmul.f32.gmra.mxu0 %v2731
    %v2753 = vpop.f32.mrf.mxu0
    %v2754 = vadd.f32 %v2725, %v2753
    %2755 = vdwg.mxu0
    %v2756 = vmul.f32 %v2751, 0.5
    %v2757 = vmul.f32 %v2754, 0.5
    %v2758 = vmul.f32 %v2751, 0.70710677
    %v2759 = vmul.f32 %v2754, 0.70710677
    %v2760 = vand.u32 2147483647, %v2758
    %v2761 = vand.u32 2147483647, %v2759
    %v2762 = vmul.f32 %v2760, 0.3275911
    %v2763 = vmul.f32 %v2761, 0.3275911
    %v2764 = vadd.f32 %v2762, 1.0
    %v2765 = vadd.f32 %v2763, 1.0
    %v2766 = vrcp.pop %v2764
    %v2767 = vmul.f32 %v2764, %v2766
    %v2768 = vsub.f32 1.0, %v2767
    %v2769 = vmul.f32 %v2766, %v2768
    %v2770 = vadd.f32 %v2766, %v2769
    %vm2771 = vweird.f32 %v2764
    %vm2772 = vweird.f32 %v2766
    %vm2773 = vmor %vm2771, %vm2772
    %v2774 = vsel %vm2773, %v2766, %v2770
    %v2775 = vand.u32 2147483647, %v2764
    %vm2776 = vcmp.eq.f32.partialorder %v2775, 8.507059e+37
    %v2777 = vand.u32 %v2764, 2147483648
    %v2778 = vor.u32 1.1754944e-38, %v2777
    %v2779 = vsel %vm2776, %v2778, %v2774
    %v2780 = vmul.f32 1.0, %v2779
    %v2781 = vrcp.pop %v2765
    %v2782 = vmul.f32 %v2765, %v2781
    %v2783 = vsub.f32 1.0, %v2782
    %v2784 = vmul.f32 %v2781, %v2783
    %v2785 = vadd.f32 %v2781, %v2784
    %vm2786 = vweird.f32 %v2765
    %vm2787 = vweird.f32 %v2781
    %vm2788 = vmor %vm2786, %vm2787
    %v2789 = vsel %vm2788, %v2781, %v2785
    %v2790 = vand.u32 2147483647, %v2765
    %vm2791 = vcmp.eq.f32.partialorder %v2790, 8.507059e+37
    %v2792 = vand.u32 %v2765, 2147483648
    %v2793 = vor.u32 1.1754944e-38, %v2792
    %v2794 = vsel %vm2791, %v2793, %v2789
    %v2795 = vmul.f32 1.0, %v2794
    %v2796 = vmul.f32 %v2780, 1.0614054
    %v2797 = vmul.f32 %v2795, 1.0614054
    %v2798 = vadd.f32 %v2796, -1.4531521
    %v2799 = vadd.f32 %v2797, -1.4531521
    %v2800 = vmul.f32 %v2798, %v2780
    %v2801 = vmul.f32 %v2799, %v2795
    %v2802 = vadd.f32 %v2800, 1.4214138
    %v2803 = vadd.f32 %v2801, 1.4214138
    %v2804 = vmul.f32 %v2802, %v2780
    %v2805 = vmul.f32 %v2803, %v2795
    %v2806 = vadd.f32 %v2804, -0.28449672
    %v2807 = vadd.f32 %v2805, -0.28449672
    %v2808 = vmul.f32 %v2806, %v2780
    %v2809 = vmul.f32 %v2807, %v2795
    %v2810 = vadd.f32 %v2808, 0.2548296
    %v2811 = vadd.f32 %v2809, 0.2548296
    %v2812 = vmul.f32 %v2810, %v2780
    %v2813 = vmul.f32 %v2811, %v2795
    %v2814 = vsub.f32 0.0, %v2760
    %v2815 = vsub.f32 0.0, %v2761
    %v2816 = vmul.f32 %v2814, %v2760
    %v2817 = vmul.f32 %v2815, %v2761
    %v2818 = vmul.f32 %v2816, 1.442695
    %v2819 = vpow.pop %v2818
    %v2820 = vmul.f32 %v2817, 1.442695
    %v2821 = vpow.pop %v2820
    %v2822 = vmul.f32 %v2812, %v2819
    %v2823 = vmul.f32 %v2813, %v2821
    %v2824 = vsub.f32 1.0, %v2822
    %v2825 = vsub.f32 1.0, %v2823
    %vm2826 = vcmp.lt.f32.partialorder %v2758, 0.0
    %vm2827 = vcmp.lt.f32.partialorder %v2759, 0.0
    %v2828 = vsub.f32 0.0, %v2824
    %v2829 = vsub.f32 0.0, %v2825
    %v2830 = vsel %vm2826, %v2828, %v2824
    %v2831 = vsel %vm2827, %v2829, %v2825
    %v2832 = vadd.f32 %v2830, 1.0
    %v2833 = vadd.f32 %v2831, 1.0
    %v2834 = vmul.f32 %v2756, %v2832
    %v2835 = vmul.f32 %v2757, %v2833
    %v2837 = vperm.slane %v324, 0
    %vm2839 = vcmask 523264
    %v2841 = vsel %vm2839, %v2834, 0
    %v2844 = vsel %vm2839, %v2835, 0
    %2846 = vmatpush.msra.mxu0 0.0
    %2847 = vmatpush.msra.mxu0 0.0
    %2848 = vmatpush.msra.mxu0 0.0
    %2849 = vmatpush.msra.mxu0 0.0
    %2850 = vmatpush.msra.mxu0 0.0
    %2851 = vmatpush.msra.mxu0 0.0
    %2852 = vmatpush.msra.mxu0 0.0
    %2853 = vmatpush.msra.mxu0 0.0
    %2854 = vmatpush.msra.mxu0 %v323
    %2855 = vmatpush.msra.mxu0 %v322
    %2856 = vmatpush.msra.mxu0 %v321
    %2857 = vmatpush.msra.mxu0 %v320
    %2858 = vmatpush.msra.mxu0 %v319
    %2859 = vmatpush.msra.mxu0 %v318
    %2860 = vmatpush.msra.mxu0 %v317
    %2861 = vmatpush.msra.mxu0 %v316
    %2862 = vmatmul.f32.gmra.mxu0 %v2841
    %v2863 = vpop.f32.mrf.mxu0
    %v2864 = vadd.f32 %v2837, %v2863
    %2865 = vmatmul.f32.gmra.mxu0 %v2844
    %v2866 = vpop.f32.mrf.mxu0
    %v2867 = vadd.f32 %v2837, %v2866
    %2868 = vdwg.mxu0
    %v2869 = vadd.f32 %v2864, %v2668
    %v2870 = vadd.f32 %v2867, %v2669
    %v2871 = vld [vmem:[%s49] sm:$0x1]
    %v2872 = vld [vmem:[%s51] sm:$0x1]
    %v2873 = vld [vmem:[%s53] sm:$0xff]
    %v2874 = vld [vmem:[%s53 + $0x8] sm:$0xff]
    %v2875 = vld [vmem:[%s53 + $0x10] sm:$0xff]
    %v2876 = vld [vmem:[%s53 + $0x18] sm:$0xff]
    %v2877 = vld [vmem:[%s53 + $0x20] sm:$0xff]
    %v2878 = vld [vmem:[%s53 + $0x28] sm:$0xff]
    %v2879 = vld [vmem:[%s53 + $0x30] sm:$0xff]
    %v2880 = vld [vmem:[%s53 + $0x38] sm:$0xff]
    %v2881 = vld [vmem:[%s53 + $0x40] sm:$0xff]
    %v2882 = vld [vmem:[%s53 + $0x48] sm:$0xff]
    %v2883 = vld [vmem:[%s53 + $0x50] sm:$0xff]
    %v2884 = vld [vmem:[%s53 + $0x58] sm:$0xff]
    %v2885 = vld [vmem:[%s53 + $0x60] sm:$0xff]
    %v2886 = vld [vmem:[%s53 + $0x68] sm:$0xff]
    %v2887 = vld [vmem:[%s53 + $0x70] sm:$0xff]
    %v2888 = vld [vmem:[%s53 + $0x78] sm:$0xff]
    %v2889 = vld [vmem:[%s55] sm:$0xff]
    %v2890 = vld [vmem:[%s55 + $0x8] sm:$0xff]
    %v2891 = vld [vmem:[%s55 + $0x10] sm:$0xff]
    %v2892 = vld [vmem:[%s55 + $0x18] sm:$0xff]
    %v2893 = vld [vmem:[%s55 + $0x20] sm:$0xff]
    %v2894 = vld [vmem:[%s55 + $0x28] sm:$0xff]
    %v2895 = vld [vmem:[%s55 + $0x30] sm:$0xff]
    %v2896 = vld [vmem:[%s55 + $0x38] sm:$0xff]
    %v2897 = vld [vmem:[%s55 + $0x40] sm:$0xff]
    %v2898 = vld [vmem:[%s55 + $0x48] sm:$0xff]
    %v2899 = vld [vmem:[%s55 + $0x50] sm:$0xff]
    %v2900 = vld [vmem:[%s55 + $0x58] sm:$0xff]
    %v2901 = vld [vmem:[%s55 + $0x60] sm:$0xff]
    %v2902 = vld [vmem:[%s55 + $0x68] sm:$0xff]
    %v2903 = vld [vmem:[%s55 + $0x70] sm:$0xff]
    %v2904 = vld [vmem:[%s55 + $0x78] sm:$0xff]
    %v2905 = vld [vmem:[%s57] sm:$0xff]
    %v2906 = vld [vmem:[%s57 + $0x8] sm:$0xff]
    %v2907 = vld [vmem:[%s57 + $0x10] sm:$0xff]
    %v2908 = vld [vmem:[%s57 + $0x18] sm:$0xff]
    %v2909 = vld [vmem:[%s57 + $0x20] sm:$0xff]
    %v2910 = vld [vmem:[%s57 + $0x28] sm:$0xff]
    %v2911 = vld [vmem:[%s57 + $0x30] sm:$0xff]
    %v2912 = vld [vmem:[%s57 + $0x38] sm:$0xff]
    %v2913 = vld [vmem:[%s57 + $0x40] sm:$0xff]
    %v2914 = vld [vmem:[%s57 + $0x48] sm:$0xff]
    %v2915 = vld [vmem:[%s57 + $0x50] sm:$0xff]
    %v2916 = vld [vmem:[%s57 + $0x58] sm:$0xff]
    %v2917 = vld [vmem:[%s57 + $0x60] sm:$0xff]
    %v2918 = vld [vmem:[%s57 + $0x68] sm:$0xff]
    %v2919 = vld [vmem:[%s57 + $0x70] sm:$0xff]
    %v2920 = vld [vmem:[%s57 + $0x78] sm:$0xff]
    %v2921 = vld [vmem:[%s59] sm:$0xff]
    %v2922 = vld [vmem:[%s59 + $0x8] sm:$0xff]
    %v2923 = vld [vmem:[%s59 + $0x10] sm:$0xff]
    %v2924 = vld [vmem:[%s59 + $0x18] sm:$0xff]
    %v2925 = vld [vmem:[%s61] sm:$0x1]
    %v2926 = vld [vmem:[%s63] sm:$0x1]
    %v2927 = vld [vmem:[%s65] sm:$0x1]
    %v2928 = vld [vmem:[%s67] sm:$0xff]
    %v2929 = vld [vmem:[%s67 + $0x8] sm:$0xff]
    %v2930 = vld [vmem:[%s67 + $0x10] sm:$0xff]
    %v2931 = vld [vmem:[%s67 + $0x18] sm:$0xff]
    %v2932 = vld [vmem:[%s67 + $0x20] sm:$0xff]
    %v2933 = vld [vmem:[%s67 + $0x28] sm:$0xff]
    %v2934 = vld [vmem:[%s67 + $0x30] sm:$0xff]
    %v2935 = vld [vmem:[%s67 + $0x38] sm:$0xff]
    %v2936 = vld [vmem:[%s67 + $0x40] sm:$0xff]
    %v2937 = vld [vmem:[%s67 + $0x48] sm:$0xff]
    %v2938 = vld [vmem:[%s67 + $0x50] sm:$0xff]
    %v2939 = vld [vmem:[%s67 + $0x58] sm:$0xff]
    %v2940 = vld [vmem:[%s67 + $0x60] sm:$0xff]
    %v2941 = vld [vmem:[%s67 + $0x68] sm:$0xff]
    %v2942 = vld [vmem:[%s67 + $0x70] sm:$0xff]
    %v2943 = vld [vmem:[%s67 + $0x78] sm:$0xff]
    %v2944 = vld [vmem:[%s69] sm:$0xff]
    %v2945 = vld [vmem:[%s69 + $0x8] sm:$0xff]
    %v2946 = vld [vmem:[%s69 + $0x10] sm:$0xff]
    %v2947 = vld [vmem:[%s69 + $0x18] sm:$0xff]
    %v2948 = vld [vmem:[%s69 + $0x20] sm:$0xff]
    %v2949 = vld [vmem:[%s69 + $0x28] sm:$0xff]
    %v2950 = vld [vmem:[%s69 + $0x30] sm:$0xff]
    %v2951 = vld [vmem:[%s69 + $0x38] sm:$0xff]
    %v2952 = vld [vmem:[%s69 + $0x40] sm:$0xff]
    %v2953 = vld [vmem:[%s69 + $0x48] sm:$0xff]
    %v2954 = vld [vmem:[%s69 + $0x50] sm:$0xff]
    %v2955 = vld [vmem:[%s69 + $0x58] sm:$0xff]
    %v2956 = vld [vmem:[%s69 + $0x60] sm:$0xff]
    %v2957 = vld [vmem:[%s69 + $0x68] sm:$0xff]
    %v2958 = vld [vmem:[%s69 + $0x70] sm:$0xff]
    %v2959 = vld [vmem:[%s69 + $0x78] sm:$0xff]
    %v2960 = vld [vmem:[%s71] sm:$0xff]
    %v2961 = vld [vmem:[%s71 + $0x8] sm:$0xff]
    %v2962 = vld [vmem:[%s71 + $0x10] sm:$0xff]
    %v2963 = vld [vmem:[%s71 + $0x18] sm:$0xff]
    %v2964 = vld [vmem:[%s71 + $0x20] sm:$0xff]
    %v2965 = vld [vmem:[%s71 + $0x28] sm:$0xff]
    %v2966 = vld [vmem:[%s71 + $0x30] sm:$0xff]
    %v2967 = vld [vmem:[%s71 + $0x38] sm:$0xff]
    %v2968 = vld [vmem:[%s71 + $0x40] sm:$0xff]
    %v2969 = vld [vmem:[%s71 + $0x48] sm:$0xff]
    %v2970 = vld [vmem:[%s71 + $0x50] sm:$0xff]
    %v2971 = vld [vmem:[%s71 + $0x58] sm:$0xff]
    %v2972 = vld [vmem:[%s71 + $0x60] sm:$0xff]
    %v2973 = vld [vmem:[%s71 + $0x68] sm:$0xff]
    %v2974 = vld [vmem:[%s71 + $0x70] sm:$0xff]
    %v2975 = vld [vmem:[%s71 + $0x78] sm:$0xff]
    %v2976 = vld [vmem:[%s73] sm:$0xff]
    %v2977 = vld [vmem:[%s73 + $0x8] sm:$0xff]
    %v2978 = vld [vmem:[%s73 + $0x10] sm:$0xff]
    %v2979 = vld [vmem:[%s73 + $0x18] sm:$0xff]
    %v2980 = vld [vmem:[%s75] sm:$0x1]
    %v2981 = vld [vmem:[%s77] sm:$0x1]
    %v2982 = vld [vmem:[%s79] sm:$0x1]
    %v2983 = vld [vmem:[%s81] sm:$0xff]
    %v2984 = vld [vmem:[%s81 + $0x8] sm:$0xff]
    %v2985 = vld [vmem:[%s81 + $0x10] sm:$0xff]
    %v2986 = vld [vmem:[%s81 + $0x18] sm:$0xff]
    %v2987 = vld [vmem:[%s83] sm:$0x1]
    %v2988 = vld [vmem:[%s85] sm:$0xff]
    %v2989 = vld [vmem:[%s85 + $0x8] sm:$0xff]
    %v2990 = vld [vmem:[%s85 + $0x10] sm:$0xff]
    %v2991 = vld [vmem:[%s85 + $0x18] sm:$0xff]
    %v2992 = vld [vmem:[%s85 + $0x20] sm:$0xff]
    %v2993 = vld [vmem:[%s85 + $0x28] sm:$0xff]
    %v2994 = vld [vmem:[%s85 + $0x30] sm:$0xff]
    %v2995 = vld [vmem:[%s85 + $0x38] sm:$0xff]
    %v2996 = vld [vmem:[%s87] sm:$0x1]
    %v2997 = vsel %vm325, %v2869, 0.0
    %2998 = vadd.xlane.f32.xlu0 %v2997
    %v2999 = vpop.xlane.xlu0 %2998
    %v3000 = vsel %vm325, %v2870, 0.0
    %3001 = vadd.xlane.f32.xlu0 %v3000
    %v3002 = vpop.xlane.xlu0 %3001
    %v3003 = vmul.f32 %v2999, %v338
    %v3004 = vmul.f32 %v3002, %v338
    %v3005 = vsub.f32 %v2869, %v3003
    %v3006 = vsub.f32 %v2870, %v3004
    %v3007 = vmul.f32 %v3005, %v3005
    %v3008 = vmul.f32 %v3006, %v3006
    %v3009 = vsel %vm325, %v3007, 0.0
    %3010 = vadd.xlane.f32.xlu0 %v3009
    %v3011 = vpop.xlane.xlu0 %3010
    %v3012 = vsel %vm325, %v3008, 0.0
    %3013 = vadd.xlane.f32.xlu0 %v3012
    %v3014 = vpop.xlane.xlu0 %3013
    %v3015 = vmul.f32 %v3011, %v338
    %v3016 = vmul.f32 %v3014, %v338
    %v3017 = vadd.f32 %v3015, 1e-05
    %v3018 = vadd.f32 %v3016, 1e-05
    %v3019 = vrsqrt.pop %v3017
    %v3020 = vmul.f32 %v3019, %v3017
    %v3021 = vmul.f32 %v3020, %v3019
    %v3022 = vmul.f32 0.5, %v3021
    %v3023 = vsub.f32 1.5, %v3022
    %v3024 = vmul.f32 %v3019, %v3023
    %vm3025 = vweird.f32 %v3017
    %vm3026 = vweird.f32 %v3019
    %vm3027 = vmor %vm3025, %vm3026
    %v3028 = vsel %vm3027, %v3019, %v3024
    %v3029 = vrsqrt.pop %v3018
    %v3030 = vmul.f32 %v3029, %v3018
    %v3031 = vmul.f32 %v3030, %v3029
    %v3032 = vmul.f32 0.5, %v3031
    %v3033 = vsub.f32 1.5, %v3032
    %v3034 = vmul.f32 %v3029, %v3033
    %vm3035 = vweird.f32 %v3018
    %vm3036 = vweird.f32 %v3029
    %vm3037 = vmor %vm3035, %vm3036
    %v3038 = vsel %vm3037, %v3029, %v3034
    %v3039 = vmul.f32 %v3005, %v3028
    %v3040 = vmul.f32 %v3006, %v3038
    %v3042 = vperm.slane %v2871, 0
    %v3044 = vmul.f32 %v3039, %v3042
    %v3045 = vmul.f32 %v3040, %v3042
    %v3047 = vperm.slane %v2872, 0
    %v3049 = vadd.f32 %v3044, %v3047
    %v3050 = vadd.f32 %v3045, %v3047
    %v3052 = vsel %vm325, %v3049, 0
    %v3055 = vsel %vm325, %v3050, 0
    %3057 = vmatpush.msra.mxu0 0.0
    %3058 = vmatpush.msra.mxu0 0.0
    %3059 = vmatpush.msra.mxu0 0.0
    %3060 = vmatpush.msra.mxu0 0.0
    %3061 = vmatpush.msra.mxu0 0.0
    %3062 = vmatpush.msra.mxu0 0.0
    %3063 = vmatpush.msra.mxu0 0.0
    %3064 = vmatpush.msra.mxu0 0.0
    %3065 = vmatpush.msra.mxu0 0.0
    %3066 = vmatpush.msra.mxu0 0.0
    %3067 = vmatpush.msra.mxu0 0.0
    %3068 = vmatpush.msra.mxu0 0.0
    %3069 = vmatpush.msra.mxu0 %v2876
    %3070 = vmatpush.msra.mxu0 %v2875
    %3071 = vmatpush.msra.mxu0 %v2874
    %3072 = vmatpush.msra.mxu0 %v2873
    %3073 = vmatmul.f32.gmra.mxu0 %v3052
    %v3074 = vpop.f32.mrf.mxu0
    %v3075 = vadd.f32 0.0, %v3074
    %3076 = vmatmul.f32.gmra.mxu0 %v3055
    %v3077 = vpop.f32.mrf.mxu0
    %v3078 = vadd.f32 0.0, %v3077
    %3079 = vdwg.mxu0
    %3080 = vmatpush.msra.mxu0 0.0
    %3081 = vmatpush.msra.mxu0 0.0
    %3082 = vmatpush.msra.mxu0 0.0
    %3083 = vmatpush.msra.mxu0 0.0
    %3084 = vmatpush.msra.mxu0 0.0
    %3085 = vmatpush.msra.mxu0 0.0
    %3086 = vmatpush.msra.mxu0 0.0
    %3087 = vmatpush.msra.mxu0 0.0
    %3088 = vmatpush.msra.mxu0 0.0
    %3089 = vmatpush.msra.mxu0 0.0
    %3090 = vmatpush.msra.mxu0 0.0
    %3091 = vmatpush.msra.mxu0 0.0
    %3092 = vmatpush.msra.mxu0 %v2880
    %3093 = vmatpush.msra.mxu0 %v2879
    %3094 = vmatpush.msra.mxu0 %v2878
    %3095 = vmatpush.msra.mxu0 %v2877
    %3096 = vmatmul.f32.gmra.mxu0 %v3052
    %v3097 = vpop.f32.mrf.mxu0
    %v3098 = vadd.f32 0.0, %v3097
    %3099 = vmatmul.f32.gmra.mxu0 %v3055
    %v3100 = vpop.f32.mrf.mxu0
    %v3101 = vadd.f32 0.0, %v3100
    %3102 = vdwg.mxu0
    %3103 = vmatpush.msra.mxu0 0.0
    %3104 = vmatpush.msra.mxu0 0.0
    %3105 = vmatpush.msra.mxu0 0.0
    %3106 = vmatpush.msra.mxu0 0.0
    %3107 = vmatpush.msra.mxu0 0.0
    %3108 = vmatpush.msra.mxu0 0.0
    %3109 = vmatpush.msra.mxu0 0.0
    %3110 = vmatpush.msra.mxu0 0.0
    %3111 = vmatpush.msra.mxu0 0.0
    %3112 = vmatpush.msra.mxu0 0.0
    %3113 = vmatpush.msra.mxu0 0.0
    %3114 = vmatpush.msra.mxu0 0.0
    %3115 = vmatpush.msra.mxu0 %v2884
    %3116 = vmatpush.msra.mxu0 %v2883
    %3117 = vmatpush.msra.mxu0 %v2882
    %3118 = vmatpush.msra.mxu0 %v2881
    %3119 = vmatmul.f32.gmra.mxu0 %v3052
    %v3120 = vpop.f32.mrf.mxu0
    %v3121 = vadd.f32 0.0, %v3120
    %3122 = vmatmul.f32.gmra.mxu0 %v3055
    %v3123 = vpop.f32.mrf.mxu0
    %v3124 = vadd.f32 0.0, %v3123
    %3125 = vdwg.mxu0
    %3126 = vmatpush.msra.mxu0 0.0
    %3127 = vmatpush.msra.mxu0 0.0
    %3128 = vmatpush.msra.mxu0 0.0
    %3129 = vmatpush.msra.mxu0 0.0
    %3130 = vmatpush.msra.mxu0 0.0
    %3131 = vmatpush.msra.mxu0 0.0
    %3132 = vmatpush.msra.mxu0 0.0
    %3133 = vmatpush.msra.mxu0 0.0
    %3134 = vmatpush.msra.mxu0 0.0
    %3135 = vmatpush.msra.mxu0 0.0
    %3136 = vmatpush.msra.mxu0 0.0
    %3137 = vmatpush.msra.mxu0 0.0
    %3138 = vmatpush.msra.mxu0 %v2888
    %3139 = vmatpush.msra.mxu0 %v2887
    %3140 = vmatpush.msra.mxu0 %v2886
    %3141 = vmatpush.msra.mxu0 %v2885
    %3142 = vmatmul.f32.gmra.mxu0 %v3052
    %v3143 = vpop.f32.mrf.mxu0
    %v3144 = vadd.f32 0.0, %v3143
    %3145 = vmatmul.f32.gmra.mxu0 %v3055
    %v3146 = vpop.f32.mrf.mxu0
    %v3147 = vadd.f32 0.0, %v3146
    %3148 = vdwg.mxu0
    %3149 = vmatpush.msra.mxu0 0.0
    %3150 = vmatpush.msra.mxu0 0.0
    %3151 = vmatpush.msra.mxu0 0.0
    %3152 = vmatpush.msra.mxu0 0.0
    %3153 = vmatpush.msra.mxu0 0.0
    %3154 = vmatpush.msra.mxu0 0.0
    %3155 = vmatpush.msra.mxu0 0.0
    %3156 = vmatpush.msra.mxu0 0.0
    %3157 = vmatpush.msra.mxu0 0.0
    %3158 = vmatpush.msra.mxu0 0.0
    %3159 = vmatpush.msra.mxu0 0.0
    %3160 = vmatpush.msra.mxu0 0.0
    %3161 = vmatpush.msra.mxu0 %v2892
    %3162 = vmatpush.msra.mxu0 %v2891
    %3163 = vmatpush.msra.mxu0 %v2890
    %3164 = vmatpush.msra.mxu0 %v2889
    %3165 = vmatmul.f32.gmra.mxu0 %v3052
    %v3166 = vpop.f32.mrf.mxu0
    %v3167 = vadd.f32 0.0, %v3166
    %3168 = vmatmul.f32.gmra.mxu0 %v3055
    %v3169 = vpop.f32.mrf.mxu0
    %v3170 = vadd.f32 0.0, %v3169
    %3171 = vdwg.mxu0
    %3172 = vmatpush.msra.mxu0 0.0
    %3173 = vmatpush.msra.mxu0 0.0
    %3174 = vmatpush.msra.mxu0 0.0
    %3175 = vmatpush.msra.mxu0 0.0
    %3176 = vmatpush.msra.mxu0 0.0
    %3177 = vmatpush.msra.mxu0 0.0
    %3178 = vmatpush.msra.mxu0 0.0
    %3179 = vmatpush.msra.mxu0 0.0
    %3180 = vmatpush.msra.mxu0 0.0
    %3181 = vmatpush.msra.mxu0 0.0
    %3182 = vmatpush.msra.mxu0 0.0
    %3183 = vmatpush.msra.mxu0 0.0
    %3184 = vmatpush.msra.mxu0 %v2896
    %3185 = vmatpush.msra.mxu0 %v2895
    %3186 = vmatpush.msra.mxu0 %v2894
    %3187 = vmatpush.msra.mxu0 %v2893
    %3188 = vmatmul.f32.gmra.mxu0 %v3052
    %v3189 = vpop.f32.mrf.mxu0
    %v3190 = vadd.f32 0.0, %v3189
    %3191 = vmatmul.f32.gmra.mxu0 %v3055
    %v3192 = vpop.f32.mrf.mxu0
    %v3193 = vadd.f32 0.0, %v3192
    %3194 = vdwg.mxu0
    %3195 = vmatpush.msra.mxu0 0.0
    %3196 = vmatpush.msra.mxu0 0.0
    %3197 = vmatpush.msra.mxu0 0.0
    %3198 = vmatpush.msra.mxu0 0.0
    %3199 = vmatpush.msra.mxu0 0.0
    %3200 = vmatpush.msra.mxu0 0.0
    %3201 = vmatpush.msra.mxu0 0.0
    %3202 = vmatpush.msra.mxu0 0.0
    %3203 = vmatpush.msra.mxu0 0.0
    %3204 = vmatpush.msra.mxu0 0.0
    %3205 = vmatpush.msra.mxu0 0.0
    %3206 = vmatpush.msra.mxu0 0.0
    %3207 = vmatpush.msra.mxu0 %v2900
    %3208 = vmatpush.msra.mxu0 %v2899
    %3209 = vmatpush.msra.mxu0 %v2898
    %3210 = vmatpush.msra.mxu0 %v2897
    %3211 = vmatmul.f32.gmra.mxu0 %v3052
    %v3212 = vpop.f32.mrf.mxu0
    %v3213 = vadd.f32 0.0, %v3212
    %3214 = vmatmul.f32.gmra.mxu0 %v3055
    %v3215 = vpop.f32.mrf.mxu0
    %v3216 = vadd.f32 0.0, %v3215
    %3217 = vdwg.mxu0
    %3218 = vmatpush.msra.mxu0 0.0
    %3219 = vmatpush.msra.mxu0 0.0
    %3220 = vmatpush.msra.mxu0 0.0
    %3221 = vmatpush.msra.mxu0 0.0
    %3222 = vmatpush.msra.mxu0 0.0
    %3223 = vmatpush.msra.mxu0 0.0
    %3224 = vmatpush.msra.mxu0 0.0
    %3225 = vmatpush.msra.mxu0 0.0
    %3226 = vmatpush.msra.mxu0 0.0
    %3227 = vmatpush.msra.mxu0 0.0
    %3228 = vmatpush.msra.mxu0 0.0
    %3229 = vmatpush.msra.mxu0 0.0
    %3230 = vmatpush.msra.mxu0 %v2904
    %3231 = vmatpush.msra.mxu0 %v2903
    %3232 = vmatpush.msra.mxu0 %v2902
    %3233 = vmatpush.msra.mxu0 %v2901
    %3234 = vmatmul.f32.gmra.mxu0 %v3052
    %v3235 = vpop.f32.mrf.mxu0
    %v3236 = vadd.f32 0.0, %v3235
    %3237 = vmatmul.f32.gmra.mxu0 %v3055
    %v3238 = vpop.f32.mrf.mxu0
    %v3239 = vadd.f32 0.0, %v3238
    %3240 = vdwg.mxu0
    %3241 = vmatpush.msra.mxu0 0.0
    %3242 = vmatpush.msra.mxu0 0.0
    %3243 = vmatpush.msra.mxu0 0.0
    %3244 = vmatpush.msra.mxu0 0.0
    %3245 = vmatpush.msra.mxu0 0.0
    %3246 = vmatpush.msra.mxu0 0.0
    %3247 = vmatpush.msra.mxu0 0.0
    %3248 = vmatpush.msra.mxu0 0.0
    %3249 = vmatpush.msra.mxu0 0.0
    %3250 = vmatpush.msra.mxu0 0.0
    %3251 = vmatpush.msra.mxu0 0.0
    %3252 = vmatpush.msra.mxu0 0.0
    %3253 = vmatpush.msra.mxu0 %v2908
    %3254 = vmatpush.msra.mxu0 %v2907
    %3255 = vmatpush.msra.mxu0 %v2906
    %3256 = vmatpush.msra.mxu0 %v2905
    %3257 = vmatmul.f32.gmra.mxu0 %v3052
    %v3258 = vpop.f32.mrf.mxu0
    %v3259 = vadd.f32 0.0, %v3258
    %3260 = vmatmul.f32.gmra.mxu0 %v3055
    %v3261 = vpop.f32.mrf.mxu0
    %v3262 = vadd.f32 0.0, %v3261
    %3263 = vdwg.mxu0
    %3264 = vmatpush.msra.mxu0 0.0
    %3265 = vmatpush.msra.mxu0 0.0
    %3266 = vmatpush.msra.mxu0 0.0
    %3267 = vmatpush.msra.mxu0 0.0
    %3268 = vmatpush.msra.mxu0 0.0
    %3269 = vmatpush.msra.mxu0 0.0
    %3270 = vmatpush.msra.mxu0 0.0
    %3271 = vmatpush.msra.mxu0 0.0
    %3272 = vmatpush.msra.mxu0 0.0
    %3273 = vmatpush.msra.mxu0 0.0
    %3274 = vmatpush.msra.mxu0 0.0
    %3275 = vmatpush.msra.mxu0 0.0
    %3276 = vmatpush.msra.mxu0 %v2912
    %3277 = vmatpush.msra.mxu0 %v2911
    %3278 = vmatpush.msra.mxu0 %v2910
    %3279 = vmatpush.msra.mxu0 %v2909
    %3280 = vmatmul.f32.gmra.mxu0 %v3052
    %v3281 = vpop.f32.mrf.mxu0
    %v3282 = vadd.f32 0.0, %v3281
    %3283 = vmatmul.f32.gmra.mxu0 %v3055
    %v3284 = vpop.f32.mrf.mxu0
    %v3285 = vadd.f32 0.0, %v3284
    %3286 = vdwg.mxu0
    %3287 = vmatpush.msra.mxu0 0.0
    %3288 = vmatpush.msra.mxu0 0.0
    %3289 = vmatpush.msra.mxu0 0.0
    %3290 = vmatpush.msra.mxu0 0.0
    %3291 = vmatpush.msra.mxu0 0.0
    %3292 = vmatpush.msra.mxu0 0.0
    %3293 = vmatpush.msra.mxu0 0.0
    %3294 = vmatpush.msra.mxu0 0.0
    %3295 = vmatpush.msra.mxu0 0.0
    %3296 = vmatpush.msra.mxu0 0.0
    %3297 = vmatpush.msra.mxu0 0.0
    %3298 = vmatpush.msra.mxu0 0.0
    %3299 = vmatpush.msra.mxu0 %v2916
    %3300 = vmatpush.msra.mxu0 %v2915
    %3301 = vmatpush.msra.mxu0 %v2914
    %3302 = vmatpush.msra.mxu0 %v2913
    %3303 = vmatmul.f32.gmra.mxu0 %v3052
    %v3304 = vpop.f32.mrf.mxu0
    %v3305 = vadd.f32 0.0, %v3304
    %3306 = vmatmul.f32.gmra.mxu0 %v3055
    %v3307 = vpop.f32.mrf.mxu0
    %v3308 = vadd.f32 0.0, %v3307
    %3309 = vdwg.mxu0
    %3310 = vmatpush.msra.mxu0 0.0
    %3311 = vmatpush.msra.mxu0 0.0
    %3312 = vmatpush.msra.mxu0 0.0
    %3313 = vmatpush.msra.mxu0 0.0
    %3314 = vmatpush.msra.mxu0 0.0
    %3315 = vmatpush.msra.mxu0 0.0
    %3316 = vmatpush.msra.mxu0 0.0
    %3317 = vmatpush.msra.mxu0 0.0
    %3318 = vmatpush.msra.mxu0 0.0
    %3319 = vmatpush.msra.mxu0 0.0
    %3320 = vmatpush.msra.mxu0 0.0
    %3321 = vmatpush.msra.mxu0 0.0
    %3322 = vmatpush.msra.mxu0 %v2920
    %3323 = vmatpush.msra.mxu0 %v2919
    %3324 = vmatpush.msra.mxu0 %v2918
    %3325 = vmatpush.msra.mxu0 %v2917
    %3326 = vmatmul.f32.gmra.mxu0 %v3052
    %v3327 = vpop.f32.mrf.mxu0
    %v3328 = vadd.f32 0.0, %v3327
    %3329 = vmatmul.f32.gmra.mxu0 %v3055
    %v3330 = vpop.f32.mrf.mxu0
    %v3331 = vadd.f32 0.0, %v3330
    %3332 = vdwg.mxu0
    %v3334 = vsel %vm669, %v3075, 0
    %v3337 = vsel %vm669, %v3167, 0
    %3339 = vmatpush.xpose.msra.mxu0 0.0
    %3340 = vmatpush.xpose.msra.mxu0 0.0
    %3341 = vmatpush.xpose.msra.mxu0 0.0
    %3342 = vmatpush.xpose.msra.mxu0 0.0
    %3343 = vmatpush.xpose.msra.mxu0 0.0
    %3344 = vmatpush.xpose.msra.mxu0 0.0
    %3345 = vmatpush.xpose.msra.mxu0 0.0
    %3346 = vmatpush.xpose.msra.mxu0 0.0
    %3347 = vmatpush.xpose.msra.mxu0 0.0
    %3348 = vmatpush.xpose.msra.mxu0 0.0
    %3349 = vmatpush.xpose.msra.mxu0 0.0
    %3350 = vmatpush.xpose.msra.mxu0 0.0
    %3351 = vmatpush.xpose.msra.mxu0 0.0
    %3352 = vmatpush.xpose.msra.mxu0 0.0
    %3353 = vmatpush.xpose.msra.mxu0 0.0
    %3354 = vmatpush.xpose.msra.mxu0 %v3337
    %3355 = vmatmul.f32.gmra.mxu0 %v3334
    %v3356 = vpop.f32.mrf.mxu0
    %v3357 = vadd.f32 0.0, %v3356
    %3358 = vdwg.mxu0
    %v3360 = vsel %vm669, %v3098, 0
    %v3363 = vsel %vm669, %v3190, 0
    %3365 = vmatpush.xpose.msra.mxu0 0.0
    %3366 = vmatpush.xpose.msra.mxu0 0.0
    %3367 = vmatpush.xpose.msra.mxu0 0.0
    %3368 = vmatpush.xpose.msra.mxu0 0.0
    %3369 = vmatpush.xpose.msra.mxu0 0.0
    %3370 = vmatpush.xpose.msra.mxu0 0.0
    %3371 = vmatpush.xpose.msra.mxu0 0.0
    %3372 = vmatpush.xpose.msra.mxu0 0.0
    %3373 = vmatpush.xpose.msra.mxu0 0.0
    %3374 = vmatpush.xpose.msra.mxu0 0.0
    %3375 = vmatpush.xpose.msra.mxu0 0.0
    %3376 = vmatpush.xpose.msra.mxu0 0.0
    %3377 = vmatpush.xpose.msra.mxu0 0.0
    %3378 = vmatpush.xpose.msra.mxu0 0.0
    %3379 = vmatpush.xpose.msra.mxu0 0.0
    %3380 = vmatpush.xpose.msra.mxu0 %v3363
    %3381 = vmatmul.f32.gmra.mxu0 %v3360
    %v3382 = vpop.f32.mrf.mxu0
    %v3383 = vadd.f32 0.0, %v3382
    %3384 = vdwg.mxu0
    %v3386 = vsel %vm669, %v3121, 0
    %v3389 = vsel %vm669, %v3213, 0
    %3391 = vmatpush.xpose.msra.mxu0 0.0
    %3392 = vmatpush.xpose.msra.mxu0 0.0
    %3393 = vmatpush.xpose.msra.mxu0 0.0
    %3394 = vmatpush.xpose.msra.mxu0 0.0
    %3395 = vmatpush.xpose.msra.mxu0 0.0
    %3396 = vmatpush.xpose.msra.mxu0 0.0
    %3397 = vmatpush.xpose.msra.mxu0 0.0
    %3398 = vmatpush.xpose.msra.mxu0 0.0
    %3399 = vmatpush.xpose.msra.mxu0 0.0
    %3400 = vmatpush.xpose.msra.mxu0 0.0
    %3401 = vmatpush.xpose.msra.mxu0 0.0
    %3402 = vmatpush.xpose.msra.mxu0 0.0
    %3403 = vmatpush.xpose.msra.mxu0 0.0
    %3404 = vmatpush.xpose.msra.mxu0 0.0
    %3405 = vmatpush.xpose.msra.mxu0 0.0
    %3406 = vmatpush.xpose.msra.mxu0 %v3389
    %3407 = vmatmul.f32.gmra.mxu0 %v3386
    %v3408 = vpop.f32.mrf.mxu0
    %v3409 = vadd.f32 0.0, %v3408
    %3410 = vdwg.mxu0
    %v3412 = vsel %vm669, %v3144, 0
    %v3415 = vsel %vm669, %v3236, 0
    %3417 = vmatpush.xpose.msra.mxu0 0.0
    %3418 = vmatpush.xpose.msra.mxu0 0.0
    %3419 = vmatpush.xpose.msra.mxu0 0.0
    %3420 = vmatpush.xpose.msra.mxu0 0.0
    %3421 = vmatpush.xpose.msra.mxu0 0.0
    %3422 = vmatpush.xpose.msra.mxu0 0.0
    %3423 = vmatpush.xpose.msra.mxu0 0.0
    %3424 = vmatpush.xpose.msra.mxu0 0.0
    %3425 = vmatpush.xpose.msra.mxu0 0.0
    %3426 = vmatpush.xpose.msra.mxu0 0.0
    %3427 = vmatpush.xpose.msra.mxu0 0.0
    %3428 = vmatpush.xpose.msra.mxu0 0.0
    %3429 = vmatpush.xpose.msra.mxu0 0.0
    %3430 = vmatpush.xpose.msra.mxu0 0.0
    %3431 = vmatpush.xpose.msra.mxu0 0.0
    %3432 = vmatpush.xpose.msra.mxu0 %v3415
    %3433 = vmatmul.f32.gmra.mxu0 %v3412
    %v3434 = vpop.f32.mrf.mxu0
    %v3435 = vadd.f32 0.0, %v3434
    %3436 = vdwg.mxu0
    %v3437 = vmul.f32 %v3357, 0.35355338
    %v3438 = vmul.f32 %v3383, 0.35355338
    %v3439 = vmul.f32 %v3409, 0.35355338
    %v3440 = vmul.f32 %v3435, 0.35355338
    %v3441 = vadd.f32 %v3437, %v191
    %v3442 = vadd.f32 %v3438, %v191
    %v3443 = vadd.f32 %v3439, %v191
    %v3444 = vadd.f32 %v3440, %v191
    %v3445 = vsel %vm669, %v3441, -inf
    %3446 = vmax.xlane.f32.xlu0 %v3445
    %v3447 = vpop.xlane.xlu0 %3446
    %v3448 = vsel %vm669, %v3442, -inf
    %3449 = vmax.xlane.f32.xlu0 %v3448
    %v3450 = vpop.xlane.xlu0 %3449
    %v3451 = vsel %vm669, %v3443, -inf
    %3452 = vmax.xlane.f32.xlu0 %v3451
    %v3453 = vpop.xlane.xlu0 %3452
    %v3454 = vsel %vm669, %v3444, -inf
    %3455 = vmax.xlane.f32.xlu0 %v3454
    %v3456 = vpop.xlane.xlu0 %3455
    %v3457 = vsub.f32 %v3441, %v3447
    %v3458 = vsub.f32 %v3442, %v3450
    %v3459 = vsub.f32 %v3443, %v3453
    %v3460 = vsub.f32 %v3444, %v3456
    %v3461 = vmul.f32 %v3457, 1.442695
    %v3462 = vpow.pop %v3461
    %v3463 = vmul.f32 %v3458, 1.442695
    %v3464 = vpow.pop %v3463
    %v3465 = vmul.f32 %v3459, 1.442695
    %v3466 = vpow.pop %v3465
    %v3467 = vmul.f32 %v3460, 1.442695
    %v3468 = vpow.pop %v3467
    %v3469 = vsel %vm669, %v3462, 0.0
    %3470 = vadd.xlane.f32.xlu0 %v3469
    %v3471 = vpop.xlane.xlu0 %3470
    %v3472 = vsel %vm669, %v3464, 0.0
    %3473 = vadd.xlane.f32.xlu0 %v3472
    %v3474 = vpop.xlane.xlu0 %3473
    %v3475 = vsel %vm669, %v3466, 0.0
    %3476 = vadd.xlane.f32.xlu0 %v3475
    %v3477 = vpop.xlane.xlu0 %3476
    %v3478 = vsel %vm669, %v3468, 0.0
    %3479 = vadd.xlane.f32.xlu0 %v3478
    %v3480 = vpop.xlane.xlu0 %3479
    %v3481 = vrcp.pop %v3471
    %v3482 = vmul.f32 %v3471, %v3481
    %v3483 = vsub.f32 1.0, %v3482
    %v3484 = vmul.f32 %v3481, %v3483
    %v3485 = vadd.f32 %v3481, %v3484
    %vm3486 = vweird.f32 %v3471
    %vm3487 = vweird.f32 %v3481
    %vm3488 = vmor %vm3486, %vm3487
    %v3489 = vsel %vm3488, %v3481, %v3485
    %v3490 = vand.u32 2147483647, %v3471
    %vm3491 = vcmp.eq.f32.partialorder %v3490, 8.507059e+37
    %v3492 = vand.u32 %v3471, 2147483648
    %v3493 = vor.u32 1.1754944e-38, %v3492
    %v3494 = vsel %vm3491, %v3493, %v3489
    %v3495 = vrcp.pop %v3474
    %v3496 = vmul.f32 %v3474, %v3495
    %v3497 = vsub.f32 1.0, %v3496
    %v3498 = vmul.f32 %v3495, %v3497
    %v3499 = vadd.f32 %v3495, %v3498
    %vm3500 = vweird.f32 %v3474
    %vm3501 = vweird.f32 %v3495
    %vm3502 = vmor %vm3500, %vm3501
    %v3503 = vsel %vm3502, %v3495, %v3499
    %v3504 = vand.u32 2147483647, %v3474
    %vm3505 = vcmp.eq.f32.partialorder %v3504, 8.507059e+37
    %v3506 = vand.u32 %v3474, 2147483648
    %v3507 = vor.u32 1.1754944e-38, %v3506
    %v3508 = vsel %vm3505, %v3507, %v3503
    %v3509 = vrcp.pop %v3477
    %v3510 = vmul.f32 %v3477, %v3509
    %v3511 = vsub.f32 1.0, %v3510
    %v3512 = vmul.f32 %v3509, %v3511
    %v3513 = vadd.f32 %v3509, %v3512
    %vm3514 = vweird.f32 %v3477
    %vm3515 = vweird.f32 %v3509
    %vm3516 = vmor %vm3514, %vm3515
    %v3517 = vsel %vm3516, %v3509, %v3513
    %v3518 = vand.u32 2147483647, %v3477
    %vm3519 = vcmp.eq.f32.partialorder %v3518, 8.507059e+37
    %v3520 = vand.u32 %v3477, 2147483648
    %v3521 = vor.u32 1.1754944e-38, %v3520
    %v3522 = vsel %vm3519, %v3521, %v3517
    %v3523 = vrcp.pop %v3480
    %v3524 = vmul.f32 %v3480, %v3523
    %v3525 = vsub.f32 1.0, %v3524
    %v3526 = vmul.f32 %v3523, %v3525
    %v3527 = vadd.f32 %v3523, %v3526
    %vm3528 = vweird.f32 %v3480
    %vm3529 = vweird.f32 %v3523
    %vm3530 = vmor %vm3528, %vm3529
    %v3531 = vsel %vm3530, %v3523, %v3527
    %v3532 = vand.u32 2147483647, %v3480
    %vm3533 = vcmp.eq.f32.partialorder %v3532, 8.507059e+37
    %v3534 = vand.u32 %v3480, 2147483648
    %v3535 = vor.u32 1.1754944e-38, %v3534
    %v3536 = vsel %vm3533, %v3535, %v3531
    %v3537 = vmul.f32 %v3462, %v3494
    %v3538 = vmul.f32 %v3464, %v3508
    %v3539 = vmul.f32 %v3466, %v3522
    %v3540 = vmul.f32 %v3468, %v3536
    %v3542 = vsel %vm669, %v3537, 0
    %3544 = vmatpush.msra.mxu0 0.0
    %3545 = vmatpush.msra.mxu0 0.0
    %3546 = vmatpush.msra.mxu0 0.0
    %3547 = vmatpush.msra.mxu0 0.0
    %3548 = vmatpush.msra.mxu0 0.0
    %3549 = vmatpush.msra.mxu0 0.0
    %3550 = vmatpush.msra.mxu0 0.0
    %3551 = vmatpush.msra.mxu0 0.0
    %3552 = vmatpush.msra.mxu0 0.0
    %3553 = vmatpush.msra.mxu0 0.0
    %3554 = vmatpush.msra.mxu0 0.0
    %3555 = vmatpush.msra.mxu0 0.0
    %3556 = vmatpush.msra.mxu0 0.0
    %3557 = vmatpush.msra.mxu0 0.0
    %3558 = vmatpush.msra.mxu0 0.0
    %3559 = vmatpush.msra.mxu0 %v3259
    %3560 = vmatmul.f32.gmra.mxu0 %v3542
    %v3561 = vpop.f32.mrf.mxu0
    %v3562 = vadd.f32 0.0, %v3561
    %3563 = vdwg.mxu0
    %v3565 = vsel %vm669, %v3538, 0
    %3567 = vmatpush.msra.mxu0 0.0
    %3568 = vmatpush.msra.mxu0 0.0
    %3569 = vmatpush.msra.mxu0 0.0
    %3570 = vmatpush.msra.mxu0 0.0
    %3571 = vmatpush.msra.mxu0 0.0
    %3572 = vmatpush.msra.mxu0 0.0
    %3573 = vmatpush.msra.mxu0 0.0
    %3574 = vmatpush.msra.mxu0 0.0
    %3575 = vmatpush.msra.mxu0 0.0
    %3576 = vmatpush.msra.mxu0 0.0
    %3577 = vmatpush.msra.mxu0 0.0
    %3578 = vmatpush.msra.mxu0 0.0
    %3579 = vmatpush.msra.mxu0 0.0
    %3580 = vmatpush.msra.mxu0 0.0
    %3581 = vmatpush.msra.mxu0 0.0
    %3582 = vmatpush.msra.mxu0 %v3282
    %3583 = vmatmul.f32.gmra.mxu0 %v3565
    %v3584 = vpop.f32.mrf.mxu0
    %v3585 = vadd.f32 0.0, %v3584
    %3586 = vdwg.mxu0
    %v3588 = vsel %vm669, %v3539, 0
    %3590 = vmatpush.msra.mxu0 0.0
    %3591 = vmatpush.msra.mxu0 0.0
    %3592 = vmatpush.msra.mxu0 0.0
    %3593 = vmatpush.msra.mxu0 0.0
    %3594 = vmatpush.msra.mxu0 0.0
    %3595 = vmatpush.msra.mxu0 0.0
    %3596 = vmatpush.msra.mxu0 0.0
    %3597 = vmatpush.msra.mxu0 0.0
    %3598 = vmatpush.msra.mxu0 0.0
    %3599 = vmatpush.msra.mxu0 0.0
    %3600 = vmatpush.msra.mxu0 0.0
    %3601 = vmatpush.msra.mxu0 0.0
    %3602 = vmatpush.msra.mxu0 0.0
    %3603 = vmatpush.msra.mxu0 0.0
    %3604 = vmatpush.msra.mxu0 0.0
    %3605 = vmatpush.msra.mxu0 %v3305
    %3606 = vmatmul.f32.gmra.mxu0 %v3588
    %v3607 = vpop.f32.mrf.mxu0
    %v3608 = vadd.f32 0.0, %v3607
    %3609 = vdwg.mxu0
    %v3611 = vsel %vm669, %v3540, 0
    %3613 = vmatpush.msra.mxu0 0.0
    %3614 = vmatpush.msra.mxu0 0.0
    %3615 = vmatpush.msra.mxu0 0.0
    %3616 = vmatpush.msra.mxu0 0.0
    %3617 = vmatpush.msra.mxu0 0.0
    %3618 = vmatpush.msra.mxu0 0.0
    %3619 = vmatpush.msra.mxu0 0.0
    %3620 = vmatpush.msra.mxu0 0.0
    %3621 = vmatpush.msra.mxu0 0.0
    %3622 = vmatpush.msra.mxu0 0.0
    %3623 = vmatpush.msra.mxu0 0.0
    %3624 = vmatpush.msra.mxu0 0.0
    %3625 = vmatpush.msra.mxu0 0.0
    %3626 = vmatpush.msra.mxu0 0.0
    %3627 = vmatpush.msra.mxu0 0.0
    %3628 = vmatpush.msra.mxu0 %v3328
    %3629 = vmatmul.f32.gmra.mxu0 %v3611
    %v3630 = vpop.f32.mrf.mxu0
    %v3631 = vadd.f32 0.0, %v3630
    %3632 = vdwg.mxu0
    %v3634 = vsel %vm669, %v3562, 0
    %3636 = vmatpush.msra.mxu0 0.0
    %3637 = vmatpush.msra.mxu0 0.0
    %3638 = vmatpush.msra.mxu0 0.0
    %3639 = vmatpush.msra.mxu0 0.0
    %3640 = vmatpush.msra.mxu0 0.0
    %3641 = vmatpush.msra.mxu0 0.0
    %3642 = vmatpush.msra.mxu0 0.0
    %3643 = vmatpush.msra.mxu0 0.0
    %3644 = vmatpush.msra.mxu0 0.0
    %3645 = vmatpush.msra.mxu0 0.0
    %3646 = vmatpush.msra.mxu0 0.0
    %3647 = vmatpush.msra.mxu0 0.0
    %3648 = vmatpush.msra.mxu0 0.0
    %3649 = vmatpush.msra.mxu0 0.0
    %3650 = vmatpush.msra.mxu0 0.0
    %3651 = vmatpush.msra.mxu0 %v2921
    %3652 = vmatmul.f32.gmra.mxu0 %v3634
    %v3653 = vpop.f32.mrf.mxu0
    %v3654 = vadd.f32 0.0, %v3653
    %3655 = vdwg.mxu0
    %v3657 = vsel %vm669, %v3585, 0
    %3659 = vmatpush.msra.mxu0 0.0
    %3660 = vmatpush.msra.mxu0 0.0
    %3661 = vmatpush.msra.mxu0 0.0
    %3662 = vmatpush.msra.mxu0 0.0
    %3663 = vmatpush.msra.mxu0 0.0
    %3664 = vmatpush.msra.mxu0 0.0
    %3665 = vmatpush.msra.mxu0 0.0
    %3666 = vmatpush.msra.mxu0 0.0
    %3667 = vmatpush.msra.mxu0 0.0
    %3668 = vmatpush.msra.mxu0 0.0
    %3669 = vmatpush.msra.mxu0 0.0
    %3670 = vmatpush.msra.mxu0 0.0
    %3671 = vmatpush.msra.mxu0 0.0
    %3672 = vmatpush.msra.mxu0 0.0
    %3673 = vmatpush.msra.mxu0 0.0
    %3674 = vmatpush.msra.mxu0 %v2922
    %3675 = vmatmul.f32.gmra.mxu0 %v3657
    %v3676 = vpop.f32.mrf.mxu0
    %v3677 = vadd.f32 0.0, %v3676
    %3678 = vdwg.mxu0
    %v3680 = vsel %vm669, %v3608, 0
    %3682 = vmatpush.msra.mxu0 0.0
    %3683 = vmatpush.msra.mxu0 0.0
    %3684 = vmatpush.msra.mxu0 0.0
    %3685 = vmatpush.msra.mxu0 0.0
    %3686 = vmatpush.msra.mxu0 0.0
    %3687 = vmatpush.msra.mxu0 0.0
    %3688 = vmatpush.msra.mxu0 0.0
    %3689 = vmatpush.msra.mxu0 0.0
    %3690 = vmatpush.msra.mxu0 0.0
    %3691 = vmatpush.msra.mxu0 0.0
    %3692 = vmatpush.msra.mxu0 0.0
    %3693 = vmatpush.msra.mxu0 0.0
    %3694 = vmatpush.msra.mxu0 0.0
    %3695 = vmatpush.msra.mxu0 0.0
    %3696 = vmatpush.msra.mxu0 0.0
    %3697 = vmatpush.msra.mxu0 %v2923
    %3698 = vmatmul.f32.gmra.mxu0 %v3680
    %v3699 = vpop.f32.mrf.mxu0
    %v3700 = vadd.f32 0.0, %v3699
    %3701 = vdwg.mxu0
    %v3703 = vsel %vm669, %v3631, 0
    %3705 = vmatpush.msra.mxu0 0.0
    %3706 = vmatpush.msra.mxu0 0.0
    %3707 = vmatpush.msra.mxu0 0.0
    %3708 = vmatpush.msra.mxu0 0.0
    %3709 = vmatpush.msra.mxu0 0.0
    %3710 = vmatpush.msra.mxu0 0.0
    %3711 = vmatpush.msra.mxu0 0.0
    %3712 = vmatpush.msra.mxu0 0.0
    %3713 = vmatpush.msra.mxu0 0.0
    %3714 = vmatpush.msra.mxu0 0.0
    %3715 = vmatpush.msra.mxu0 0.0
    %3716 = vmatpush.msra.mxu0 0.0
    %3717 = vmatpush.msra.mxu0 0.0
    %3718 = vmatpush.msra.mxu0 0.0
    %3719 = vmatpush.msra.mxu0 0.0
    %3720 = vmatpush.msra.mxu0 %v2924
    %3721 = vmatmul.f32.gmra.mxu0 %v3703
    %v3722 = vpop.f32.mrf.mxu0
    %v3723 = vadd.f32 0.0, %v3722
    %3724 = vdwg.mxu0
    %v3725 = vsel %vm325, %v3654, 0.0
    %v3726 = vsel %vm325, %v3677, 0.0
    %v3727 = vadd.f32 %v3725, %v3726
    %v3728 = vsel %vm325, %v3700, 0.0
    %v3729 = vadd.f32 %v3727, %v3728
    %v3730 = vsel %vm325, %v3723, 0.0
    %v3731 = vadd.f32 %v3729, %v3730
    %v3733 = vsel %vm669, %v3078, 0
    %v3736 = vsel %vm669, %v3170, 0
    %3738 = vmatpush.xpose.msra.mxu0 0.0
    %3739 = vmatpush.xpose.msra.mxu0 0.0
    %3740 = vmatpush.xpose.msra.mxu0 0.0
    %3741 = vmatpush.xpose.msra.mxu0 0.0
    %3742 = vmatpush.xpose.msra.mxu0 0.0
    %3743 = vmatpush.xpose.msra.mxu0 0.0
    %3744 = vmatpush.xpose.msra.mxu0 0.0
    %3745 = vmatpush.xpose.msra.mxu0 0.0
    %3746 = vmatpush.xpose.msra.mxu0 0.0
    %3747 = vmatpush.xpose.msra.mxu0 0.0
    %3748 = vmatpush.xpose.msra.mxu0 0.0
    %3749 = vmatpush.xpose.msra.mxu0 0.0
    %3750 = vmatpush.xpose.msra.mxu0 0.0
    %3751 = vmatpush.xpose.msra.mxu0 0.0
    %3752 = vmatpush.xpose.msra.mxu0 0.0
    %3753 = vmatpush.xpose.msra.mxu0 %v3736
    %3754 = vmatmul.f32.gmra.mxu0 %v3733
    %v3755 = vpop.f32.mrf.mxu0
    %v3756 = vadd.f32 0.0, %v3755
    %3757 = vdwg.mxu0
    %v3759 = vsel %vm669, %v3101, 0
    %v3762 = vsel %vm669, %v3193, 0
    %3764 = vmatpush.xpose.msra.mxu0 0.0
    %3765 = vmatpush.xpose.msra.mxu0 0.0
    %3766 = vmatpush.xpose.msra.mxu0 0.0
    %3767 = vmatpush.xpose.msra.mxu0 0.0
    %3768 = vmatpush.xpose.msra.mxu0 0.0
    %3769 = vmatpush.xpose.msra.mxu0 0.0
    %3770 = vmatpush.xpose.msra.mxu0 0.0
    %3771 = vmatpush.xpose.msra.mxu0 0.0
    %3772 = vmatpush.xpose.msra.mxu0 0.0
    %3773 = vmatpush.xpose.msra.mxu0 0.0
    %3774 = vmatpush.xpose.msra.mxu0 0.0
    %3775 = vmatpush.xpose.msra.mxu0 0.0
    %3776 = vmatpush.xpose.msra.mxu0 0.0
    %3777 = vmatpush.xpose.msra.mxu0 0.0
    %3778 = vmatpush.xpose.msra.mxu0 0.0
    %3779 = vmatpush.xpose.msra.mxu0 %v3762
    %3780 = vmatmul.f32.gmra.mxu0 %v3759
    %v3781 = vpop.f32.mrf.mxu0
    %v3782 = vadd.f32 0.0, %v3781
    %3783 = vdwg.mxu0
    %v3785 = vsel %vm669, %v3124, 0
    %v3788 = vsel %vm669, %v3216, 0
    %3790 = vmatpush.xpose.msra.mxu0 0.0
    %3791 = vmatpush.xpose.msra.mxu0 0.0
    %3792 = vmatpush.xpose.msra.mxu0 0.0
    %3793 = vmatpush.xpose.msra.mxu0 0.0
    %3794 = vmatpush.xpose.msra.mxu0 0.0
    %3795 = vmatpush.xpose.msra.mxu0 0.0
    %3796 = vmatpush.xpose.msra.mxu0 0.0
    %3797 = vmatpush.xpose.msra.mxu0 0.0
    %3798 = vmatpush.xpose.msra.mxu0 0.0
    %3799 = vmatpush.xpose.msra.mxu0 0.0
    %3800 = vmatpush.xpose.msra.mxu0 0.0
    %3801 = vmatpush.xpose.msra.mxu0 0.0
    %3802 = vmatpush.xpose.msra.mxu0 0.0
    %3803 = vmatpush.xpose.msra.mxu0 0.0
    %3804 = vmatpush.xpose.msra.mxu0 0.0
    %3805 = vmatpush.xpose.msra.mxu0 %v3788
    %3806 = vmatmul.f32.gmra.mxu0 %v3785
    %v3807 = vpop.f32.mrf.mxu0
    %v3808 = vadd.f32 0.0, %v3807
    %3809 = vdwg.mxu0
    %v3811 = vsel %vm669, %v3147, 0
    %v3814 = vsel %vm669, %v3239, 0
    %3816 = vmatpush.xpose.msra.mxu0 0.0
    %3817 = vmatpush.xpose.msra.mxu0 0.0
    %3818 = vmatpush.xpose.msra.mxu0 0.0
    %3819 = vmatpush.xpose.msra.mxu0 0.0
    %3820 = vmatpush.xpose.msra.mxu0 0.0
    %3821 = vmatpush.xpose.msra.mxu0 0.0
    %3822 = vmatpush.xpose.msra.mxu0 0.0
    %3823 = vmatpush.xpose.msra.mxu0 0.0
    %3824 = vmatpush.xpose.msra.mxu0 0.0
    %3825 = vmatpush.xpose.msra.mxu0 0.0
    %3826 = vmatpush.xpose.msra.mxu0 0.0
    %3827 = vmatpush.xpose.msra.mxu0 0.0
    %3828 = vmatpush.xpose.msra.mxu0 0.0
    %3829 = vmatpush.xpose.msra.mxu0 0.0
    %3830 = vmatpush.xpose.msra.mxu0 0.0
    %3831 = vmatpush.xpose.msra.mxu0 %v3814
    %3832 = vmatmul.f32.gmra.mxu0 %v3811
    %v3833 = vpop.f32.mrf.mxu0
    %v3834 = vadd.f32 0.0, %v3833
    %3835 = vdwg.mxu0
    %v3836 = vmul.f32 %v3756, 0.35355338
    %v3837 = vmul.f32 %v3782, 0.35355338
    %v3838 = vmul.f32 %v3808, 0.35355338
    %v3839 = vmul.f32 %v3834, 0.35355338
    %v3840 = vadd.f32 %v3836, %v192
    %v3841 = vadd.f32 %v3837, %v192
    %v3842 = vadd.f32 %v3838, %v192
    %v3843 = vadd.f32 %v3839, %v192
    %v3844 = vsel %vm669, %v3840, -inf
    %3845 = vmax.xlane.f32.xlu0 %v3844
    %v3846 = vpop.xlane.xlu0 %3845
    %v3847 = vsel %vm669, %v3841, -inf
    %3848 = vmax.xlane.f32.xlu0 %v3847
    %v3849 = vpop.xlane.xlu0 %3848
    %v3850 = vsel %vm669, %v3842, -inf
    %3851 = vmax.xlane.f32.xlu0 %v3850
    %v3852 = vpop.xlane.xlu0 %3851
    %v3853 = vsel %vm669, %v3843, -inf
    %3854 = vmax.xlane.f32.xlu0 %v3853
    %v3855 = vpop.xlane.xlu0 %3854
    %v3856 = vsub.f32 %v3840, %v3846
    %v3857 = vsub.f32 %v3841, %v3849
    %v3858 = vsub.f32 %v3842, %v3852
    %v3859 = vsub.f32 %v3843, %v3855
    %v3860 = vmul.f32 %v3856, 1.442695
    %v3861 = vpow.pop %v3860
    %v3862 = vmul.f32 %v3857, 1.442695
    %v3863 = vpow.pop %v3862
    %v3864 = vmul.f32 %v3858, 1.442695
    %v3865 = vpow.pop %v3864
    %v3866 = vmul.f32 %v3859, 1.442695
    %v3867 = vpow.pop %v3866
    %v3868 = vsel %vm669, %v3861, 0.0
    %3869 = vadd.xlane.f32.xlu0 %v3868
    %v3870 = vpop.xlane.xlu0 %3869
    %v3871 = vsel %vm669, %v3863, 0.0
    %3872 = vadd.xlane.f32.xlu0 %v3871
    %v3873 = vpop.xlane.xlu0 %3872
    %v3874 = vsel %vm669, %v3865, 0.0
    %3875 = vadd.xlane.f32.xlu0 %v3874
    %v3876 = vpop.xlane.xlu0 %3875
    %v3877 = vsel %vm669, %v3867, 0.0
    %3878 = vadd.xlane.f32.xlu0 %v3877
    %v3879 = vpop.xlane.xlu0 %3878
    %v3880 = vrcp.pop %v3870
    %v3881 = vmul.f32 %v3870, %v3880
    %v3882 = vsub.f32 1.0, %v3881
    %v3883 = vmul.f32 %v3880, %v3882
    %v3884 = vadd.f32 %v3880, %v3883
    %vm3885 = vweird.f32 %v3870
    %vm3886 = vweird.f32 %v3880
    %vm3887 = vmor %vm3885, %vm3886
    %v3888 = vsel %vm3887, %v3880, %v3884
    %v3889 = vand.u32 2147483647, %v3870
    %vm3890 = vcmp.eq.f32.partialorder %v3889, 8.507059e+37
    %v3891 = vand.u32 %v3870, 2147483648
    %v3892 = vor.u32 1.1754944e-38, %v3891
    %v3893 = vsel %vm3890, %v3892, %v3888
    %v3894 = vrcp.pop %v3873
    %v3895 = vmul.f32 %v3873, %v3894
    %v3896 = vsub.f32 1.0, %v3895
    %v3897 = vmul.f32 %v3894, %v3896
    %v3898 = vadd.f32 %v3894, %v3897
    %vm3899 = vweird.f32 %v3873
    %vm3900 = vweird.f32 %v3894
    %vm3901 = vmor %vm3899, %vm3900
    %v3902 = vsel %vm3901, %v3894, %v3898
    %v3903 = vand.u32 2147483647, %v3873
    %vm3904 = vcmp.eq.f32.partialorder %v3903, 8.507059e+37
    %v3905 = vand.u32 %v3873, 2147483648
    %v3906 = vor.u32 1.1754944e-38, %v3905
    %v3907 = vsel %vm3904, %v3906, %v3902
    %v3908 = vrcp.pop %v3876
    %v3909 = vmul.f32 %v3876, %v3908
    %v3910 = vsub.f32 1.0, %v3909
    %v3911 = vmul.f32 %v3908, %v3910
    %v3912 = vadd.f32 %v3908, %v3911
    %vm3913 = vweird.f32 %v3876
    %vm3914 = vweird.f32 %v3908
    %vm3915 = vmor %vm3913, %vm3914
    %v3916 = vsel %vm3915, %v3908, %v3912
    %v3917 = vand.u32 2147483647, %v3876
    %vm3918 = vcmp.eq.f32.partialorder %v3917, 8.507059e+37
    %v3919 = vand.u32 %v3876, 2147483648
    %v3920 = vor.u32 1.1754944e-38, %v3919
    %v3921 = vsel %vm3918, %v3920, %v3916
    %v3922 = vrcp.pop %v3879
    %v3923 = vmul.f32 %v3879, %v3922
    %v3924 = vsub.f32 1.0, %v3923
    %v3925 = vmul.f32 %v3922, %v3924
    %v3926 = vadd.f32 %v3922, %v3925
    %vm3927 = vweird.f32 %v3879
    %vm3928 = vweird.f32 %v3922
    %vm3929 = vmor %vm3927, %vm3928
    %v3930 = vsel %vm3929, %v3922, %v3926
    %v3931 = vand.u32 2147483647, %v3879
    %vm3932 = vcmp.eq.f32.partialorder %v3931, 8.507059e+37
    %v3933 = vand.u32 %v3879, 2147483648
    %v3934 = vor.u32 1.1754944e-38, %v3933
    %v3935 = vsel %vm3932, %v3934, %v3930
    %v3936 = vmul.f32 %v3861, %v3893
    %v3937 = vmul.f32 %v3863, %v3907
    %v3938 = vmul.f32 %v3865, %v3921
    %v3939 = vmul.f32 %v3867, %v3935
    %v3941 = vsel %vm669, %v3936, 0
    %3943 = vmatpush.msra.mxu0 0.0
    %3944 = vmatpush.msra.mxu0 0.0
    %3945 = vmatpush.msra.mxu0 0.0
    %3946 = vmatpush.msra.mxu0 0.0
    %3947 = vmatpush.msra.mxu0 0.0
    %3948 = vmatpush.msra.mxu0 0.0
    %3949 = vmatpush.msra.mxu0 0.0
    %3950 = vmatpush.msra.mxu0 0.0
    %3951 = vmatpush.msra.mxu0 0.0
    %3952 = vmatpush.msra.mxu0 0.0
    %3953 = vmatpush.msra.mxu0 0.0
    %3954 = vmatpush.msra.mxu0 0.0
    %3955 = vmatpush.msra.mxu0 0.0
    %3956 = vmatpush.msra.mxu0 0.0
    %3957 = vmatpush.msra.mxu0 0.0
    %3958 = vmatpush.msra.mxu0 %v3262
    %3959 = vmatmul.f32.gmra.mxu0 %v3941
    %v3960 = vpop.f32.mrf.mxu0
    %v3961 = vadd.f32 0.0, %v3960
    %3962 = vdwg.mxu0
    %v3964 = vsel %vm669, %v3937, 0
    %3966 = vmatpush.msra.mxu0 0.0
    %3967 = vmatpush.msra.mxu0 0.0
    %3968 = vmatpush.msra.mxu0 0.0
    %3969 = vmatpush.msra.mxu0 0.0
    %3970 = vmatpush.msra.mxu0 0.0
    %3971 = vmatpush.msra.mxu0 0.0
    %3972 = vmatpush.msra.mxu0 0.0
    %3973 = vmatpush.msra.mxu0 0.0
    %3974 = vmatpush.msra.mxu0 0.0
    %3975 = vmatpush.msra.mxu0 0.0
    %3976 = vmatpush.msra.mxu0 0.0
    %3977 = vmatpush.msra.mxu0 0.0
    %3978 = vmatpush.msra.mxu0 0.0
    %3979 = vmatpush.msra.mxu0 0.0
    %3980 = vmatpush.msra.mxu0 0.0
    %3981 = vmatpush.msra.mxu0 %v3285
    %3982 = vmatmul.f32.gmra.mxu0 %v3964
    %v3983 = vpop.f32.mrf.mxu0
    %v3984 = vadd.f32 0.0, %v3983
    %3985 = vdwg.mxu0
    %v3987 = vsel %vm669, %v3938, 0
    %3989 = vmatpush.msra.mxu0 0.0
    %3990 = vmatpush.msra.mxu0 0.0
    %3991 = vmatpush.msra.mxu0 0.0
    %3992 = vmatpush.msra.mxu0 0.0
    %3993 = vmatpush.msra.mxu0 0.0
    %3994 = vmatpush.msra.mxu0 0.0
    %3995 = vmatpush.msra.mxu0 0.0
    %3996 = vmatpush.msra.mxu0 0.0
    %3997 = vmatpush.msra.mxu0 0.0
    %3998 = vmatpush.msra.mxu0 0.0
    %3999 = vmatpush.msra.mxu0 0.0
    %4000 = vmatpush.msra.mxu0 0.0
    %4001 = vmatpush.msra.mxu0 0.0
    %4002 = vmatpush.msra.mxu0 0.0
    %4003 = vmatpush.msra.mxu0 0.0
    %4004 = vmatpush.msra.mxu0 %v3308
    %4005 = vmatmul.f32.gmra.mxu0 %v3987
    %v4006 = vpop.f32.mrf.mxu0
    %v4007 = vadd.f32 0.0, %v4006
    %4008 = vdwg.mxu0
    %v4010 = vsel %vm669, %v3939, 0
    %4012 = vmatpush.msra.mxu0 0.0
    %4013 = vmatpush.msra.mxu0 0.0
    %4014 = vmatpush.msra.mxu0 0.0
    %4015 = vmatpush.msra.mxu0 0.0
    %4016 = vmatpush.msra.mxu0 0.0
    %4017 = vmatpush.msra.mxu0 0.0
    %4018 = vmatpush.msra.mxu0 0.0
    %4019 = vmatpush.msra.mxu0 0.0
    %4020 = vmatpush.msra.mxu0 0.0
    %4021 = vmatpush.msra.mxu0 0.0
    %4022 = vmatpush.msra.mxu0 0.0
    %4023 = vmatpush.msra.mxu0 0.0
    %4024 = vmatpush.msra.mxu0 0.0
    %4025 = vmatpush.msra.mxu0 0.0
    %4026 = vmatpush.msra.mxu0 0.0
    %4027 = vmatpush.msra.mxu0 %v3331
    %4028 = vmatmul.f32.gmra.mxu0 %v4010
    %v4029 = vpop.f32.mrf.mxu0
    %v4030 = vadd.f32 0.0, %v4029
    %4031 = vdwg.mxu0
    %v4033 = vsel %vm669, %v3961, 0
    %4035 = vmatpush.msra.mxu0 0.0
    %4036 = vmatpush.msra.mxu0 0.0
    %4037 = vmatpush.msra.mxu0 0.0
    %4038 = vmatpush.msra.mxu0 0.0
    %4039 = vmatpush.msra.mxu0 0.0
    %4040 = vmatpush.msra.mxu0 0.0
    %4041 = vmatpush.msra.mxu0 0.0
    %4042 = vmatpush.msra.mxu0 0.0
    %4043 = vmatpush.msra.mxu0 0.0
    %4044 = vmatpush.msra.mxu0 0.0
    %4045 = vmatpush.msra.mxu0 0.0
    %4046 = vmatpush.msra.mxu0 0.0
    %4047 = vmatpush.msra.mxu0 0.0
    %4048 = vmatpush.msra.mxu0 0.0
    %4049 = vmatpush.msra.mxu0 0.0
    %4050 = vmatpush.msra.mxu0 %v2921
    %4051 = vmatmul.f32.gmra.mxu0 %v4033
    %v4052 = vpop.f32.mrf.mxu0
    %v4053 = vadd.f32 0.0, %v4052
    %4054 = vdwg.mxu0
    %v4056 = vsel %vm669, %v3984, 0
    %4058 = vmatpush.msra.mxu0 0.0
    %4059 = vmatpush.msra.mxu0 0.0
    %4060 = vmatpush.msra.mxu0 0.0
    %4061 = vmatpush.msra.mxu0 0.0
    %4062 = vmatpush.msra.mxu0 0.0
    %4063 = vmatpush.msra.mxu0 0.0
    %4064 = vmatpush.msra.mxu0 0.0
    %4065 = vmatpush.msra.mxu0 0.0
    %4066 = vmatpush.msra.mxu0 0.0
    %4067 = vmatpush.msra.mxu0 0.0
    %4068 = vmatpush.msra.mxu0 0.0
    %4069 = vmatpush.msra.mxu0 0.0
    %4070 = vmatpush.msra.mxu0 0.0
    %4071 = vmatpush.msra.mxu0 0.0
    %4072 = vmatpush.msra.mxu0 0.0
    %4073 = vmatpush.msra.mxu0 %v2922
    %4074 = vmatmul.f32.gmra.mxu0 %v4056
    %v4075 = vpop.f32.mrf.mxu0
    %v4076 = vadd.f32 0.0, %v4075
    %4077 = vdwg.mxu0
    %v4079 = vsel %vm669, %v4007, 0
    %4081 = vmatpush.msra.mxu0 0.0
    %4082 = vmatpush.msra.mxu0 0.0
    %4083 = vmatpush.msra.mxu0 0.0
    %4084 = vmatpush.msra.mxu0 0.0
    %4085 = vmatpush.msra.mxu0 0.0
    %4086 = vmatpush.msra.mxu0 0.0
    %4087 = vmatpush.msra.mxu0 0.0
    %4088 = vmatpush.msra.mxu0 0.0
    %4089 = vmatpush.msra.mxu0 0.0
    %4090 = vmatpush.msra.mxu0 0.0
    %4091 = vmatpush.msra.mxu0 0.0
    %4092 = vmatpush.msra.mxu0 0.0
    %4093 = vmatpush.msra.mxu0 0.0
    %4094 = vmatpush.msra.mxu0 0.0
    %4095 = vmatpush.msra.mxu0 0.0
    %4096 = vmatpush.msra.mxu0 %v2923
    %4097 = vmatmul.f32.gmra.mxu0 %v4079
    %v4098 = vpop.f32.mrf.mxu0
    %v4099 = vadd.f32 0.0, %v4098
    %4100 = vdwg.mxu0
    %v4102 = vsel %vm669, %v4030, 0
    %4104 = vmatpush.msra.mxu0 0.0
    %4105 = vmatpush.msra.mxu0 0.0
    %4106 = vmatpush.msra.mxu0 0.0
    %4107 = vmatpush.msra.mxu0 0.0
    %4108 = vmatpush.msra.mxu0 0.0
    %4109 = vmatpush.msra.mxu0 0.0
    %4110 = vmatpush.msra.mxu0 0.0
    %4111 = vmatpush.msra.mxu0 0.0
    %4112 = vmatpush.msra.mxu0 0.0
    %4113 = vmatpush.msra.mxu0 0.0
    %4114 = vmatpush.msra.mxu0 0.0
    %4115 = vmatpush.msra.mxu0 0.0
    %4116 = vmatpush.msra.mxu0 0.0
    %4117 = vmatpush.msra.mxu0 0.0
    %4118 = vmatpush.msra.mxu0 0.0
    %4119 = vmatpush.msra.mxu0 %v2924
    %4120 = vmatmul.f32.gmra.mxu0 %v4102
    %v4121 = vpop.f32.mrf.mxu0
    %v4122 = vadd.f32 0.0, %v4121
    %4123 = vdwg.mxu0
    %v4124 = vsel %vm325, %v4053, 0.0
    %v4125 = vsel %vm325, %v4076, 0.0
    %v4126 = vadd.f32 %v4124, %v4125
    %v4127 = vsel %vm325, %v4099, 0.0
    %v4128 = vadd.f32 %v4126, %v4127
    %v4129 = vsel %vm325, %v4122, 0.0
    %v4130 = vadd.f32 %v4128, %v4129
    %v4132 = vperm.slane %v2925, 0
    %v4134 = vadd.f32 %v3731, %v4132
    %v4135 = vadd.f32 %v4130, %v4132
    %v4136 = vadd.f32 %v4134, %v2869
    %v4137 = vadd.f32 %v4135, %v2870
    %v4138 = vsel %vm325, %v4136, 0.0
    %4139 = vadd.xlane.f32.xlu0 %v4138
    %v4140 = vpop.xlane.xlu0 %4139
    %v4141 = vsel %vm325, %v4137, 0.0
    %4142 = vadd.xlane.f32.xlu0 %v4141
    %v4143 = vpop.xlane.xlu0 %4142
    %v4144 = vmul.f32 %v4140, %v338
    %v4145 = vmul.f32 %v4143, %v338
    %v4146 = vsub.f32 %v4136, %v4144
    %v4147 = vsub.f32 %v4137, %v4145
    %v4148 = vmul.f32 %v4146, %v4146
    %v4149 = vmul.f32 %v4147, %v4147
    %v4150 = vsel %vm325, %v4148, 0.0
    %4151 = vadd.xlane.f32.xlu0 %v4150
    %v4152 = vpop.xlane.xlu0 %4151
    %v4153 = vsel %vm325, %v4149, 0.0
    %4154 = vadd.xlane.f32.xlu0 %v4153
    %v4155 = vpop.xlane.xlu0 %4154
    %v4156 = vmul.f32 %v4152, %v338
    %v4157 = vmul.f32 %v4155, %v338
    %v4158 = vadd.f32 %v4156, 1e-05
    %v4159 = vadd.f32 %v4157, 1e-05
    %v4160 = vrsqrt.pop %v4158
    %v4161 = vmul.f32 %v4160, %v4158
    %v4162 = vmul.f32 %v4161, %v4160
    %v4163 = vmul.f32 0.5, %v4162
    %v4164 = vsub.f32 1.5, %v4163
    %v4165 = vmul.f32 %v4160, %v4164
    %vm4166 = vweird.f32 %v4158
    %vm4167 = vweird.f32 %v4160
    %vm4168 = vmor %vm4166, %vm4167
    %v4169 = vsel %vm4168, %v4160, %v4165
    %v4170 = vrsqrt.pop %v4159
    %v4171 = vmul.f32 %v4170, %v4159
    %v4172 = vmul.f32 %v4171, %v4170
    %v4173 = vmul.f32 0.5, %v4172
    %v4174 = vsub.f32 1.5, %v4173
    %v4175 = vmul.f32 %v4170, %v4174
    %vm4176 = vweird.f32 %v4159
    %vm4177 = vweird.f32 %v4170
    %vm4178 = vmor %vm4176, %vm4177
    %v4179 = vsel %vm4178, %v4170, %v4175
    %v4180 = vmul.f32 %v4146, %v4169
    %v4181 = vmul.f32 %v4147, %v4179
    %v4183 = vperm.slane %v2926, 0
    %v4185 = vmul.f32 %v4180, %v4183
    %v4186 = vmul.f32 %v4181, %v4183
    %v4188 = vperm.slane %v2927, 0
    %v4190 = vadd.f32 %v4185, %v4188
    %v4191 = vadd.f32 %v4186, %v4188
    %v4192 = vmul.f32 %v1571, %v4183
    %v4193 = vmul.f32 %v1572, %v4183
    %v4194 = vadd.f32 %v4192, %v4188
    %v4195 = vadd.f32 %v4193, %v4188
    %v4197 = vsel %vm325, %v4190, 0
    %v4200 = vsel %vm325, %v4191, 0
    %4202 = vmatpush.msra.mxu0 0.0
    %4203 = vmatpush.msra.mxu0 0.0
    %4204 = vmatpush.msra.mxu0 0.0
    %4205 = vmatpush.msra.mxu0 0.0
    %4206 = vmatpush.msra.mxu0 0.0
    %4207 = vmatpush.msra.mxu0 0.0
    %4208 = vmatpush.msra.mxu0 0.0
    %4209 = vmatpush.msra.mxu0 0.0
    %4210 = vmatpush.msra.mxu0 0.0
    %4211 = vmatpush.msra.mxu0 0.0
    %4212 = vmatpush.msra.mxu0 0.0
    %4213 = vmatpush.msra.mxu0 0.0
    %4214 = vmatpush.msra.mxu0 %v2931
    %4215 = vmatpush.msra.mxu0 %v2930
    %4216 = vmatpush.msra.mxu0 %v2929
    %4217 = vmatpush.msra.mxu0 %v2928
    %4218 = vmatmul.f32.gmra.mxu0 %v4197
    %v4219 = vpop.f32.mrf.mxu0
    %v4220 = vadd.f32 0.0, %v4219
    %4221 = vmatmul.f32.gmra.mxu0 %v4200
    %v4222 = vpop.f32.mrf.mxu0
    %v4223 = vadd.f32 0.0, %v4222
    %4224 = vdwg.mxu0
    %4225 = vmatpush.msra.mxu0 0.0
    %4226 = vmatpush.msra.mxu0 0.0
    %4227 = vmatpush.msra.mxu0 0.0
    %4228 = vmatpush.msra.mxu0 0.0
    %4229 = vmatpush.msra.mxu0 0.0
    %4230 = vmatpush.msra.mxu0 0.0
    %4231 = vmatpush.msra.mxu0 0.0
    %4232 = vmatpush.msra.mxu0 0.0
    %4233 = vmatpush.msra.mxu0 0.0
    %4234 = vmatpush.msra.mxu0 0.0
    %4235 = vmatpush.msra.mxu0 0.0
    %4236 = vmatpush.msra.mxu0 0.0
    %4237 = vmatpush.msra.mxu0 %v2935
    %4238 = vmatpush.msra.mxu0 %v2934
    %4239 = vmatpush.msra.mxu0 %v2933
    %4240 = vmatpush.msra.mxu0 %v2932
    %4241 = vmatmul.f32.gmra.mxu0 %v4197
    %v4242 = vpop.f32.mrf.mxu0
    %v4243 = vadd.f32 0.0, %v4242
    %4244 = vmatmul.f32.gmra.mxu0 %v4200
    %v4245 = vpop.f32.mrf.mxu0
    %v4246 = vadd.f32 0.0, %v4245
    %4247 = vdwg.mxu0
    %4248 = vmatpush.msra.mxu0 0.0
    %4249 = vmatpush.msra.mxu0 0.0
    %4250 = vmatpush.msra.mxu0 0.0
    %4251 = vmatpush.msra.mxu0 0.0
    %4252 = vmatpush.msra.mxu0 0.0
    %4253 = vmatpush.msra.mxu0 0.0
    %4254 = vmatpush.msra.mxu0 0.0
    %4255 = vmatpush.msra.mxu0 0.0
    %4256 = vmatpush.msra.mxu0 0.0
    %4257 = vmatpush.msra.mxu0 0.0
    %4258 = vmatpush.msra.mxu0 0.0
    %4259 = vmatpush.msra.mxu0 0.0
    %4260 = vmatpush.msra.mxu0 %v2939
    %4261 = vmatpush.msra.mxu0 %v2938
    %4262 = vmatpush.msra.mxu0 %v2937
    %4263 = vmatpush.msra.mxu0 %v2936
    %4264 = vmatmul.f32.gmra.mxu0 %v4197
    %v4265 = vpop.f32.mrf.mxu0
    %v4266 = vadd.f32 0.0, %v4265
    %4267 = vmatmul.f32.gmra.mxu0 %v4200
    %v4268 = vpop.f32.mrf.mxu0
    %v4269 = vadd.f32 0.0, %v4268
    %4270 = vdwg.mxu0
    %4271 = vmatpush.msra.mxu0 0.0
    %4272 = vmatpush.msra.mxu0 0.0
    %4273 = vmatpush.msra.mxu0 0.0
    %4274 = vmatpush.msra.mxu0 0.0
    %4275 = vmatpush.msra.mxu0 0.0
    %4276 = vmatpush.msra.mxu0 0.0
    %4277 = vmatpush.msra.mxu0 0.0
    %4278 = vmatpush.msra.mxu0 0.0
    %4279 = vmatpush.msra.mxu0 0.0
    %4280 = vmatpush.msra.mxu0 0.0
    %4281 = vmatpush.msra.mxu0 0.0
    %4282 = vmatpush.msra.mxu0 0.0
    %4283 = vmatpush.msra.mxu0 %v2943
    %4284 = vmatpush.msra.mxu0 %v2942
    %4285 = vmatpush.msra.mxu0 %v2941
    %4286 = vmatpush.msra.mxu0 %v2940
    %4287 = vmatmul.f32.gmra.mxu0 %v4197
    %v4288 = vpop.f32.mrf.mxu0
    %v4289 = vadd.f32 0.0, %v4288
    %4290 = vmatmul.f32.gmra.mxu0 %v4200
    %v4291 = vpop.f32.mrf.mxu0
    %v4292 = vadd.f32 0.0, %v4291
    %4293 = vdwg.mxu0
    %v4295 = vsel %vm325, %v4194, 0
    %v4298 = vsel %vm325, %v4195, 0
    %4300 = vmatpush.msra.mxu0 0.0
    %4301 = vmatpush.msra.mxu0 0.0
    %4302 = vmatpush.msra.mxu0 0.0
    %4303 = vmatpush.msra.mxu0 0.0
    %4304 = vmatpush.msra.mxu0 0.0
    %4305 = vmatpush.msra.mxu0 0.0
    %4306 = vmatpush.msra.mxu0 0.0
    %4307 = vmatpush.msra.mxu0 0.0
    %4308 = vmatpush.msra.mxu0 0.0
    %4309 = vmatpush.msra.mxu0 0.0
    %4310 = vmatpush.msra.mxu0 0.0
    %4311 = vmatpush.msra.mxu0 0.0
    %4312 = vmatpush.msra.mxu0 %v2947
    %4313 = vmatpush.msra.mxu0 %v2946
    %4314 = vmatpush.msra.mxu0 %v2945
    %4315 = vmatpush.msra.mxu0 %v2944
    %4316 = vmatmul.f32.gmra.mxu0 %v4295
    %v4317 = vpop.f32.mrf.mxu0
    %v4318 = vadd.f32 0.0, %v4317
    %4319 = vmatmul.f32.gmra.mxu0 %v4298
    %v4320 = vpop.f32.mrf.mxu0
    %v4321 = vadd.f32 0.0, %v4320
    %4322 = vdwg.mxu0
    %4323 = vmatpush.msra.mxu0 0.0
    %4324 = vmatpush.msra.mxu0 0.0
    %4325 = vmatpush.msra.mxu0 0.0
    %4326 = vmatpush.msra.mxu0 0.0
    %4327 = vmatpush.msra.mxu0 0.0
    %4328 = vmatpush.msra.mxu0 0.0
    %4329 = vmatpush.msra.mxu0 0.0
    %4330 = vmatpush.msra.mxu0 0.0
    %4331 = vmatpush.msra.mxu0 0.0
    %4332 = vmatpush.msra.mxu0 0.0
    %4333 = vmatpush.msra.mxu0 0.0
    %4334 = vmatpush.msra.mxu0 0.0
    %4335 = vmatpush.msra.mxu0 %v2951
    %4336 = vmatpush.msra.mxu0 %v2950
    %4337 = vmatpush.msra.mxu0 %v2949
    %4338 = vmatpush.msra.mxu0 %v2948
    %4339 = vmatmul.f32.gmra.mxu0 %v4295
    %v4340 = vpop.f32.mrf.mxu0
    %v4341 = vadd.f32 0.0, %v4340
    %4342 = vmatmul.f32.gmra.mxu0 %v4298
    %v4343 = vpop.f32.mrf.mxu0
    %v4344 = vadd.f32 0.0, %v4343
    %4345 = vdwg.mxu0
    %4346 = vmatpush.msra.mxu0 0.0
    %4347 = vmatpush.msra.mxu0 0.0
    %4348 = vmatpush.msra.mxu0 0.0
    %4349 = vmatpush.msra.mxu0 0.0
    %4350 = vmatpush.msra.mxu0 0.0
    %4351 = vmatpush.msra.mxu0 0.0
    %4352 = vmatpush.msra.mxu0 0.0
    %4353 = vmatpush.msra.mxu0 0.0
    %4354 = vmatpush.msra.mxu0 0.0
    %4355 = vmatpush.msra.mxu0 0.0
    %4356 = vmatpush.msra.mxu0 0.0
    %4357 = vmatpush.msra.mxu0 0.0
    %4358 = vmatpush.msra.mxu0 %v2955
    %4359 = vmatpush.msra.mxu0 %v2954
    %4360 = vmatpush.msra.mxu0 %v2953
    %4361 = vmatpush.msra.mxu0 %v2952
    %4362 = vmatmul.f32.gmra.mxu0 %v4295
    %v4363 = vpop.f32.mrf.mxu0
    %v4364 = vadd.f32 0.0, %v4363
    %4365 = vmatmul.f32.gmra.mxu0 %v4298
    %v4366 = vpop.f32.mrf.mxu0
    %v4367 = vadd.f32 0.0, %v4366
    %4368 = vdwg.mxu0
    %4369 = vmatpush.msra.mxu0 0.0
    %4370 = vmatpush.msra.mxu0 0.0
    %4371 = vmatpush.msra.mxu0 0.0
    %4372 = vmatpush.msra.mxu0 0.0
    %4373 = vmatpush.msra.mxu0 0.0
    %4374 = vmatpush.msra.mxu0 0.0
    %4375 = vmatpush.msra.mxu0 0.0
    %4376 = vmatpush.msra.mxu0 0.0
    %4377 = vmatpush.msra.mxu0 0.0
    %4378 = vmatpush.msra.mxu0 0.0
    %4379 = vmatpush.msra.mxu0 0.0
    %4380 = vmatpush.msra.mxu0 0.0
    %4381 = vmatpush.msra.mxu0 %v2959
    %4382 = vmatpush.msra.mxu0 %v2958
    %4383 = vmatpush.msra.mxu0 %v2957
    %4384 = vmatpush.msra.mxu0 %v2956
    %4385 = vmatmul.f32.gmra.mxu0 %v4295
    %v4386 = vpop.f32.mrf.mxu0
    %v4387 = vadd.f32 0.0, %v4386
    %4388 = vmatmul.f32.gmra.mxu0 %v4298
    %v4389 = vpop.f32.mrf.mxu0
    %v4390 = vadd.f32 0.0, %v4389
    %4391 = vdwg.mxu0
    %4392 = vmatpush.msra.mxu0 0.0
    %4393 = vmatpush.msra.mxu0 0.0
    %4394 = vmatpush.msra.mxu0 0.0
    %4395 = vmatpush.msra.mxu0 0.0
    %4396 = vmatpush.msra.mxu0 0.0
    %4397 = vmatpush.msra.mxu0 0.0
    %4398 = vmatpush.msra.mxu0 0.0
    %4399 = vmatpush.msra.mxu0 0.0
    %4400 = vmatpush.msra.mxu0 0.0
    %4401 = vmatpush.msra.mxu0 0.0
    %4402 = vmatpush.msra.mxu0 0.0
    %4403 = vmatpush.msra.mxu0 0.0
    %4404 = vmatpush.msra.mxu0 %v2963
    %4405 = vmatpush.msra.mxu0 %v2962
    %4406 = vmatpush.msra.mxu0 %v2961
    %4407 = vmatpush.msra.mxu0 %v2960
    %4408 = vmatmul.f32.gmra.mxu0 %v4295
    %v4409 = vpop.f32.mrf.mxu0
    %v4410 = vadd.f32 0.0, %v4409
    %4411 = vmatmul.f32.gmra.mxu0 %v4298
    %v4412 = vpop.f32.mrf.mxu0
    %v4413 = vadd.f32 0.0, %v4412
    %4414 = vdwg.mxu0
    %4415 = vmatpush.msra.mxu0 0.0
    %4416 = vmatpush.msra.mxu0 0.0
    %4417 = vmatpush.msra.mxu0 0.0
    %4418 = vmatpush.msra.mxu0 0.0
    %4419 = vmatpush.msra.mxu0 0.0
    %4420 = vmatpush.msra.mxu0 0.0
    %4421 = vmatpush.msra.mxu0 0.0
    %4422 = vmatpush.msra.mxu0 0.0
    %4423 = vmatpush.msra.mxu0 0.0
    %4424 = vmatpush.msra.mxu0 0.0
    %4425 = vmatpush.msra.mxu0 0.0
    %4426 = vmatpush.msra.mxu0 0.0
    %4427 = vmatpush.msra.mxu0 %v2967
    %4428 = vmatpush.msra.mxu0 %v2966
    %4429 = vmatpush.msra.mxu0 %v2965
    %4430 = vmatpush.msra.mxu0 %v2964
    %4431 = vmatmul.f32.gmra.mxu0 %v4295
    %v4432 = vpop.f32.mrf.mxu0
    %v4433 = vadd.f32 0.0, %v4432
    %4434 = vmatmul.f32.gmra.mxu0 %v4298
    %v4435 = vpop.f32.mrf.mxu0
    %v4436 = vadd.f32 0.0, %v4435
    %4437 = vdwg.mxu0
    %4438 = vmatpush.msra.mxu0 0.0
    %4439 = vmatpush.msra.mxu0 0.0
    %4440 = vmatpush.msra.mxu0 0.0
    %4441 = vmatpush.msra.mxu0 0.0
    %4442 = vmatpush.msra.mxu0 0.0
    %4443 = vmatpush.msra.mxu0 0.0
    %4444 = vmatpush.msra.mxu0 0.0
    %4445 = vmatpush.msra.mxu0 0.0
    %4446 = vmatpush.msra.mxu0 0.0
    %4447 = vmatpush.msra.mxu0 0.0
    %4448 = vmatpush.msra.mxu0 0.0
    %4449 = vmatpush.msra.mxu0 0.0
    %4450 = vmatpush.msra.mxu0 %v2971
    %4451 = vmatpush.msra.mxu0 %v2970
    %4452 = vmatpush.msra.mxu0 %v2969
    %4453 = vmatpush.msra.mxu0 %v2968
    %4454 = vmatmul.f32.gmra.mxu0 %v4295
    %v4455 = vpop.f32.mrf.mxu0
    %v4456 = vadd.f32 0.0, %v4455
    %4457 = vmatmul.f32.gmra.mxu0 %v4298
    %v4458 = vpop.f32.mrf.mxu0
    %v4459 = vadd.f32 0.0, %v4458
    %4460 = vdwg.mxu0
    %4461 = vmatpush.msra.mxu0 0.0
    %4462 = vmatpush.msra.mxu0 0.0
    %4463 = vmatpush.msra.mxu0 0.0
    %4464 = vmatpush.msra.mxu0 0.0
    %4465 = vmatpush.msra.mxu0 0.0
    %4466 = vmatpush.msra.mxu0 0.0
    %4467 = vmatpush.msra.mxu0 0.0
    %4468 = vmatpush.msra.mxu0 0.0
    %4469 = vmatpush.msra.mxu0 0.0
    %4470 = vmatpush.msra.mxu0 0.0
    %4471 = vmatpush.msra.mxu0 0.0
    %4472 = vmatpush.msra.mxu0 0.0
    %4473 = vmatpush.msra.mxu0 %v2975
    %4474 = vmatpush.msra.mxu0 %v2974
    %4475 = vmatpush.msra.mxu0 %v2973
    %4476 = vmatpush.msra.mxu0 %v2972
    %4477 = vmatmul.f32.gmra.mxu0 %v4295
    %v4478 = vpop.f32.mrf.mxu0
    %v4479 = vadd.f32 0.0, %v4478
    %4480 = vmatmul.f32.gmra.mxu0 %v4298
    %v4481 = vpop.f32.mrf.mxu0
    %v4482 = vadd.f32 0.0, %v4481
    %4483 = vdwg.mxu0
    %v4485 = vsel %vm669, %v4220, 0
    %v4488 = vsel %vm669, %v4318, 0
    %4490 = vmatpush.xpose.msra.mxu0 0.0
    %4491 = vmatpush.xpose.msra.mxu0 0.0
    %4492 = vmatpush.xpose.msra.mxu0 0.0
    %4493 = vmatpush.xpose.msra.mxu0 0.0
    %4494 = vmatpush.xpose.msra.mxu0 0.0
    %4495 = vmatpush.xpose.msra.mxu0 0.0
    %4496 = vmatpush.xpose.msra.mxu0 0.0
    %4497 = vmatpush.xpose.msra.mxu0 0.0
    %4498 = vmatpush.xpose.msra.mxu0 0.0
    %4499 = vmatpush.xpose.msra.mxu0 0.0
    %4500 = vmatpush.xpose.msra.mxu0 0.0
    %4501 = vmatpush.xpose.msra.mxu0 0.0
    %4502 = vmatpush.xpose.msra.mxu0 0.0
    %4503 = vmatpush.xpose.msra.mxu0 0.0
    %4504 = vmatpush.xpose.msra.mxu0 0.0
    %4505 = vmatpush.xpose.msra.mxu0 %v4488
    %4506 = vmatmul.f32.gmra.mxu0 %v4485
    %v4507 = vpop.f32.mrf.mxu0
    %v4508 = vadd.f32 0.0, %v4507
    %4509 = vdwg.mxu0
    %v4511 = vsel %vm669, %v4243, 0
    %v4514 = vsel %vm669, %v4341, 0
    %4516 = vmatpush.xpose.msra.mxu0 0.0
    %4517 = vmatpush.xpose.msra.mxu0 0.0
    %4518 = vmatpush.xpose.msra.mxu0 0.0
    %4519 = vmatpush.xpose.msra.mxu0 0.0
    %4520 = vmatpush.xpose.msra.mxu0 0.0
    %4521 = vmatpush.xpose.msra.mxu0 0.0
    %4522 = vmatpush.xpose.msra.mxu0 0.0
    %4523 = vmatpush.xpose.msra.mxu0 0.0
    %4524 = vmatpush.xpose.msra.mxu0 0.0
    %4525 = vmatpush.xpose.msra.mxu0 0.0
    %4526 = vmatpush.xpose.msra.mxu0 0.0
    %4527 = vmatpush.xpose.msra.mxu0 0.0
    %4528 = vmatpush.xpose.msra.mxu0 0.0
    %4529 = vmatpush.xpose.msra.mxu0 0.0
    %4530 = vmatpush.xpose.msra.mxu0 0.0
    %4531 = vmatpush.xpose.msra.mxu0 %v4514
    %4532 = vmatmul.f32.gmra.mxu0 %v4511
    %v4533 = vpop.f32.mrf.mxu0
    %v4534 = vadd.f32 0.0, %v4533
    %4535 = vdwg.mxu0
    %v4537 = vsel %vm669, %v4266, 0
    %v4540 = vsel %vm669, %v4364, 0
    %4542 = vmatpush.xpose.msra.mxu0 0.0
    %4543 = vmatpush.xpose.msra.mxu0 0.0
    %4544 = vmatpush.xpose.msra.mxu0 0.0
    %4545 = vmatpush.xpose.msra.mxu0 0.0
    %4546 = vmatpush.xpose.msra.mxu0 0.0
    %4547 = vmatpush.xpose.msra.mxu0 0.0
    %4548 = vmatpush.xpose.msra.mxu0 0.0
    %4549 = vmatpush.xpose.msra.mxu0 0.0
    %4550 = vmatpush.xpose.msra.mxu0 0.0
    %4551 = vmatpush.xpose.msra.mxu0 0.0
    %4552 = vmatpush.xpose.msra.mxu0 0.0
    %4553 = vmatpush.xpose.msra.mxu0 0.0
    %4554 = vmatpush.xpose.msra.mxu0 0.0
    %4555 = vmatpush.xpose.msra.mxu0 0.0
    %4556 = vmatpush.xpose.msra.mxu0 0.0
    %4557 = vmatpush.xpose.msra.mxu0 %v4540
    %4558 = vmatmul.f32.gmra.mxu0 %v4537
    %v4559 = vpop.f32.mrf.mxu0
    %v4560 = vadd.f32 0.0, %v4559
    %4561 = vdwg.mxu0
    %v4563 = vsel %vm669, %v4289, 0
    %v4566 = vsel %vm669, %v4387, 0
    %4568 = vmatpush.xpose.msra.mxu0 0.0
    %4569 = vmatpush.xpose.msra.mxu0 0.0
    %4570 = vmatpush.xpose.msra.mxu0 0.0
    %4571 = vmatpush.xpose.msra.mxu0 0.0
    %4572 = vmatpush.xpose.msra.mxu0 0.0
    %4573 = vmatpush.xpose.msra.mxu0 0.0
    %4574 = vmatpush.xpose.msra.mxu0 0.0
    %4575 = vmatpush.xpose.msra.mxu0 0.0
    %4576 = vmatpush.xpose.msra.mxu0 0.0
    %4577 = vmatpush.xpose.msra.mxu0 0.0
    %4578 = vmatpush.xpose.msra.mxu0 0.0
    %4579 = vmatpush.xpose.msra.mxu0 0.0
    %4580 = vmatpush.xpose.msra.mxu0 0.0
    %4581 = vmatpush.xpose.msra.mxu0 0.0
    %4582 = vmatpush.xpose.msra.mxu0 0.0
    %4583 = vmatpush.xpose.msra.mxu0 %v4566
    %4584 = vmatmul.f32.gmra.mxu0 %v4563
    %v4585 = vpop.f32.mrf.mxu0
    %v4586 = vadd.f32 0.0, %v4585
    %4587 = vdwg.mxu0
    %v4588 = vmul.f32 %v4508, 0.35355338
    %v4589 = vmul.f32 %v4534, 0.35355338
    %v4590 = vmul.f32 %v4560, 0.35355338
    %v4591 = vmul.f32 %v4586, 0.35355338
    %v4592 = vadd.f32 %v4588, %v197
    %v4593 = vadd.f32 %v4589, %v197
    %v4594 = vadd.f32 %v4590, %v197
    %v4595 = vadd.f32 %v4591, %v197
    %v4596 = vsel %vm669, %v4592, -inf
    %4597 = vmax.xlane.f32.xlu0 %v4596
    %v4598 = vpop.xlane.xlu0 %4597
    %v4599 = vsel %vm669, %v4593, -inf
    %4600 = vmax.xlane.f32.xlu0 %v4599
    %v4601 = vpop.xlane.xlu0 %4600
    %v4602 = vsel %vm669, %v4594, -inf
    %4603 = vmax.xlane.f32.xlu0 %v4602
    %v4604 = vpop.xlane.xlu0 %4603
    %v4605 = vsel %vm669, %v4595, -inf
    %4606 = vmax.xlane.f32.xlu0 %v4605
    %v4607 = vpop.xlane.xlu0 %4606
    %v4608 = vsub.f32 %v4592, %v4598
    %v4609 = vsub.f32 %v4593, %v4601
    %v4610 = vsub.f32 %v4594, %v4604
    %v4611 = vsub.f32 %v4595, %v4607
    %v4612 = vmul.f32 %v4608, 1.442695
    %v4613 = vpow.pop %v4612
    %v4614 = vmul.f32 %v4609, 1.442695
    %v4615 = vpow.pop %v4614
    %v4616 = vmul.f32 %v4610, 1.442695
    %v4617 = vpow.pop %v4616
    %v4618 = vmul.f32 %v4611, 1.442695
    %v4619 = vpow.pop %v4618
    %v4620 = vsel %vm669, %v4613, 0.0
    %4621 = vadd.xlane.f32.xlu0 %v4620
    %v4622 = vpop.xlane.xlu0 %4621
    %v4623 = vsel %vm669, %v4615, 0.0
    %4624 = vadd.xlane.f32.xlu0 %v4623
    %v4625 = vpop.xlane.xlu0 %4624
    %v4626 = vsel %vm669, %v4617, 0.0
    %4627 = vadd.xlane.f32.xlu0 %v4626
    %v4628 = vpop.xlane.xlu0 %4627
    %v4629 = vsel %vm669, %v4619, 0.0
    %4630 = vadd.xlane.f32.xlu0 %v4629
    %v4631 = vpop.xlane.xlu0 %4630
    %v4632 = vrcp.pop %v4622
    %v4633 = vmul.f32 %v4622, %v4632
    %v4634 = vsub.f32 1.0, %v4633
    %v4635 = vmul.f32 %v4632, %v4634
    %v4636 = vadd.f32 %v4632, %v4635
    %vm4637 = vweird.f32 %v4622
    %vm4638 = vweird.f32 %v4632
    %vm4639 = vmor %vm4637, %vm4638
    %v4640 = vsel %vm4639, %v4632, %v4636
    %v4641 = vand.u32 2147483647, %v4622
    %vm4642 = vcmp.eq.f32.partialorder %v4641, 8.507059e+37
    %v4643 = vand.u32 %v4622, 2147483648
    %v4644 = vor.u32 1.1754944e-38, %v4643
    %v4645 = vsel %vm4642, %v4644, %v4640
    %v4646 = vrcp.pop %v4625
    %v4647 = vmul.f32 %v4625, %v4646
    %v4648 = vsub.f32 1.0, %v4647
    %v4649 = vmul.f32 %v4646, %v4648
    %v4650 = vadd.f32 %v4646, %v4649
    %vm4651 = vweird.f32 %v4625
    %vm4652 = vweird.f32 %v4646
    %vm4653 = vmor %vm4651, %vm4652
    %v4654 = vsel %vm4653, %v4646, %v4650
    %v4655 = vand.u32 2147483647, %v4625
    %vm4656 = vcmp.eq.f32.partialorder %v4655, 8.507059e+37
    %v4657 = vand.u32 %v4625, 2147483648
    %v4658 = vor.u32 1.1754944e-38, %v4657
    %v4659 = vsel %vm4656, %v4658, %v4654
    %v4660 = vrcp.pop %v4628
    %v4661 = vmul.f32 %v4628, %v4660
    %v4662 = vsub.f32 1.0, %v4661
    %v4663 = vmul.f32 %v4660, %v4662
    %v4664 = vadd.f32 %v4660, %v4663
    %vm4665 = vweird.f32 %v4628
    %vm4666 = vweird.f32 %v4660
    %vm4667 = vmor %vm4665, %vm4666
    %v4668 = vsel %vm4667, %v4660, %v4664
    %v4669 = vand.u32 2147483647, %v4628
    %vm4670 = vcmp.eq.f32.partialorder %v4669, 8.507059e+37
    %v4671 = vand.u32 %v4628, 2147483648
    %v4672 = vor.u32 1.1754944e-38, %v4671
    %v4673 = vsel %vm4670, %v4672, %v4668
    %v4674 = vrcp.pop %v4631
    %v4675 = vmul.f32 %v4631, %v4674
    %v4676 = vsub.f32 1.0, %v4675
    %v4677 = vmul.f32 %v4674, %v4676
    %v4678 = vadd.f32 %v4674, %v4677
    %vm4679 = vweird.f32 %v4631
    %vm4680 = vweird.f32 %v4674
    %vm4681 = vmor %vm4679, %vm4680
    %v4682 = vsel %vm4681, %v4674, %v4678
    %v4683 = vand.u32 2147483647, %v4631
    %vm4684 = vcmp.eq.f32.partialorder %v4683, 8.507059e+37
    %v4685 = vand.u32 %v4631, 2147483648
    %v4686 = vor.u32 1.1754944e-38, %v4685
    %v4687 = vsel %vm4684, %v4686, %v4682
    %v4688 = vmul.f32 %v4613, %v4645
    %v4689 = vmul.f32 %v4615, %v4659
    %v4690 = vmul.f32 %v4617, %v4673
    %v4691 = vmul.f32 %v4619, %v4687
    %v4693 = vsel %vm669, %v4688, 0
    %4695 = vmatpush.msra.mxu0 0.0
    %4696 = vmatpush.msra.mxu0 0.0
    %4697 = vmatpush.msra.mxu0 0.0
    %4698 = vmatpush.msra.mxu0 0.0
    %4699 = vmatpush.msra.mxu0 0.0
    %4700 = vmatpush.msra.mxu0 0.0
    %4701 = vmatpush.msra.mxu0 0.0
    %4702 = vmatpush.msra.mxu0 0.0
    %4703 = vmatpush.msra.mxu0 0.0
    %4704 = vmatpush.msra.mxu0 0.0
    %4705 = vmatpush.msra.mxu0 0.0
    %4706 = vmatpush.msra.mxu0 0.0
    %4707 = vmatpush.msra.mxu0 0.0
    %4708 = vmatpush.msra.mxu0 0.0
    %4709 = vmatpush.msra.mxu0 0.0
    %4710 = vmatpush.msra.mxu0 %v4410
    %4711 = vmatmul.f32.gmra.mxu0 %v4693
    %v4712 = vpop.f32.mrf.mxu0
    %v4713 = vadd.f32 0.0, %v4712
    %4714 = vdwg.mxu0
    %v4716 = vsel %vm669, %v4689, 0
    %4718 = vmatpush.msra.mxu0 0.0
    %4719 = vmatpush.msra.mxu0 0.0
    %4720 = vmatpush.msra.mxu0 0.0
    %4721 = vmatpush.msra.mxu0 0.0
    %4722 = vmatpush.msra.mxu0 0.0
    %4723 = vmatpush.msra.mxu0 0.0
    %4724 = vmatpush.msra.mxu0 0.0
    %4725 = vmatpush.msra.mxu0 0.0
    %4726 = vmatpush.msra.mxu0 0.0
    %4727 = vmatpush.msra.mxu0 0.0
    %4728 = vmatpush.msra.mxu0 0.0
    %4729 = vmatpush.msra.mxu0 0.0
    %4730 = vmatpush.msra.mxu0 0.0
    %4731 = vmatpush.msra.mxu0 0.0
    %4732 = vmatpush.msra.mxu0 0.0
    %4733 = vmatpush.msra.mxu0 %v4433
    %4734 = vmatmul.f32.gmra.mxu0 %v4716
    %v4735 = vpop.f32.mrf.mxu0
    %v4736 = vadd.f32 0.0, %v4735
    %4737 = vdwg.mxu0
    %v4739 = vsel %vm669, %v4690, 0
    %4741 = vmatpush.msra.mxu0 0.0
    %4742 = vmatpush.msra.mxu0 0.0
    %4743 = vmatpush.msra.mxu0 0.0
    %4744 = vmatpush.msra.mxu0 0.0
    %4745 = vmatpush.msra.mxu0 0.0
    %4746 = vmatpush.msra.mxu0 0.0
    %4747 = vmatpush.msra.mxu0 0.0
    %4748 = vmatpush.msra.mxu0 0.0
    %4749 = vmatpush.msra.mxu0 0.0
    %4750 = vmatpush.msra.mxu0 0.0
    %4751 = vmatpush.msra.mxu0 0.0
    %4752 = vmatpush.msra.mxu0 0.0
    %4753 = vmatpush.msra.mxu0 0.0
    %4754 = vmatpush.msra.mxu0 0.0
    %4755 = vmatpush.msra.mxu0 0.0
    %4756 = vmatpush.msra.mxu0 %v4456
    %4757 = vmatmul.f32.gmra.mxu0 %v4739
    %v4758 = vpop.f32.mrf.mxu0
    %v4759 = vadd.f32 0.0, %v4758
    %4760 = vdwg.mxu0
    %v4762 = vsel %vm669, %v4691, 0
    %4764 = vmatpush.msra.mxu0 0.0
    %4765 = vmatpush.msra.mxu0 0.0
    %4766 = vmatpush.msra.mxu0 0.0
    %4767 = vmatpush.msra.mxu0 0.0
    %4768 = vmatpush.msra.mxu0 0.0
    %4769 = vmatpush.msra.mxu0 0.0
    %4770 = vmatpush.msra.mxu0 0.0
    %4771 = vmatpush.msra.mxu0 0.0
    %4772 = vmatpush.msra.mxu0 0.0
    %4773 = vmatpush.msra.mxu0 0.0
    %4774 = vmatpush.msra.mxu0 0.0
    %4775 = vmatpush.msra.mxu0 0.0
    %4776 = vmatpush.msra.mxu0 0.0
    %4777 = vmatpush.msra.mxu0 0.0
    %4778 = vmatpush.msra.mxu0 0.0
    %4779 = vmatpush.msra.mxu0 %v4479
    %4780 = vmatmul.f32.gmra.mxu0 %v4762
    %v4781 = vpop.f32.mrf.mxu0
    %v4782 = vadd.f32 0.0, %v4781
    %4783 = vdwg.mxu0
    %v4785 = vsel %vm669, %v4713, 0
    %4787 = vmatpush.msra.mxu0 0.0
    %4788 = vmatpush.msra.mxu0 0.0
    %4789 = vmatpush.msra.mxu0 0.0
    %4790 = vmatpush.msra.mxu0 0.0
    %4791 = vmatpush.msra.mxu0 0.0
    %4792 = vmatpush.msra.mxu0 0.0
    %4793 = vmatpush.msra.mxu0 0.0
    %4794 = vmatpush.msra.mxu0 0.0
    %4795 = vmatpush.msra.mxu0 0.0
    %4796 = vmatpush.msra.mxu0 0.0
    %4797 = vmatpush.msra.mxu0 0.0
    %4798 = vmatpush.msra.mxu0 0.0
    %4799 = vmatpush.msra.mxu0 0.0
    %4800 = vmatpush.msra.mxu0 0.0
    %4801 = vmatpush.msra.mxu0 0.0
    %4802 = vmatpush.msra.mxu0 %v2976
    %4803 = vmatmul.f32.gmra.mxu0 %v4785
    %v4804 = vpop.f32.mrf.mxu0
    %v4805 = vadd.f32 0.0, %v4804
    %4806 = vdwg.mxu0
    %v4808 = vsel %vm669, %v4736, 0
    %4810 = vmatpush.msra.mxu0 0.0
    %4811 = vmatpush.msra.mxu0 0.0
    %4812 = vmatpush.msra.mxu0 0.0
    %4813 = vmatpush.msra.mxu0 0.0
    %4814 = vmatpush.msra.mxu0 0.0
    %4815 = vmatpush.msra.mxu0 0.0
    %4816 = vmatpush.msra.mxu0 0.0
    %4817 = vmatpush.msra.mxu0 0.0
    %4818 = vmatpush.msra.mxu0 0.0
    %4819 = vmatpush.msra.mxu0 0.0
    %4820 = vmatpush.msra.mxu0 0.0
    %4821 = vmatpush.msra.mxu0 0.0
    %4822 = vmatpush.msra.mxu0 0.0
    %4823 = vmatpush.msra.mxu0 0.0
    %4824 = vmatpush.msra.mxu0 0.0
    %4825 = vmatpush.msra.mxu0 %v2977
    %4826 = vmatmul.f32.gmra.mxu0 %v4808
    %v4827 = vpop.f32.mrf.mxu0
    %v4828 = vadd.f32 0.0, %v4827
    %4829 = vdwg.mxu0
    %v4831 = vsel %vm669, %v4759, 0
    %4833 = vmatpush.msra.mxu0 0.0
    %4834 = vmatpush.msra.mxu0 0.0
    %4835 = vmatpush.msra.mxu0 0.0
    %4836 = vmatpush.msra.mxu0 0.0
    %4837 = vmatpush.msra.mxu0 0.0
    %4838 = vmatpush.msra.mxu0 0.0
    %4839 = vmatpush.msra.mxu0 0.0
    %4840 = vmatpush.msra.mxu0 0.0
    %4841 = vmatpush.msra.mxu0 0.0
    %4842 = vmatpush.msra.mxu0 0.0
    %4843 = vmatpush.msra.mxu0 0.0
    %4844 = vmatpush.msra.mxu0 0.0
    %4845 = vmatpush.msra.mxu0 0.0
    %4846 = vmatpush.msra.mxu0 0.0
    %4847 = vmatpush.msra.mxu0 0.0
    %4848 = vmatpush.msra.mxu0 %v2978
    %4849 = vmatmul.f32.gmra.mxu0 %v4831
    %v4850 = vpop.f32.mrf.mxu0
    %v4851 = vadd.f32 0.0, %v4850
    %4852 = vdwg.mxu0
    %v4854 = vsel %vm669, %v4782, 0
    %4856 = vmatpush.msra.mxu0 0.0
    %4857 = vmatpush.msra.mxu0 0.0
    %4858 = vmatpush.msra.mxu0 0.0
    %4859 = vmatpush.msra.mxu0 0.0
    %4860 = vmatpush.msra.mxu0 0.0
    %4861 = vmatpush.msra.mxu0 0.0
    %4862 = vmatpush.msra.mxu0 0.0
    %4863 = vmatpush.msra.mxu0 0.0
    %4864 = vmatpush.msra.mxu0 0.0
    %4865 = vmatpush.msra.mxu0 0.0
    %4866 = vmatpush.msra.mxu0 0.0
    %4867 = vmatpush.msra.mxu0 0.0
    %4868 = vmatpush.msra.mxu0 0.0
    %4869 = vmatpush.msra.mxu0 0.0
    %4870 = vmatpush.msra.mxu0 0.0
    %4871 = vmatpush.msra.mxu0 %v2979
    %4872 = vmatmul.f32.gmra.mxu0 %v4854
    %v4873 = vpop.f32.mrf.mxu0
    %v4874 = vadd.f32 0.0, %v4873
    %4875 = vdwg.mxu0
    %v4876 = vsel %vm325, %v4805, 0.0
    %v4877 = vsel %vm325, %v4828, 0.0
    %v4878 = vadd.f32 %v4876, %v4877
    %v4879 = vsel %vm325, %v4851, 0.0
    %v4880 = vadd.f32 %v4878, %v4879
    %v4881 = vsel %vm325, %v4874, 0.0
    %v4882 = vadd.f32 %v4880, %v4881
    %v4884 = vsel %vm669, %v4223, 0
    %v4887 = vsel %vm669, %v4321, 0
    %4889 = vmatpush.xpose.msra.mxu0 0.0
    %4890 = vmatpush.xpose.msra.mxu0 0.0
    %4891 = vmatpush.xpose.msra.mxu0 0.0
    %4892 = vmatpush.xpose.msra.mxu0 0.0
    %4893 = vmatpush.xpose.msra.mxu0 0.0
    %4894 = vmatpush.xpose.msra.mxu0 0.0
    %4895 = vmatpush.xpose.msra.mxu0 0.0
    %4896 = vmatpush.xpose.msra.mxu0 0.0
    %4897 = vmatpush.xpose.msra.mxu0 0.0
    %4898 = vmatpush.xpose.msra.mxu0 0.0
    %4899 = vmatpush.xpose.msra.mxu0 0.0
    %4900 = vmatpush.xpose.msra.mxu0 0.0
    %4901 = vmatpush.xpose.msra.mxu0 0.0
    %4902 = vmatpush.xpose.msra.mxu0 0.0
    %4903 = vmatpush.xpose.msra.mxu0 0.0
    %4904 = vmatpush.xpose.msra.mxu0 %v4887
    %4905 = vmatmul.f32.gmra.mxu0 %v4884
    %v4906 = vpop.f32.mrf.mxu0
    %v4907 = vadd.f32 0.0, %v4906
    %4908 = vdwg.mxu0
    %v4910 = vsel %vm669, %v4246, 0
    %v4913 = vsel %vm669, %v4344, 0
    %4915 = vmatpush.xpose.msra.mxu0 0.0
    %4916 = vmatpush.xpose.msra.mxu0 0.0
    %4917 = vmatpush.xpose.msra.mxu0 0.0
    %4918 = vmatpush.xpose.msra.mxu0 0.0
    %4919 = vmatpush.xpose.msra.mxu0 0.0
    %4920 = vmatpush.xpose.msra.mxu0 0.0
    %4921 = vmatpush.xpose.msra.mxu0 0.0
    %4922 = vmatpush.xpose.msra.mxu0 0.0
    %4923 = vmatpush.xpose.msra.mxu0 0.0
    %4924 = vmatpush.xpose.msra.mxu0 0.0
    %4925 = vmatpush.xpose.msra.mxu0 0.0
    %4926 = vmatpush.xpose.msra.mxu0 0.0
    %4927 = vmatpush.xpose.msra.mxu0 0.0
    %4928 = vmatpush.xpose.msra.mxu0 0.0
    %4929 = vmatpush.xpose.msra.mxu0 0.0
    %4930 = vmatpush.xpose.msra.mxu0 %v4913
    %4931 = vmatmul.f32.gmra.mxu0 %v4910
    %v4932 = vpop.f32.mrf.mxu0
    %v4933 = vadd.f32 0.0, %v4932
    %4934 = vdwg.mxu0
    %v4936 = vsel %vm669, %v4269, 0
    %v4939 = vsel %vm669, %v4367, 0
    %4941 = vmatpush.xpose.msra.mxu0 0.0
    %4942 = vmatpush.xpose.msra.mxu0 0.0
    %4943 = vmatpush.xpose.msra.mxu0 0.0
    %4944 = vmatpush.xpose.msra.mxu0 0.0
    %4945 = vmatpush.xpose.msra.mxu0 0.0
    %4946 = vmatpush.xpose.msra.mxu0 0.0
    %4947 = vmatpush.xpose.msra.mxu0 0.0
    %4948 = vmatpush.xpose.msra.mxu0 0.0
    %4949 = vmatpush.xpose.msra.mxu0 0.0
    %4950 = vmatpush.xpose.msra.mxu0 0.0
    %4951 = vmatpush.xpose.msra.mxu0 0.0
    %4952 = vmatpush.xpose.msra.mxu0 0.0
    %4953 = vmatpush.xpose.msra.mxu0 0.0
    %4954 = vmatpush.xpose.msra.mxu0 0.0
    %4955 = vmatpush.xpose.msra.mxu0 0.0
    %4956 = vmatpush.xpose.msra.mxu0 %v4939
    %4957 = vmatmul.f32.gmra.mxu0 %v4936
    %v4958 = vpop.f32.mrf.mxu0
    %v4959 = vadd.f32 0.0, %v4958
    %4960 = vdwg.mxu0
    %v4962 = vsel %vm669, %v4292, 0
    %v4965 = vsel %vm669, %v4390, 0
    %4967 = vmatpush.xpose.msra.mxu0 0.0
    %4968 = vmatpush.xpose.msra.mxu0 0.0
    %4969 = vmatpush.xpose.msra.mxu0 0.0
    %4970 = vmatpush.xpose.msra.mxu0 0.0
    %4971 = vmatpush.xpose.msra.mxu0 0.0
    %4972 = vmatpush.xpose.msra.mxu0 0.0
    %4973 = vmatpush.xpose.msra.mxu0 0.0
    %4974 = vmatpush.xpose.msra.mxu0 0.0
    %4975 = vmatpush.xpose.msra.mxu0 0.0
    %4976 = vmatpush.xpose.msra.mxu0 0.0
    %4977 = vmatpush.xpose.msra.mxu0 0.0
    %4978 = vmatpush.xpose.msra.mxu0 0.0
    %4979 = vmatpush.xpose.msra.mxu0 0.0
    %4980 = vmatpush.xpose.msra.mxu0 0.0
    %4981 = vmatpush.xpose.msra.mxu0 0.0
    %4982 = vmatpush.xpose.msra.mxu0 %v4965
    %4983 = vmatmul.f32.gmra.mxu0 %v4962
    %v4984 = vpop.f32.mrf.mxu0
    %v4985 = vadd.f32 0.0, %v4984
    %4986 = vdwg.mxu0
    %v4987 = vmul.f32 %v4907, 0.35355338
    %v4988 = vmul.f32 %v4933, 0.35355338
    %v4989 = vmul.f32 %v4959, 0.35355338
    %v4990 = vmul.f32 %v4985, 0.35355338
    %v4991 = vadd.f32 %v4987, %v198
    %v4992 = vadd.f32 %v4988, %v198
    %v4993 = vadd.f32 %v4989, %v198
    %v4994 = vadd.f32 %v4990, %v198
    %v4995 = vsel %vm669, %v4991, -inf
    %4996 = vmax.xlane.f32.xlu0 %v4995
    %v4997 = vpop.xlane.xlu0 %4996
    %v4998 = vsel %vm669, %v4992, -inf
    %4999 = vmax.xlane.f32.xlu0 %v4998
    %v5000 = vpop.xlane.xlu0 %4999
    %v5001 = vsel %vm669, %v4993, -inf
    %5002 = vmax.xlane.f32.xlu0 %v5001
    %v5003 = vpop.xlane.xlu0 %5002
    %v5004 = vsel %vm669, %v4994, -inf
    %5005 = vmax.xlane.f32.xlu0 %v5004
    %v5006 = vpop.xlane.xlu0 %5005
    %v5007 = vsub.f32 %v4991, %v4997
    %v5008 = vsub.f32 %v4992, %v5000
    %v5009 = vsub.f32 %v4993, %v5003
    %v5010 = vsub.f32 %v4994, %v5006
    %v5011 = vmul.f32 %v5007, 1.442695
    %v5012 = vpow.pop %v5011
    %v5013 = vmul.f32 %v5008, 1.442695
    %v5014 = vpow.pop %v5013
    %v5015 = vmul.f32 %v5009, 1.442695
    %v5016 = vpow.pop %v5015
    %v5017 = vmul.f32 %v5010, 1.442695
    %v5018 = vpow.pop %v5017
    %v5019 = vsel %vm669, %v5012, 0.0
    %5020 = vadd.xlane.f32.xlu0 %v5019
    %v5021 = vpop.xlane.xlu0 %5020
    %v5022 = vsel %vm669, %v5014, 0.0
    %5023 = vadd.xlane.f32.xlu0 %v5022
    %v5024 = vpop.xlane.xlu0 %5023
    %v5025 = vsel %vm669, %v5016, 0.0
    %5026 = vadd.xlane.f32.xlu0 %v5025
    %v5027 = vpop.xlane.xlu0 %5026
    %v5028 = vsel %vm669, %v5018, 0.0
    %5029 = vadd.xlane.f32.xlu0 %v5028
    %v5030 = vpop.xlane.xlu0 %5029
    %v5031 = vrcp.pop %v5021
    %v5032 = vmul.f32 %v5021, %v5031
    %v5033 = vsub.f32 1.0, %v5032
    %v5034 = vmul.f32 %v5031, %v5033
    %v5035 = vadd.f32 %v5031, %v5034
    %vm5036 = vweird.f32 %v5021
    %vm5037 = vweird.f32 %v5031
    %vm5038 = vmor %vm5036, %vm5037
    %v5039 = vsel %vm5038, %v5031, %v5035
    %v5040 = vand.u32 2147483647, %v5021
    %vm5041 = vcmp.eq.f32.partialorder %v5040, 8.507059e+37
    %v5042 = vand.u32 %v5021, 2147483648
    %v5043 = vor.u32 1.1754944e-38, %v5042
    %v5044 = vsel %vm5041, %v5043, %v5039
    %v5045 = vrcp.pop %v5024
    %v5046 = vmul.f32 %v5024, %v5045
    %v5047 = vsub.f32 1.0, %v5046
    %v5048 = vmul.f32 %v5045, %v5047
    %v5049 = vadd.f32 %v5045, %v5048
    %vm5050 = vweird.f32 %v5024
    %vm5051 = vweird.f32 %v5045
    %vm5052 = vmor %vm5050, %vm5051
    %v5053 = vsel %vm5052, %v5045, %v5049
    %v5054 = vand.u32 2147483647, %v5024
    %vm5055 = vcmp.eq.f32.partialorder %v5054, 8.507059e+37
    %v5056 = vand.u32 %v5024, 2147483648
    %v5057 = vor.u32 1.1754944e-38, %v5056
    %v5058 = vsel %vm5055, %v5057, %v5053
    %v5059 = vrcp.pop %v5027
    %v5060 = vmul.f32 %v5027, %v5059
    %v5061 = vsub.f32 1.0, %v5060
    %v5062 = vmul.f32 %v5059, %v5061
    %v5063 = vadd.f32 %v5059, %v5062
    %vm5064 = vweird.f32 %v5027
    %vm5065 = vweird.f32 %v5059
    %vm5066 = vmor %vm5064, %vm5065
    %v5067 = vsel %vm5066, %v5059, %v5063
    %v5068 = vand.u32 2147483647, %v5027
    %vm5069 = vcmp.eq.f32.partialorder %v5068, 8.507059e+37
    %v5070 = vand.u32 %v5027, 2147483648
    %v5071 = vor.u32 1.1754944e-38, %v5070
    %v5072 = vsel %vm5069, %v5071, %v5067
    %v5073 = vrcp.pop %v5030
    %v5074 = vmul.f32 %v5030, %v5073
    %v5075 = vsub.f32 1.0, %v5074
    %v5076 = vmul.f32 %v5073, %v5075
    %v5077 = vadd.f32 %v5073, %v5076
    %vm5078 = vweird.f32 %v5030
    %vm5079 = vweird.f32 %v5073
    %vm5080 = vmor %vm5078, %vm5079
    %v5081 = vsel %vm5080, %v5073, %v5077
    %v5082 = vand.u32 2147483647, %v5030
    %vm5083 = vcmp.eq.f32.partialorder %v5082, 8.507059e+37
    %v5084 = vand.u32 %v5030, 2147483648
    %v5085 = vor.u32 1.1754944e-38, %v5084
    %v5086 = vsel %vm5083, %v5085, %v5081
    %v5087 = vmul.f32 %v5012, %v5044
    %v5088 = vmul.f32 %v5014, %v5058
    %v5089 = vmul.f32 %v5016, %v5072
    %v5090 = vmul.f32 %v5018, %v5086
    %v5092 = vsel %vm669, %v5087, 0
    %5094 = vmatpush.msra.mxu0 0.0
    %5095 = vmatpush.msra.mxu0 0.0
    %5096 = vmatpush.msra.mxu0 0.0
    %5097 = vmatpush.msra.mxu0 0.0
    %5098 = vmatpush.msra.mxu0 0.0
    %5099 = vmatpush.msra.mxu0 0.0
    %5100 = vmatpush.msra.mxu0 0.0
    %5101 = vmatpush.msra.mxu0 0.0
    %5102 = vmatpush.msra.mxu0 0.0
    %5103 = vmatpush.msra.mxu0 0.0
    %5104 = vmatpush.msra.mxu0 0.0
    %5105 = vmatpush.msra.mxu0 0.0
    %5106 = vmatpush.msra.mxu0 0.0
    %5107 = vmatpush.msra.mxu0 0.0
    %5108 = vmatpush.msra.mxu0 0.0
    %5109 = vmatpush.msra.mxu0 %v4413
    %5110 = vmatmul.f32.gmra.mxu0 %v5092
    %v5111 = vpop.f32.mrf.mxu0
    %v5112 = vadd.f32 0.0, %v5111
    %5113 = vdwg.mxu0
    %v5115 = vsel %vm669, %v5088, 0
    %5117 = vmatpush.msra.mxu0 0.0
    %5118 = vmatpush.msra.mxu0 0.0
    %5119 = vmatpush.msra.mxu0 0.0
    %5120 = vmatpush.msra.mxu0 0.0
    %5121 = vmatpush.msra.mxu0 0.0
    %5122 = vmatpush.msra.mxu0 0.0
    %5123 = vmatpush.msra.mxu0 0.0
    %5124 = vmatpush.msra.mxu0 0.0
    %5125 = vmatpush.msra.mxu0 0.0
    %5126 = vmatpush.msra.mxu0 0.0
    %5127 = vmatpush.msra.mxu0 0.0
    %5128 = vmatpush.msra.mxu0 0.0
    %5129 = vmatpush.msra.mxu0 0.0
    %5130 = vmatpush.msra.mxu0 0.0
    %5131 = vmatpush.msra.mxu0 0.0
    %5132 = vmatpush.msra.mxu0 %v4436
    %5133 = vmatmul.f32.gmra.mxu0 %v5115
    %v5134 = vpop.f32.mrf.mxu0
    %v5135 = vadd.f32 0.0, %v5134
    %5136 = vdwg.mxu0
    %v5138 = vsel %vm669, %v5089, 0
    %5140 = vmatpush.msra.mxu0 0.0
    %5141 = vmatpush.msra.mxu0 0.0
    %5142 = vmatpush.msra.mxu0 0.0
    %5143 = vmatpush.msra.mxu0 0.0
    %5144 = vmatpush.msra.mxu0 0.0
    %5145 = vmatpush.msra.mxu0 0.0
    %5146 = vmatpush.msra.mxu0 0.0
    %5147 = vmatpush.msra.mxu0 0.0
    %5148 = vmatpush.msra.mxu0 0.0
    %5149 = vmatpush.msra.mxu0 0.0
    %5150 = vmatpush.msra.mxu0 0.0
    %5151 = vmatpush.msra.mxu0 0.0
    %5152 = vmatpush.msra.mxu0 0.0
    %5153 = vmatpush.msra.mxu0 0.0
    %5154 = vmatpush.msra.mxu0 0.0
    %5155 = vmatpush.msra.mxu0 %v4459
    %5156 = vmatmul.f32.gmra.mxu0 %v5138
    %v5157 = vpop.f32.mrf.mxu0
    %v5158 = vadd.f32 0.0, %v5157
    %5159 = vdwg.mxu0
    %v5161 = vsel %vm669, %v5090, 0
    %5163 = vmatpush.msra.mxu0 0.0
    %5164 = vmatpush.msra.mxu0 0.0
    %5165 = vmatpush.msra.mxu0 0.0
    %5166 = vmatpush.msra.mxu0 0.0
    %5167 = vmatpush.msra.mxu0 0.0
    %5168 = vmatpush.msra.mxu0 0.0
    %5169 = vmatpush.msra.mxu0 0.0
    %5170 = vmatpush.msra.mxu0 0.0
    %5171 = vmatpush.msra.mxu0 0.0
    %5172 = vmatpush.msra.mxu0 0.0
    %5173 = vmatpush.msra.mxu0 0.0
    %5174 = vmatpush.msra.mxu0 0.0
    %5175 = vmatpush.msra.mxu0 0.0
    %5176 = vmatpush.msra.mxu0 0.0
    %5177 = vmatpush.msra.mxu0 0.0
    %5178 = vmatpush.msra.mxu0 %v4482
    %5179 = vmatmul.f32.gmra.mxu0 %v5161
    %v5180 = vpop.f32.mrf.mxu0
    %v5181 = vadd.f32 0.0, %v5180
    %5182 = vdwg.mxu0
    %v5184 = vsel %vm669, %v5112, 0
    %5186 = vmatpush.msra.mxu0 0.0
    %5187 = vmatpush.msra.mxu0 0.0
    %5188 = vmatpush.msra.mxu0 0.0
    %5189 = vmatpush.msra.mxu0 0.0
    %5190 = vmatpush.msra.mxu0 0.0
    %5191 = vmatpush.msra.mxu0 0.0
    %5192 = vmatpush.msra.mxu0 0.0
    %5193 = vmatpush.msra.mxu0 0.0
    %5194 = vmatpush.msra.mxu0 0.0
    %5195 = vmatpush.msra.mxu0 0.0
    %5196 = vmatpush.msra.mxu0 0.0
    %5197 = vmatpush.msra.mxu0 0.0
    %5198 = vmatpush.msra.mxu0 0.0
    %5199 = vmatpush.msra.mxu0 0.0
    %5200 = vmatpush.msra.mxu0 0.0
    %5201 = vmatpush.msra.mxu0 %v2976
    %5202 = vmatmul.f32.gmra.mxu0 %v5184
    %v5203 = vpop.f32.mrf.mxu0
    %v5204 = vadd.f32 0.0, %v5203
    %5205 = vdwg.mxu0
    %v5207 = vsel %vm669, %v5135, 0
    %5209 = vmatpush.msra.mxu0 0.0
    %5210 = vmatpush.msra.mxu0 0.0
    %5211 = vmatpush.msra.mxu0 0.0
    %5212 = vmatpush.msra.mxu0 0.0
    %5213 = vmatpush.msra.mxu0 0.0
    %5214 = vmatpush.msra.mxu0 0.0
    %5215 = vmatpush.msra.mxu0 0.0
    %5216 = vmatpush.msra.mxu0 0.0
    %5217 = vmatpush.msra.mxu0 0.0
    %5218 = vmatpush.msra.mxu0 0.0
    %5219 = vmatpush.msra.mxu0 0.0
    %5220 = vmatpush.msra.mxu0 0.0
    %5221 = vmatpush.msra.mxu0 0.0
    %5222 = vmatpush.msra.mxu0 0.0
    %5223 = vmatpush.msra.mxu0 0.0
    %5224 = vmatpush.msra.mxu0 %v2977
    %5225 = vmatmul.f32.gmra.mxu0 %v5207
    %v5226 = vpop.f32.mrf.mxu0
    %v5227 = vadd.f32 0.0, %v5226
    %5228 = vdwg.mxu0
    %v5230 = vsel %vm669, %v5158, 0
    %5232 = vmatpush.msra.mxu0 0.0
    %5233 = vmatpush.msra.mxu0 0.0
    %5234 = vmatpush.msra.mxu0 0.0
    %5235 = vmatpush.msra.mxu0 0.0
    %5236 = vmatpush.msra.mxu0 0.0
    %5237 = vmatpush.msra.mxu0 0.0
    %5238 = vmatpush.msra.mxu0 0.0
    %5239 = vmatpush.msra.mxu0 0.0
    %5240 = vmatpush.msra.mxu0 0.0
    %5241 = vmatpush.msra.mxu0 0.0
    %5242 = vmatpush.msra.mxu0 0.0
    %5243 = vmatpush.msra.mxu0 0.0
    %5244 = vmatpush.msra.mxu0 0.0
    %5245 = vmatpush.msra.mxu0 0.0
    %5246 = vmatpush.msra.mxu0 0.0
    %5247 = vmatpush.msra.mxu0 %v2978
    %5248 = vmatmul.f32.gmra.mxu0 %v5230
    %v5249 = vpop.f32.mrf.mxu0
    %v5250 = vadd.f32 0.0, %v5249
    %5251 = vdwg.mxu0
    %v5253 = vsel %vm669, %v5181, 0
    %5255 = vmatpush.msra.mxu0 0.0
    %5256 = vmatpush.msra.mxu0 0.0
    %5257 = vmatpush.msra.mxu0 0.0
    %5258 = vmatpush.msra.mxu0 0.0
    %5259 = vmatpush.msra.mxu0 0.0
    %5260 = vmatpush.msra.mxu0 0.0
    %5261 = vmatpush.msra.mxu0 0.0
    %5262 = vmatpush.msra.mxu0 0.0
    %5263 = vmatpush.msra.mxu0 0.0
    %5264 = vmatpush.msra.mxu0 0.0
    %5265 = vmatpush.msra.mxu0 0.0
    %5266 = vmatpush.msra.mxu0 0.0
    %5267 = vmatpush.msra.mxu0 0.0
    %5268 = vmatpush.msra.mxu0 0.0
    %5269 = vmatpush.msra.mxu0 0.0
    %5270 = vmatpush.msra.mxu0 %v2979
    %5271 = vmatmul.f32.gmra.mxu0 %v5253
    %v5272 = vpop.f32.mrf.mxu0
    %v5273 = vadd.f32 0.0, %v5272
    %5274 = vdwg.mxu0
    %v5275 = vsel %vm325, %v5204, 0.0
    %v5276 = vsel %vm325, %v5227, 0.0
    %v5277 = vadd.f32 %v5275, %v5276
    %v5278 = vsel %vm325, %v5250, 0.0
    %v5279 = vadd.f32 %v5277, %v5278
    %v5280 = vsel %vm325, %v5273, 0.0
    %v5281 = vadd.f32 %v5279, %v5280
    %v5283 = vperm.slane %v2980, 0
    %v5285 = vadd.f32 %v4882, %v5283
    %v5286 = vadd.f32 %v5281, %v5283
    %v5287 = vadd.f32 %v5285, %v4136
    %v5288 = vadd.f32 %v5286, %v4137
    %v5289 = vsel %vm325, %v5287, 0.0
    %5290 = vadd.xlane.f32.xlu0 %v5289
    %v5291 = vpop.xlane.xlu0 %5290
    %v5292 = vsel %vm325, %v5288, 0.0
    %5293 = vadd.xlane.f32.xlu0 %v5292
    %v5294 = vpop.xlane.xlu0 %5293
    %v5295 = vmul.f32 %v5291, %v338
    %v5296 = vmul.f32 %v5294, %v338
    %v5297 = vsub.f32 %v5287, %v5295
    %v5298 = vsub.f32 %v5288, %v5296
    %v5299 = vmul.f32 %v5297, %v5297
    %v5300 = vmul.f32 %v5298, %v5298
    %v5301 = vsel %vm325, %v5299, 0.0
    %5302 = vadd.xlane.f32.xlu0 %v5301
    %v5303 = vpop.xlane.xlu0 %5302
    %v5304 = vsel %vm325, %v5300, 0.0
    %5305 = vadd.xlane.f32.xlu0 %v5304
    %v5306 = vpop.xlane.xlu0 %5305
    %v5307 = vmul.f32 %v5303, %v338
    %v5308 = vmul.f32 %v5306, %v338
    %v5309 = vadd.f32 %v5307, 1e-05
    %v5310 = vadd.f32 %v5308, 1e-05
    %v5311 = vrsqrt.pop %v5309
    %v5312 = vmul.f32 %v5311, %v5309
    %v5313 = vmul.f32 %v5312, %v5311
    %v5314 = vmul.f32 0.5, %v5313
    %v5315 = vsub.f32 1.5, %v5314
    %v5316 = vmul.f32 %v5311, %v5315
    %vm5317 = vweird.f32 %v5309
    %vm5318 = vweird.f32 %v5311
    %vm5319 = vmor %vm5317, %vm5318
    %v5320 = vsel %vm5319, %v5311, %v5316
    %v5321 = vrsqrt.pop %v5310
    %v5322 = vmul.f32 %v5321, %v5310
    %v5323 = vmul.f32 %v5322, %v5321
    %v5324 = vmul.f32 0.5, %v5323
    %v5325 = vsub.f32 1.5, %v5324
    %v5326 = vmul.f32 %v5321, %v5325
    %vm5327 = vweird.f32 %v5310
    %vm5328 = vweird.f32 %v5321
    %vm5329 = vmor %vm5327, %vm5328
    %v5330 = vsel %vm5329, %v5321, %v5326
    %v5331 = vmul.f32 %v5297, %v5320
    %v5332 = vmul.f32 %v5298, %v5330
    %v5334 = vperm.slane %v2981, 0
    %v5336 = vmul.f32 %v5331, %v5334
    %v5337 = vmul.f32 %v5332, %v5334
    %v5339 = vperm.slane %v2982, 0
    %v5341 = vadd.f32 %v5336, %v5339
    %v5342 = vadd.f32 %v5337, %v5339
    %v5344 = vperm.slane %v2987, 0
    %v5347 = vsel %vm325, %v5341, 0
    %v5350 = vsel %vm325, %v5342, 0
    %5352 = vmatpush.msra.mxu0 0.0
    %5353 = vmatpush.msra.mxu0 0.0
    %5354 = vmatpush.msra.mxu0 0.0
    %5355 = vmatpush.msra.mxu0 0.0
    %5356 = vmatpush.msra.mxu0 0.0
    %5357 = vmatpush.msra.mxu0 0.0
    %5358 = vmatpush.msra.mxu0 0.0
    %5359 = vmatpush.msra.mxu0 0.0
    %5360 = vmatpush.msra.mxu0 0.0
    %5361 = vmatpush.msra.mxu0 0.0
    %5362 = vmatpush.msra.mxu0 0.0
    %5363 = vmatpush.msra.mxu0 0.0
    %5364 = vmatpush.msra.mxu0 %v2986
    %5365 = vmatpush.msra.mxu0 %v2985
    %5366 = vmatpush.msra.mxu0 %v2984
    %5367 = vmatpush.msra.mxu0 %v2983
    %5368 = vmatmul.f32.gmra.mxu0 %v5347
    %v5369 = vpop.f32.mrf.mxu0
    %v5370 = vadd.f32 %v5344, %v5369
    %5371 = vmatmul.f32.gmra.mxu0 %v5350
    %v5372 = vpop.f32.mrf.mxu0
    %v5373 = vadd.f32 %v5344, %v5372
    %5374 = vdwg.mxu0
    %v5375 = vmul.f32 %v5370, 0.5
    %v5376 = vmul.f32 %v5373, 0.5
    %v5377 = vmul.f32 %v5370, 0.70710677
    %v5378 = vmul.f32 %v5373, 0.70710677
    %v5379 = vand.u32 2147483647, %v5377
    %v5380 = vand.u32 2147483647, %v5378
    %v5381 = vmul.f32 %v5379, 0.3275911
    %v5382 = vmul.f32 %v5380, 0.3275911
    %v5383 = vadd.f32 %v5381, 1.0
    %v5384 = vadd.f32 %v5382, 1.0
    %v5385 = vrcp.pop %v5383
    %v5386 = vmul.f32 %v5383, %v5385
    %v5387 = vsub.f32 1.0, %v5386
    %v5388 = vmul.f32 %v5385, %v5387
    %v5389 = vadd.f32 %v5385, %v5388
    %vm5390 = vweird.f32 %v5383
    %vm5391 = vweird.f32 %v5385
    %vm5392 = vmor %vm5390, %vm5391
    %v5393 = vsel %vm5392, %v5385, %v5389
    %v5394 = vand.u32 2147483647, %v5383
    %vm5395 = vcmp.eq.f32.partialorder %v5394, 8.507059e+37
    %v5396 = vand.u32 %v5383, 2147483648
    %v5397 = vor.u32 1.1754944e-38, %v5396
    %v5398 = vsel %vm5395, %v5397, %v5393
    %v5399 = vmul.f32 1.0, %v5398
    %v5400 = vrcp.pop %v5384
    %v5401 = vmul.f32 %v5384, %v5400
    %v5402 = vsub.f32 1.0, %v5401
    %v5403 = vmul.f32 %v5400, %v5402
    %v5404 = vadd.f32 %v5400, %v5403
    %vm5405 = vweird.f32 %v5384
    %vm5406 = vweird.f32 %v5400
    %vm5407 = vmor %vm5405, %vm5406
    %v5408 = vsel %vm5407, %v5400, %v5404
    %v5409 = vand.u32 2147483647, %v5384
    %vm5410 = vcmp.eq.f32.partialorder %v5409, 8.507059e+37
    %v5411 = vand.u32 %v5384, 2147483648
    %v5412 = vor.u32 1.1754944e-38, %v5411
    %v5413 = vsel %vm5410, %v5412, %v5408
    %v5414 = vmul.f32 1.0, %v5413
    %v5415 = vmul.f32 %v5399, 1.0614054
    %v5416 = vmul.f32 %v5414, 1.0614054
    %v5417 = vadd.f32 %v5415, -1.4531521
    %v5418 = vadd.f32 %v5416, -1.4531521
    %v5419 = vmul.f32 %v5417, %v5399
    %v5420 = vmul.f32 %v5418, %v5414
    %v5421 = vadd.f32 %v5419, 1.4214138
    %v5422 = vadd.f32 %v5420, 1.4214138
    %v5423 = vmul.f32 %v5421, %v5399
    %v5424 = vmul.f32 %v5422, %v5414
    %v5425 = vadd.f32 %v5423, -0.28449672
    %v5426 = vadd.f32 %v5424, -0.28449672
    %v5427 = vmul.f32 %v5425, %v5399
    %v5428 = vmul.f32 %v5426, %v5414
    %v5429 = vadd.f32 %v5427, 0.2548296
    %v5430 = vadd.f32 %v5428, 0.2548296
    %v5431 = vmul.f32 %v5429, %v5399
    %v5432 = vmul.f32 %v5430, %v5414
    %v5433 = vsub.f32 0.0, %v5379
    %v5434 = vsub.f32 0.0, %v5380
    %v5435 = vmul.f32 %v5433, %v5379
    %v5436 = vmul.f32 %v5434, %v5380
    %v5437 = vmul.f32 %v5435, 1.442695
    %v5438 = vpow.pop %v5437
    %v5439 = vmul.f32 %v5436, 1.442695
    %v5440 = vpow.pop %v5439
    %v5441 = vmul.f32 %v5431, %v5438
    %v5442 = vmul.f32 %v5432, %v5440
    %v5443 = vsub.f32 1.0, %v5441
    %v5444 = vsub.f32 1.0, %v5442
    %vm5445 = vcmp.lt.f32.partialorder %v5377, 0.0
    %vm5446 = vcmp.lt.f32.partialorder %v5378, 0.0
    %v5447 = vsub.f32 0.0, %v5443
    %v5448 = vsub.f32 0.0, %v5444
    %v5449 = vsel %vm5445, %v5447, %v5443
    %v5450 = vsel %vm5446, %v5448, %v5444
    %v5451 = vadd.f32 %v5449, 1.0
    %v5452 = vadd.f32 %v5450, 1.0
    %v5453 = vmul.f32 %v5375, %v5451
    %v5454 = vmul.f32 %v5376, %v5452
    %v5456 = vperm.slane %v2996, 0
    %v5459 = vsel %vm2839, %v5453, 0
    %v5462 = vsel %vm2839, %v5454, 0
    %5464 = vmatpush.msra.mxu0 0.0
    %5465 = vmatpush.msra.mxu0 0.0
    %5466 = vmatpush.msra.mxu0 0.0
    %5467 = vmatpush.msra.mxu0 0.0
    %5468 = vmatpush.msra.mxu0 0.0
    %5469 = vmatpush.msra.mxu0 0.0
    %5470 = vmatpush.msra.mxu0 0.0
    %5471 = vmatpush.msra.mxu0 0.0
    %5472 = vmatpush.msra.mxu0 %v2995
    %5473 = vmatpush.msra.mxu0 %v2994
    %5474 = vmatpush.msra.mxu0 %v2993
    %5475 = vmatpush.msra.mxu0 %v2992
    %5476 = vmatpush.msra.mxu0 %v2991
    %5477 = vmatpush.msra.mxu0 %v2990
    %5478 = vmatpush.msra.mxu0 %v2989
    %5479 = vmatpush.msra.mxu0 %v2988
    %5480 = vmatmul.f32.gmra.mxu0 %v5459
    %v5481 = vpop.f32.mrf.mxu0
    %v5482 = vadd.f32 %v5456, %v5481
    %5483 = vmatmul.f32.gmra.mxu0 %v5462
    %v5484 = vpop.f32.mrf.mxu0
    %v5485 = vadd.f32 %v5456, %v5484
    %5486 = vdwg.mxu0
    %v5487 = vadd.f32 %v5482, %v5287
    %v5488 = vadd.f32 %v5485, %v5288
    %5489 = vst.msk [vmem:[#allocation2] sm:$0xff] %vm325, %v5487
    %5490 = vst.msk [vmem:[#allocation2 + $0x8] sm:$0xff] %vm325, %v5488
    // Predicated region
    $region178: #{decoder_forward.1} parent=1 // pred_check
      _
    $region179: #{decoder_forward.1} parent=1 // pred_check_branch
      %5492 = sbr.rel (0) target = $region181
    $region180: #{decoder_forward.1} parent=1 // pred_region
      %5494 = vsyncadd [#allocation3], 0
      %s5495 = sshll.u32 [#allocation2], 4
      %s5496 = int_to_ptr.vmem [resolvable:$true] %s5495
      %s5497 = sshll.u32 %s89, 4
      %s5498 = int_to_ptr.hbm [resolvable:$true] %s5497
      %5503 = dma.vmem_to_hbm [thread:$0]  %s5496, 256, %s5498, [#allocation3], 128, 128, 8
    $region181: #{decoder_forward.1} parent=1 // pred_fallthru
      _
    // Predicated region
    $region182: #{decoder_forward.1} parent=1 // pred_check
      _
    $region183: #{decoder_forward.1} parent=1 // pred_check_branch
      %5505 = sbr.rel (0) target = $region185
    $region184: #{decoder_forward.1} parent=1 // pred_region
      %5507 = dma.done [#allocation3], 256
    $region185: #{decoder_forward.1} parent=1 // pred_fallthru
      _
    %5508 = vsyncpa [#allocation3], 1

</llo_original>
